<compile_context>
chip_gen: v5e
topology: v5e:2x2
jax: 0.10.0
libtpu: 0.0.40
codegen_flags: <defaults>
</compile_context>

<pallas_src>
import functools

import jax
import jax.numpy as jnp
from jax.experimental import pallas as pl
from jax.experimental.pallas import tpu as pltpu

THRESH = 0.5
DECAY = 0.2


# ----------------------------------------------------------------------------
# Conv3x3 (pad 1) + bias + LIF membrane update, one (batch, time) tile per step.
# ----------------------------------------------------------------------------

def conv_lif_kernel(x_ref, w_ref, b_ref, spike_out_ref, mem_ref, spk_ref, *, S, Wp):
    # x_ref:         [Cin, Lin]  bf16, Lin = S + 2*(Wp+1): zero guard band, padded
    #                image flattened row-major (S = (H+2)*(W+2)), guard band.
    # w_ref:         [9, Cout, Cin] bf16, tap k = ky*3 + kx.
    # b_ref:         [Cout, 1]   f32.
    # spike_out_ref: [Cout, S]   bf16 full-resolution (padded-grid) spikes for this t.
    # mem_ref/spk_ref: [Cout, S] f32 VMEM scratch, resident across the T grid axis.
    t = pl.program_id(1)

    @pl.when(t == 0)
    def _init():
        mem_ref[...] = jnp.zeros_like(mem_ref)
        spk_ref[...] = jnp.zeros_like(spk_ref)

    # LIF decay (uses previous spike as reset gate) + bias; conv taps accumulate below.
    mem_ref[...] = mem_ref[...] * DECAY * (1.0 - spk_ref[...]) + b_ref[...]

    x = x_ref[...]                                   # [Cin, Lin] bf16
    # In-kernel im2col: 9 shifted lane-slices, each a [Cout,Cin] x [Cin,S] matmul.
    # Border positions of the padded grid accumulate junk but are never read
    # (pooling extracts the interior); interior positions are exact.
    for k in range(9):
        ky, kx = divmod(k, 3)
        off = ky * Wp + kx                           # static lane offset, 0 .. 2*(Wp+1)
        xk = x[:, off:off + S]                       # [Cin, S] bf16
        mem_ref[...] += jnp.dot(w_ref[k], xk, preferred_element_type=jnp.float32)

    spk = (mem_ref[...] > THRESH).astype(jnp.float32)
    spk_ref[...] = spk
    spike_out_ref[...] = spk.astype(spike_out_ref.dtype)


def conv_lif_layer(x_flat, w, b, *, B, T, Cin, Cout, H, W):
    """x_flat: [T, B, Cin, S + 2G] bf16 -> full-res padded-grid spikes [T, B, Cout, S]."""
    Hp, Wp = H + 2, W + 2
    S = Hp * Wp
    G = Wp + 1
    Lin = S + 2 * G
    assert x_flat.shape == (T, B, Cin, Lin), (x_flat.shape, (T, B, Cin, Lin))

    kernel = functools.partial(conv_lif_kernel, S=S, Wp=Wp)
    return pl.pallas_call(
        kernel,
        out_shape=jax.ShapeDtypeStruct((T, B, Cout, S), jnp.bfloat16),
        grid=(B, T),                                 # B outer (parallel), T inner
        in_specs=[
            pl.BlockSpec((None, None, Cin, Lin), lambda bb, tt: (tt, bb, 0, 0)),
            pl.BlockSpec((9, Cout, Cin), lambda bb, tt: (0, 0, 0)),
            pl.BlockSpec((Cout, 1), lambda bb, tt: (0, 0)),
        ],
        out_specs=pl.BlockSpec((None, None, Cout, S), lambda bb, tt: (tt, bb, 0, 0)),
        scratch_shapes=[pltpu.VMEM((Cout, S), jnp.float32),   # mem (resident over T)
                        pltpu.VMEM((Cout, S), jnp.float32)],  # spike (resident over T)
        compiler_params=pltpu.CompilerParams(
            dimension_semantics=("parallel", "arbitrary")),
    )(x_flat, w, b)


# ----------------------------------------------------------------------------
# fc1 + fc2 + LIF + spike-sum, fused over all timesteps in one pallas_call.
# ----------------------------------------------------------------------------

def fc_lif_kernel(x_ref, w1_ref, b1_ref, w2_ref, b2_ref, out_ref,
                  h1_mem, h1_spk, h2_mem, h2_spk, *, T):
    t = pl.program_id(0)

    @pl.when(t == 0)
    def _init():
        h1_mem[...] = jnp.zeros_like(h1_mem)
        h1_spk[...] = jnp.zeros_like(h1_spk)
        h2_mem[...] = jnp.zeros_like(h2_mem)
        h2_spk[...] = jnp.zeros_like(h2_spk)
        out_ref[...] = jnp.zeros_like(out_ref)

    x = x_ref[...]                                                       # [B, F] bf16
    a1 = jnp.dot(x, w1_ref[...], preferred_element_type=jnp.float32) + b1_ref[...]
    m1 = h1_mem[...] * DECAY * (1.0 - h1_spk[...]) + a1
    s1 = (m1 > THRESH).astype(jnp.float32)
    h1_mem[...] = m1
    h1_spk[...] = s1
    # NOTE: h1_sumspike of the PyTorch module is never used in its output -> dropped.

    a2 = jnp.dot(s1.astype(w2_ref.dtype), w2_ref[...],
                 preferred_element_type=jnp.float32) + b2_ref[...]
    m2 = h2_mem[...] * DECAY * (1.0 - h2_spk[...]) + a2
    s2 = (m2 > THRESH).astype(jnp.float32)
    h2_mem[...] = m2
    h2_spk[...] = s2

    out_ref[...] += s2                              # running h2_sumspike (resident)

    @pl.when(t == T - 1)
    def _finalize():
        out_ref[...] = out_ref[...] / float(T)


def fc_lif_all_t(x, w1, b1, w2, b2, *, B, T, F, N1, N2):
    kernel = functools.partial(fc_lif_kernel, T=T)
    return pl.pallas_call(
        kernel,
        out_shape=jax.ShapeDtypeStruct((B, N2), jnp.float32),
        grid=(T,),
        in_specs=[
            pl.BlockSpec((None, B, F), lambda tt: (tt, 0, 0)),
            pl.BlockSpec((F, N1), lambda tt: (0, 0)),
            pl.BlockSpec((1, N1), lambda tt: (0, 0)),
            pl.BlockSpec((N1, N2), lambda tt: (0, 0)),
            pl.BlockSpec((1, N2), lambda tt: (0, 0)),
        ],
        out_specs=pl.BlockSpec((B, N2), lambda tt: (0, 0)),   # resident accumulator
        scratch_shapes=[pltpu.VMEM((B, N1), jnp.float32),
                        pltpu.VMEM((B, N1), jnp.float32),
                        pltpu.VMEM((B, N2), jnp.float32),
                        pltpu.VMEM((B, N2), jnp.float32)],
        compiler_params=pltpu.CompilerParams(dimension_semantics=("arbitrary",)),
    )(x, w1, b1, w2, b2)


# ----------------------------------------------------------------------------
# XLA glue: pooling of the padded-grid spikes and (re)padding for the next conv.
# ----------------------------------------------------------------------------

def pool2_from_padded(spk_flat, *, T, B, C, H, W):
    """spk_flat [T,B,C,(H+2)*(W+2)] -> 2x2 avg-pooled interior [T,B,C,H//2,W//2]."""
    Hp, Wp = H + 2, W + 2
    x = spk_flat.reshape(T, B, C, Hp, Wp)[:, :, :, 1:1 + H, 1:1 + W]
    x = x.reshape(T, B, C, H // 2, 2, W // 2, 2).mean(axis=(4, 6))
    return x


def pad_for_conv(x):
    """x [T,B,C,H,W] -> zero-guarded padded flat layout [T,B,C,S+2G] in bf16."""
    T, B, C, H, W = x.shape
    Wp = W + 2
    S = (H + 2) * Wp
    G = Wp + 1
    x = jnp.pad(x, ((0, 0), (0, 0), (0, 0), (1, 1), (1, 1)))
    x = x.reshape(T, B, C, S)
    x = jnp.pad(x, ((0, 0), (0, 0), (0, 0), (G, G)))
    return x.astype(jnp.bfloat16)


# ----------------------------------------------------------------------------
# SCNN forward
# ----------------------------------------------------------------------------

def scnn_forward(inp, params, cfg_cnn, cfg_fc, cfg_kernel):
    """inp: [B, T, 2, H, W] (PyTorch-style NCHW frames along time dim 1)."""
    B, T = inp.shape[0], inp.shape[1]
    H0, H1, H2, H3 = cfg_kernel
    C0, C1, C2 = cfg_cnn[0][1], cfg_cnn[1][1], cfg_cnn[2][1]
    (w0, b0), (w1, b1), (w2, b2), (wf1, bf1), (wf2, bf2) = params

    # time-major, channel-major frames -> padded flat conv layout
    x = jnp.transpose(inp, (1, 0, 2, 3, 4)).astype(jnp.float32)   # [T,B,2,H0,H0]
    x = pad_for_conv(x)

    spk0 = conv_lif_layer(x, w0, b0, B=B, T=T, Cin=cfg_cnn[0][0], Cout=C0, H=H0, W=H0)
    x = pool2_from_padded(spk0, T=T, B=B, C=C0, H=H0, W=H0)       # [T,B,C0,H1,H1]
    x = pad_for_conv(x)

    spk1 = conv_lif_layer(x, w1, b1, B=B, T=T, Cin=C0, Cout=C1, H=H1, W=H1)
    x = pool2_from_padded(spk1, T=T, B=B, C=C1, H=H1, W=H1)       # [T,B,C1,H2,H2]
    x = pad_for_conv(x)

    spk2 = conv_lif_layer(x, w2, b2, B=B, T=T, Cin=C1, Cout=C2, H=H2, W=H2)
    x = pool2_from_padded(spk2, T=T, B=B, C=C2, H=H2, W=H2)       # [T,B,C2,H3,H3]

    # Channel-major layout == PyTorch NCHW x.view(B, -1) flatten order: no transpose.
    F = C2 * H3 * H3
    x = x.reshape(T, B, F).astype(jnp.bfloat16)

    return fc_lif_all_t(x, wf1, bf1, wf2, bf2, B=B, T=T, F=F,
                        N1=cfg_fc[0], N2=cfg_fc[1])


# ----------------------------------------------------------------------------
# Deterministic parameter init (synthetic; shapes follow the module __init__)
# ----------------------------------------------------------------------------

def init_params(key, cfg_cnn, cfg_fc, cfg_kernel):
    params = []
    keys = jax.random.split(key, 10)
    ki = 0
    # conv layers: PyTorch weight [Cout, Cin, 3, 3] -> per-tap weights [9, Cout, Cin]
    for (cin, cout, _s, _p, k) in cfg_cnn:
        fan_in = cin * k * k
        w = jax.random.normal(keys[ki], (cout, cin, k, k), jnp.float32) / jnp.sqrt(fan_in)
        b = jax.random.normal(keys[ki + 1], (cout,), jnp.float32) * 0.01
        ki += 2
        w_taps = jnp.transpose(w, (2, 3, 0, 1)).reshape(k * k, cout, cin)
        params.append((w_taps.astype(jnp.bfloat16), b.reshape(cout, 1)))
    # fc layers: stored as [in, out] (== PyTorch weight.T) so the kernel does x @ W
    fc1_in = cfg_kernel[-1] * cfg_kernel[-1] * cfg_cnn[-1][1]
    dims = [(fc1_in, cfg_fc[0]), (cfg_fc[0], cfg_fc[1])]
    for (din, dout) in dims:
        w = jax.random.normal(keys[ki], (din, dout), jnp.float32) / jnp.sqrt(din)
        b = jax.random.normal(keys[ki + 1], (dout,), jnp.float32) * 0.01
        ki += 2
        params.append((w.astype(jnp.bfloat16), b.reshape(1, dout)))
    return params


if __name__ == "__main__":
    # Small config consistent with the module structure (spatial scaled 128 -> 32).
    cfg_cnn = [(2, 32, 1, 1, 3), (32, 32, 1, 1, 3), (32, 32, 1, 1, 3)]
    cfg_fc = [128, 10]
    SPATIAL = 32
    cfg_kernel = [SPATIAL, SPATIAL // 2, SPATIAL // 4, SPATIAL // 8]

    B, T = 2, 4
    key = jax.random.PRNGKey(0)
    k_in, k_par = jax.random.split(key)
    x = jax.random.normal(k_in, (B, T, cfg_cnn[0][0], SPATIAL, SPATIAL), jnp.float32)
    params = init_params(k_par, cfg_cnn, cfg_fc, cfg_kernel)

    fwd = jax.jit(functools.partial(
        scnn_forward, cfg_cnn=cfg_cnn, cfg_fc=cfg_fc, cfg_kernel=cfg_kernel))
    out = fwd(x, params)
    out = jax.block_until_ready(out)
    assert out.shape == (B, cfg_fc[1]) and out.dtype == jnp.float32
    assert bool(jnp.all(jnp.isfinite(out)))
    print("KERNEL_OK")
</pallas_src>

<mosaic_0001>
module attributes {stable_mosaic.version = 11 : i64} {
  func.func @conv_lif_kernel(%arg0: i32, %arg1: i32, %arg2: memref<1x1x2x1226xbf16, #tpu.memory_space<vmem>>, %arg3: memref<9x32x2xbf16, #tpu.memory_space<vmem>>, %arg4: memref<32x1xf32, #tpu.memory_space<vmem>>, %arg5: memref<1x1x32x1156xbf16, #tpu.memory_space<vmem>>, %arg6: memref<32x1156xf32, #tpu.memory_space<vmem>>, %arg7: memref<32x1156xf32, #tpu.memory_space<vmem>>) attributes {dimension_semantics = [#tpu.dimension_semantics<parallel>, #tpu.dimension_semantics<arbitrary>], iteration_bounds = array<i64: 2, 4>, scalar_prefetch = 0 : i64, scratch_operands = 2 : i64, tpu.core_type = #tpu.core_type<tc>, window_params = [{transform_indices = @transform_0, window_bounds = array<i64: 1, 1, 2, 1226>}, {pipeline_mode = #tpu.pipeline_mode<synchronous>, transform_indices = @transform_1, window_bounds = array<i64: 9, 32, 2>}, {pipeline_mode = #tpu.pipeline_mode<synchronous>, transform_indices = @transform_2, window_bounds = array<i64: 32, 1>}, {transform_indices = @transform_3, window_bounds = array<i64: 1, 1, 32, 1156>}]} {
    %c0_i32 = arith.constant 0 : i32
    %0 = arith.cmpi eq, %arg1, %c0_i32 : i32
    %1 = arith.extui %0 : i1 to i32
    %c0_i32_0 = arith.constant 0 : i32
    %2 = arith.cmpi ne, %1, %c0_i32_0 : i32
    scf.if %2 {
      %cst_86 = arith.constant 0.000000e+00 : f32
      %89 = vector.broadcast %cst_86 : f32 to vector<32x1156xf32>
      %c0_87 = arith.constant 0 : index
      %c0_88 = arith.constant 0 : index
      %90 = vector.load %arg6[%c0_87, %c0_88] : memref<32x1156xf32, #tpu.memory_space<vmem>>, vector<32x1156xf32>
      tpu.vector_store %arg6[%c0_87, %c0_88], %89 {strides = array<i32>} : memref<32x1156xf32, #tpu.memory_space<vmem>>, vector<32x1156xf32>,
      %cst_89 = arith.constant 0.000000e+00 : f32
      %91 = vector.broadcast %cst_89 : f32 to vector<32x1156xf32>
      %c0_90 = arith.constant 0 : index
      %c0_91 = arith.constant 0 : index
      %92 = vector.load %arg7[%c0_90, %c0_91] : memref<32x1156xf32, #tpu.memory_space<vmem>>, vector<32x1156xf32>
      tpu.vector_store %arg7[%c0_90, %c0_91], %91 {strides = array<i32>} : memref<32x1156xf32, #tpu.memory_space<vmem>>, vector<32x1156xf32>,
    } else {
    }
    %c0 = arith.constant 0 : index
    %c0_1 = arith.constant 0 : index
    %3 = vector.load %arg6[%c0, %c0_1] : memref<32x1156xf32, #tpu.memory_space<vmem>>, vector<32x1156xf32>
    %cst = arith.constant 2.000000e-01 : f32
    %4 = vector.broadcast %cst : f32 to vector<32x1156xf32>
    %5 = arith.mulf %3, %4 : vector<32x1156xf32>
    %c0_2 = arith.constant 0 : index
    %c0_3 = arith.constant 0 : index
    %6 = vector.load %arg7[%c0_2, %c0_3] : memref<32x1156xf32, #tpu.memory_space<vmem>>, vector<32x1156xf32>
    %cst_4 = arith.constant 1.000000e+00 : f32
    %7 = vector.broadcast %cst_4 : f32 to vector<32x1156xf32>
    %8 = arith.subf %7, %6 : vector<32x1156xf32>
    %9 = arith.mulf %5, %8 : vector<32x1156xf32>
    %c0_5 = arith.constant 0 : index
    %c0_6 = arith.constant 0 : index
    %10 = vector.load %arg4[%c0_5, %c0_6] : memref<32x1xf32, #tpu.memory_space<vmem>>, vector<32x1xf32>
    %11 = vector.broadcast %10 : vector<32x1xf32> to vector<32x1156xf32>
    %12 = arith.addf %9, %11 : vector<32x1156xf32>
    %c0_7 = arith.constant 0 : index
    %c0_8 = arith.constant 0 : index
    %13 = vector.load %arg6[%c0_7, %c0_8] : memref<32x1156xf32, #tpu.memory_space<vmem>>, vector<32x1156xf32>
    tpu.vector_store %arg6[%c0_7, %c0_8], %12 {strides = array<i32>} : memref<32x1156xf32, #tpu.memory_space<vmem>>, vector<32x1156xf32>,
    %c0_9 = arith.constant 0 : index
    %c0_10 = arith.constant 0 : index
    %c0_11 = arith.constant 0 : index
    %c0_12 = arith.constant 0 : index
    %14 = vector.load %arg2[%c0_9, %c0_10, %c0_11, %c0_12] : memref<1x1x2x1226xbf16, #tpu.memory_space<vmem>>, vector<1x1x2x1226xbf16>
    %15 = vector.shape_cast %14 : vector<1x1x2x1226xbf16> to vector<2x1226xbf16>
    %16 = vector.extract_strided_slice %15 {offsets = [0, 0], sizes = [2, 1156], strides = [1, 1]} : vector<2x1226xbf16> to vector<2x1156xbf16>
    %c0_13 = arith.constant 0 : index
    %c0_14 = arith.constant 0 : index
    %17 = vector.load %arg6[%c0_13, %c0_14] : memref<32x1156xf32, #tpu.memory_space<vmem>>, vector<32x1156xf32>
    %c0_15 = arith.constant 0 : index
    %c0_16 = arith.constant 0 : index
    %c0_17 = arith.constant 0 : index
    %18 = vector.load %arg3[%c0_15, %c0_16, %c0_17] : memref<9x32x2xbf16, #tpu.memory_space<vmem>>, vector<1x32x2xbf16>
    %19 = vector.shape_cast %18 : vector<1x32x2xbf16> to vector<32x2xbf16>
    %cst_18 = arith.constant dense<0.000000e+00> : vector<32x1156xf32>
    %20 = tpu.matmul %19, %16, %cst_18 {dimension_numbers = #tpu.dot_dimension_numbers<[1], [0], [0], [1], [0, 0, 1, 1], [], []>} : vector<32x2xbf16>, vector<2x1156xbf16>, vector<32x1156xf32> -> vector<32x1156xf32>
    %21 = arith.addf %17, %20 : vector<32x1156xf32>
    %c0_19 = arith.constant 0 : index
    %c0_20 = arith.constant 0 : index
    %22 = vector.load %arg6[%c0_19, %c0_20] : memref<32x1156xf32, #tpu.memory_space<vmem>>, vector<32x1156xf32>
    tpu.vector_store %arg6[%c0_19, %c0_20], %21 {strides = array<i32>} : memref<32x1156xf32, #tpu.memory_space<vmem>>, vector<32x1156xf32>,
    %23 = vector.extract_strided_slice %15 {offsets = [0, 1], sizes = [2, 1156], strides = [1, 1]} : vector<2x1226xbf16> to vector<2x1156xbf16>
    %c0_21 = arith.constant 0 : index
    %c0_22 = arith.constant 0 : index
    %24 = vector.load %arg6[%c0_21, %c0_22] : memref<32x1156xf32, #tpu.memory_space<vmem>>, vector<32x1156xf32>
    %c1 = arith.constant 1 : index
    %c0_23 = arith.constant 0 : index
    %c0_24 = arith.constant 0 : index
    %25 = vector.load %arg3[%c1, %c0_23, %c0_24] : memref<9x32x2xbf16, #tpu.memory_space<vmem>>, vector<1x32x2xbf16>
    %26 = vector.shape_cast %25 : vector<1x32x2xbf16> to vector<32x2xbf16>
    %cst_25 = arith.constant dense<0.000000e+00> : vector<32x1156xf32>
    %27 = tpu.matmul %26, %23, %cst_25 {dimension_numbers = #tpu.dot_dimension_numbers<[1], [0], [0], [1], [0, 0, 1, 1], [], []>} : vector<32x2xbf16>, vector<2x1156xbf16>, vector<32x1156xf32> -> vector<32x1156xf32>
    %28 = arith.addf %24, %27 : vector<32x1156xf32>
    %c0_26 = arith.constant 0 : index
    %c0_27 = arith.constant 0 : index
    %29 = vector.load %arg6[%c0_26, %c0_27] : memref<32x1156xf32, #tpu.memory_space<vmem>>, vector<32x1156xf32>
    tpu.vector_store %arg6[%c0_26, %c0_27], %28 {strides = array<i32>} : memref<32x1156xf32, #tpu.memory_space<vmem>>, vector<32x1156xf32>,
    %30 = vector.extract_strided_slice %15 {offsets = [0, 2], sizes = [2, 1156], strides = [1, 1]} : vector<2x1226xbf16> to vector<2x1156xbf16>
    %c0_28 = arith.constant 0 : index
    %c0_29 = arith.constant 0 : index
    %31 = vector.load %arg6[%c0_28, %c0_29] : memref<32x1156xf32, #tpu.memory_space<vmem>>, vector<32x1156xf32>
    %c2 = arith.constant 2 : index
    %c0_30 = arith.constant 0 : index
    %c0_31 = arith.constant 0 : index
    %32 = vector.load %arg3[%c2, %c0_30, %c0_31] : memref<9x32x2xbf16, #tpu.memory_space<vmem>>, vector<1x32x2xbf16>
    %33 = vector.shape_cast %32 : vector<1x32x2xbf16> to vector<32x2xbf16>
    %cst_32 = arith.constant dense<0.000000e+00> : vector<32x1156xf32>
    %34 = tpu.matmul %33, %30, %cst_32 {dimension_numbers = #tpu.dot_dimension_numbers<[1], [0], [0], [1], [0, 0, 1, 1], [], []>} : vector<32x2xbf16>, vector<2x1156xbf16>, vector<32x1156xf32> -> vector<32x1156xf32>
    %35 = arith.addf %31, %34 : vector<32x1156xf32>
    %c0_33 = arith.constant 0 : index
    %c0_34 = arith.constant 0 : index
    %36 = vector.load %arg6[%c0_33, %c0_34] : memref<32x1156xf32, #tpu.memory_space<vmem>>, vector<32x1156xf32>
    tpu.vector_store %arg6[%c0_33, %c0_34], %35 {strides = array<i32>} : memref<32x1156xf32, #tpu.memory_space<vmem>>, vector<32x1156xf32>,
    %37 = vector.extract_strided_slice %15 {offsets = [0, 34], sizes = [2, 1156], strides = [1, 1]} : vector<2x1226xbf16> to vector<2x1156xbf16>
    %c0_35 = arith.constant 0 : index
    %c0_36 = arith.constant 0 : index
    %38 = vector.load %arg6[%c0_35, %c0_36] : memref<32x1156xf32, #tpu.memory_space<vmem>>, vector<32x1156xf32>
    %c3 = arith.constant 3 : index
    %c0_37 = arith.constant 0 : index
    %c0_38 = arith.constant 0 : index
    %39 = vector.load %arg3[%c3, %c0_37, %c0_38] : memref<9x32x2xbf16, #tpu.memory_space<vmem>>, vector<1x32x2xbf16>
    %40 = vector.shape_cast %39 : vector<1x32x2xbf16> to vector<32x2xbf16>
    %cst_39 = arith.constant dense<0.000000e+00> : vector<32x1156xf32>
    %41 = tpu.matmul %40, %37, %cst_39 {dimension_numbers = #tpu.dot_dimension_numbers<[1], [0], [0], [1], [0, 0, 1, 1], [], []>} : vector<32x2xbf16>, vector<2x1156xbf16>, vector<32x1156xf32> -> vector<32x1156xf32>
    %42 = arith.addf %38, %41 : vector<32x1156xf32>
    %c0_40 = arith.constant 0 : index
    %c0_41 = arith.constant 0 : index
    %43 = vector.load %arg6[%c0_40, %c0_41] : memref<32x1156xf32, #tpu.memory_space<vmem>>, vector<32x1156xf32>
    tpu.vector_store %arg6[%c0_40, %c0_41], %42 {strides = array<i32>} : memref<32x1156xf32, #tpu.memory_space<vmem>>, vector<32x1156xf32>,
    %44 = vector.extract_strided_slice %15 {offsets = [0, 35], sizes = [2, 1156], strides = [1, 1]} : vector<2x1226xbf16> to vector<2x1156xbf16>
    %c0_42 = arith.constant 0 : index
    %c0_43 = arith.constant 0 : index
    %45 = vector.load %arg6[%c0_42, %c0_43] : memref<32x1156xf32, #tpu.memory_space<vmem>>, vector<32x1156xf32>
    %c4 = arith.constant 4 : index
    %c0_44 = arith.constant 0 : index
    %c0_45 = arith.constant 0 : index
    %46 = vector.load %arg3[%c4, %c0_44, %c0_45] : memref<9x32x2xbf16, #tpu.memory_space<vmem>>, vector<1x32x2xbf16>
    %47 = vector.shape_cast %46 : vector<1x32x2xbf16> to vector<32x2xbf16>
    %cst_46 = arith.constant dense<0.000000e+00> : vector<32x1156xf32>
    %48 = tpu.matmul %47, %44, %cst_46 {dimension_numbers = #tpu.dot_dimension_numbers<[1], [0], [0], [1], [0, 0, 1, 1], [], []>} : vector<32x2xbf16>, vector<2x1156xbf16>, vector<32x1156xf32> -> vector<32x1156xf32>
    %49 = arith.addf %45, %48 : vector<32x1156xf32>
    %c0_47 = arith.constant 0 : index
    %c0_48 = arith.constant 0 : index
    %50 = vector.load %arg6[%c0_47, %c0_48] : memref<32x1156xf32, #tpu.memory_space<vmem>>, vector<32x1156xf32>
    tpu.vector_store %arg6[%c0_47, %c0_48], %49 {strides = array<i32>} : memref<32x1156xf32, #tpu.memory_space<vmem>>, vector<32x1156xf32>,
    %51 = vector.extract_strided_slice %15 {offsets = [0, 36], sizes = [2, 1156], strides = [1, 1]} : vector<2x1226xbf16> to vector<2x1156xbf16>
    %c0_49 = arith.constant 0 : index
    %c0_50 = arith.constant 0 : index
    %52 = vector.load %arg6[%c0_49, %c0_50] : memref<32x1156xf32, #tpu.memory_space<vmem>>, vector<32x1156xf32>
    %c5 = arith.constant 5 : index
    %c0_51 = arith.constant 0 : index
    %c0_52 = arith.constant 0 : index
    %53 = vector.load %arg3[%c5, %c0_51, %c0_52] : memref<9x32x2xbf16, #tpu.memory_space<vmem>>, vector<1x32x2xbf16>
    %54 = vector.shape_cast %53 : vector<1x32x2xbf16> to vector<32x2xbf16>
    %cst_53 = arith.constant dense<0.000000e+00> : vector<32x1156xf32>
    %55 = tpu.matmul %54, %51, %cst_53 {dimension_numbers = #tpu.dot_dimension_numbers<[1], [0], [0], [1], [0, 0, 1, 1], [], []>} : vector<32x2xbf16>, vector<2x1156xbf16>, vector<32x1156xf32> -> vector<32x1156xf32>
    %56 = arith.addf %52, %55 : vector<32x1156xf32>
    %c0_54 = arith.constant 0 : index
    %c0_55 = arith.constant 0 : index
    %57 = vector.load %arg6[%c0_54, %c0_55] : memref<32x1156xf32, #tpu.memory_space<vmem>>, vector<32x1156xf32>
    tpu.vector_store %arg6[%c0_54, %c0_55], %56 {strides = array<i32>} : memref<32x1156xf32, #tpu.memory_space<vmem>>, vector<32x1156xf32>,
    %58 = vector.extract_strided_slice %15 {offsets = [0, 68], sizes = [2, 1156], strides = [1, 1]} : vector<2x1226xbf16> to vector<2x1156xbf16>
    %c0_56 = arith.constant 0 : index
    %c0_57 = arith.constant 0 : index
    %59 = vector.load %arg6[%c0_56, %c0_57] : memref<32x1156xf32, #tpu.memory_space<vmem>>, vector<32x1156xf32>
    %c6 = arith.constant 6 : index
    %c0_58 = arith.constant 0 : index
    %c0_59 = arith.constant 0 : index
    %60 = vector.load %arg3[%c6, %c0_58, %c0_59] : memref<9x32x2xbf16, #tpu.memory_space<vmem>>, vector<1x32x2xbf16>
    %61 = vector.shape_cast %60 : vector<1x32x2xbf16> to vector<32x2xbf16>
    %cst_60 = arith.constant dense<0.000000e+00> : vector<32x1156xf32>
    %62 = tpu.matmul %61, %58, %cst_60 {dimension_numbers = #tpu.dot_dimension_numbers<[1], [0], [0], [1], [0, 0, 1, 1], [], []>} : vector<32x2xbf16>, vector<2x1156xbf16>, vector<32x1156xf32> -> vector<32x1156xf32>
    %63 = arith.addf %59, %62 : vector<32x1156xf32>
    %c0_61 = arith.constant 0 : index
    %c0_62 = arith.constant 0 : index
    %64 = vector.load %arg6[%c0_61, %c0_62] : memref<32x1156xf32, #tpu.memory_space<vmem>>, vector<32x1156xf32>
    tpu.vector_store %arg6[%c0_61, %c0_62], %63 {strides = array<i32>} : memref<32x1156xf32, #tpu.memory_space<vmem>>, vector<32x1156xf32>,
    %65 = vector.extract_strided_slice %15 {offsets = [0, 69], sizes = [2, 1156], strides = [1, 1]} : vector<2x1226xbf16> to vector<2x1156xbf16>
    %c0_63 = arith.constant 0 : index
    %c0_64 = arith.constant 0 : index
    %66 = vector.load %arg6[%c0_63, %c0_64] : memref<32x1156xf32, #tpu.memory_space<vmem>>, vector<32x1156xf32>
    %c7 = arith.constant 7 : index
    %c0_65 = arith.constant 0 : index
    %c0_66 = arith.constant 0 : index
    %67 = vector.load %arg3[%c7, %c0_65, %c0_66] : memref<9x32x2xbf16, #tpu.memory_space<vmem>>, vector<1x32x2xbf16>
    %68 = vector.shape_cast %67 : vector<1x32x2xbf16> to vector<32x2xbf16>
    %cst_67 = arith.constant dense<0.000000e+00> : vector<32x1156xf32>
    %69 = tpu.matmul %68, %65, %cst_67 {dimension_numbers = #tpu.dot_dimension_numbers<[1], [0], [0], [1], [0, 0, 1, 1], [], []>} : vector<32x2xbf16>, vector<2x1156xbf16>, vector<32x1156xf32> -> vector<32x1156xf32>
    %70 = arith.addf %66, %69 : vector<32x1156xf32>
    %c0_68 = arith.constant 0 : index
    %c0_69 = arith.constant 0 : index
    %71 = vector.load %arg6[%c0_68, %c0_69] : memref<32x1156xf32, #tpu.memory_space<vmem>>, vector<32x1156xf32>
    tpu.vector_store %arg6[%c0_68, %c0_69], %70 {strides = array<i32>} : memref<32x1156xf32, #tpu.memory_space<vmem>>, vector<32x1156xf32>,
    %72 = vector.extract_strided_slice %15 {offsets = [0, 70], sizes = [2, 1156], strides = [1, 1]} : vector<2x1226xbf16> to vector<2x1156xbf16>
    %c0_70 = arith.constant 0 : index
    %c0_71 = arith.constant 0 : index
    %73 = vector.load %arg6[%c0_70, %c0_71] : memref<32x1156xf32, #tpu.memory_space<vmem>>, vector<32x1156xf32>
    %c8 = arith.constant 8 : index
    %c0_72 = arith.constant 0 : index
    %c0_73 = arith.constant 0 : index
    %74 = vector.load %arg3[%c8, %c0_72, %c0_73] : memref<9x32x2xbf16, #tpu.memory_space<vmem>>, vector<1x32x2xbf16>
    %75 = vector.shape_cast %74 : vector<1x32x2xbf16> to vector<32x2xbf16>
    %cst_74 = arith.constant dense<0.000000e+00> : vector<32x1156xf32>
    %76 = tpu.matmul %75, %72, %cst_74 {dimension_numbers = #tpu.dot_dimension_numbers<[1], [0], [0], [1], [0, 0, 1, 1], [], []>} : vector<32x2xbf16>, vector<2x1156xbf16>, vector<32x1156xf32> -> vector<32x1156xf32>
    %77 = arith.addf %73, %76 : vector<32x1156xf32>
    %c0_75 = arith.constant 0 : index
    %c0_76 = arith.constant 0 : index
    %78 = vector.load %arg6[%c0_75, %c0_76] : memref<32x1156xf32, #tpu.memory_space<vmem>>, vector<32x1156xf32>
    tpu.vector_store %arg6[%c0_75, %c0_76], %77 {strides = array<i32>} : memref<32x1156xf32, #tpu.memory_space<vmem>>, vector<32x1156xf32>,
    %c0_77 = arith.constant 0 : index
    %c0_78 = arith.constant 0 : index
    %79 = vector.load %arg6[%c0_77, %c0_78] : memref<32x1156xf32, #tpu.memory_space<vmem>>, vector<32x1156xf32>
    %cst_79 = arith.constant 5.000000e-01 : f32
    %80 = vector.broadcast %cst_79 : f32 to vector<32x1156xf32>
    %81 = arith.cmpf ogt, %79, %80 : vector<32x1156xf32>
    %82 = arith.extui %81 : vector<32x1156xi1> to vector<32x1156xi32>
    %83 = arith.sitofp %82 : vector<32x1156xi32> to vector<32x1156xf32>
    %c0_80 = arith.constant 0 : index
    %c0_81 = arith.constant 0 : index
    %84 = vector.load %arg7[%c0_80, %c0_81] : memref<32x1156xf32, #tpu.memory_space<vmem>>, vector<32x1156xf32>
    tpu.vector_store %arg7[%c0_80, %c0_81], %83 {strides = array<i32>} : memref<32x1156xf32, #tpu.memory_space<vmem>>, vector<32x1156xf32>,
    %85 = arith.truncf %83 : vector<32x1156xf32> to vector<32x1156xbf16>
    %c0_82 = arith.constant 0 : index
    %c0_83 = arith.constant 0 : index
    %c0_84 = arith.constant 0 : index
    %c0_85 = arith.constant 0 : index
    %86 = vector.load %arg5[%c0_82, %c0_83, %c0_84, %c0_85] : memref<1x1x32x1156xbf16, #tpu.memory_space<vmem>>, vector<1x1x32x1156xbf16>
    %87 = vector.shape_cast %86 : vector<1x1x32x1156xbf16> to vector<32x1156xbf16>
    %88 = vector.shape_cast %85 : vector<32x1156xbf16> to vector<1x1x32x1156xbf16>
    tpu.vector_store %arg5[%c0_82, %c0_83, %c0_84, %c0_85], %88 {strides = array<i32>} : memref<1x1x32x1156xbf16, #tpu.memory_space<vmem>>, vector<1x1x32x1156xbf16>,
    return
  }
  func.func @transform_0(%arg0: i32, %arg1: i32) -> (i32, i32, i32, i32) {
    %c0_i32 = arith.constant 0 : i32
    %c0_i32_0 = arith.constant 0 : i32
    %c0_i32_1 = arith.constant 0 : i32
    return %arg1, %arg0, %c0_i32, %c0_i32_0 : i32, i32, i32, i32
  }
  func.func @transform_1(%arg0: i32, %arg1: i32) -> (i32, i32, i32) {
    %c0_i32 = arith.constant 0 : i32
    %c0_i32_0 = arith.constant 0 : i32
    %c0_i32_1 = arith.constant 0 : i32
    %c0_i32_2 = arith.constant 0 : i32
    return %c0_i32, %c0_i32_0, %c0_i32_1 : i32, i32, i32
  }
  func.func @transform_2(%arg0: i32, %arg1: i32) -> (i32, i32) {
    %c0_i32 = arith.constant 0 : i32
    %c0_i32_0 = arith.constant 0 : i32
    %c0_i32_1 = arith.constant 0 : i32
    return %c0_i32, %c0_i32_0 : i32, i32
  }
  func.func @transform_3(%arg0: i32, %arg1: i32) -> (i32, i32, i32, i32) {
    %c0_i32 = arith.constant 0 : i32
    %c0_i32_0 = arith.constant 0 : i32
    %c0_i32_1 = arith.constant 0 : i32
    return %arg1, %arg0, %c0_i32, %c0_i32_0 : i32, i32, i32, i32
  }
}

module attributes {stable_mosaic.version = 11 : i64} {
  func.func @conv_lif_kernel(%arg0: i32, %arg1: i32, %arg2: memref<1x1x32x362xbf16, #tpu.memory_space<vmem>>, %arg3: memref<9x32x32xbf16, #tpu.memory_space<vmem>>, %arg4: memref<32x1xf32, #tpu.memory_space<vmem>>, %arg5: memref<1x1x32x324xbf16, #tpu.memory_space<vmem>>, %arg6: memref<32x324xf32, #tpu.memory_space<vmem>>, %arg7: memref<32x324xf32, #tpu.memory_space<vmem>>) attributes {dimension_semantics = [#tpu.dimension_semantics<parallel>, #tpu.dimension_semantics<arbitrary>], iteration_bounds = array<i64: 2, 4>, scalar_prefetch = 0 : i64, scratch_operands = 2 : i64, tpu.core_type = #tpu.core_type<tc>, window_params = [{transform_indices = @transform_0, window_bounds = array<i64: 1, 1, 32, 362>}, {pipeline_mode = #tpu.pipeline_mode<synchronous>, transform_indices = @transform_1, window_bounds = array<i64: 9, 32, 32>}, {pipeline_mode = #tpu.pipeline_mode<synchronous>, transform_indices = @transform_2, window_bounds = array<i64: 32, 1>}, {transform_indices = @transform_3, window_bounds = array<i64: 1, 1, 32, 324>}]} {
    %c0_i32 = arith.constant 0 : i32
    %0 = arith.cmpi eq, %arg1, %c0_i32 : i32
    %1 = arith.extui %0 : i1 to i32
    %c0_i32_0 = arith.constant 0 : i32
    %2 = arith.cmpi ne, %1, %c0_i32_0 : i32
    scf.if %2 {
      %cst_86 = arith.constant 0.000000e+00 : f32
      %89 = vector.broadcast %cst_86 : f32 to vector<32x324xf32>
      %c0_87 = arith.constant 0 : index
      %c0_88 = arith.constant 0 : index
      %90 = vector.load %arg6[%c0_87, %c0_88] : memref<32x324xf32, #tpu.memory_space<vmem>>, vector<32x324xf32>
      tpu.vector_store %arg6[%c0_87, %c0_88], %89 {strides = array<i32>} : memref<32x324xf32, #tpu.memory_space<vmem>>, vector<32x324xf32>,
      %cst_89 = arith.constant 0.000000e+00 : f32
      %91 = vector.broadcast %cst_89 : f32 to vector<32x324xf32>
      %c0_90 = arith.constant 0 : index
      %c0_91 = arith.constant 0 : index
      %92 = vector.load %arg7[%c0_90, %c0_91] : memref<32x324xf32, #tpu.memory_space<vmem>>, vector<32x324xf32>
      tpu.vector_store %arg7[%c0_90, %c0_91], %91 {strides = array<i32>} : memref<32x324xf32, #tpu.memory_space<vmem>>, vector<32x324xf32>,
    } else {
    }
    %c0 = arith.constant 0 : index
    %c0_1 = arith.constant 0 : index
    %3 = vector.load %arg6[%c0, %c0_1] : memref<32x324xf32, #tpu.memory_space<vmem>>, vector<32x324xf32>
    %cst = arith.constant 2.000000e-01 : f32
    %4 = vector.broadcast %cst : f32 to vector<32x324xf32>
    %5 = arith.mulf %3, %4 : vector<32x324xf32>
    %c0_2 = arith.constant 0 : index
    %c0_3 = arith.constant 0 : index
    %6 = vector.load %arg7[%c0_2, %c0_3] : memref<32x324xf32, #tpu.memory_space<vmem>>, vector<32x324xf32>
    %cst_4 = arith.constant 1.000000e+00 : f32
    %7 = vector.broadcast %cst_4 : f32 to vector<32x324xf32>
    %8 = arith.subf %7, %6 : vector<32x324xf32>
    %9 = arith.mulf %5, %8 : vector<32x324xf32>
    %c0_5 = arith.constant 0 : index
    %c0_6 = arith.constant 0 : index
    %10 = vector.load %arg4[%c0_5, %c0_6] : memref<32x1xf32, #tpu.memory_space<vmem>>, vector<32x1xf32>
    %11 = vector.broadcast %10 : vector<32x1xf32> to vector<32x324xf32>
    %12 = arith.addf %9, %11 : vector<32x324xf32>
    %c0_7 = arith.constant 0 : index
    %c0_8 = arith.constant 0 : index
    %13 = vector.load %arg6[%c0_7, %c0_8] : memref<32x324xf32, #tpu.memory_space<vmem>>, vector<32x324xf32>
    tpu.vector_store %arg6[%c0_7, %c0_8], %12 {strides = array<i32>} : memref<32x324xf32, #tpu.memory_space<vmem>>, vector<32x324xf32>,
    %c0_9 = arith.constant 0 : index
    %c0_10 = arith.constant 0 : index
    %c0_11 = arith.constant 0 : index
    %c0_12 = arith.constant 0 : index
    %14 = vector.load %arg2[%c0_9, %c0_10, %c0_11, %c0_12] : memref<1x1x32x362xbf16, #tpu.memory_space<vmem>>, vector<1x1x32x362xbf16>
    %15 = vector.shape_cast %14 : vector<1x1x32x362xbf16> to vector<32x362xbf16>
    %16 = vector.extract_strided_slice %15 {offsets = [0, 0], sizes = [32, 324], strides = [1, 1]} : vector<32x362xbf16> to vector<32x324xbf16>
    %c0_13 = arith.constant 0 : index
    %c0_14 = arith.constant 0 : index
    %17 = vector.load %arg6[%c0_13, %c0_14] : memref<32x324xf32, #tpu.memory_space<vmem>>, vector<32x324xf32>
    %c0_15 = arith.constant 0 : index
    %c0_16 = arith.constant 0 : index
    %c0_17 = arith.constant 0 : index
    %18 = vector.load %arg3[%c0_15, %c0_16, %c0_17] : memref<9x32x32xbf16, #tpu.memory_space<vmem>>, vector<1x32x32xbf16>
    %19 = vector.shape_cast %18 : vector<1x32x32xbf16> to vector<32x32xbf16>
    %cst_18 = arith.constant dense<0.000000e+00> : vector<32x324xf32>
    %20 = tpu.matmul %19, %16, %cst_18 {dimension_numbers = #tpu.dot_dimension_numbers<[1], [0], [0], [1], [0, 0, 1, 1], [], []>} : vector<32x32xbf16>, vector<32x324xbf16>, vector<32x324xf32> -> vector<32x324xf32>
    %21 = arith.addf %17, %20 : vector<32x324xf32>
    %c0_19 = arith.constant 0 : index
    %c0_20 = arith.constant 0 : index
    %22 = vector.load %arg6[%c0_19, %c0_20] : memref<32x324xf32, #tpu.memory_space<vmem>>, vector<32x324xf32>
    tpu.vector_store %arg6[%c0_19, %c0_20], %21 {strides = array<i32>} : memref<32x324xf32, #tpu.memory_space<vmem>>, vector<32x324xf32>,
    %23 = vector.extract_strided_slice %15 {offsets = [0, 1], sizes = [32, 324], strides = [1, 1]} : vector<32x362xbf16> to vector<32x324xbf16>
    %c0_21 = arith.constant 0 : index
    %c0_22 = arith.constant 0 : index
    %24 = vector.load %arg6[%c0_21, %c0_22] : memref<32x324xf32, #tpu.memory_space<vmem>>, vector<32x324xf32>
    %c1 = arith.constant 1 : index
    %c0_23 = arith.constant 0 : index
    %c0_24 = arith.constant 0 : index
    %25 = vector.load %arg3[%c1, %c0_23, %c0_24] : memref<9x32x32xbf16, #tpu.memory_space<vmem>>, vector<1x32x32xbf16>
    %26 = vector.shape_cast %25 : vector<1x32x32xbf16> to vector<32x32xbf16>
    %cst_25 = arith.constant dense<0.000000e+00> : vector<32x324xf32>
    %27 = tpu.matmul %26, %23, %cst_25 {dimension_numbers = #tpu.dot_dimension_numbers<[1], [0], [0], [1], [0, 0, 1, 1], [], []>} : vector<32x32xbf16>, vector<32x324xbf16>, vector<32x324xf32> -> vector<32x324xf32>
    %28 = arith.addf %24, %27 : vector<32x324xf32>
    %c0_26 = arith.constant 0 : index
    %c0_27 = arith.constant 0 : index
    %29 = vector.load %arg6[%c0_26, %c0_27] : memref<32x324xf32, #tpu.memory_space<vmem>>, vector<32x324xf32>
    tpu.vector_store %arg6[%c0_26, %c0_27], %28 {strides = array<i32>} : memref<32x324xf32, #tpu.memory_space<vmem>>, vector<32x324xf32>,
    %30 = vector.extract_strided_slice %15 {offsets = [0, 2], sizes = [32, 324], strides = [1, 1]} : vector<32x362xbf16> to vector<32x324xbf16>
    %c0_28 = arith.constant 0 : index
    %c0_29 = arith.constant 0 : index
    %31 = vector.load %arg6[%c0_28, %c0_29] : memref<32x324xf32, #tpu.memory_space<vmem>>, vector<32x324xf32>
    %c2 = arith.constant 2 : index
    %c0_30 = arith.constant 0 : index
    %c0_31 = arith.constant 0 : index
    %32 = vector.load %arg3[%c2, %c0_30, %c0_31] : memref<9x32x32xbf16, #tpu.memory_space<vmem>>, vector<1x32x32xbf16>
    %33 = vector.shape_cast %32 : vector<1x32x32xbf16> to vector<32x32xbf16>
    %cst_32 = arith.constant dense<0.000000e+00> : vector<32x324xf32>
    %34 = tpu.matmul %33, %30, %cst_32 {dimension_numbers = #tpu.dot_dimension_numbers<[1], [0], [0], [1], [0, 0, 1, 1], [], []>} : vector<32x32xbf16>, vector<32x324xbf16>, vector<32x324xf32> -> vector<32x324xf32>
    %35 = arith.addf %31, %34 : vector<32x324xf32>
    %c0_33 = arith.constant 0 : index
    %c0_34 = arith.constant 0 : index
    %36 = vector.load %arg6[%c0_33, %c0_34] : memref<32x324xf32, #tpu.memory_space<vmem>>, vector<32x324xf32>
    tpu.vector_store %arg6[%c0_33, %c0_34], %35 {strides = array<i32>} : memref<32x324xf32, #tpu.memory_space<vmem>>, vector<32x324xf32>,
    %37 = vector.extract_strided_slice %15 {offsets = [0, 18], sizes = [32, 324], strides = [1, 1]} : vector<32x362xbf16> to vector<32x324xbf16>
    %c0_35 = arith.constant 0 : index
    %c0_36 = arith.constant 0 : index
    %38 = vector.load %arg6[%c0_35, %c0_36] : memref<32x324xf32, #tpu.memory_space<vmem>>, vector<32x324xf32>
    %c3 = arith.constant 3 : index
    %c0_37 = arith.constant 0 : index
    %c0_38 = arith.constant 0 : index
    %39 = vector.load %arg3[%c3, %c0_37, %c0_38] : memref<9x32x32xbf16, #tpu.memory_space<vmem>>, vector<1x32x32xbf16>
    %40 = vector.shape_cast %39 : vector<1x32x32xbf16> to vector<32x32xbf16>
    %cst_39 = arith.constant dense<0.000000e+00> : vector<32x324xf32>
    %41 = tpu.matmul %40, %37, %cst_39 {dimension_numbers = #tpu.dot_dimension_numbers<[1], [0], [0], [1], [0, 0, 1, 1], [], []>} : vector<32x32xbf16>, vector<32x324xbf16>, vector<32x324xf32> -> vector<32x324xf32>
    %42 = arith.addf %38, %41 : vector<32x324xf32>
    %c0_40 = arith.constant 0 : index
    %c0_41 = arith.constant 0 : index
    %43 = vector.load %arg6[%c0_40, %c0_41] : memref<32x324xf32, #tpu.memory_space<vmem>>, vector<32x324xf32>
    tpu.vector_store %arg6[%c0_40, %c0_41], %42 {strides = array<i32>} : memref<32x324xf32, #tpu.memory_space<vmem>>, vector<32x324xf32>,
    %44 = vector.extract_strided_slice %15 {offsets = [0, 19], sizes = [32, 324], strides = [1, 1]} : vector<32x362xbf16> to vector<32x324xbf16>
    %c0_42 = arith.constant 0 : index
    %c0_43 = arith.constant 0 : index
    %45 = vector.load %arg6[%c0_42, %c0_43] : memref<32x324xf32, #tpu.memory_space<vmem>>, vector<32x324xf32>
    %c4 = arith.constant 4 : index
    %c0_44 = arith.constant 0 : index
    %c0_45 = arith.constant 0 : index
    %46 = vector.load %arg3[%c4, %c0_44, %c0_45] : memref<9x32x32xbf16, #tpu.memory_space<vmem>>, vector<1x32x32xbf16>
    %47 = vector.shape_cast %46 : vector<1x32x32xbf16> to vector<32x32xbf16>
    %cst_46 = arith.constant dense<0.000000e+00> : vector<32x324xf32>
    %48 = tpu.matmul %47, %44, %cst_46 {dimension_numbers = #tpu.dot_dimension_numbers<[1], [0], [0], [1], [0, 0, 1, 1], [], []>} : vector<32x32xbf16>, vector<32x324xbf16>, vector<32x324xf32> -> vector<32x324xf32>
    %49 = arith.addf %45, %48 : vector<32x324xf32>
    %c0_47 = arith.constant 0 : index
    %c0_48 = arith.constant 0 : index
    %50 = vector.load %arg6[%c0_47, %c0_48] : memref<32x324xf32, #tpu.memory_space<vmem>>, vector<32x324xf32>
    tpu.vector_store %arg6[%c0_47, %c0_48], %49 {strides = array<i32>} : memref<32x324xf32, #tpu.memory_space<vmem>>, vector<32x324xf32>,
    %51 = vector.extract_strided_slice %15 {offsets = [0, 20], sizes = [32, 324], strides = [1, 1]} : vector<32x362xbf16> to vector<32x324xbf16>
    %c0_49 = arith.constant 0 : index
    %c0_50 = arith.constant 0 : index
    %52 = vector.load %arg6[%c0_49, %c0_50] : memref<32x324xf32, #tpu.memory_space<vmem>>, vector<32x324xf32>
    %c5 = arith.constant 5 : index
    %c0_51 = arith.constant 0 : index
    %c0_52 = arith.constant 0 : index
    %53 = vector.load %arg3[%c5, %c0_51, %c0_52] : memref<9x32x32xbf16, #tpu.memory_space<vmem>>, vector<1x32x32xbf16>
    %54 = vector.shape_cast %53 : vector<1x32x32xbf16> to vector<32x32xbf16>
    %cst_53 = arith.constant dense<0.000000e+00> : vector<32x324xf32>
    %55 = tpu.matmul %54, %51, %cst_53 {dimension_numbers = #tpu.dot_dimension_numbers<[1], [0], [0], [1], [0, 0, 1, 1], [], []>} : vector<32x32xbf16>, vector<32x324xbf16>, vector<32x324xf32> -> vector<32x324xf32>
    %56 = arith.addf %52, %55 : vector<32x324xf32>
    %c0_54 = arith.constant 0 : index
    %c0_55 = arith.constant 0 : index
    %57 = vector.load %arg6[%c0_54, %c0_55] : memref<32x324xf32, #tpu.memory_space<vmem>>, vector<32x324xf32>
    tpu.vector_store %arg6[%c0_54, %c0_55], %56 {strides = array<i32>} : memref<32x324xf32, #tpu.memory_space<vmem>>, vector<32x324xf32>,
    %58 = vector.extract_strided_slice %15 {offsets = [0, 36], sizes = [32, 324], strides = [1, 1]} : vector<32x362xbf16> to vector<32x324xbf16>
    %c0_56 = arith.constant 0 : index
    %c0_57 = arith.constant 0 : index
    %59 = vector.load %arg6[%c0_56, %c0_57] : memref<32x324xf32, #tpu.memory_space<vmem>>, vector<32x324xf32>
    %c6 = arith.constant 6 : index
    %c0_58 = arith.constant 0 : index
    %c0_59 = arith.constant 0 : index
    %60 = vector.load %arg3[%c6, %c0_58, %c0_59] : memref<9x32x32xbf16, #tpu.memory_space<vmem>>, vector<1x32x32xbf16>
    %61 = vector.shape_cast %60 : vector<1x32x32xbf16> to vector<32x32xbf16>
    %cst_60 = arith.constant dense<0.000000e+00> : vector<32x324xf32>
    %62 = tpu.matmul %61, %58, %cst_60 {dimension_numbers = #tpu.dot_dimension_numbers<[1], [0], [0], [1], [0, 0, 1, 1], [], []>} : vector<32x32xbf16>, vector<32x324xbf16>, vector<32x324xf32> -> vector<32x324xf32>
    %63 = arith.addf %59, %62 : vector<32x324xf32>
    %c0_61 = arith.constant 0 : index
    %c0_62 = arith.constant 0 : index
    %64 = vector.load %arg6[%c0_61, %c0_62] : memref<32x324xf32, #tpu.memory_space<vmem>>, vector<32x324xf32>
    tpu.vector_store %arg6[%c0_61, %c0_62], %63 {strides = array<i32>} : memref<32x324xf32, #tpu.memory_space<vmem>>, vector<32x324xf32>,
    %65 = vector.extract_strided_slice %15 {offsets = [0, 37], sizes = [32, 324], strides = [1, 1]} : vector<32x362xbf16> to vector<32x324xbf16>
    %c0_63 = arith.constant 0 : index
    %c0_64 = arith.constant 0 : index
    %66 = vector.load %arg6[%c0_63, %c0_64] : memref<32x324xf32, #tpu.memory_space<vmem>>, vector<32x324xf32>
    %c7 = arith.constant 7 : index
    %c0_65 = arith.constant 0 : index
    %c0_66 = arith.constant 0 : index
    %67 = vector.load %arg3[%c7, %c0_65, %c0_66] : memref<9x32x32xbf16, #tpu.memory_space<vmem>>, vector<1x32x32xbf16>
    %68 = vector.shape_cast %67 : vector<1x32x32xbf16> to vector<32x32xbf16>
    %cst_67 = arith.constant dense<0.000000e+00> : vector<32x324xf32>
    %69 = tpu.matmul %68, %65, %cst_67 {dimension_numbers = #tpu.dot_dimension_numbers<[1], [0], [0], [1], [0, 0, 1, 1], [], []>} : vector<32x32xbf16>, vector<32x324xbf16>, vector<32x324xf32> -> vector<32x324xf32>
    %70 = arith.addf %66, %69 : vector<32x324xf32>
    %c0_68 = arith.constant 0 : index
    %c0_69 = arith.constant 0 : index
    %71 = vector.load %arg6[%c0_68, %c0_69] : memref<32x324xf32, #tpu.memory_space<vmem>>, vector<32x324xf32>
    tpu.vector_store %arg6[%c0_68, %c0_69], %70 {strides = array<i32>} : memref<32x324xf32, #tpu.memory_space<vmem>>, vector<32x324xf32>,
    %72 = vector.extract_strided_slice %15 {offsets = [0, 38], sizes = [32, 324], strides = [1, 1]} : vector<32x362xbf16> to vector<32x324xbf16>
    %c0_70 = arith.constant 0 : index
    %c0_71 = arith.constant 0 : index
    %73 = vector.load %arg6[%c0_70, %c0_71] : memref<32x324xf32, #tpu.memory_space<vmem>>, vector<32x324xf32>
    %c8 = arith.constant 8 : index
    %c0_72 = arith.constant 0 : index
    %c0_73 = arith.constant 0 : index
    %74 = vector.load %arg3[%c8, %c0_72, %c0_73] : memref<9x32x32xbf16, #tpu.memory_space<vmem>>, vector<1x32x32xbf16>
    %75 = vector.shape_cast %74 : vector<1x32x32xbf16> to vector<32x32xbf16>
    %cst_74 = arith.constant dense<0.000000e+00> : vector<32x324xf32>
    %76 = tpu.matmul %75, %72, %cst_74 {dimension_numbers = #tpu.dot_dimension_numbers<[1], [0], [0], [1], [0, 0, 1, 1], [], []>} : vector<32x32xbf16>, vector<32x324xbf16>, vector<32x324xf32> -> vector<32x324xf32>
    %77 = arith.addf %73, %76 : vector<32x324xf32>
    %c0_75 = arith.constant 0 : index
    %c0_76 = arith.constant 0 : index
    %78 = vector.load %arg6[%c0_75, %c0_76] : memref<32x324xf32, #tpu.memory_space<vmem>>, vector<32x324xf32>
    tpu.vector_store %arg6[%c0_75, %c0_76], %77 {strides = array<i32>} : memref<32x324xf32, #tpu.memory_space<vmem>>, vector<32x324xf32>,
    %c0_77 = arith.constant 0 : index
    %c0_78 = arith.constant 0 : index
    %79 = vector.load %arg6[%c0_77, %c0_78] : memref<32x324xf32, #tpu.memory_space<vmem>>, vector<32x324xf32>
    %cst_79 = arith.constant 5.000000e-01 : f32
    %80 = vector.broadcast %cst_79 : f32 to vector<32x324xf32>
    %81 = arith.cmpf ogt, %79, %80 : vector<32x324xf32>
    %82 = arith.extui %81 : vector<32x324xi1> to vector<32x324xi32>
    %83 = arith.sitofp %82 : vector<32x324xi32> to vector<32x324xf32>
    %c0_80 = arith.constant 0 : index
    %c0_81 = arith.constant 0 : index
    %84 = vector.load %arg7[%c0_80, %c0_81] : memref<32x324xf32, #tpu.memory_space<vmem>>, vector<32x324xf32>
    tpu.vector_store %arg7[%c0_80, %c0_81], %83 {strides = array<i32>} : memref<32x324xf32, #tpu.memory_space<vmem>>, vector<32x324xf32>,
    %85 = arith.truncf %83 : vector<32x324xf32> to vector<32x324xbf16>
    %c0_82 = arith.constant 0 : index
    %c0_83 = arith.constant 0 : index
    %c0_84 = arith.constant 0 : index
    %c0_85 = arith.constant 0 : index
    %86 = vector.load %arg5[%c0_82, %c0_83, %c0_84, %c0_85] : memref<1x1x32x324xbf16, #tpu.memory_space<vmem>>, vector<1x1x32x324xbf16>
    %87 = vector.shape_cast %86 : vector<1x1x32x324xbf16> to vector<32x324xbf16>
    %88 = vector.shape_cast %85 : vector<32x324xbf16> to vector<1x1x32x324xbf16>
    tpu.vector_store %arg5[%c0_82, %c0_83, %c0_84, %c0_85], %88 {strides = array<i32>} : memref<1x1x32x324xbf16, #tpu.memory_space<vmem>>, vector<1x1x32x324xbf16>,
    return
  }
  func.func @transform_0(%arg0: i32, %arg1: i32) -> (i32, i32, i32, i32) {
    %c0_i32 = arith.constant 0 : i32
    %c0_i32_0 = arith.constant 0 : i32
    %c0_i32_1 = arith.constant 0 : i32
    return %arg1, %arg0, %c0_i32, %c0_i32_0 : i32, i32, i32, i32
  }
  func.func @transform_1(%arg0: i32, %arg1: i32) -> (i32, i32, i32) {
    %c0_i32 = arith.constant 0 : i32
    %c0_i32_0 = arith.constant 0 : i32
    %c0_i32_1 = arith.constant 0 : i32
    %c0_i32_2 = arith.constant 0 : i32
    return %c0_i32, %c0_i32_0, %c0_i32_1 : i32, i32, i32
  }
  func.func @transform_2(%arg0: i32, %arg1: i32) -> (i32, i32) {
    %c0_i32 = arith.constant 0 : i32
    %c0_i32_0 = arith.constant 0 : i32
    %c0_i32_1 = arith.constant 0 : i32
    return %c0_i32, %c0_i32_0 : i32, i32
  }
  func.func @transform_3(%arg0: i32, %arg1: i32) -> (i32, i32, i32, i32) {
    %c0_i32 = arith.constant 0 : i32
    %c0_i32_0 = arith.constant 0 : i32
    %c0_i32_1 = arith.constant 0 : i32
    return %arg1, %arg0, %c0_i32, %c0_i32_0 : i32, i32, i32, i32
  }
}

module attributes {stable_mosaic.version = 11 : i64} {
  func.func @conv_lif_kernel(%arg0: i32, %arg1: i32, %arg2: memref<1x1x32x122xbf16, #tpu.memory_space<vmem>>, %arg3: memref<9x32x32xbf16, #tpu.memory_space<vmem>>, %arg4: memref<32x1xf32, #tpu.memory_space<vmem>>, %arg5: memref<1x1x32x100xbf16, #tpu.memory_space<vmem>>, %arg6: memref<32x100xf32, #tpu.memory_space<vmem>>, %arg7: memref<32x100xf32, #tpu.memory_space<vmem>>) attributes {dimension_semantics = [#tpu.dimension_semantics<parallel>, #tpu.dimension_semantics<arbitrary>], iteration_bounds = array<i64: 2, 4>, scalar_prefetch = 0 : i64, scratch_operands = 2 : i64, tpu.core_type = #tpu.core_type<tc>, window_params = [{transform_indices = @transform_0, window_bounds = array<i64: 1, 1, 32, 122>}, {pipeline_mode = #tpu.pipeline_mode<synchronous>, transform_indices = @transform_1, window_bounds = array<i64: 9, 32, 32>}, {pipeline_mode = #tpu.pipeline_mode<synchronous>, transform_indices = @transform_2, window_bounds = array<i64: 32, 1>}, {transform_indices = @transform_3, window_bounds = array<i64: 1, 1, 32, 100>}]} {
    %c0_i32 = arith.constant 0 : i32
    %0 = arith.cmpi eq, %arg1, %c0_i32 : i32
    %1 = arith.extui %0 : i1 to i32
    %c0_i32_0 = arith.constant 0 : i32
    %2 = arith.cmpi ne, %1, %c0_i32_0 : i32
    scf.if %2 {
      %cst_86 = arith.constant 0.000000e+00 : f32
      %89 = vector.broadcast %cst_86 : f32 to vector<32x100xf32>
      %c0_87 = arith.constant 0 : index
      %c0_88 = arith.constant 0 : index
      %90 = vector.load %arg6[%c0_87, %c0_88] : memref<32x100xf32, #tpu.memory_space<vmem>>, vector<32x100xf32>
      tpu.vector_store %arg6[%c0_87, %c0_88], %89 {strides = array<i32>} : memref<32x100xf32, #tpu.memory_space<vmem>>, vector<32x100xf32>,
      %cst_89 = arith.constant 0.000000e+00 : f32
      %91 = vector.broadcast %cst_89 : f32 to vector<32x100xf32>
      %c0_90 = arith.constant 0 : index
      %c0_91 = arith.constant 0 : index
      %92 = vector.load %arg7[%c0_90, %c0_91] : memref<32x100xf32, #tpu.memory_space<vmem>>, vector<32x100xf32>
      tpu.vector_store %arg7[%c0_90, %c0_91], %91 {strides = array<i32>} : memref<32x100xf32, #tpu.memory_space<vmem>>, vector<32x100xf32>,
    } else {
    }
    %c0 = arith.constant 0 : index
    %c0_1 = arith.constant 0 : index
    %3 = vector.load %arg6[%c0, %c0_1] : memref<32x100xf32, #tpu.memory_space<vmem>>, vector<32x100xf32>
    %cst = arith.constant 2.000000e-01 : f32
    %4 = vector.broadcast %cst : f32 to vector<32x100xf32>
    %5 = arith.mulf %3, %4 : vector<32x100xf32>
    %c0_2 = arith.constant 0 : index
    %c0_3 = arith.constant 0 : index
    %6 = vector.load %arg7[%c0_2, %c0_3] : memref<32x100xf32, #tpu.memory_space<vmem>>, vector<32x100xf32>
    %cst_4 = arith.constant 1.000000e+00 : f32
    %7 = vector.broadcast %cst_4 : f32 to vector<32x100xf32>
    %8 = arith.subf %7, %6 : vector<32x100xf32>
    %9 = arith.mulf %5, %8 : vector<32x100xf32>
    %c0_5 = arith.constant 0 : index
    %c0_6 = arith.constant 0 : index
    %10 = vector.load %arg4[%c0_5, %c0_6] : memref<32x1xf32, #tpu.memory_space<vmem>>, vector<32x1xf32>
    %11 = vector.broadcast %10 : vector<32x1xf32> to vector<32x100xf32>
    %12 = arith.addf %9, %11 : vector<32x100xf32>
    %c0_7 = arith.constant 0 : index
    %c0_8 = arith.constant 0 : index
    %13 = vector.load %arg6[%c0_7, %c0_8] : memref<32x100xf32, #tpu.memory_space<vmem>>, vector<32x100xf32>
    tpu.vector_store %arg6[%c0_7, %c0_8], %12 {strides = array<i32>} : memref<32x100xf32, #tpu.memory_space<vmem>>, vector<32x100xf32>,
    %c0_9 = arith.constant 0 : index
    %c0_10 = arith.constant 0 : index
    %c0_11 = arith.constant 0 : index
    %c0_12 = arith.constant 0 : index
    %14 = vector.load %arg2[%c0_9, %c0_10, %c0_11, %c0_12] : memref<1x1x32x122xbf16, #tpu.memory_space<vmem>>, vector<1x1x32x122xbf16>
    %15 = vector.shape_cast %14 : vector<1x1x32x122xbf16> to vector<32x122xbf16>
    %16 = vector.extract_strided_slice %15 {offsets = [0, 0], sizes = [32, 100], strides = [1, 1]} : vector<32x122xbf16> to vector<32x100xbf16>
    %c0_13 = arith.constant 0 : index
    %c0_14 = arith.constant 0 : index
    %17 = vector.load %arg6[%c0_13, %c0_14] : memref<32x100xf32, #tpu.memory_space<vmem>>, vector<32x100xf32>
    %c0_15 = arith.constant 0 : index
    %c0_16 = arith.constant 0 : index
    %c0_17 = arith.constant 0 : index
    %18 = vector.load %arg3[%c0_15, %c0_16, %c0_17] : memref<9x32x32xbf16, #tpu.memory_space<vmem>>, vector<1x32x32xbf16>
    %19 = vector.shape_cast %18 : vector<1x32x32xbf16> to vector<32x32xbf16>
    %cst_18 = arith.constant dense<0.000000e+00> : vector<32x100xf32>
    %20 = tpu.matmul %19, %16, %cst_18 {dimension_numbers = #tpu.dot_dimension_numbers<[1], [0], [0], [1], [0, 0, 1, 1], [], []>} : vector<32x32xbf16>, vector<32x100xbf16>, vector<32x100xf32> -> vector<32x100xf32>
    %21 = arith.addf %17, %20 : vector<32x100xf32>
    %c0_19 = arith.constant 0 : index
    %c0_20 = arith.constant 0 : index
    %22 = vector.load %arg6[%c0_19, %c0_20] : memref<32x100xf32, #tpu.memory_space<vmem>>, vector<32x100xf32>
    tpu.vector_store %arg6[%c0_19, %c0_20], %21 {strides = array<i32>} : memref<32x100xf32, #tpu.memory_space<vmem>>, vector<32x100xf32>,
    %23 = vector.extract_strided_slice %15 {offsets = [0, 1], sizes = [32, 100], strides = [1, 1]} : vector<32x122xbf16> to vector<32x100xbf16>
    %c0_21 = arith.constant 0 : index
    %c0_22 = arith.constant 0 : index
    %24 = vector.load %arg6[%c0_21, %c0_22] : memref<32x100xf32, #tpu.memory_space<vmem>>, vector<32x100xf32>
    %c1 = arith.constant 1 : index
    %c0_23 = arith.constant 0 : index
    %c0_24 = arith.constant 0 : index
    %25 = vector.load %arg3[%c1, %c0_23, %c0_24] : memref<9x32x32xbf16, #tpu.memory_space<vmem>>, vector<1x32x32xbf16>
    %26 = vector.shape_cast %25 : vector<1x32x32xbf16> to vector<32x32xbf16>
    %cst_25 = arith.constant dense<0.000000e+00> : vector<32x100xf32>
    %27 = tpu.matmul %26, %23, %cst_25 {dimension_numbers = #tpu.dot_dimension_numbers<[1], [0], [0], [1], [0, 0, 1, 1], [], []>} : vector<32x32xbf16>, vector<32x100xbf16>, vector<32x100xf32> -> vector<32x100xf32>
    %28 = arith.addf %24, %27 : vector<32x100xf32>
    %c0_26 = arith.constant 0 : index
    %c0_27 = arith.constant 0 : index
    %29 = vector.load %arg6[%c0_26, %c0_27] : memref<32x100xf32, #tpu.memory_space<vmem>>, vector<32x100xf32>
    tpu.vector_store %arg6[%c0_26, %c0_27], %28 {strides = array<i32>} : memref<32x100xf32, #tpu.memory_space<vmem>>, vector<32x100xf32>,
    %30 = vector.extract_strided_slice %15 {offsets = [0, 2], sizes = [32, 100], strides = [1, 1]} : vector<32x122xbf16> to vector<32x100xbf16>
    %c0_28 = arith.constant 0 : index
    %c0_29 = arith.constant 0 : index
    %31 = vector.load %arg6[%c0_28, %c0_29] : memref<32x100xf32, #tpu.memory_space<vmem>>, vector<32x100xf32>
    %c2 = arith.constant 2 : index
    %c0_30 = arith.constant 0 : index
    %c0_31 = arith.constant 0 : index
    %32 = vector.load %arg3[%c2, %c0_30, %c0_31] : memref<9x32x32xbf16, #tpu.memory_space<vmem>>, vector<1x32x32xbf16>
    %33 = vector.shape_cast %32 : vector<1x32x32xbf16> to vector<32x32xbf16>
    %cst_32 = arith.constant dense<0.000000e+00> : vector<32x100xf32>
    %34 = tpu.matmul %33, %30, %cst_32 {dimension_numbers = #tpu.dot_dimension_numbers<[1], [0], [0], [1], [0, 0, 1, 1], [], []>} : vector<32x32xbf16>, vector<32x100xbf16>, vector<32x100xf32> -> vector<32x100xf32>
    %35 = arith.addf %31, %34 : vector<32x100xf32>
    %c0_33 = arith.constant 0 : index
    %c0_34 = arith.constant 0 : index
    %36 = vector.load %arg6[%c0_33, %c0_34] : memref<32x100xf32, #tpu.memory_space<vmem>>, vector<32x100xf32>
    tpu.vector_store %arg6[%c0_33, %c0_34], %35 {strides = array<i32>} : memref<32x100xf32, #tpu.memory_space<vmem>>, vector<32x100xf32>,
    %37 = vector.extract_strided_slice %15 {offsets = [0, 10], sizes = [32, 100], strides = [1, 1]} : vector<32x122xbf16> to vector<32x100xbf16>
    %c0_35 = arith.constant 0 : index
    %c0_36 = arith.constant 0 : index
    %38 = vector.load %arg6[%c0_35, %c0_36] : memref<32x100xf32, #tpu.memory_space<vmem>>, vector<32x100xf32>
    %c3 = arith.constant 3 : index
    %c0_37 = arith.constant 0 : index
    %c0_38 = arith.constant 0 : index
    %39 = vector.load %arg3[%c3, %c0_37, %c0_38] : memref<9x32x32xbf16, #tpu.memory_space<vmem>>, vector<1x32x32xbf16>
    %40 = vector.shape_cast %39 : vector<1x32x32xbf16> to vector<32x32xbf16>
    %cst_39 = arith.constant dense<0.000000e+00> : vector<32x100xf32>
    %41 = tpu.matmul %40, %37, %cst_39 {dimension_numbers = #tpu.dot_dimension_numbers<[1], [0], [0], [1], [0, 0, 1, 1], [], []>} : vector<32x32xbf16>, vector<32x100xbf16>, vector<32x100xf32> -> vector<32x100xf32>
    %42 = arith.addf %38, %41 : vector<32x100xf32>
    %c0_40 = arith.constant 0 : index
    %c0_41 = arith.constant 0 : index
    %43 = vector.load %arg6[%c0_40, %c0_41] : memref<32x100xf32, #tpu.memory_space<vmem>>, vector<32x100xf32>
    tpu.vector_store %arg6[%c0_40, %c0_41], %42 {strides = array<i32>} : memref<32x100xf32, #tpu.memory_space<vmem>>, vector<32x100xf32>,
    %44 = vector.extract_strided_slice %15 {offsets = [0, 11], sizes = [32, 100], strides = [1, 1]} : vector<32x122xbf16> to vector<32x100xbf16>
    %c0_42 = arith.constant 0 : index
    %c0_43 = arith.constant 0 : index
    %45 = vector.load %arg6[%c0_42, %c0_43] : memref<32x100xf32, #tpu.memory_space<vmem>>, vector<32x100xf32>
    %c4 = arith.constant 4 : index
    %c0_44 = arith.constant 0 : index
    %c0_45 = arith.constant 0 : index
    %46 = vector.load %arg3[%c4, %c0_44, %c0_45] : memref<9x32x32xbf16, #tpu.memory_space<vmem>>, vector<1x32x32xbf16>
    %47 = vector.shape_cast %46 : vector<1x32x32xbf16> to vector<32x32xbf16>
    %cst_46 = arith.constant dense<0.000000e+00> : vector<32x100xf32>
    %48 = tpu.matmul %47, %44, %cst_46 {dimension_numbers = #tpu.dot_dimension_numbers<[1], [0], [0], [1], [0, 0, 1, 1], [], []>} : vector<32x32xbf16>, vector<32x100xbf16>, vector<32x100xf32> -> vector<32x100xf32>
    %49 = arith.addf %45, %48 : vector<32x100xf32>
    %c0_47 = arith.constant 0 : index
    %c0_48 = arith.constant 0 : index
    %50 = vector.load %arg6[%c0_47, %c0_48] : memref<32x100xf32, #tpu.memory_space<vmem>>, vector<32x100xf32>
    tpu.vector_store %arg6[%c0_47, %c0_48], %49 {strides = array<i32>} : memref<32x100xf32, #tpu.memory_space<vmem>>, vector<32x100xf32>,
    %51 = vector.extract_strided_slice %15 {offsets = [0, 12], sizes = [32, 100], strides = [1, 1]} : vector<32x122xbf16> to vector<32x100xbf16>
    %c0_49 = arith.constant 0 : index
    %c0_50 = arith.constant 0 : index
    %52 = vector.load %arg6[%c0_49, %c0_50] : memref<32x100xf32, #tpu.memory_space<vmem>>, vector<32x100xf32>
    %c5 = arith.constant 5 : index
    %c0_51 = arith.constant 0 : index
    %c0_52 = arith.constant 0 : index
    %53 = vector.load %arg3[%c5, %c0_51, %c0_52] : memref<9x32x32xbf16, #tpu.memory_space<vmem>>, vector<1x32x32xbf16>
    %54 = vector.shape_cast %53 : vector<1x32x32xbf16> to vector<32x32xbf16>
    %cst_53 = arith.constant dense<0.000000e+00> : vector<32x100xf32>
    %55 = tpu.matmul %54, %51, %cst_53 {dimension_numbers = #tpu.dot_dimension_numbers<[1], [0], [0], [1], [0, 0, 1, 1], [], []>} : vector<32x32xbf16>, vector<32x100xbf16>, vector<32x100xf32> -> vector<32x100xf32>
    %56 = arith.addf %52, %55 : vector<32x100xf32>
    %c0_54 = arith.constant 0 : index
    %c0_55 = arith.constant 0 : index
    %57 = vector.load %arg6[%c0_54, %c0_55] : memref<32x100xf32, #tpu.memory_space<vmem>>, vector<32x100xf32>
    tpu.vector_store %arg6[%c0_54, %c0_55], %56 {strides = array<i32>} : memref<32x100xf32, #tpu.memory_space<vmem>>, vector<32x100xf32>,
    %58 = vector.extract_strided_slice %15 {offsets = [0, 20], sizes = [32, 100], strides = [1, 1]} : vector<32x122xbf16> to vector<32x100xbf16>
    %c0_56 = arith.constant 0 : index
    %c0_57 = arith.constant 0 : index
    %59 = vector.load %arg6[%c0_56, %c0_57] : memref<32x100xf32, #tpu.memory_space<vmem>>, vector<32x100xf32>
    %c6 = arith.constant 6 : index
    %c0_58 = arith.constant 0 : index
    %c0_59 = arith.constant 0 : index
    %60 = vector.load %arg3[%c6, %c0_58, %c0_59] : memref<9x32x32xbf16, #tpu.memory_space<vmem>>, vector<1x32x32xbf16>
    %61 = vector.shape_cast %60 : vector<1x32x32xbf16> to vector<32x32xbf16>
    %cst_60 = arith.constant dense<0.000000e+00> : vector<32x100xf32>
    %62 = tpu.matmul %61, %58, %cst_60 {dimension_numbers = #tpu.dot_dimension_numbers<[1], [0], [0], [1], [0, 0, 1, 1], [], []>} : vector<32x32xbf16>, vector<32x100xbf16>, vector<32x100xf32> -> vector<32x100xf32>
    %63 = arith.addf %59, %62 : vector<32x100xf32>
    %c0_61 = arith.constant 0 : index
    %c0_62 = arith.constant 0 : index
    %64 = vector.load %arg6[%c0_61, %c0_62] : memref<32x100xf32, #tpu.memory_space<vmem>>, vector<32x100xf32>
    tpu.vector_store %arg6[%c0_61, %c0_62], %63 {strides = array<i32>} : memref<32x100xf32, #tpu.memory_space<vmem>>, vector<32x100xf32>,
    %65 = vector.extract_strided_slice %15 {offsets = [0, 21], sizes = [32, 100], strides = [1, 1]} : vector<32x122xbf16> to vector<32x100xbf16>
    %c0_63 = arith.constant 0 : index
    %c0_64 = arith.constant 0 : index
    %66 = vector.load %arg6[%c0_63, %c0_64] : memref<32x100xf32, #tpu.memory_space<vmem>>, vector<32x100xf32>
    %c7 = arith.constant 7 : index
    %c0_65 = arith.constant 0 : index
    %c0_66 = arith.constant 0 : index
    %67 = vector.load %arg3[%c7, %c0_65, %c0_66] : memref<9x32x32xbf16, #tpu.memory_space<vmem>>, vector<1x32x32xbf16>
    %68 = vector.shape_cast %67 : vector<1x32x32xbf16> to vector<32x32xbf16>
    %cst_67 = arith.constant dense<0.000000e+00> : vector<32x100xf32>
    %69 = tpu.matmul %68, %65, %cst_67 {dimension_numbers = #tpu.dot_dimension_numbers<[1], [0], [0], [1], [0, 0, 1, 1], [], []>} : vector<32x32xbf16>, vector<32x100xbf16>, vector<32x100xf32> -> vector<32x100xf32>
    %70 = arith.addf %66, %69 : vector<32x100xf32>
    %c0_68 = arith.constant 0 : index
    %c0_69 = arith.constant 0 : index
    %71 = vector.load %arg6[%c0_68, %c0_69] : memref<32x100xf32, #tpu.memory_space<vmem>>, vector<32x100xf32>
    tpu.vector_store %arg6[%c0_68, %c0_69], %70 {strides = array<i32>} : memref<32x100xf32, #tpu.memory_space<vmem>>, vector<32x100xf32>,
    %72 = vector.extract_strided_slice %15 {offsets = [0, 22], sizes = [32, 100], strides = [1, 1]} : vector<32x122xbf16> to vector<32x100xbf16>
    %c0_70 = arith.constant 0 : index
    %c0_71 = arith.constant 0 : index
    %73 = vector.load %arg6[%c0_70, %c0_71] : memref<32x100xf32, #tpu.memory_space<vmem>>, vector<32x100xf32>
    %c8 = arith.constant 8 : index
    %c0_72 = arith.constant 0 : index
    %c0_73 = arith.constant 0 : index
    %74 = vector.load %arg3[%c8, %c0_72, %c0_73] : memref<9x32x32xbf16, #tpu.memory_space<vmem>>, vector<1x32x32xbf16>
    %75 = vector.shape_cast %74 : vector<1x32x32xbf16> to vector<32x32xbf16>
    %cst_74 = arith.constant dense<0.000000e+00> : vector<32x100xf32>
    %76 = tpu.matmul %75, %72, %cst_74 {dimension_numbers = #tpu.dot_dimension_numbers<[1], [0], [0], [1], [0, 0, 1, 1], [], []>} : vector<32x32xbf16>, vector<32x100xbf16>, vector<32x100xf32> -> vector<32x100xf32>
    %77 = arith.addf %73, %76 : vector<32x100xf32>
    %c0_75 = arith.constant 0 : index
    %c0_76 = arith.constant 0 : index
    %78 = vector.load %arg6[%c0_75, %c0_76] : memref<32x100xf32, #tpu.memory_space<vmem>>, vector<32x100xf32>
    tpu.vector_store %arg6[%c0_75, %c0_76], %77 {strides = array<i32>} : memref<32x100xf32, #tpu.memory_space<vmem>>, vector<32x100xf32>,
    %c0_77 = arith.constant 0 : index
    %c0_78 = arith.constant 0 : index
    %79 = vector.load %arg6[%c0_77, %c0_78] : memref<32x100xf32, #tpu.memory_space<vmem>>, vector<32x100xf32>
    %cst_79 = arith.constant 5.000000e-01 : f32
    %80 = vector.broadcast %cst_79 : f32 to vector<32x100xf32>
    %81 = arith.cmpf ogt, %79, %80 : vector<32x100xf32>
    %82 = arith.extui %81 : vector<32x100xi1> to vector<32x100xi32>
    %83 = arith.sitofp %82 : vector<32x100xi32> to vector<32x100xf32>
    %c0_80 = arith.constant 0 : index
    %c0_81 = arith.constant 0 : index
    %84 = vector.load %arg7[%c0_80, %c0_81] : memref<32x100xf32, #tpu.memory_space<vmem>>, vector<32x100xf32>
    tpu.vector_store %arg7[%c0_80, %c0_81], %83 {strides = array<i32>} : memref<32x100xf32, #tpu.memory_space<vmem>>, vector<32x100xf32>,
    %85 = arith.truncf %83 : vector<32x100xf32> to vector<32x100xbf16>
    %c0_82 = arith.constant 0 : index
    %c0_83 = arith.constant 0 : index
    %c0_84 = arith.constant 0 : index
    %c0_85 = arith.constant 0 : index
    %86 = vector.load %arg5[%c0_82, %c0_83, %c0_84, %c0_85] : memref<1x1x32x100xbf16, #tpu.memory_space<vmem>>, vector<1x1x32x100xbf16>
    %87 = vector.shape_cast %86 : vector<1x1x32x100xbf16> to vector<32x100xbf16>
    %88 = vector.shape_cast %85 : vector<32x100xbf16> to vector<1x1x32x100xbf16>
    tpu.vector_store %arg5[%c0_82, %c0_83, %c0_84, %c0_85], %88 {strides = array<i32>} : memref<1x1x32x100xbf16, #tpu.memory_space<vmem>>, vector<1x1x32x100xbf16>,
    return
  }
  func.func @transform_0(%arg0: i32, %arg1: i32) -> (i32, i32, i32, i32) {
    %c0_i32 = arith.constant 0 : i32
    %c0_i32_0 = arith.constant 0 : i32
    %c0_i32_1 = arith.constant 0 : i32
    return %arg1, %arg0, %c0_i32, %c0_i32_0 : i32, i32, i32, i32
  }
  func.func @transform_1(%arg0: i32, %arg1: i32) -> (i32, i32, i32) {
    %c0_i32 = arith.constant 0 : i32
    %c0_i32_0 = arith.constant 0 : i32
    %c0_i32_1 = arith.constant 0 : i32
    %c0_i32_2 = arith.constant 0 : i32
    return %c0_i32, %c0_i32_0, %c0_i32_1 : i32, i32, i32
  }
  func.func @transform_2(%arg0: i32, %arg1: i32) -> (i32, i32) {
    %c0_i32 = arith.constant 0 : i32
    %c0_i32_0 = arith.constant 0 : i32
    %c0_i32_1 = arith.constant 0 : i32
    return %c0_i32, %c0_i32_0 : i32, i32
  }
  func.func @transform_3(%arg0: i32, %arg1: i32) -> (i32, i32, i32, i32) {
    %c0_i32 = arith.constant 0 : i32
    %c0_i32_0 = arith.constant 0 : i32
    %c0_i32_1 = arith.constant 0 : i32
    return %arg1, %arg0, %c0_i32, %c0_i32_0 : i32, i32, i32, i32
  }
}

module attributes {stable_mosaic.version = 11 : i64} {
  func.func @fc_lif_kernel(%arg0: i32, %arg1: memref<1x2x512xbf16, #tpu.memory_space<vmem>>, %arg2: memref<512x128xbf16, #tpu.memory_space<vmem>>, %arg3: memref<1x128xf32, #tpu.memory_space<vmem>>, %arg4: memref<128x10xbf16, #tpu.memory_space<vmem>>, %arg5: memref<1x10xf32, #tpu.memory_space<vmem>>, %arg6: memref<2x10xf32, #tpu.memory_space<vmem>>, %arg7: memref<2x128xf32, #tpu.memory_space<vmem>>, %arg8: memref<2x128xf32, #tpu.memory_space<vmem>>, %arg9: memref<2x10xf32, #tpu.memory_space<vmem>>, %arg10: memref<2x10xf32, #tpu.memory_space<vmem>>) attributes {dimension_semantics = [#tpu.dimension_semantics<arbitrary>], iteration_bounds = array<i64: 4>, scalar_prefetch = 0 : i64, scratch_operands = 4 : i64, tpu.core_type = #tpu.core_type<tc>, window_params = [{transform_indices = @transform_0, window_bounds = array<i64: 1, 2, 512>}, {pipeline_mode = #tpu.pipeline_mode<synchronous>, transform_indices = @transform_1, window_bounds = array<i64: 512, 128>}, {pipeline_mode = #tpu.pipeline_mode<synchronous>, transform_indices = @transform_2, window_bounds = array<i64: 1, 128>}, {pipeline_mode = #tpu.pipeline_mode<synchronous>, transform_indices = @transform_3, window_bounds = array<i64: 128, 10>}, {pipeline_mode = #tpu.pipeline_mode<synchronous>, transform_indices = @transform_4, window_bounds = array<i64: 1, 10>}, {pipeline_mode = #tpu.pipeline_mode<synchronous>, transform_indices = @transform_5, window_bounds = array<i64: 2, 10>}]} {
    %c0_i32 = arith.constant 0 : i32
    %0 = arith.cmpi eq, %arg0, %c0_i32 : i32
    %1 = arith.extui %0 : i1 to i32
    %c0_i32_0 = arith.constant 0 : i32
    %2 = arith.cmpi ne, %1, %c0_i32_0 : i32
    scf.if %2 {
      %cst_39 = arith.constant 0.000000e+00 : f32
      %50 = vector.broadcast %cst_39 : f32 to vector<2x128xf32>
      %c0_40 = arith.constant 0 : index
      %c0_41 = arith.constant 0 : index
      %51 = vector.load %arg7[%c0_40, %c0_41] : memref<2x128xf32, #tpu.memory_space<vmem>>, vector<2x128xf32>
      tpu.vector_store %arg7[%c0_40, %c0_41], %50 {strides = array<i32>} : memref<2x128xf32, #tpu.memory_space<vmem>>, vector<2x128xf32>,
      %cst_42 = arith.constant 0.000000e+00 : f32
      %52 = vector.broadcast %cst_42 : f32 to vector<2x128xf32>
      %c0_43 = arith.constant 0 : index
      %c0_44 = arith.constant 0 : index
      %53 = vector.load %arg8[%c0_43, %c0_44] : memref<2x128xf32, #tpu.memory_space<vmem>>, vector<2x128xf32>
      tpu.vector_store %arg8[%c0_43, %c0_44], %52 {strides = array<i32>} : memref<2x128xf32, #tpu.memory_space<vmem>>, vector<2x128xf32>,
      %cst_45 = arith.constant 0.000000e+00 : f32
      %54 = vector.broadcast %cst_45 : f32 to vector<2x10xf32>
      %c0_46 = arith.constant 0 : index
      %c0_47 = arith.constant 0 : index
      %55 = vector.load %arg9[%c0_46, %c0_47] : memref<2x10xf32, #tpu.memory_space<vmem>>, vector<2x10xf32>
      tpu.vector_store %arg9[%c0_46, %c0_47], %54 {strides = array<i32>} : memref<2x10xf32, #tpu.memory_space<vmem>>, vector<2x10xf32>,
      %cst_48 = arith.constant 0.000000e+00 : f32
      %56 = vector.broadcast %cst_48 : f32 to vector<2x10xf32>
      %c0_49 = arith.constant 0 : index
      %c0_50 = arith.constant 0 : index
      %57 = vector.load %arg10[%c0_49, %c0_50] : memref<2x10xf32, #tpu.memory_space<vmem>>, vector<2x10xf32>
      tpu.vector_store %arg10[%c0_49, %c0_50], %56 {strides = array<i32>} : memref<2x10xf32, #tpu.memory_space<vmem>>, vector<2x10xf32>,
      %cst_51 = arith.constant 0.000000e+00 : f32
      %58 = vector.broadcast %cst_51 : f32 to vector<2x10xf32>
      %c0_52 = arith.constant 0 : index
      %c0_53 = arith.constant 0 : index
      %59 = vector.load %arg6[%c0_52, %c0_53] : memref<2x10xf32, #tpu.memory_space<vmem>>, vector<2x10xf32>
      tpu.vector_store %arg6[%c0_52, %c0_53], %58 {strides = array<i32>} : memref<2x10xf32, #tpu.memory_space<vmem>>, vector<2x10xf32>,
    } else {
    }
    %c0 = arith.constant 0 : index
    %c0_1 = arith.constant 0 : index
    %c0_2 = arith.constant 0 : index
    %3 = vector.load %arg1[%c0, %c0_1, %c0_2] : memref<1x2x512xbf16, #tpu.memory_space<vmem>>, vector<1x2x512xbf16>
    %4 = vector.shape_cast %3 : vector<1x2x512xbf16> to vector<2x512xbf16>
    %c0_3 = arith.constant 0 : index
    %c0_4 = arith.constant 0 : index
    %5 = vector.load %arg2[%c0_3, %c0_4] : memref<512x128xbf16, #tpu.memory_space<vmem>>, vector<512x128xbf16>
    %cst = arith.constant dense<0.000000e+00> : vector<2x128xf32>
    %6 = tpu.matmul %4, %5, %cst {dimension_numbers = #tpu.dot_dimension_numbers<[1], [0], [0], [1], [0, 0, 1, 1], [], []>} : vector<2x512xbf16>, vector<512x128xbf16>, vector<2x128xf32> -> vector<2x128xf32>
    %c0_5 = arith.constant 0 : index
    %c0_6 = arith.constant 0 : index
    %7 = vector.load %arg3[%c0_5, %c0_6] : memref<1x128xf32, #tpu.memory_space<vmem>>, vector<1x128xf32>
    %8 = vector.broadcast %7 : vector<1x128xf32> to vector<2x128xf32>
    %9 = arith.addf %6, %8 : vector<2x128xf32>
    %c0_7 = arith.constant 0 : index
    %c0_8 = arith.constant 0 : index
    %10 = vector.load %arg7[%c0_7, %c0_8] : memref<2x128xf32, #tpu.memory_space<vmem>>, vector<2x128xf32>
    %cst_9 = arith.constant 2.000000e-01 : f32
    %11 = vector.broadcast %cst_9 : f32 to vector<2x128xf32>
    %12 = arith.mulf %10, %11 : vector<2x128xf32>
    %c0_10 = arith.constant 0 : index
    %c0_11 = arith.constant 0 : index
    %13 = vector.load %arg8[%c0_10, %c0_11] : memref<2x128xf32, #tpu.memory_space<vmem>>, vector<2x128xf32>
    %cst_12 = arith.constant 1.000000e+00 : f32
    %14 = vector.broadcast %cst_12 : f32 to vector<2x128xf32>
    %15 = arith.subf %14, %13 : vector<2x128xf32>
    %16 = arith.mulf %12, %15 : vector<2x128xf32>
    %17 = arith.addf %16, %9 : vector<2x128xf32>
    %cst_13 = arith.constant 5.000000e-01 : f32
    %18 = vector.broadcast %cst_13 : f32 to vector<2x128xf32>
    %19 = arith.cmpf ogt, %17, %18 : vector<2x128xf32>
    %20 = arith.extui %19 : vector<2x128xi1> to vector<2x128xi32>
    %21 = arith.sitofp %20 : vector<2x128xi32> to vector<2x128xf32>
    %c0_14 = arith.constant 0 : index
    %c0_15 = arith.constant 0 : index
    %22 = vector.load %arg7[%c0_14, %c0_15] : memref<2x128xf32, #tpu.memory_space<vmem>>, vector<2x128xf32>
    tpu.vector_store %arg7[%c0_14, %c0_15], %17 {strides = array<i32>} : memref<2x128xf32, #tpu.memory_space<vmem>>, vector<2x128xf32>,
    %c0_16 = arith.constant 0 : index
    %c0_17 = arith.constant 0 : index
    %23 = vector.load %arg8[%c0_16, %c0_17] : memref<2x128xf32, #tpu.memory_space<vmem>>, vector<2x128xf32>
    tpu.vector_store %arg8[%c0_16, %c0_17], %21 {strides = array<i32>} : memref<2x128xf32, #tpu.memory_space<vmem>>, vector<2x128xf32>,
    %24 = arith.truncf %21 : vector<2x128xf32> to vector<2x128xbf16>
    %c0_18 = arith.constant 0 : index
    %c0_19 = arith.constant 0 : index
    %25 = vector.load %arg4[%c0_18, %c0_19] : memref<128x10xbf16, #tpu.memory_space<vmem>>, vector<128x10xbf16>
    %cst_20 = arith.constant dense<0.000000e+00> : vector<2x10xf32>
    %26 = tpu.matmul %24, %25, %cst_20 {dimension_numbers = #tpu.dot_dimension_numbers<[1], [0], [0], [1], [0, 0, 1, 1], [], []>} : vector<2x128xbf16>, vector<128x10xbf16>, vector<2x10xf32> -> vector<2x10xf32>
    %c0_21 = arith.constant 0 : index
    %c0_22 = arith.constant 0 : index
    %27 = vector.load %arg5[%c0_21, %c0_22] : memref<1x10xf32, #tpu.memory_space<vmem>>, vector<1x10xf32>
    %28 = vector.broadcast %27 : vector<1x10xf32> to vector<2x10xf32>
    %29 = arith.addf %26, %28 : vector<2x10xf32>
    %c0_23 = arith.constant 0 : index
    %c0_24 = arith.constant 0 : index
    %30 = vector.load %arg9[%c0_23, %c0_24] : memref<2x10xf32, #tpu.memory_space<vmem>>, vector<2x10xf32>
    %cst_25 = arith.constant 2.000000e-01 : f32
    %31 = vector.broadcast %cst_25 : f32 to vector<2x10xf32>
    %32 = arith.mulf %30, %31 : vector<2x10xf32>
    %c0_26 = arith.constant 0 : index
    %c0_27 = arith.constant 0 : index
    %33 = vector.load %arg10[%c0_26, %c0_27] : memref<2x10xf32, #tpu.memory_space<vmem>>, vector<2x10xf32>
    %cst_28 = arith.constant 1.000000e+00 : f32
    %34 = vector.broadcast %cst_28 : f32 to vector<2x10xf32>
    %35 = arith.subf %34, %33 : vector<2x10xf32>
    %36 = arith.mulf %32, %35 : vector<2x10xf32>
    %37 = arith.addf %36, %29 : vector<2x10xf32>
    %cst_29 = arith.constant 5.000000e-01 : f32
    %38 = vector.broadcast %cst_29 : f32 to vector<2x10xf32>
    %39 = arith.cmpf ogt, %37, %38 : vector<2x10xf32>
    %40 = arith.extui %39 : vector<2x10xi1> to vector<2x10xi32>
    %41 = arith.sitofp %40 : vector<2x10xi32> to vector<2x10xf32>
    %c0_30 = arith.constant 0 : index
    %c0_31 = arith.constant 0 : index
    %42 = vector.load %arg9[%c0_30, %c0_31] : memref<2x10xf32, #tpu.memory_space<vmem>>, vector<2x10xf32>
    tpu.vector_store %arg9[%c0_30, %c0_31], %37 {strides = array<i32>} : memref<2x10xf32, #tpu.memory_space<vmem>>, vector<2x10xf32>,
    %c0_32 = arith.constant 0 : index
    %c0_33 = arith.constant 0 : index
    %43 = vector.load %arg10[%c0_32, %c0_33] : memref<2x10xf32, #tpu.memory_space<vmem>>, vector<2x10xf32>
    tpu.vector_store %arg10[%c0_32, %c0_33], %41 {strides = array<i32>} : memref<2x10xf32, #tpu.memory_space<vmem>>, vector<2x10xf32>,
    %c0_34 = arith.constant 0 : index
    %c0_35 = arith.constant 0 : index
    %44 = vector.load %arg6[%c0_34, %c0_35] : memref<2x10xf32, #tpu.memory_space<vmem>>, vector<2x10xf32>
    %45 = arith.addf %44, %41 : vector<2x10xf32>
    %c0_36 = arith.constant 0 : index
    %c0_37 = arith.constant 0 : index
    %46 = vector.load %arg6[%c0_36, %c0_37] : memref<2x10xf32, #tpu.memory_space<vmem>>, vector<2x10xf32>
    tpu.vector_store %arg6[%c0_36, %c0_37], %45 {strides = array<i32>} : memref<2x10xf32, #tpu.memory_space<vmem>>, vector<2x10xf32>,
    %c3_i32 = arith.constant 3 : i32
    %47 = arith.cmpi eq, %arg0, %c3_i32 : i32
    %48 = arith.extui %47 : i1 to i32
    %c0_i32_38 = arith.constant 0 : i32
    %49 = arith.cmpi ne, %48, %c0_i32_38 : i32
    scf.if %49 {
      %c0_39 = arith.constant 0 : index
      %c0_40 = arith.constant 0 : index
      %50 = vector.load %arg6[%c0_39, %c0_40] : memref<2x10xf32, #tpu.memory_space<vmem>>, vector<2x10xf32>
      %cst_41 = arith.constant 4.000000e+00 : f32
      %51 = vector.broadcast %cst_41 : f32 to vector<2x10xf32>
      %52 = arith.divf %50, %51 : vector<2x10xf32>
      %c0_42 = arith.constant 0 : index
      %c0_43 = arith.constant 0 : index
      %53 = vector.load %arg6[%c0_42, %c0_43] : memref<2x10xf32, #tpu.memory_space<vmem>>, vector<2x10xf32>
      tpu.vector_store %arg6[%c0_42, %c0_43], %52 {strides = array<i32>} : memref<2x10xf32, #tpu.memory_space<vmem>>, vector<2x10xf32>,
    } else {
    }
    return
  }
  func.func @transform_0(%arg0: i32) -> (i32, i32, i32) {
    %c0_i32 = arith.constant 0 : i32
    %c0_i32_0 = arith.constant 0 : i32
    %c0_i32_1 = arith.constant 0 : i32
    return %arg0, %c0_i32, %c0_i32_0 : i32, i32, i32
  }
  func.func @transform_1(%arg0: i32) -> (i32, i32) {
    %c0_i32 = arith.constant 0 : i32
    %c0_i32_0 = arith.constant 0 : i32
    %c0_i32_1 = arith.constant 0 : i32
    return %c0_i32, %c0_i32_0 : i32, i32
  }
  func.func @transform_2(%arg0: i32) -> (i32, i32) {
    %c0_i32 = arith.constant 0 : i32
    %c0_i32_0 = arith.constant 0 : i32
    %c0_i32_1 = arith.constant 0 : i32
    return %c0_i32, %c0_i32_0 : i32, i32
  }
  func.func @transform_3(%arg0: i32) -> (i32, i32) {
    %c0_i32 = arith.constant 0 : i32
    %c0_i32_0 = arith.constant 0 : i32
    %c0_i32_1 = arith.constant 0 : i32
    return %c0_i32, %c0_i32_0 : i32, i32
  }
  func.func @transform_4(%arg0: i32) -> (i32, i32) {
    %c0_i32 = arith.constant 0 : i32
    %c0_i32_0 = arith.constant 0 : i32
    %c0_i32_1 = arith.constant 0 : i32
    return %c0_i32, %c0_i32_0 : i32, i32
  }
  func.func @transform_5(%arg0: i32) -> (i32, i32) {
    %c0_i32 = arith.constant 0 : i32
    %c0_i32_0 = arith.constant 0 : i32
    %c0_i32_1 = arith.constant 0 : i32
    return %c0_i32, %c0_i32_0 : i32, i32
  }
}

</mosaic_0001>

<llo_original>
// kernel: scnn_forward.4
$region0: #{scnn_forward.4}
  #allocation0 [shape = 'u32[]', space=smem, size = 0x4, offset = 0x4, fixed_abs, tag = 'smem constant byte address 0x4 - core index']
  #allocation1 [shape = 'u32[72,128]{1,0:T(1,128)}', space=vmem, size = 0x9000, scoped, tag = 'internal scratch']
  #allocation2 [shape = 'f32[32,1156]{1,0:T(8,128)}', space=vmem, size = 0x28000, scoped, tag = 'scratch operand']
  #allocation3 [shape = 'f32[32,1156]{1,0:T(8,128)}', space=vmem, size = 0x28000, scoped, tag = 'scratch operand']
  %s0 = inlined_call_operand.vmem [shape: bf16[4,2,2,1226], index: 0, kind: input, shape index: {}]
  %s1 = inlined_call_operand.vmem [shape: bf16[9,32,2], index: 1, kind: input, shape index: {}]
  %s2 = inlined_call_operand.vmem [shape: f32[32,1], index: 2, kind: input, shape index: {}]
  %s3 = inlined_call_operand.vmem [shape: bf16[4,2,32,1156], index: 3, kind: output, shape index: {}]
  %s4 = sld [smem:[#allocation0]]
  $region49: #{scnn_forward.4} parent=0
    _
  %s6 = ssub.s32 1, %s4
  %s7 = scalar_select 0, %s6, %s4
  loop: start=0, step=1, limit=10
  $region2: #{scnn_forward.4} parent=0 // loop_pre_header
    _
  $region3: #{scnn_forward.4} parent=0 // loop_header
    %s9 = sphi 0, %s13
    %p10 = scmp.ge.s32.totalorder %s9, 10
    %s16 = sphi 0, %s28
    %s17 = sphi 0, %s24
    %s18 = sphi 0, %s16
    %s19 = sphi 0, %s17
    %s20 = sphi 0, %s18
    %s21 = sphi 0, %s19
    %s33 = sphi 0, %s35
    %s36 = sphi 0, %s33
    %s37 = sphi 0, %s36
    %s53 = sphi 0, %s37
    %s57 = sphi 0, %s57
    %s59 = sphi 0, %s57
    %s60 = sphi 0, %s59
    %s74 = sphi 0, %s60
    %s78 = sphi 0, %s78
    %s80 = sphi 0, %s78
    %s81 = sphi 0, %s80
    %s95 = sphi 0, %s81
    %s103 = sphi 0, %s105
    %s106 = sphi 0, %s103
    %s107 = sphi 0, %s106
    %s123 = sphi 0, %s107
  $region4: #{scnn_forward.4} parent=0 // loop_header_branch
    %12 = sbr.rel (%p10) target = $region8
  $region5: #{scnn_forward.4} parent=0 // loop_body
    %s14 = ssub.s32 %s9, 1
    %s15 = ssub.s32 %s9, 2
    %s22 = sadd.s32 1, %s17
    %p23 = scmp.ge.s32.totalorder %s22, 4
    %s24 = scalar_select %p23, 0, %s22
    %s25 = sadd.s32 1, %s16
    %s26 = scalar_select %p23, %s25, %s16
    %p27 = scmp.ge.s32.totalorder %s26, 2
    %s28 = scalar_select %p27, 0, %s26
    %s29 = ssub.s32 %s17, %s24
    %s30 = ssub.s32 %s16, %s28
    %s31 = sor.u32 %s29, %s30
    %p32 = scmp.eq.s32.totalorder %s31, 0
    %s34 = sadd.s32 %s33, 1
    %s35 = scalar_select %p32, %s33, %s34
    %p38 = pneg %p32
    %p39 = scmp.eq.s32.totalorder %s9, 7
    %p40 = por %p38, %p39
    %p41 = scmp.ne.s32.totalorder %s33, %s36
    %p42 = scmp.eq.s32.totalorder %s9, 0
    %p43 = por %p41, %p42
    %p44 = scmp.ne.s32.totalorder %s33, %s36
    %p45 = scmp.eq.s32.totalorder %s14, 7
    %p46 = por %p44, %p45
    %p47 = scmp.ne.s32.totalorder %s36, %s37
    %p48 = scmp.eq.s32.totalorder %s14, 0
    %p49 = por %p47, %p48
    %p50 = scmp.ne.s32.totalorder %s36, %s37
    %p51 = scmp.eq.s32.totalorder %s15, 7
    %p52 = por %p50, %p51
    %p54 = scmp.ne.s32.totalorder %s37, %s53
    %p55 = scmp.eq.s32.totalorder %s15, 0
    %p56 = por %p54, %p55
    %s58 = sadd.s32 %s57, 1
    %p61 = scmp.eq.s32.totalorder %s9, 7
    %p62 = scmp.ne.s32.totalorder %s57, %s59
    %p63 = scmp.eq.s32.totalorder %s9, 0
    %p64 = por %p62, %p63
    %p65 = scmp.ne.s32.totalorder %s57, %s59
    %p66 = scmp.eq.s32.totalorder %s14, 7
    %p67 = por %p65, %p66
    %p68 = scmp.ne.s32.totalorder %s59, %s60
    %p69 = scmp.eq.s32.totalorder %s14, 0
    %p70 = por %p68, %p69
    %p71 = scmp.ne.s32.totalorder %s59, %s60
    %p72 = scmp.eq.s32.totalorder %s15, 7
    %p73 = por %p71, %p72
    %p75 = scmp.ne.s32.totalorder %s60, %s74
    %p76 = scmp.eq.s32.totalorder %s15, 0
    %p77 = por %p75, %p76
    %s79 = sadd.s32 %s78, 1
    %p82 = scmp.eq.s32.totalorder %s9, 7
    %p83 = scmp.ne.s32.totalorder %s78, %s80
    %p84 = scmp.eq.s32.totalorder %s9, 0
    %p85 = por %p83, %p84
    %p86 = scmp.ne.s32.totalorder %s78, %s80
    %p87 = scmp.eq.s32.totalorder %s14, 7
    %p88 = por %p86, %p87
    %p89 = scmp.ne.s32.totalorder %s80, %s81
    %p90 = scmp.eq.s32.totalorder %s14, 0
    %p91 = por %p89, %p90
    %p92 = scmp.ne.s32.totalorder %s80, %s81
    %p93 = scmp.eq.s32.totalorder %s15, 7
    %p94 = por %p92, %p93
    %p96 = scmp.ne.s32.totalorder %s81, %s95
    %p97 = scmp.eq.s32.totalorder %s15, 0
    %p98 = por %p96, %p97
    %s99 = ssub.s32 %s17, %s24
    %s100 = ssub.s32 %s16, %s28
    %s101 = sor.u32 %s99, %s100
    %p102 = scmp.eq.s32.totalorder %s101, 0
    %s104 = sadd.s32 %s103, 1
    %s105 = scalar_select %p102, %s103, %s104
    %p108 = pneg %p102
    %p109 = scmp.eq.s32.totalorder %s9, 7
    %p110 = por %p108, %p109
    %p111 = scmp.ne.s32.totalorder %s103, %s106
    %p112 = scmp.eq.s32.totalorder %s9, 0
    %p113 = por %p111, %p112
    %p114 = scmp.ne.s32.totalorder %s103, %s106
    %p115 = scmp.eq.s32.totalorder %s14, 7
    %p116 = por %p114, %p115
    %p117 = scmp.ne.s32.totalorder %s106, %s107
    %p118 = scmp.eq.s32.totalorder %s14, 0
    %p119 = por %p117, %p118
    %p120 = scmp.ne.s32.totalorder %s106, %s107
    %p121 = scmp.eq.s32.totalorder %s15, 7
    %p122 = por %p120, %p121
    %p124 = scmp.ne.s32.totalorder %s107, %s123
    %p125 = scmp.eq.s32.totalorder %s15, 0
    %p126 = por %p124, %p125
    %p127 = scmp.le.s32.totalorder 1, %s9
    %p128 = scmp.lt.s32.totalorder %s9, 9
    %p129 = pnand %p127, %p128
    %p130 = pneg %p129
    // Predicated region
    $region9: #{scnn_forward.4} parent=5 // pred_check
      _
    $region10: #{scnn_forward.4} parent=5 // pred_check_branch
      %132 = sbr.rel (%p129) target = $region12
    $region11: #{scnn_forward.4} parent=5 // pred_region
      %s133 = ssub.s32 %s9, 1
      // Predicated region
      $region13: #{scnn_forward.4} parent=11 // pred_check
        %p134 = pneg %p70
      $region14: #{scnn_forward.4} parent=11 // pred_check_branch
        %136 = sbr.rel (%p134) target = $region16
      $region15: #{scnn_forward.4} parent=11 // pred_region
        _
      $region16: #{scnn_forward.4} parent=11 // pred_fallthru
        _
      // Predicated region
      $region17: #{scnn_forward.4} parent=11 // pred_check
        %p137 = pneg %p91
      $region18: #{scnn_forward.4} parent=11 // pred_check_branch
        %139 = sbr.rel (%p137) target = $region20
      $region19: #{scnn_forward.4} parent=11 // pred_region
        _
      $region20: #{scnn_forward.4} parent=11 // pred_fallthru
        _
    $region12: #{scnn_forward.4} parent=5 // pred_fallthru
      _
    %p140 = scmp.lt.s32.totalorder %s9, 8
    // Predicated region
    $region21: #{scnn_forward.4} parent=5 // pred_check
      %p141 = pneg %p140
    $region22: #{scnn_forward.4} parent=5 // pred_check_branch
      %143 = sbr.rel (%p141) target = $region24
    $region23: #{scnn_forward.4} parent=5 // pred_region
      // Predicated region
      $region25: #{scnn_forward.4} parent=23 // pred_check
        %p144 = pneg %p43
      $region26: #{scnn_forward.4} parent=23 // pred_check_branch
        %146 = sbr.rel (%p144) target = $region28
      $region27: #{scnn_forward.4} parent=23 // pred_region
        %p147 = scmp.lt.s32.totalorder %s17, 3
        %s148 = scalar_select %p147, %s17, 3
        %p149 = scmp.lt.s32.totalorder %s16, 1
        %s150 = scalar_select %p149, %s16, 1
        %s151 = smul.addr %s150, 10
        %s152 = smul.addr %s148, 20
        %s153 = sadd.s32 %s151, %s152
        %s154 = scalar_lea.vmem %s0, %s153
      $region28: #{scnn_forward.4} parent=23 // pred_fallthru
        _
    $region24: #{scnn_forward.4} parent=5 // pred_fallthru
      _
    %p155 = scmp.le.s32.totalorder 1, %s9
    %p156 = scmp.lt.s32.totalorder %s9, 9
    %p157 = pnand %p155, %p156
    %p158 = pneg %p157
    // Predicated region
    $region29: #{scnn_forward.4} parent=5 // pred_check
      _
    $region30: #{scnn_forward.4} parent=5 // pred_check_branch
      %160 = sbr.rel (%p157) target = $region32
    $region31: #{scnn_forward.4} parent=5 // pred_region
      %s161 = ssub.s32 %s9, 1
      %p162 = scmp.lt.s32.totalorder %s19, 3
      %s163 = scalar_select %p162, %s19, 3
      %p164 = scmp.lt.s32.totalorder %s18, 1
      %s165 = scalar_select %p164, %s18, 1
      %s166 = smul.addr %s165, 10
      %s167 = smul.addr %s163, 20
      %s168 = sadd.s32 %s166, %s167
      %s169 = scalar_lea.vmem %s0, %s168
      %p170 = pneg %p49
      %p171 = pneg %p46
      %p172 = pneg %p70
      %p173 = pneg %p67
      %p174 = pneg %p91
      %p175 = pneg %p88
      %p176 = pneg %p119
      %p177 = pneg %p116
      %p178 = scmp.lt.s32.totalorder %s19, 3
      %s179 = scalar_select %p178, %s19, 3
      %p180 = scmp.lt.s32.totalorder %s18, 1
      %s181 = scalar_select %p180, %s18, 1
      %s182 = smul.addr %s181, 40
      %s183 = smul.addr %s179, 80
      %s184 = sadd.s32 %s182, %s183
      %s185 = smul.addr %s184, 4
      %s186 = scalar_lea.vmem %s3, %s185
      %p187 = scmp.lt.s32.totalorder %s19, 3
      %s188 = scalar_select %p187, %s19, 3
      %p189 = scmp.lt.s32.totalorder %s18, 1
      %s190 = scalar_select %p189, %s18, 1
      %s191 = smul.addr %s190, 10
      %s192 = smul.addr %s188, 20
      %s193 = sadd.s32 %s191, %s192
      %s194 = scalar_lea.vmem %s0, %s193
      %p195 = scmp.lt.s32.totalorder %s19, 3
      %s196 = scalar_select %p195, %s19, 3
      %p197 = scmp.lt.s32.totalorder %s18, 1
      %s198 = scalar_select %p197, %s18, 1
      %s199 = smul.addr %s198, 40
      %s200 = smul.addr %s196, 80
      %s201 = sadd.s32 %s199, %s200
      %s202 = smul.addr %s201, 4
      %s203 = scalar_lea.vmem %s3, %s202
      %p205 = scmp.eq.s32.totalorder %s19, 0
      // Predicated region
      $region33: #{scnn_forward.4} parent=31 // pred_check
        %p206 = pneg %p205
      $region34: #{scnn_forward.4} parent=31 // pred_check_branch
        %208 = sbr.rel (%p206) target = $region36
      $region35: #{scnn_forward.4} parent=31 // pred_region
        %209 = vst [vmem:[#allocation2] sm:$0xff] 0.0
        %210 = vst [vmem:[#allocation2 + $0x8] sm:$0xff] 0.0
        %211 = vst [vmem:[#allocation2 + $0x10] sm:$0xff] 0.0
        %212 = vst [vmem:[#allocation2 + $0x18] sm:$0xff] 0.0
        %213 = vst [vmem:[#allocation2 + $0x20] sm:$0xff] 0.0
        %214 = vst [vmem:[#allocation2 + $0x28] sm:$0xff] 0.0
        %215 = vst [vmem:[#allocation2 + $0x30] sm:$0xff] 0.0
        %216 = vst [vmem:[#allocation2 + $0x38] sm:$0xff] 0.0
        %217 = vst [vmem:[#allocation2 + $0x40] sm:$0xff] 0.0
        %vm218 = vcmask 31744
        %219 = vst.msk [vmem:[#allocation2 + $0x48] sm:$0xff] %vm218, 0.0
        %220 = vst [vmem:[#allocation2 + $0x50] sm:$0xff] 0.0
        %221 = vst [vmem:[#allocation2 + $0x58] sm:$0xff] 0.0
        %222 = vst [vmem:[#allocation2 + $0x60] sm:$0xff] 0.0
        %223 = vst [vmem:[#allocation2 + $0x68] sm:$0xff] 0.0
        %224 = vst [vmem:[#allocation2 + $0x70] sm:$0xff] 0.0
        %225 = vst [vmem:[#allocation2 + $0x78] sm:$0xff] 0.0
        %226 = vst [vmem:[#allocation2 + $0x80] sm:$0xff] 0.0
        %227 = vst [vmem:[#allocation2 + $0x88] sm:$0xff] 0.0
        %228 = vst [vmem:[#allocation2 + $0x90] sm:$0xff] 0.0
        %229 = vst.msk [vmem:[#allocation2 + $0x98] sm:$0xff] %vm218, 0.0
        %230 = vst [vmem:[#allocation2 + $0xa0] sm:$0xff] 0.0
        %231 = vst [vmem:[#allocation2 + $0xa8] sm:$0xff] 0.0
        %232 = vst [vmem:[#allocation2 + $0xb0] sm:$0xff] 0.0
        %233 = vst [vmem:[#allocation2 + $0xb8] sm:$0xff] 0.0
        %234 = vst [vmem:[#allocation2 + $0xc0] sm:$0xff] 0.0
        %235 = vst [vmem:[#allocation2 + $0xc8] sm:$0xff] 0.0
        %236 = vst [vmem:[#allocation2 + $0xd0] sm:$0xff] 0.0
        %237 = vst [vmem:[#allocation2 + $0xd8] sm:$0xff] 0.0
        %238 = vst [vmem:[#allocation2 + $0xe0] sm:$0xff] 0.0
        %239 = vst.msk [vmem:[#allocation2 + $0xe8] sm:$0xff] %vm218, 0.0
        %240 = vst [vmem:[#allocation2 + $0xf0] sm:$0xff] 0.0
        %241 = vst [vmem:[#allocation2 + $0xf8] sm:$0xff] 0.0
        %242 = vst [vmem:[#allocation2 + $0x100] sm:$0xff] 0.0
        %243 = vst [vmem:[#allocation2 + $0x108] sm:$0xff] 0.0
        %244 = vst [vmem:[#allocation2 + $0x110] sm:$0xff] 0.0
        %245 = vst [vmem:[#allocation2 + $0x118] sm:$0xff] 0.0
        %246 = vst [vmem:[#allocation2 + $0x120] sm:$0xff] 0.0
        %247 = vst [vmem:[#allocation2 + $0x128] sm:$0xff] 0.0
        %248 = vst [vmem:[#allocation2 + $0x130] sm:$0xff] 0.0
        %249 = vst.msk [vmem:[#allocation2 + $0x138] sm:$0xff] %vm218, 0.0
        %250 = vst [vmem:[#allocation3] sm:$0xff] 0.0
        %251 = vst [vmem:[#allocation3 + $0x8] sm:$0xff] 0.0
        %252 = vst [vmem:[#allocation3 + $0x10] sm:$0xff] 0.0
        %253 = vst [vmem:[#allocation3 + $0x18] sm:$0xff] 0.0
        %254 = vst [vmem:[#allocation3 + $0x20] sm:$0xff] 0.0
        %255 = vst [vmem:[#allocation3 + $0x28] sm:$0xff] 0.0
        %256 = vst [vmem:[#allocation3 + $0x30] sm:$0xff] 0.0
        %257 = vst [vmem:[#allocation3 + $0x38] sm:$0xff] 0.0
        %258 = vst [vmem:[#allocation3 + $0x40] sm:$0xff] 0.0
        %259 = vst.msk [vmem:[#allocation3 + $0x48] sm:$0xff] %vm218, 0.0
        %260 = vst [vmem:[#allocation3 + $0x50] sm:$0xff] 0.0
        %261 = vst [vmem:[#allocation3 + $0x58] sm:$0xff] 0.0
        %262 = vst [vmem:[#allocation3 + $0x60] sm:$0xff] 0.0
        %263 = vst [vmem:[#allocation3 + $0x68] sm:$0xff] 0.0
        %264 = vst [vmem:[#allocation3 + $0x70] sm:$0xff] 0.0
        %265 = vst [vmem:[#allocation3 + $0x78] sm:$0xff] 0.0
        %266 = vst [vmem:[#allocation3 + $0x80] sm:$0xff] 0.0
        %267 = vst [vmem:[#allocation3 + $0x88] sm:$0xff] 0.0
        %268 = vst [vmem:[#allocation3 + $0x90] sm:$0xff] 0.0
        %269 = vst.msk [vmem:[#allocation3 + $0x98] sm:$0xff] %vm218, 0.0
        %270 = vst [vmem:[#allocation3 + $0xa0] sm:$0xff] 0.0
        %271 = vst [vmem:[#allocation3 + $0xa8] sm:$0xff] 0.0
        %272 = vst [vmem:[#allocation3 + $0xb0] sm:$0xff] 0.0
        %273 = vst [vmem:[#allocation3 + $0xb8] sm:$0xff] 0.0
        %274 = vst [vmem:[#allocation3 + $0xc0] sm:$0xff] 0.0
        %275 = vst [vmem:[#allocation3 + $0xc8] sm:$0xff] 0.0
        %276 = vst [vmem:[#allocation3 + $0xd0] sm:$0xff] 0.0
        %277 = vst [vmem:[#allocation3 + $0xd8] sm:$0xff] 0.0
        %278 = vst [vmem:[#allocation3 + $0xe0] sm:$0xff] 0.0
        %279 = vst.msk [vmem:[#allocation3 + $0xe8] sm:$0xff] %vm218, 0.0
        %280 = vst [vmem:[#allocation3 + $0xf0] sm:$0xff] 0.0
        %281 = vst [vmem:[#allocation3 + $0xf8] sm:$0xff] 0.0
        %282 = vst [vmem:[#allocation3 + $0x100] sm:$0xff] 0.0
        %283 = vst [vmem:[#allocation3 + $0x108] sm:$0xff] 0.0
        %284 = vst [vmem:[#allocation3 + $0x110] sm:$0xff] 0.0
        %285 = vst [vmem:[#allocation3 + $0x118] sm:$0xff] 0.0
        %286 = vst [vmem:[#allocation3 + $0x120] sm:$0xff] 0.0
        %287 = vst [vmem:[#allocation3 + $0x128] sm:$0xff] 0.0
        %288 = vst [vmem:[#allocation3 + $0x130] sm:$0xff] 0.0
        %289 = vst.msk [vmem:[#allocation3 + $0x138] sm:$0xff] %vm218, 0.0
      $region36: #{scnn_forward.4} parent=31 // pred_fallthru
        _
      %v290 = vld [vmem:[#allocation2] sm:$0xff]
      %v291 = vld [vmem:[#allocation2 + $0x8] sm:$0xff]
      %v292 = vld [vmem:[#allocation2 + $0x10] sm:$0xff]
      %v293 = vld [vmem:[#allocation2 + $0x18] sm:$0xff]
      %v294 = vld [vmem:[#allocation2 + $0x20] sm:$0xff]
      %v295 = vld [vmem:[#allocation2 + $0x28] sm:$0xff]
      %v296 = vld [vmem:[#allocation2 + $0x30] sm:$0xff]
      %v297 = vld [vmem:[#allocation2 + $0x38] sm:$0xff]
      %v298 = vld [vmem:[#allocation2 + $0x40] sm:$0xff]
      %v299 = vld [vmem:[#allocation2 + $0x48] sm:$0xff]
      %v300 = vld [vmem:[#allocation2 + $0x50] sm:$0xff]
      %v301 = vld [vmem:[#allocation2 + $0x58] sm:$0xff]
      %v302 = vld [vmem:[#allocation2 + $0x60] sm:$0xff]
      %v303 = vld [vmem:[#allocation2 + $0x68] sm:$0xff]
      %v304 = vld [vmem:[#allocation2 + $0x70] sm:$0xff]
      %v305 = vld [vmem:[#allocation2 + $0x78] sm:$0xff]
      %v306 = vld [vmem:[#allocation2 + $0x80] sm:$0xff]
      %v307 = vld [vmem:[#allocation2 + $0x88] sm:$0xff]
      %v308 = vld [vmem:[#allocation2 + $0x90] sm:$0xff]
      %v309 = vld [vmem:[#allocation2 + $0x98] sm:$0xff]
      %v310 = vld [vmem:[#allocation2 + $0xa0] sm:$0xff]
      %v311 = vld [vmem:[#allocation2 + $0xa8] sm:$0xff]
      %v312 = vld [vmem:[#allocation2 + $0xb0] sm:$0xff]
      %v313 = vld [vmem:[#allocation2 + $0xb8] sm:$0xff]
      %v314 = vld [vmem:[#allocation2 + $0xc0] sm:$0xff]
      %v315 = vld [vmem:[#allocation2 + $0xc8] sm:$0xff]
      %v316 = vld [vmem:[#allocation2 + $0xd0] sm:$0xff]
      %v317 = vld [vmem:[#allocation2 + $0xd8] sm:$0xff]
      %v318 = vld [vmem:[#allocation2 + $0xe0] sm:$0xff]
      %v319 = vld [vmem:[#allocation2 + $0xe8] sm:$0xff]
      %v320 = vld [vmem:[#allocation2 + $0xf0] sm:$0xff]
      %v321 = vld [vmem:[#allocation2 + $0xf8] sm:$0xff]
      %v322 = vld [vmem:[#allocation2 + $0x100] sm:$0xff]
      %v323 = vld [vmem:[#allocation2 + $0x108] sm:$0xff]
      %v324 = vld [vmem:[#allocation2 + $0x110] sm:$0xff]
      %v325 = vld [vmem:[#allocation2 + $0x118] sm:$0xff]
      %v326 = vld [vmem:[#allocation2 + $0x120] sm:$0xff]
      %v327 = vld [vmem:[#allocation2 + $0x128] sm:$0xff]
      %v328 = vld [vmem:[#allocation2 + $0x130] sm:$0xff]
      %v329 = vld [vmem:[#allocation2 + $0x138] sm:$0xff]
      %v330 = vmul.f32 %v290, 0.2
      %v331 = vmul.f32 %v291, 0.2
      %v332 = vmul.f32 %v292, 0.2
      %v333 = vmul.f32 %v293, 0.2
      %v334 = vmul.f32 %v294, 0.2
      %v335 = vmul.f32 %v295, 0.2
      %v336 = vmul.f32 %v296, 0.2
      %v337 = vmul.f32 %v297, 0.2
      %v338 = vmul.f32 %v298, 0.2
      %v339 = vmul.f32 %v299, 0.2
      %v340 = vmul.f32 %v300, 0.2
      %v341 = vmul.f32 %v301, 0.2
      %v342 = vmul.f32 %v302, 0.2
      %v343 = vmul.f32 %v303, 0.2
      %v344 = vmul.f32 %v304, 0.2
      %v345 = vmul.f32 %v305, 0.2
      %v346 = vmul.f32 %v306, 0.2
      %v347 = vmul.f32 %v307, 0.2
      %v348 = vmul.f32 %v308, 0.2
      %v349 = vmul.f32 %v309, 0.2
      %v350 = vmul.f32 %v310, 0.2
      %v351 = vmul.f32 %v311, 0.2
      %v352 = vmul.f32 %v312, 0.2
      %v353 = vmul.f32 %v313, 0.2
      %v354 = vmul.f32 %v314, 0.2
      %v355 = vmul.f32 %v315, 0.2
      %v356 = vmul.f32 %v316, 0.2
      %v357 = vmul.f32 %v317, 0.2
      %v358 = vmul.f32 %v318, 0.2
      %v359 = vmul.f32 %v319, 0.2
      %v360 = vmul.f32 %v320, 0.2
      %v361 = vmul.f32 %v321, 0.2
      %v362 = vmul.f32 %v322, 0.2
      %v363 = vmul.f32 %v323, 0.2
      %v364 = vmul.f32 %v324, 0.2
      %v365 = vmul.f32 %v325, 0.2
      %v366 = vmul.f32 %v326, 0.2
      %v367 = vmul.f32 %v327, 0.2
      %v368 = vmul.f32 %v328, 0.2
      %v369 = vmul.f32 %v329, 0.2
      %v370 = vld [vmem:[#allocation3] sm:$0xff]
      %v371 = vld [vmem:[#allocation3 + $0x8] sm:$0xff]
      %v372 = vld [vmem:[#allocation3 + $0x10] sm:$0xff]
      %v373 = vld [vmem:[#allocation3 + $0x18] sm:$0xff]
      %v374 = vld [vmem:[#allocation3 + $0x20] sm:$0xff]
      %v375 = vld [vmem:[#allocation3 + $0x28] sm:$0xff]
      %v376 = vld [vmem:[#allocation3 + $0x30] sm:$0xff]
      %v377 = vld [vmem:[#allocation3 + $0x38] sm:$0xff]
      %v378 = vld [vmem:[#allocation3 + $0x40] sm:$0xff]
      %v379 = vld [vmem:[#allocation3 + $0x48] sm:$0xff]
      %v380 = vld [vmem:[#allocation3 + $0x50] sm:$0xff]
      %v381 = vld [vmem:[#allocation3 + $0x58] sm:$0xff]
      %v382 = vld [vmem:[#allocation3 + $0x60] sm:$0xff]
      %v383 = vld [vmem:[#allocation3 + $0x68] sm:$0xff]
      %v384 = vld [vmem:[#allocation3 + $0x70] sm:$0xff]
      %v385 = vld [vmem:[#allocation3 + $0x78] sm:$0xff]
      %v386 = vld [vmem:[#allocation3 + $0x80] sm:$0xff]
      %v387 = vld [vmem:[#allocation3 + $0x88] sm:$0xff]
      %v388 = vld [vmem:[#allocation3 + $0x90] sm:$0xff]
      %v389 = vld [vmem:[#allocation3 + $0x98] sm:$0xff]
      %v390 = vld [vmem:[#allocation3 + $0xa0] sm:$0xff]
      %v391 = vld [vmem:[#allocation3 + $0xa8] sm:$0xff]
      %v392 = vld [vmem:[#allocation3 + $0xb0] sm:$0xff]
      %v393 = vld [vmem:[#allocation3 + $0xb8] sm:$0xff]
      %v394 = vld [vmem:[#allocation3 + $0xc0] sm:$0xff]
      %v395 = vld [vmem:[#allocation3 + $0xc8] sm:$0xff]
      %v396 = vld [vmem:[#allocation3 + $0xd0] sm:$0xff]
      %v397 = vld [vmem:[#allocation3 + $0xd8] sm:$0xff]
      %v398 = vld [vmem:[#allocation3 + $0xe0] sm:$0xff]
      %v399 = vld [vmem:[#allocation3 + $0xe8] sm:$0xff]
      %v400 = vld [vmem:[#allocation3 + $0xf0] sm:$0xff]
      %v401 = vld [vmem:[#allocation3 + $0xf8] sm:$0xff]
      %v402 = vld [vmem:[#allocation3 + $0x100] sm:$0xff]
      %v403 = vld [vmem:[#allocation3 + $0x108] sm:$0xff]
      %v404 = vld [vmem:[#allocation3 + $0x110] sm:$0xff]
      %v405 = vld [vmem:[#allocation3 + $0x118] sm:$0xff]
      %v406 = vld [vmem:[#allocation3 + $0x120] sm:$0xff]
      %v407 = vld [vmem:[#allocation3 + $0x128] sm:$0xff]
      %v408 = vld [vmem:[#allocation3 + $0x130] sm:$0xff]
      %v409 = vld [vmem:[#allocation3 + $0x138] sm:$0xff]
      %v410 = vsub.f32 1.0, %v370
      %v411 = vsub.f32 1.0, %v371
      %v412 = vsub.f32 1.0, %v372
      %v413 = vsub.f32 1.0, %v373
      %v414 = vsub.f32 1.0, %v374
      %v415 = vsub.f32 1.0, %v375
      %v416 = vsub.f32 1.0, %v376
      %v417 = vsub.f32 1.0, %v377
      %v418 = vsub.f32 1.0, %v378
      %v419 = vsub.f32 1.0, %v379
      %v420 = vsub.f32 1.0, %v380
      %v421 = vsub.f32 1.0, %v381
      %v422 = vsub.f32 1.0, %v382
      %v423 = vsub.f32 1.0, %v383
      %v424 = vsub.f32 1.0, %v384
      %v425 = vsub.f32 1.0, %v385
      %v426 = vsub.f32 1.0, %v386
      %v427 = vsub.f32 1.0, %v387
      %v428 = vsub.f32 1.0, %v388
      %v429 = vsub.f32 1.0, %v389
      %v430 = vsub.f32 1.0, %v390
      %v431 = vsub.f32 1.0, %v391
      %v432 = vsub.f32 1.0, %v392
      %v433 = vsub.f32 1.0, %v393
      %v434 = vsub.f32 1.0, %v394
      %v435 = vsub.f32 1.0, %v395
      %v436 = vsub.f32 1.0, %v396
      %v437 = vsub.f32 1.0, %v397
      %v438 = vsub.f32 1.0, %v398
      %v439 = vsub.f32 1.0, %v399
      %v440 = vsub.f32 1.0, %v400
      %v441 = vsub.f32 1.0, %v401
      %v442 = vsub.f32 1.0, %v402
      %v443 = vsub.f32 1.0, %v403
      %v444 = vsub.f32 1.0, %v404
      %v445 = vsub.f32 1.0, %v405
      %v446 = vsub.f32 1.0, %v406
      %v447 = vsub.f32 1.0, %v407
      %v448 = vsub.f32 1.0, %v408
      %v449 = vsub.f32 1.0, %v409
      %v450 = vmul.f32 %v330, %v410
      %v451 = vmul.f32 %v331, %v411
      %v452 = vmul.f32 %v332, %v412
      %v453 = vmul.f32 %v333, %v413
      %v454 = vmul.f32 %v334, %v414
      %v455 = vmul.f32 %v335, %v415
      %v456 = vmul.f32 %v336, %v416
      %v457 = vmul.f32 %v337, %v417
      %v458 = vmul.f32 %v338, %v418
      %v459 = vmul.f32 %v339, %v419
      %v460 = vmul.f32 %v340, %v420
      %v461 = vmul.f32 %v341, %v421
      %v462 = vmul.f32 %v342, %v422
      %v463 = vmul.f32 %v343, %v423
      %v464 = vmul.f32 %v344, %v424
      %v465 = vmul.f32 %v345, %v425
      %v466 = vmul.f32 %v346, %v426
      %v467 = vmul.f32 %v347, %v427
      %v468 = vmul.f32 %v348, %v428
      %v469 = vmul.f32 %v349, %v429
      %v470 = vmul.f32 %v350, %v430
      %v471 = vmul.f32 %v351, %v431
      %v472 = vmul.f32 %v352, %v432
      %v473 = vmul.f32 %v353, %v433
      %v474 = vmul.f32 %v354, %v434
      %v475 = vmul.f32 %v355, %v435
      %v476 = vmul.f32 %v356, %v436
      %v477 = vmul.f32 %v357, %v437
      %v478 = vmul.f32 %v358, %v438
      %v479 = vmul.f32 %v359, %v439
      %v480 = vmul.f32 %v360, %v440
      %v481 = vmul.f32 %v361, %v441
      %v482 = vmul.f32 %v362, %v442
      %v483 = vmul.f32 %v363, %v443
      %v484 = vmul.f32 %v364, %v444
      %v485 = vmul.f32 %v365, %v445
      %v486 = vmul.f32 %v366, %v446
      %v487 = vmul.f32 %v367, %v447
      %v488 = vmul.f32 %v368, %v448
      %v489 = vmul.f32 %v369, %v449
      %v490 = vld [vmem:[%s2] sm:$0xff]
      %v491 = vld [vmem:[%s2 + $0x8] sm:$0xff]
      %v492 = vld [vmem:[%s2 + $0x10] sm:$0xff]
      %v493 = vld [vmem:[%s2 + $0x18] sm:$0xff]
      %495 = vset.pattern.permute.xlu0 0
      %496 = vperm.xlu0 %495, %v490
      %v497 = vpop.permute.xlu0 %496
      %500 = vset.pattern.permute.xlu0 0
      %501 = vperm.xlu0 %500, %v491
      %v502 = vpop.permute.xlu0 %501
      %505 = vset.pattern.permute.xlu0 0
      %506 = vperm.xlu0 %505, %v492
      %v507 = vpop.permute.xlu0 %506
      %510 = vset.pattern.permute.xlu0 0
      %511 = vperm.xlu0 %510, %v493
      %v512 = vpop.permute.xlu0 %511
      %v514 = vadd.f32 %v450, %v497
      %v515 = vadd.f32 %v451, %v497
      %v516 = vadd.f32 %v452, %v497
      %v517 = vadd.f32 %v453, %v497
      %v518 = vadd.f32 %v454, %v497
      %v519 = vadd.f32 %v455, %v497
      %v520 = vadd.f32 %v456, %v497
      %v521 = vadd.f32 %v457, %v497
      %v522 = vadd.f32 %v458, %v497
      %v523 = vadd.f32 %v459, %v497
      %v524 = vadd.f32 %v460, %v502
      %v525 = vadd.f32 %v461, %v502
      %v526 = vadd.f32 %v462, %v502
      %v527 = vadd.f32 %v463, %v502
      %v528 = vadd.f32 %v464, %v502
      %v529 = vadd.f32 %v465, %v502
      %v530 = vadd.f32 %v466, %v502
      %v531 = vadd.f32 %v467, %v502
      %v532 = vadd.f32 %v468, %v502
      %v533 = vadd.f32 %v469, %v502
      %v534 = vadd.f32 %v470, %v507
      %v535 = vadd.f32 %v471, %v507
      %v536 = vadd.f32 %v472, %v507
      %v537 = vadd.f32 %v473, %v507
      %v538 = vadd.f32 %v474, %v507
      %v539 = vadd.f32 %v475, %v507
      %v540 = vadd.f32 %v476, %v507
      %v541 = vadd.f32 %v477, %v507
      %v542 = vadd.f32 %v478, %v507
      %v543 = vadd.f32 %v479, %v507
      %v544 = vadd.f32 %v480, %v512
      %v545 = vadd.f32 %v481, %v512
      %v546 = vadd.f32 %v482, %v512
      %v547 = vadd.f32 %v483, %v512
      %v548 = vadd.f32 %v484, %v512
      %v549 = vadd.f32 %v485, %v512
      %v550 = vadd.f32 %v486, %v512
      %v551 = vadd.f32 %v487, %v512
      %v552 = vadd.f32 %v488, %v512
      %v553 = vadd.f32 %v489, %v512
      %554 = vst [vmem:[#allocation2] sm:$0xff] %v514
      %555 = vst [vmem:[#allocation2 + $0x8] sm:$0xff] %v515
      %556 = vst [vmem:[#allocation2 + $0x10] sm:$0xff] %v516
      %557 = vst [vmem:[#allocation2 + $0x18] sm:$0xff] %v517
      %558 = vst [vmem:[#allocation2 + $0x20] sm:$0xff] %v518
      %559 = vst [vmem:[#allocation2 + $0x28] sm:$0xff] %v519
      %560 = vst [vmem:[#allocation2 + $0x30] sm:$0xff] %v520
      %561 = vst [vmem:[#allocation2 + $0x38] sm:$0xff] %v521
      %562 = vst [vmem:[#allocation2 + $0x40] sm:$0xff] %v522
      %vm563 = vcmask 31744
      %564 = vst.msk [vmem:[#allocation2 + $0x48] sm:$0xff] %vm563, %v523
      %565 = vst [vmem:[#allocation2 + $0x50] sm:$0xff] %v524
      %566 = vst [vmem:[#allocation2 + $0x58] sm:$0xff] %v525
      %567 = vst [vmem:[#allocation2 + $0x60] sm:$0xff] %v526
      %568 = vst [vmem:[#allocation2 + $0x68] sm:$0xff] %v527
      %569 = vst [vmem:[#allocation2 + $0x70] sm:$0xff] %v528
      %570 = vst [vmem:[#allocation2 + $0x78] sm:$0xff] %v529
      %571 = vst [vmem:[#allocation2 + $0x80] sm:$0xff] %v530
      %572 = vst [vmem:[#allocation2 + $0x88] sm:$0xff] %v531
      %573 = vst [vmem:[#allocation2 + $0x90] sm:$0xff] %v532
      %574 = vst.msk [vmem:[#allocation2 + $0x98] sm:$0xff] %vm563, %v533
      %575 = vst [vmem:[#allocation2 + $0xa0] sm:$0xff] %v534
      %576 = vst [vmem:[#allocation2 + $0xa8] sm:$0xff] %v535
      %577 = vst [vmem:[#allocation2 + $0xb0] sm:$0xff] %v536
      %578 = vst [vmem:[#allocation2 + $0xb8] sm:$0xff] %v537
      %579 = vst [vmem:[#allocation2 + $0xc0] sm:$0xff] %v538
      %580 = vst [vmem:[#allocation2 + $0xc8] sm:$0xff] %v539
      %581 = vst [vmem:[#allocation2 + $0xd0] sm:$0xff] %v540
      %582 = vst [vmem:[#allocation2 + $0xd8] sm:$0xff] %v541
      %583 = vst [vmem:[#allocation2 + $0xe0] sm:$0xff] %v542
      %584 = vst.msk [vmem:[#allocation2 + $0xe8] sm:$0xff] %vm563, %v543
      %585 = vst [vmem:[#allocation2 + $0xf0] sm:$0xff] %v544
      %586 = vst [vmem:[#allocation2 + $0xf8] sm:$0xff] %v545
      %587 = vst [vmem:[#allocation2 + $0x100] sm:$0xff] %v546
      %588 = vst [vmem:[#allocation2 + $0x108] sm:$0xff] %v547
      %589 = vst [vmem:[#allocation2 + $0x110] sm:$0xff] %v548
      %590 = vst [vmem:[#allocation2 + $0x118] sm:$0xff] %v549
      %591 = vst [vmem:[#allocation2 + $0x120] sm:$0xff] %v550
      %592 = vst [vmem:[#allocation2 + $0x128] sm:$0xff] %v551
      %593 = vst [vmem:[#allocation2 + $0x130] sm:$0xff] %v552
      %594 = vst.msk [vmem:[#allocation2 + $0x138] sm:$0xff] %vm563, %v553
      %v595 = vld [vmem:[%s194] sm:$0xff]
      %v596 = vld [vmem:[%s194 + $0x8] sm:$0x3]
      %v597 = vld [vmem:[#allocation2] sm:$0xff]
      %v598 = vld [vmem:[#allocation2 + $0x8] sm:$0xff]
      %v599 = vld [vmem:[#allocation2 + $0x10] sm:$0xff]
      %v600 = vld [vmem:[#allocation2 + $0x18] sm:$0xff]
      %v601 = vld [vmem:[#allocation2 + $0x20] sm:$0xff]
      %v602 = vld [vmem:[#allocation2 + $0x28] sm:$0xff]
      %v603 = vld [vmem:[#allocation2 + $0x30] sm:$0xff]
      %v604 = vld [vmem:[#allocation2 + $0x38] sm:$0xff]
      %v605 = vld [vmem:[#allocation2 + $0x40] sm:$0xff]
      %v606 = vld [vmem:[#allocation2 + $0x48] sm:$0xff]
      %v607 = vld [vmem:[#allocation2 + $0x50] sm:$0xff]
      %v608 = vld [vmem:[#allocation2 + $0x58] sm:$0xff]
      %v609 = vld [vmem:[#allocation2 + $0x60] sm:$0xff]
      %v610 = vld [vmem:[#allocation2 + $0x68] sm:$0xff]
      %v611 = vld [vmem:[#allocation2 + $0x70] sm:$0xff]
      %v612 = vld [vmem:[#allocation2 + $0x78] sm:$0xff]
      %v613 = vld [vmem:[#allocation2 + $0x80] sm:$0xff]
      %v614 = vld [vmem:[#allocation2 + $0x88] sm:$0xff]
      %v615 = vld [vmem:[#allocation2 + $0x90] sm:$0xff]
      %v616 = vld [vmem:[#allocation2 + $0x98] sm:$0xff]
      %v617 = vld [vmem:[#allocation2 + $0xa0] sm:$0xff]
      %v618 = vld [vmem:[#allocation2 + $0xa8] sm:$0xff]
      %v619 = vld [vmem:[#allocation2 + $0xb0] sm:$0xff]
      %v620 = vld [vmem:[#allocation2 + $0xb8] sm:$0xff]
      %v621 = vld [vmem:[#allocation2 + $0xc0] sm:$0xff]
      %v622 = vld [vmem:[#allocation2 + $0xc8] sm:$0xff]
      %v623 = vld [vmem:[#allocation2 + $0xd0] sm:$0xff]
      %v624 = vld [vmem:[#allocation2 + $0xd8] sm:$0xff]
      %v625 = vld [vmem:[#allocation2 + $0xe0] sm:$0xff]
      %v626 = vld [vmem:[#allocation2 + $0xe8] sm:$0xff]
      %v627 = vld [vmem:[#allocation2 + $0xf0] sm:$0xff]
      %v628 = vld [vmem:[#allocation2 + $0xf8] sm:$0xff]
      %v629 = vld [vmem:[#allocation2 + $0x100] sm:$0xff]
      %v630 = vld [vmem:[#allocation2 + $0x108] sm:$0xff]
      %v631 = vld [vmem:[#allocation2 + $0x110] sm:$0xff]
      %v632 = vld [vmem:[#allocation2 + $0x118] sm:$0xff]
      %v633 = vld [vmem:[#allocation2 + $0x120] sm:$0xff]
      %v634 = vld [vmem:[#allocation2 + $0x128] sm:$0xff]
      %v635 = vld [vmem:[#allocation2 + $0x130] sm:$0xff]
      %v636 = vld [vmem:[#allocation2 + $0x138] sm:$0xff]
      %v637 = vld [vmem:[%s1] sm:$0xf]
      %v638 = vld [vmem:[%s1 + $0x4] sm:$0xf]
      %v639 = vld [vmem:[%s1 + $0x8] sm:$0xf]
      %v640 = vld [vmem:[%s1 + $0xc] sm:$0xf]
      %v645 = vunpack.c.l.b16 %v637
      %v646 = vunpack.c.l.b16 %v638
      %v647 = vunpack.c.l.b16 %v639
      %v648 = vunpack.c.l.b16 %v640
      %v649 = vpack.c.b16 %v646, %v645
      %v650 = vpack.c.b16 %v648, %v647
      %652 = vst [vmem:[#allocation1] ss:$9 sm:$0xff] %v595
      %v653 = vld [vmem:[#allocation1] sm:$0xff]
      %v654 = vld [vmem:[#allocation1 + $0x9] sm:$0xff]
      %v655 = vld [vmem:[#allocation1 + $0x12] sm:$0xff]
      %v656 = vld [vmem:[#allocation1 + $0x1b] sm:$0xff]
      %v657 = vld [vmem:[#allocation1 + $0x24] sm:$0xff]
      %v658 = vld [vmem:[#allocation1 + $0x2d] sm:$0xff]
      %v659 = vld [vmem:[#allocation1 + $0x36] sm:$0xff]
      %v660 = vld [vmem:[#allocation1 + $0x3f] sm:$0xff]
      %662 = vst [vmem:[#allocation1] ss:$9 sm:$0xff] %v596
      %v663 = vld [vmem:[#allocation1] sm:$0xff]
      %v664 = vld [vmem:[#allocation1 + $0x9] sm:$0xff]
      %vm665 = vcmask 15360
      %v667 = vsel %vm665, %v649, 0
      %v670 = vsel %vm665, %v650, 0
      %vm672 = vcmask 1040384
      %v673 = vsel %vm672, %v653, 0
      %v675 = vsel %vm672, %v654, 0
      %v677 = vsel %vm672, %v655, 0
      %v679 = vsel %vm672, %v656, 0
      %v681 = vsel %vm672, %v657, 0
      %v683 = vsel %vm672, %v658, 0
      %v685 = vsel %vm672, %v659, 0
      %v687 = vsel %vm672, %v660, 0
      %v689 = vsel %vm672, %v663, 0
      %v691 = vsel %vm672, %v664, 0
      %693 = vmatpush.bf16.msra.mxu0 0
      %694 = vmatpush.bf16.msra.mxu0 0
      %695 = vmatpush.bf16.msra.mxu0 0
      %696 = vmatpush.bf16.msra.mxu0 0
      %697 = vmatpush.bf16.msra.mxu0 0
      %698 = vmatpush.bf16.msra.mxu0 0
      %699 = vmatpush.bf16.msra.mxu0 0
      %700 = vmatpush.bf16.msra.mxu0 %v673
      %701 = vmatmul.bf16.gmra.mxu0 %v667
      %v702 = vpop.f32.mrf.mxu0
      %v703 = vadd.f32 0.0, %v702
      %v704 = vpop.f32.mrf.mxu0
      %v705 = vadd.f32 0.0, %v704
      %706 = vmatmul.bf16.gmra.mxu0 %v670
      %v707 = vpop.f32.mrf.mxu0
      %v708 = vadd.f32 0.0, %v707
      %v709 = vpop.f32.mrf.mxu0
      %v710 = vadd.f32 0.0, %v709
      %711 = vdwg.mxu0
      %712 = vmatpush.bf16.msra.mxu0 0
      %713 = vmatpush.bf16.msra.mxu0 0
      %714 = vmatpush.bf16.msra.mxu0 0
      %715 = vmatpush.bf16.msra.mxu0 0
      %716 = vmatpush.bf16.msra.mxu0 0
      %717 = vmatpush.bf16.msra.mxu0 0
      %718 = vmatpush.bf16.msra.mxu0 0
      %719 = vmatpush.bf16.msra.mxu0 %v675
      %720 = vmatmul.bf16.gmra.mxu0 %v667
      %v721 = vpop.f32.mrf.mxu0
      %v722 = vadd.f32 0.0, %v721
      %v723 = vpop.f32.mrf.mxu0
      %v724 = vadd.f32 0.0, %v723
      %725 = vmatmul.bf16.gmra.mxu0 %v670
      %v726 = vpop.f32.mrf.mxu0
      %v727 = vadd.f32 0.0, %v726
      %v728 = vpop.f32.mrf.mxu0
      %v729 = vadd.f32 0.0, %v728
      %730 = vdwg.mxu0
      %731 = vmatpush.bf16.msra.mxu0 0
      %732 = vmatpush.bf16.msra.mxu0 0
      %733 = vmatpush.bf16.msra.mxu0 0
      %734 = vmatpush.bf16.msra.mxu0 0
      %735 = vmatpush.bf16.msra.mxu0 0
      %736 = vmatpush.bf16.msra.mxu0 0
      %737 = vmatpush.bf16.msra.mxu0 0
      %738 = vmatpush.bf16.msra.mxu0 %v677
      %739 = vmatmul.bf16.gmra.mxu0 %v667
      %v740 = vpop.f32.mrf.mxu0
      %v741 = vadd.f32 0.0, %v740
      %v742 = vpop.f32.mrf.mxu0
      %v743 = vadd.f32 0.0, %v742
      %744 = vmatmul.bf16.gmra.mxu0 %v670
      %v745 = vpop.f32.mrf.mxu0
      %v746 = vadd.f32 0.0, %v745
      %v747 = vpop.f32.mrf.mxu0
      %v748 = vadd.f32 0.0, %v747
      %749 = vdwg.mxu0
      %750 = vmatpush.bf16.msra.mxu0 0
      %751 = vmatpush.bf16.msra.mxu0 0
      %752 = vmatpush.bf16.msra.mxu0 0
      %753 = vmatpush.bf16.msra.mxu0 0
      %754 = vmatpush.bf16.msra.mxu0 0
      %755 = vmatpush.bf16.msra.mxu0 0
      %756 = vmatpush.bf16.msra.mxu0 0
      %757 = vmatpush.bf16.msra.mxu0 %v679
      %758 = vmatmul.bf16.gmra.mxu0 %v667
      %v759 = vpop.f32.mrf.mxu0
      %v760 = vadd.f32 0.0, %v759
      %v761 = vpop.f32.mrf.mxu0
      %v762 = vadd.f32 0.0, %v761
      %763 = vmatmul.bf16.gmra.mxu0 %v670
      %v764 = vpop.f32.mrf.mxu0
      %v765 = vadd.f32 0.0, %v764
      %v766 = vpop.f32.mrf.mxu0
      %v767 = vadd.f32 0.0, %v766
      %768 = vdwg.mxu0
      %769 = vmatpush.bf16.msra.mxu0 0
      %770 = vmatpush.bf16.msra.mxu0 0
      %771 = vmatpush.bf16.msra.mxu0 0
      %772 = vmatpush.bf16.msra.mxu0 0
      %773 = vmatpush.bf16.msra.mxu0 0
      %774 = vmatpush.bf16.msra.mxu0 0
      %775 = vmatpush.bf16.msra.mxu0 0
      %776 = vmatpush.bf16.msra.mxu0 %v681
      %777 = vmatmul.bf16.gmra.mxu0 %v667
      %v778 = vpop.f32.mrf.mxu0
      %v779 = vadd.f32 0.0, %v778
      %v780 = vpop.f32.mrf.mxu0
      %v781 = vadd.f32 0.0, %v780
      %782 = vmatmul.bf16.gmra.mxu0 %v670
      %v783 = vpop.f32.mrf.mxu0
      %v784 = vadd.f32 0.0, %v783
      %v785 = vpop.f32.mrf.mxu0
      %v786 = vadd.f32 0.0, %v785
      %787 = vdwg.mxu0
      %788 = vmatpush.bf16.msra.mxu0 0
      %789 = vmatpush.bf16.msra.mxu0 0
      %790 = vmatpush.bf16.msra.mxu0 0
      %791 = vmatpush.bf16.msra.mxu0 0
      %792 = vmatpush.bf16.msra.mxu0 0
      %793 = vmatpush.bf16.msra.mxu0 0
      %794 = vmatpush.bf16.msra.mxu0 0
      %795 = vmatpush.bf16.msra.mxu0 %v683
      %796 = vmatmul.bf16.gmra.mxu0 %v667
      %v797 = vpop.f32.mrf.mxu0
      %v798 = vadd.f32 0.0, %v797
      %v799 = vpop.f32.mrf.mxu0
      %v800 = vadd.f32 0.0, %v799
      %801 = vmatmul.bf16.gmra.mxu0 %v670
      %v802 = vpop.f32.mrf.mxu0
      %v803 = vadd.f32 0.0, %v802
      %v804 = vpop.f32.mrf.mxu0
      %v805 = vadd.f32 0.0, %v804
      %806 = vdwg.mxu0
      %807 = vmatpush.bf16.msra.mxu0 0
      %808 = vmatpush.bf16.msra.mxu0 0
      %809 = vmatpush.bf16.msra.mxu0 0
      %810 = vmatpush.bf16.msra.mxu0 0
      %811 = vmatpush.bf16.msra.mxu0 0
      %812 = vmatpush.bf16.msra.mxu0 0
      %813 = vmatpush.bf16.msra.mxu0 0
      %814 = vmatpush.bf16.msra.mxu0 %v685
      %815 = vmatmul.bf16.gmra.mxu0 %v667
      %v816 = vpop.f32.mrf.mxu0
      %v817 = vadd.f32 0.0, %v816
      %v818 = vpop.f32.mrf.mxu0
      %v819 = vadd.f32 0.0, %v818
      %820 = vmatmul.bf16.gmra.mxu0 %v670
      %v821 = vpop.f32.mrf.mxu0
      %v822 = vadd.f32 0.0, %v821
      %v823 = vpop.f32.mrf.mxu0
      %v824 = vadd.f32 0.0, %v823
      %825 = vdwg.mxu0
      %826 = vmatpush.bf16.msra.mxu0 0
      %827 = vmatpush.bf16.msra.mxu0 0
      %828 = vmatpush.bf16.msra.mxu0 0
      %829 = vmatpush.bf16.msra.mxu0 0
      %830 = vmatpush.bf16.msra.mxu0 0
      %831 = vmatpush.bf16.msra.mxu0 0
      %832 = vmatpush.bf16.msra.mxu0 0
      %833 = vmatpush.bf16.msra.mxu0 %v687
      %834 = vmatmul.bf16.gmra.mxu0 %v667
      %v835 = vpop.f32.mrf.mxu0
      %v836 = vadd.f32 0.0, %v835
      %v837 = vpop.f32.mrf.mxu0
      %v838 = vadd.f32 0.0, %v837
      %839 = vmatmul.bf16.gmra.mxu0 %v670
      %v840 = vpop.f32.mrf.mxu0
      %v841 = vadd.f32 0.0, %v840
      %v842 = vpop.f32.mrf.mxu0
      %v843 = vadd.f32 0.0, %v842
      %844 = vdwg.mxu0
      %845 = vmatpush.bf16.msra.mxu0 0
      %846 = vmatpush.bf16.msra.mxu0 0
      %847 = vmatpush.bf16.msra.mxu0 0
      %848 = vmatpush.bf16.msra.mxu0 0
      %849 = vmatpush.bf16.msra.mxu0 0
      %850 = vmatpush.bf16.msra.mxu0 0
      %851 = vmatpush.bf16.msra.mxu0 0
      %852 = vmatpush.bf16.msra.mxu0 %v689
      %853 = vmatmul.bf16.gmra.mxu0 %v667
      %v854 = vpop.f32.mrf.mxu0
      %v855 = vadd.f32 0.0, %v854
      %v856 = vpop.f32.mrf.mxu0
      %v857 = vadd.f32 0.0, %v856
      %858 = vmatmul.bf16.gmra.mxu0 %v670
      %v859 = vpop.f32.mrf.mxu0
      %v860 = vadd.f32 0.0, %v859
      %v861 = vpop.f32.mrf.mxu0
      %v862 = vadd.f32 0.0, %v861
      %863 = vdwg.mxu0
      %864 = vmatpush.bf16.msra.mxu0 0
      %865 = vmatpush.bf16.msra.mxu0 0
      %866 = vmatpush.bf16.msra.mxu0 0
      %867 = vmatpush.bf16.msra.mxu0 0
      %868 = vmatpush.bf16.msra.mxu0 0
      %869 = vmatpush.bf16.msra.mxu0 0
      %870 = vmatpush.bf16.msra.mxu0 0
      %871 = vmatpush.bf16.msra.mxu0 %v691
      %872 = vmatmul.bf16.gmra.mxu0 %v667
      %v873 = vpop.f32.mrf.mxu0
      %v874 = vadd.f32 0.0, %v873
      %v875 = vpop.f32.mrf.mxu0
      %v876 = vadd.f32 0.0, %v875
      %877 = vmatmul.bf16.gmra.mxu0 %v670
      %v878 = vpop.f32.mrf.mxu0
      %v879 = vadd.f32 0.0, %v878
      %v880 = vpop.f32.mrf.mxu0
      %v881 = vadd.f32 0.0, %v880
      %882 = vdwg.mxu0
      %v883 = vadd.f32 %v597, %v703
      %v884 = vadd.f32 %v598, %v722
      %v885 = vadd.f32 %v599, %v741
      %v886 = vadd.f32 %v600, %v760
      %v887 = vadd.f32 %v601, %v779
      %v888 = vadd.f32 %v602, %v798
      %v889 = vadd.f32 %v603, %v817
      %v890 = vadd.f32 %v604, %v836
      %v891 = vadd.f32 %v605, %v855
      %v892 = vadd.f32 %v606, %v874
      %v893 = vadd.f32 %v607, %v705
      %v894 = vadd.f32 %v608, %v724
      %v895 = vadd.f32 %v609, %v743
      %v896 = vadd.f32 %v610, %v762
      %v897 = vadd.f32 %v611, %v781
      %v898 = vadd.f32 %v612, %v800
      %v899 = vadd.f32 %v613, %v819
      %v900 = vadd.f32 %v614, %v838
      %v901 = vadd.f32 %v615, %v857
      %v902 = vadd.f32 %v616, %v876
      %v903 = vadd.f32 %v617, %v708
      %v904 = vadd.f32 %v618, %v727
      %v905 = vadd.f32 %v619, %v746
      %v906 = vadd.f32 %v620, %v765
      %v907 = vadd.f32 %v621, %v784
      %v908 = vadd.f32 %v622, %v803
      %v909 = vadd.f32 %v623, %v822
      %v910 = vadd.f32 %v624, %v841
      %v911 = vadd.f32 %v625, %v860
      %v912 = vadd.f32 %v626, %v879
      %v913 = vadd.f32 %v627, %v710
      %v914 = vadd.f32 %v628, %v729
      %v915 = vadd.f32 %v629, %v748
      %v916 = vadd.f32 %v630, %v767
      %v917 = vadd.f32 %v631, %v786
      %v918 = vadd.f32 %v632, %v805
      %v919 = vadd.f32 %v633, %v824
      %v920 = vadd.f32 %v634, %v843
      %v921 = vadd.f32 %v635, %v862
      %v922 = vadd.f32 %v636, %v881
      %923 = vst [vmem:[#allocation2] sm:$0xff] %v883
      %924 = vst [vmem:[#allocation2 + $0x8] sm:$0xff] %v884
      %925 = vst [vmem:[#allocation2 + $0x10] sm:$0xff] %v885
      %926 = vst [vmem:[#allocation2 + $0x18] sm:$0xff] %v886
      %927 = vst [vmem:[#allocation2 + $0x20] sm:$0xff] %v887
      %928 = vst [vmem:[#allocation2 + $0x28] sm:$0xff] %v888
      %929 = vst [vmem:[#allocation2 + $0x30] sm:$0xff] %v889
      %930 = vst [vmem:[#allocation2 + $0x38] sm:$0xff] %v890
      %931 = vst [vmem:[#allocation2 + $0x40] sm:$0xff] %v891
      %932 = vst.msk [vmem:[#allocation2 + $0x48] sm:$0xff] %vm563, %v892
      %933 = vst [vmem:[#allocation2 + $0x50] sm:$0xff] %v893
      %934 = vst [vmem:[#allocation2 + $0x58] sm:$0xff] %v894
      %935 = vst [vmem:[#allocation2 + $0x60] sm:$0xff] %v895
      %936 = vst [vmem:[#allocation2 + $0x68] sm:$0xff] %v896
      %937 = vst [vmem:[#allocation2 + $0x70] sm:$0xff] %v897
      %938 = vst [vmem:[#allocation2 + $0x78] sm:$0xff] %v898
      %939 = vst [vmem:[#allocation2 + $0x80] sm:$0xff] %v899
      %940 = vst [vmem:[#allocation2 + $0x88] sm:$0xff] %v900
      %941 = vst [vmem:[#allocation2 + $0x90] sm:$0xff] %v901
      %942 = vst.msk [vmem:[#allocation2 + $0x98] sm:$0xff] %vm563, %v902
      %943 = vst [vmem:[#allocation2 + $0xa0] sm:$0xff] %v903
      %944 = vst [vmem:[#allocation2 + $0xa8] sm:$0xff] %v904
      %945 = vst [vmem:[#allocation2 + $0xb0] sm:$0xff] %v905
      %946 = vst [vmem:[#allocation2 + $0xb8] sm:$0xff] %v906
      %947 = vst [vmem:[#allocation2 + $0xc0] sm:$0xff] %v907
      %948 = vst [vmem:[#allocation2 + $0xc8] sm:$0xff] %v908
      %949 = vst [vmem:[#allocation2 + $0xd0] sm:$0xff] %v909
      %950 = vst [vmem:[#allocation2 + $0xd8] sm:$0xff] %v910
      %951 = vst [vmem:[#allocation2 + $0xe0] sm:$0xff] %v911
      %952 = vst.msk [vmem:[#allocation2 + $0xe8] sm:$0xff] %vm563, %v912
      %953 = vst [vmem:[#allocation2 + $0xf0] sm:$0xff] %v913
      %954 = vst [vmem:[#allocation2 + $0xf8] sm:$0xff] %v914
      %955 = vst [vmem:[#allocation2 + $0x100] sm:$0xff] %v915
      %956 = vst [vmem:[#allocation2 + $0x108] sm:$0xff] %v916
      %957 = vst [vmem:[#allocation2 + $0x110] sm:$0xff] %v917
      %958 = vst [vmem:[#allocation2 + $0x118] sm:$0xff] %v918
      %959 = vst [vmem:[#allocation2 + $0x120] sm:$0xff] %v919
      %960 = vst [vmem:[#allocation2 + $0x128] sm:$0xff] %v920
      %961 = vst [vmem:[#allocation2 + $0x130] sm:$0xff] %v921
      %962 = vst.msk [vmem:[#allocation2 + $0x138] sm:$0xff] %vm563, %v922
      %v963 = vld [vmem:[#allocation2] sm:$0xff]
      %v964 = vld [vmem:[#allocation2 + $0x8] sm:$0xff]
      %v965 = vld [vmem:[#allocation2 + $0x10] sm:$0xff]
      %v966 = vld [vmem:[#allocation2 + $0x18] sm:$0xff]
      %v967 = vld [vmem:[#allocation2 + $0x20] sm:$0xff]
      %v968 = vld [vmem:[#allocation2 + $0x28] sm:$0xff]
      %v969 = vld [vmem:[#allocation2 + $0x30] sm:$0xff]
      %v970 = vld [vmem:[#allocation2 + $0x38] sm:$0xff]
      %v971 = vld [vmem:[#allocation2 + $0x40] sm:$0xff]
      %v972 = vld [vmem:[#allocation2 + $0x48] sm:$0xff]
      %v973 = vld [vmem:[#allocation2 + $0x50] sm:$0xff]
      %v974 = vld [vmem:[#allocation2 + $0x58] sm:$0xff]
      %v975 = vld [vmem:[#allocation2 + $0x60] sm:$0xff]
      %v976 = vld [vmem:[#allocation2 + $0x68] sm:$0xff]
      %v977 = vld [vmem:[#allocation2 + $0x70] sm:$0xff]
      %v978 = vld [vmem:[#allocation2 + $0x78] sm:$0xff]
      %v979 = vld [vmem:[#allocation2 + $0x80] sm:$0xff]
      %v980 = vld [vmem:[#allocation2 + $0x88] sm:$0xff]
      %v981 = vld [vmem:[#allocation2 + $0x90] sm:$0xff]
      %v982 = vld [vmem:[#allocation2 + $0x98] sm:$0xff]
      %v983 = vld [vmem:[#allocation2 + $0xa0] sm:$0xff]
      %v984 = vld [vmem:[#allocation2 + $0xa8] sm:$0xff]
      %v985 = vld [vmem:[#allocation2 + $0xb0] sm:$0xff]
      %v986 = vld [vmem:[#allocation2 + $0xb8] sm:$0xff]
      %v987 = vld [vmem:[#allocation2 + $0xc0] sm:$0xff]
      %v988 = vld [vmem:[#allocation2 + $0xc8] sm:$0xff]
      %v989 = vld [vmem:[#allocation2 + $0xd0] sm:$0xff]
      %v990 = vld [vmem:[#allocation2 + $0xd8] sm:$0xff]
      %v991 = vld [vmem:[#allocation2 + $0xe0] sm:$0xff]
      %v992 = vld [vmem:[#allocation2 + $0xe8] sm:$0xff]
      %v993 = vld [vmem:[#allocation2 + $0xf0] sm:$0xff]
      %v994 = vld [vmem:[#allocation2 + $0xf8] sm:$0xff]
      %v995 = vld [vmem:[#allocation2 + $0x100] sm:$0xff]
      %v996 = vld [vmem:[#allocation2 + $0x108] sm:$0xff]
      %v997 = vld [vmem:[#allocation2 + $0x110] sm:$0xff]
      %v998 = vld [vmem:[#allocation2 + $0x118] sm:$0xff]
      %v999 = vld [vmem:[#allocation2 + $0x120] sm:$0xff]
      %v1000 = vld [vmem:[#allocation2 + $0x128] sm:$0xff]
      %v1001 = vld [vmem:[#allocation2 + $0x130] sm:$0xff]
      %v1002 = vld [vmem:[#allocation2 + $0x138] sm:$0xff]
      %s1003 = scalar_lea.vmem %s1, 16
      %v1004 = vld [vmem:[%s1003] sm:$0xf]
      %v1005 = vld [vmem:[%s1003 + $0x4] sm:$0xf]
      %v1006 = vld [vmem:[%s1003 + $0x8] sm:$0xf]
      %v1007 = vld [vmem:[%s1003 + $0xc] sm:$0xf]
      %v1012 = vunpack.c.l.b16 %v1004
      %v1013 = vunpack.c.l.b16 %v1005
      %v1014 = vunpack.c.l.b16 %v1006
      %v1015 = vunpack.c.l.b16 %v1007
      %v1016 = vpack.c.b16 %v1013, %v1012
      %v1017 = vpack.c.b16 %v1015, %v1014
      %1018 = vst [vmem:[#allocation1] ss:$9 sm:$0xff] %v595
      %v1019 = vld [vmem:[#allocation1] sm:$0xff]
      %v1021 = vld [vmem:[#allocation1 + $0x9] sm:$0xff]
      %v1023 = vld [vmem:[#allocation1 + $0x12] sm:$0xff]
      %v1025 = vld [vmem:[#allocation1 + $0x1b] sm:$0xff]
      %v1027 = vld [vmem:[#allocation1 + $0x24] sm:$0xff]
      %v1029 = vld [vmem:[#allocation1 + $0x2d] sm:$0xff]
      %v1031 = vld [vmem:[#allocation1 + $0x36] sm:$0xff]
      %v1033 = vld [vmem:[#allocation1 + $0x3f] sm:$0xff]
      %1035 = vst [vmem:[#allocation1] ss:$9 sm:$0xff] %v596
      %v1036 = vld [vmem:[#allocation1] sm:$0xff]
      %v1038 = vld [vmem:[#allocation1 + $0x9] sm:$0xff]
      %1040 = vrot.lane.b32.xlu0 %v1019, 127
      %v1041 = vpop.permute.xlu0 %1040
      %1042 = vrot.lane.b32.xlu0 %v1021, 127
      %v1043 = vpop.permute.xlu0 %1042
      %1044 = vrot.lane.b32.xlu0 %v1023, 127
      %v1045 = vpop.permute.xlu0 %1044
      %1046 = vrot.lane.b32.xlu0 %v1025, 127
      %v1047 = vpop.permute.xlu0 %1046
      %1048 = vrot.lane.b32.xlu0 %v1027, 127
      %v1049 = vpop.permute.xlu0 %1048
      %1050 = vrot.lane.b32.xlu0 %v1029, 127
      %v1051 = vpop.permute.xlu0 %1050
      %1052 = vrot.lane.b32.xlu0 %v1031, 127
      %v1053 = vpop.permute.xlu0 %1052
      %1054 = vrot.lane.b32.xlu0 %v1033, 127
      %v1055 = vpop.permute.xlu0 %1054
      %1056 = vrot.lane.b32.xlu0 %v1036, 127
      %v1057 = vpop.permute.xlu0 %1056
      %1058 = vrot.lane.b32.xlu0 %v1038, 127
      %v1059 = vpop.permute.xlu0 %1058
      %vm1060 = vcmask 1039360
      %v1061 = vsel %vm1060, %v1041, %v1043
      %v1062 = vsel %vm1060, %v1043, %v1045
      %v1063 = vsel %vm1060, %v1045, %v1047
      %v1064 = vsel %vm1060, %v1047, %v1049
      %v1065 = vsel %vm1060, %v1049, %v1051
      %v1066 = vsel %vm1060, %v1051, %v1053
      %v1067 = vsel %vm1060, %v1053, %v1055
      %v1068 = vsel %vm1060, %v1055, %v1057
      %v1069 = vsel %vm1060, %v1057, %v1059
      %v1071 = vsel %vm665, %v1016, 0
      %v1074 = vsel %vm665, %v1017, 0
      %v1077 = vsel %vm672, %v1061, 0
      %v1080 = vsel %vm672, %v1062, 0
      %v1083 = vsel %vm672, %v1063, 0
      %v1086 = vsel %vm672, %v1064, 0
      %v1089 = vsel %vm672, %v1065, 0
      %v1092 = vsel %vm672, %v1066, 0
      %v1095 = vsel %vm672, %v1067, 0
      %v1098 = vsel %vm672, %v1068, 0
      %v1101 = vsel %vm672, %v1069, 0
      %v1104 = vsel %vm672, %v1059, 0
      %1106 = vmatpush.bf16.msra.mxu0 0
      %1107 = vmatpush.bf16.msra.mxu0 0
      %1108 = vmatpush.bf16.msra.mxu0 0
      %1109 = vmatpush.bf16.msra.mxu0 0
      %1110 = vmatpush.bf16.msra.mxu0 0
      %1111 = vmatpush.bf16.msra.mxu0 0
      %1112 = vmatpush.bf16.msra.mxu0 0
      %1113 = vmatpush.bf16.msra.mxu0 %v1077
      %1114 = vmatmul.bf16.gmra.mxu0 %v1071
      %v1115 = vpop.f32.mrf.mxu0
      %v1116 = vadd.f32 0.0, %v1115
      %v1117 = vpop.f32.mrf.mxu0
      %v1118 = vadd.f32 0.0, %v1117
      %1119 = vmatmul.bf16.gmra.mxu0 %v1074
      %v1120 = vpop.f32.mrf.mxu0
      %v1121 = vadd.f32 0.0, %v1120
      %v1122 = vpop.f32.mrf.mxu0
      %v1123 = vadd.f32 0.0, %v1122
      %1124 = vdwg.mxu0
      %1125 = vmatpush.bf16.msra.mxu0 0
      %1126 = vmatpush.bf16.msra.mxu0 0
      %1127 = vmatpush.bf16.msra.mxu0 0
      %1128 = vmatpush.bf16.msra.mxu0 0
      %1129 = vmatpush.bf16.msra.mxu0 0
      %1130 = vmatpush.bf16.msra.mxu0 0
      %1131 = vmatpush.bf16.msra.mxu0 0
      %1132 = vmatpush.bf16.msra.mxu0 %v1080
      %1133 = vmatmul.bf16.gmra.mxu0 %v1071
      %v1134 = vpop.f32.mrf.mxu0
      %v1135 = vadd.f32 0.0, %v1134
      %v1136 = vpop.f32.mrf.mxu0
      %v1137 = vadd.f32 0.0, %v1136
      %1138 = vmatmul.bf16.gmra.mxu0 %v1074
      %v1139 = vpop.f32.mrf.mxu0
      %v1140 = vadd.f32 0.0, %v1139
      %v1141 = vpop.f32.mrf.mxu0
      %v1142 = vadd.f32 0.0, %v1141
      %1143 = vdwg.mxu0
      %1144 = vmatpush.bf16.msra.mxu0 0
      %1145 = vmatpush.bf16.msra.mxu0 0
      %1146 = vmatpush.bf16.msra.mxu0 0
      %1147 = vmatpush.bf16.msra.mxu0 0
      %1148 = vmatpush.bf16.msra.mxu0 0
      %1149 = vmatpush.bf16.msra.mxu0 0
      %1150 = vmatpush.bf16.msra.mxu0 0
      %1151 = vmatpush.bf16.msra.mxu0 %v1083
      %1152 = vmatmul.bf16.gmra.mxu0 %v1071
      %v1153 = vpop.f32.mrf.mxu0
      %v1154 = vadd.f32 0.0, %v1153
      %v1155 = vpop.f32.mrf.mxu0
      %v1156 = vadd.f32 0.0, %v1155
      %1157 = vmatmul.bf16.gmra.mxu0 %v1074
      %v1158 = vpop.f32.mrf.mxu0
      %v1159 = vadd.f32 0.0, %v1158
      %v1160 = vpop.f32.mrf.mxu0
      %v1161 = vadd.f32 0.0, %v1160
      %1162 = vdwg.mxu0
      %1163 = vmatpush.bf16.msra.mxu0 0
      %1164 = vmatpush.bf16.msra.mxu0 0
      %1165 = vmatpush.bf16.msra.mxu0 0
      %1166 = vmatpush.bf16.msra.mxu0 0
      %1167 = vmatpush.bf16.msra.mxu0 0
      %1168 = vmatpush.bf16.msra.mxu0 0
      %1169 = vmatpush.bf16.msra.mxu0 0
      %1170 = vmatpush.bf16.msra.mxu0 %v1086
      %1171 = vmatmul.bf16.gmra.mxu0 %v1071
      %v1172 = vpop.f32.mrf.mxu0
      %v1173 = vadd.f32 0.0, %v1172
      %v1174 = vpop.f32.mrf.mxu0
      %v1175 = vadd.f32 0.0, %v1174
      %1176 = vmatmul.bf16.gmra.mxu0 %v1074
      %v1177 = vpop.f32.mrf.mxu0
      %v1178 = vadd.f32 0.0, %v1177
      %v1179 = vpop.f32.mrf.mxu0
      %v1180 = vadd.f32 0.0, %v1179
      %1181 = vdwg.mxu0
      %1182 = vmatpush.bf16.msra.mxu0 0
      %1183 = vmatpush.bf16.msra.mxu0 0
      %1184 = vmatpush.bf16.msra.mxu0 0
      %1185 = vmatpush.bf16.msra.mxu0 0
      %1186 = vmatpush.bf16.msra.mxu0 0
      %1187 = vmatpush.bf16.msra.mxu0 0
      %1188 = vmatpush.bf16.msra.mxu0 0
      %1189 = vmatpush.bf16.msra.mxu0 %v1089
      %1190 = vmatmul.bf16.gmra.mxu0 %v1071
      %v1191 = vpop.f32.mrf.mxu0
      %v1192 = vadd.f32 0.0, %v1191
      %v1193 = vpop.f32.mrf.mxu0
      %v1194 = vadd.f32 0.0, %v1193
      %1195 = vmatmul.bf16.gmra.mxu0 %v1074
      %v1196 = vpop.f32.mrf.mxu0
      %v1197 = vadd.f32 0.0, %v1196
      %v1198 = vpop.f32.mrf.mxu0
      %v1199 = vadd.f32 0.0, %v1198
      %1200 = vdwg.mxu0
      %1201 = vmatpush.bf16.msra.mxu0 0
      %1202 = vmatpush.bf16.msra.mxu0 0
      %1203 = vmatpush.bf16.msra.mxu0 0
      %1204 = vmatpush.bf16.msra.mxu0 0
      %1205 = vmatpush.bf16.msra.mxu0 0
      %1206 = vmatpush.bf16.msra.mxu0 0
      %1207 = vmatpush.bf16.msra.mxu0 0
      %1208 = vmatpush.bf16.msra.mxu0 %v1092
      %1209 = vmatmul.bf16.gmra.mxu0 %v1071
      %v1210 = vpop.f32.mrf.mxu0
      %v1211 = vadd.f32 0.0, %v1210
      %v1212 = vpop.f32.mrf.mxu0
      %v1213 = vadd.f32 0.0, %v1212
      %1214 = vmatmul.bf16.gmra.mxu0 %v1074
      %v1215 = vpop.f32.mrf.mxu0
      %v1216 = vadd.f32 0.0, %v1215
      %v1217 = vpop.f32.mrf.mxu0
      %v1218 = vadd.f32 0.0, %v1217
      %1219 = vdwg.mxu0
      %1220 = vmatpush.bf16.msra.mxu0 0
      %1221 = vmatpush.bf16.msra.mxu0 0
      %1222 = vmatpush.bf16.msra.mxu0 0
      %1223 = vmatpush.bf16.msra.mxu0 0
      %1224 = vmatpush.bf16.msra.mxu0 0
      %1225 = vmatpush.bf16.msra.mxu0 0
      %1226 = vmatpush.bf16.msra.mxu0 0
      %1227 = vmatpush.bf16.msra.mxu0 %v1095
      %1228 = vmatmul.bf16.gmra.mxu0 %v1071
      %v1229 = vpop.f32.mrf.mxu0
      %v1230 = vadd.f32 0.0, %v1229
      %v1231 = vpop.f32.mrf.mxu0
      %v1232 = vadd.f32 0.0, %v1231
      %1233 = vmatmul.bf16.gmra.mxu0 %v1074
      %v1234 = vpop.f32.mrf.mxu0
      %v1235 = vadd.f32 0.0, %v1234
      %v1236 = vpop.f32.mrf.mxu0
      %v1237 = vadd.f32 0.0, %v1236
      %1238 = vdwg.mxu0
      %1239 = vmatpush.bf16.msra.mxu0 0
      %1240 = vmatpush.bf16.msra.mxu0 0
      %1241 = vmatpush.bf16.msra.mxu0 0
      %1242 = vmatpush.bf16.msra.mxu0 0
      %1243 = vmatpush.bf16.msra.mxu0 0
      %1244 = vmatpush.bf16.msra.mxu0 0
      %1245 = vmatpush.bf16.msra.mxu0 0
      %1246 = vmatpush.bf16.msra.mxu0 %v1098
      %1247 = vmatmul.bf16.gmra.mxu0 %v1071
      %v1248 = vpop.f32.mrf.mxu0
      %v1249 = vadd.f32 0.0, %v1248
      %v1250 = vpop.f32.mrf.mxu0
      %v1251 = vadd.f32 0.0, %v1250
      %1252 = vmatmul.bf16.gmra.mxu0 %v1074
      %v1253 = vpop.f32.mrf.mxu0
      %v1254 = vadd.f32 0.0, %v1253
      %v1255 = vpop.f32.mrf.mxu0
      %v1256 = vadd.f32 0.0, %v1255
      %1257 = vdwg.mxu0
      %1258 = vmatpush.bf16.msra.mxu0 0
      %1259 = vmatpush.bf16.msra.mxu0 0
      %1260 = vmatpush.bf16.msra.mxu0 0
      %1261 = vmatpush.bf16.msra.mxu0 0
      %1262 = vmatpush.bf16.msra.mxu0 0
      %1263 = vmatpush.bf16.msra.mxu0 0
      %1264 = vmatpush.bf16.msra.mxu0 0
      %1265 = vmatpush.bf16.msra.mxu0 %v1101
      %1266 = vmatmul.bf16.gmra.mxu0 %v1071
      %v1267 = vpop.f32.mrf.mxu0
      %v1268 = vadd.f32 0.0, %v1267
      %v1269 = vpop.f32.mrf.mxu0
      %v1270 = vadd.f32 0.0, %v1269
      %1271 = vmatmul.bf16.gmra.mxu0 %v1074
      %v1272 = vpop.f32.mrf.mxu0
      %v1273 = vadd.f32 0.0, %v1272
      %v1274 = vpop.f32.mrf.mxu0
      %v1275 = vadd.f32 0.0, %v1274
      %1276 = vdwg.mxu0
      %1277 = vmatpush.bf16.msra.mxu0 0
      %1278 = vmatpush.bf16.msra.mxu0 0
      %1279 = vmatpush.bf16.msra.mxu0 0
      %1280 = vmatpush.bf16.msra.mxu0 0
      %1281 = vmatpush.bf16.msra.mxu0 0
      %1282 = vmatpush.bf16.msra.mxu0 0
      %1283 = vmatpush.bf16.msra.mxu0 0
      %1284 = vmatpush.bf16.msra.mxu0 %v1104
      %1285 = vmatmul.bf16.gmra.mxu0 %v1071
      %v1286 = vpop.f32.mrf.mxu0
      %v1287 = vadd.f32 0.0, %v1286
      %v1288 = vpop.f32.mrf.mxu0
      %v1289 = vadd.f32 0.0, %v1288
      %1290 = vmatmul.bf16.gmra.mxu0 %v1074
      %v1291 = vpop.f32.mrf.mxu0
      %v1292 = vadd.f32 0.0, %v1291
      %v1293 = vpop.f32.mrf.mxu0
      %v1294 = vadd.f32 0.0, %v1293
      %1295 = vdwg.mxu0
      %v1296 = vadd.f32 %v963, %v1116
      %v1297 = vadd.f32 %v964, %v1135
      %v1298 = vadd.f32 %v965, %v1154
      %v1299 = vadd.f32 %v966, %v1173
      %v1300 = vadd.f32 %v967, %v1192
      %v1301 = vadd.f32 %v968, %v1211
      %v1302 = vadd.f32 %v969, %v1230
      %v1303 = vadd.f32 %v970, %v1249
      %v1304 = vadd.f32 %v971, %v1268
      %v1305 = vadd.f32 %v972, %v1287
      %v1306 = vadd.f32 %v973, %v1118
      %v1307 = vadd.f32 %v974, %v1137
      %v1308 = vadd.f32 %v975, %v1156
      %v1309 = vadd.f32 %v976, %v1175
      %v1310 = vadd.f32 %v977, %v1194
      %v1311 = vadd.f32 %v978, %v1213
      %v1312 = vadd.f32 %v979, %v1232
      %v1313 = vadd.f32 %v980, %v1251
      %v1314 = vadd.f32 %v981, %v1270
      %v1315 = vadd.f32 %v982, %v1289
      %v1316 = vadd.f32 %v983, %v1121
      %v1317 = vadd.f32 %v984, %v1140
      %v1318 = vadd.f32 %v985, %v1159
      %v1319 = vadd.f32 %v986, %v1178
      %v1320 = vadd.f32 %v987, %v1197
      %v1321 = vadd.f32 %v988, %v1216
      %v1322 = vadd.f32 %v989, %v1235
      %v1323 = vadd.f32 %v990, %v1254
      %v1324 = vadd.f32 %v991, %v1273
      %v1325 = vadd.f32 %v992, %v1292
      %v1326 = vadd.f32 %v993, %v1123
      %v1327 = vadd.f32 %v994, %v1142
      %v1328 = vadd.f32 %v995, %v1161
      %v1329 = vadd.f32 %v996, %v1180
      %v1330 = vadd.f32 %v997, %v1199
      %v1331 = vadd.f32 %v998, %v1218
      %v1332 = vadd.f32 %v999, %v1237
      %v1333 = vadd.f32 %v1000, %v1256
      %v1334 = vadd.f32 %v1001, %v1275
      %v1335 = vadd.f32 %v1002, %v1294
      %1336 = vst [vmem:[#allocation2] sm:$0xff] %v1296
      %1337 = vst [vmem:[#allocation2 + $0x8] sm:$0xff] %v1297
      %1338 = vst [vmem:[#allocation2 + $0x10] sm:$0xff] %v1298
      %1339 = vst [vmem:[#allocation2 + $0x18] sm:$0xff] %v1299
      %1340 = vst [vmem:[#allocation2 + $0x20] sm:$0xff] %v1300
      %1341 = vst [vmem:[#allocation2 + $0x28] sm:$0xff] %v1301
      %1342 = vst [vmem:[#allocation2 + $0x30] sm:$0xff] %v1302
      %1343 = vst [vmem:[#allocation2 + $0x38] sm:$0xff] %v1303
      %1344 = vst [vmem:[#allocation2 + $0x40] sm:$0xff] %v1304
      %1345 = vst.msk [vmem:[#allocation2 + $0x48] sm:$0xff] %vm563, %v1305
      %1346 = vst [vmem:[#allocation2 + $0x50] sm:$0xff] %v1306
      %1347 = vst [vmem:[#allocation2 + $0x58] sm:$0xff] %v1307
      %1348 = vst [vmem:[#allocation2 + $0x60] sm:$0xff] %v1308
      %1349 = vst [vmem:[#allocation2 + $0x68] sm:$0xff] %v1309
      %1350 = vst [vmem:[#allocation2 + $0x70] sm:$0xff] %v1310
      %1351 = vst [vmem:[#allocation2 + $0x78] sm:$0xff] %v1311
      %1352 = vst [vmem:[#allocation2 + $0x80] sm:$0xff] %v1312
      %1353 = vst [vmem:[#allocation2 + $0x88] sm:$0xff] %v1313
      %1354 = vst [vmem:[#allocation2 + $0x90] sm:$0xff] %v1314
      %1355 = vst.msk [vmem:[#allocation2 + $0x98] sm:$0xff] %vm563, %v1315
      %1356 = vst [vmem:[#allocation2 + $0xa0] sm:$0xff] %v1316
      %1357 = vst [vmem:[#allocation2 + $0xa8] sm:$0xff] %v1317
      %1358 = vst [vmem:[#allocation2 + $0xb0] sm:$0xff] %v1318
      %1359 = vst [vmem:[#allocation2 + $0xb8] sm:$0xff] %v1319
      %1360 = vst [vmem:[#allocation2 + $0xc0] sm:$0xff] %v1320
      %1361 = vst [vmem:[#allocation2 + $0xc8] sm:$0xff] %v1321
      %1362 = vst [vmem:[#allocation2 + $0xd0] sm:$0xff] %v1322
      %1363 = vst [vmem:[#allocation2 + $0xd8] sm:$0xff] %v1323
      %1364 = vst [vmem:[#allocation2 + $0xe0] sm:$0xff] %v1324
      %1365 = vst.msk [vmem:[#allocation2 + $0xe8] sm:$0xff] %vm563, %v1325
      %1366 = vst [vmem:[#allocation2 + $0xf0] sm:$0xff] %v1326
      %1367 = vst [vmem:[#allocation2 + $0xf8] sm:$0xff] %v1327
      %1368 = vst [vmem:[#allocation2 + $0x100] sm:$0xff] %v1328
      %1369 = vst [vmem:[#allocation2 + $0x108] sm:$0xff] %v1329
      %1370 = vst [vmem:[#allocation2 + $0x110] sm:$0xff] %v1330
      %1371 = vst [vmem:[#allocation2 + $0x118] sm:$0xff] %v1331
      %1372 = vst [vmem:[#allocation2 + $0x120] sm:$0xff] %v1332
      %1373 = vst [vmem:[#allocation2 + $0x128] sm:$0xff] %v1333
      %1374 = vst [vmem:[#allocation2 + $0x130] sm:$0xff] %v1334
      %1375 = vst.msk [vmem:[#allocation2 + $0x138] sm:$0xff] %vm563, %v1335
      %v1376 = vld [vmem:[#allocation2] sm:$0xff]
      %v1377 = vld [vmem:[#allocation2 + $0x8] sm:$0xff]
      %v1378 = vld [vmem:[#allocation2 + $0x10] sm:$0xff]
      %v1379 = vld [vmem:[#allocation2 + $0x18] sm:$0xff]
      %v1380 = vld [vmem:[#allocation2 + $0x20] sm:$0xff]
      %v1381 = vld [vmem:[#allocation2 + $0x28] sm:$0xff]
      %v1382 = vld [vmem:[#allocation2 + $0x30] sm:$0xff]
      %v1383 = vld [vmem:[#allocation2 + $0x38] sm:$0xff]
      %v1384 = vld [vmem:[#allocation2 + $0x40] sm:$0xff]
      %v1385 = vld [vmem:[#allocation2 + $0x48] sm:$0xff]
      %v1386 = vld [vmem:[#allocation2 + $0x50] sm:$0xff]
      %v1387 = vld [vmem:[#allocation2 + $0x58] sm:$0xff]
      %v1388 = vld [vmem:[#allocation2 + $0x60] sm:$0xff]
      %v1389 = vld [vmem:[#allocation2 + $0x68] sm:$0xff]
      %v1390 = vld [vmem:[#allocation2 + $0x70] sm:$0xff]
      %v1391 = vld [vmem:[#allocation2 + $0x78] sm:$0xff]
      %v1392 = vld [vmem:[#allocation2 + $0x80] sm:$0xff]
      %v1393 = vld [vmem:[#allocation2 + $0x88] sm:$0xff]
      %v1394 = vld [vmem:[#allocation2 + $0x90] sm:$0xff]
      %v1395 = vld [vmem:[#allocation2 + $0x98] sm:$0xff]
      %v1396 = vld [vmem:[#allocation2 + $0xa0] sm:$0xff]
      %v1397 = vld [vmem:[#allocation2 + $0xa8] sm:$0xff]
      %v1398 = vld [vmem:[#allocation2 + $0xb0] sm:$0xff]
      %v1399 = vld [vmem:[#allocation2 + $0xb8] sm:$0xff]
      %v1400 = vld [vmem:[#allocation2 + $0xc0] sm:$0xff]
      %v1401 = vld [vmem:[#allocation2 + $0xc8] sm:$0xff]
      %v1402 = vld [vmem:[#allocation2 + $0xd0] sm:$0xff]
      %v1403 = vld [vmem:[#allocation2 + $0xd8] sm:$0xff]
      %v1404 = vld [vmem:[#allocation2 + $0xe0] sm:$0xff]
      %v1405 = vld [vmem:[#allocation2 + $0xe8] sm:$0xff]
      %v1406 = vld [vmem:[#allocation2 + $0xf0] sm:$0xff]
      %v1407 = vld [vmem:[#allocation2 + $0xf8] sm:$0xff]
      %v1408 = vld [vmem:[#allocation2 + $0x100] sm:$0xff]
      %v1409 = vld [vmem:[#allocation2 + $0x108] sm:$0xff]
      %v1410 = vld [vmem:[#allocation2 + $0x110] sm:$0xff]
      %v1411 = vld [vmem:[#allocation2 + $0x118] sm:$0xff]
      %v1412 = vld [vmem:[#allocation2 + $0x120] sm:$0xff]
      %v1413 = vld [vmem:[#allocation2 + $0x128] sm:$0xff]
      %v1414 = vld [vmem:[#allocation2 + $0x130] sm:$0xff]
      %v1415 = vld [vmem:[#allocation2 + $0x138] sm:$0xff]
      %s1416 = scalar_lea.vmem %s1, 32
      %v1417 = vld [vmem:[%s1416] sm:$0xf]
      %v1418 = vld [vmem:[%s1416 + $0x4] sm:$0xf]
      %v1419 = vld [vmem:[%s1416 + $0x8] sm:$0xf]
      %v1420 = vld [vmem:[%s1416 + $0xc] sm:$0xf]
      %v1425 = vunpack.c.l.b16 %v1417
      %v1426 = vunpack.c.l.b16 %v1418
      %v1427 = vunpack.c.l.b16 %v1419
      %v1428 = vunpack.c.l.b16 %v1420
      %v1429 = vpack.c.b16 %v1426, %v1425
      %v1430 = vpack.c.b16 %v1428, %v1427
      %1431 = vst [vmem:[#allocation1] ss:$9 sm:$0xff] %v595
      %v1432 = vld [vmem:[#allocation1] sm:$0xff]
      %v1434 = vld [vmem:[#allocation1 + $0x9] sm:$0xff]
      %v1436 = vld [vmem:[#allocation1 + $0x12] sm:$0xff]
      %v1438 = vld [vmem:[#allocation1 + $0x1b] sm:$0xff]
      %v1440 = vld [vmem:[#allocation1 + $0x24] sm:$0xff]
      %v1442 = vld [vmem:[#allocation1 + $0x2d] sm:$0xff]
      %v1444 = vld [vmem:[#allocation1 + $0x36] sm:$0xff]
      %v1446 = vld [vmem:[#allocation1 + $0x3f] sm:$0xff]
      %1448 = vst [vmem:[#allocation1] ss:$9 sm:$0xff] %v596
      %v1449 = vld [vmem:[#allocation1] sm:$0xff]
      %v1451 = vld [vmem:[#allocation1 + $0x9] sm:$0xff]
      %1453 = vrot.lane.b32.xlu0 %v1432, 126
      %v1454 = vpop.permute.xlu0 %1453
      %1455 = vrot.lane.b32.xlu0 %v1434, 126
      %v1456 = vpop.permute.xlu0 %1455
      %1457 = vrot.lane.b32.xlu0 %v1436, 126
      %v1458 = vpop.permute.xlu0 %1457
      %1459 = vrot.lane.b32.xlu0 %v1438, 126
      %v1460 = vpop.permute.xlu0 %1459
      %1461 = vrot.lane.b32.xlu0 %v1440, 126
      %v1462 = vpop.permute.xlu0 %1461
      %1463 = vrot.lane.b32.xlu0 %v1442, 126
      %v1464 = vpop.permute.xlu0 %1463
      %1465 = vrot.lane.b32.xlu0 %v1444, 126
      %v1466 = vpop.permute.xlu0 %1465
      %1467 = vrot.lane.b32.xlu0 %v1446, 126
      %v1468 = vpop.permute.xlu0 %1467
      %1469 = vrot.lane.b32.xlu0 %v1449, 126
      %v1470 = vpop.permute.xlu0 %1469
      %1471 = vrot.lane.b32.xlu0 %v1451, 126
      %v1472 = vpop.permute.xlu0 %1471
      %vm1473 = vcmask 1031168
      %v1474 = vsel %vm1473, %v1454, %v1456
      %v1475 = vsel %vm1473, %v1456, %v1458
      %v1476 = vsel %vm1473, %v1458, %v1460
      %v1477 = vsel %vm1473, %v1460, %v1462
      %v1478 = vsel %vm1473, %v1462, %v1464
      %v1479 = vsel %vm1473, %v1464, %v1466
      %v1480 = vsel %vm1473, %v1466, %v1468
      %v1481 = vsel %vm1473, %v1468, %v1470
      %v1482 = vsel %vm1473, %v1470, %v1472
      %v1484 = vsel %vm665, %v1429, 0
      %v1487 = vsel %vm665, %v1430, 0
      %v1490 = vsel %vm672, %v1474, 0
      %v1493 = vsel %vm672, %v1475, 0
      %v1496 = vsel %vm672, %v1476, 0
      %v1499 = vsel %vm672, %v1477, 0
      %v1502 = vsel %vm672, %v1478, 0
      %v1505 = vsel %vm672, %v1479, 0
      %v1508 = vsel %vm672, %v1480, 0
      %v1511 = vsel %vm672, %v1481, 0
      %v1514 = vsel %vm672, %v1482, 0
      %v1517 = vsel %vm672, %v1472, 0
      %1519 = vmatpush.bf16.msra.mxu0 0
      %1520 = vmatpush.bf16.msra.mxu0 0
      %1521 = vmatpush.bf16.msra.mxu0 0
      %1522 = vmatpush.bf16.msra.mxu0 0
      %1523 = vmatpush.bf16.msra.mxu0 0
      %1524 = vmatpush.bf16.msra.mxu0 0
      %1525 = vmatpush.bf16.msra.mxu0 0
      %1526 = vmatpush.bf16.msra.mxu0 %v1490
      %1527 = vmatmul.bf16.gmra.mxu0 %v1484
      %v1528 = vpop.f32.mrf.mxu0
      %v1529 = vadd.f32 0.0, %v1528
      %v1530 = vpop.f32.mrf.mxu0
      %v1531 = vadd.f32 0.0, %v1530
      %1532 = vmatmul.bf16.gmra.mxu0 %v1487
      %v1533 = vpop.f32.mrf.mxu0
      %v1534 = vadd.f32 0.0, %v1533
      %v1535 = vpop.f32.mrf.mxu0
      %v1536 = vadd.f32 0.0, %v1535
      %1537 = vdwg.mxu0
      %1538 = vmatpush.bf16.msra.mxu0 0
      %1539 = vmatpush.bf16.msra.mxu0 0
      %1540 = vmatpush.bf16.msra.mxu0 0
      %1541 = vmatpush.bf16.msra.mxu0 0
      %1542 = vmatpush.bf16.msra.mxu0 0
      %1543 = vmatpush.bf16.msra.mxu0 0
      %1544 = vmatpush.bf16.msra.mxu0 0
      %1545 = vmatpush.bf16.msra.mxu0 %v1493
      %1546 = vmatmul.bf16.gmra.mxu0 %v1484
      %v1547 = vpop.f32.mrf.mxu0
      %v1548 = vadd.f32 0.0, %v1547
      %v1549 = vpop.f32.mrf.mxu0
      %v1550 = vadd.f32 0.0, %v1549
      %1551 = vmatmul.bf16.gmra.mxu0 %v1487
      %v1552 = vpop.f32.mrf.mxu0
      %v1553 = vadd.f32 0.0, %v1552
      %v1554 = vpop.f32.mrf.mxu0
      %v1555 = vadd.f32 0.0, %v1554
      %1556 = vdwg.mxu0
      %1557 = vmatpush.bf16.msra.mxu0 0
      %1558 = vmatpush.bf16.msra.mxu0 0
      %1559 = vmatpush.bf16.msra.mxu0 0
      %1560 = vmatpush.bf16.msra.mxu0 0
      %1561 = vmatpush.bf16.msra.mxu0 0
      %1562 = vmatpush.bf16.msra.mxu0 0
      %1563 = vmatpush.bf16.msra.mxu0 0
      %1564 = vmatpush.bf16.msra.mxu0 %v1496
      %1565 = vmatmul.bf16.gmra.mxu0 %v1484
      %v1566 = vpop.f32.mrf.mxu0
      %v1567 = vadd.f32 0.0, %v1566
      %v1568 = vpop.f32.mrf.mxu0
      %v1569 = vadd.f32 0.0, %v1568
      %1570 = vmatmul.bf16.gmra.mxu0 %v1487
      %v1571 = vpop.f32.mrf.mxu0
      %v1572 = vadd.f32 0.0, %v1571
      %v1573 = vpop.f32.mrf.mxu0
      %v1574 = vadd.f32 0.0, %v1573
      %1575 = vdwg.mxu0
      %1576 = vmatpush.bf16.msra.mxu0 0
      %1577 = vmatpush.bf16.msra.mxu0 0
      %1578 = vmatpush.bf16.msra.mxu0 0
      %1579 = vmatpush.bf16.msra.mxu0 0
      %1580 = vmatpush.bf16.msra.mxu0 0
      %1581 = vmatpush.bf16.msra.mxu0 0
      %1582 = vmatpush.bf16.msra.mxu0 0
      %1583 = vmatpush.bf16.msra.mxu0 %v1499
      %1584 = vmatmul.bf16.gmra.mxu0 %v1484
      %v1585 = vpop.f32.mrf.mxu0
      %v1586 = vadd.f32 0.0, %v1585
      %v1587 = vpop.f32.mrf.mxu0
      %v1588 = vadd.f32 0.0, %v1587
      %1589 = vmatmul.bf16.gmra.mxu0 %v1487
      %v1590 = vpop.f32.mrf.mxu0
      %v1591 = vadd.f32 0.0, %v1590
      %v1592 = vpop.f32.mrf.mxu0
      %v1593 = vadd.f32 0.0, %v1592
      %1594 = vdwg.mxu0
      %1595 = vmatpush.bf16.msra.mxu0 0
      %1596 = vmatpush.bf16.msra.mxu0 0
      %1597 = vmatpush.bf16.msra.mxu0 0
      %1598 = vmatpush.bf16.msra.mxu0 0
      %1599 = vmatpush.bf16.msra.mxu0 0
      %1600 = vmatpush.bf16.msra.mxu0 0
      %1601 = vmatpush.bf16.msra.mxu0 0
      %1602 = vmatpush.bf16.msra.mxu0 %v1502
      %1603 = vmatmul.bf16.gmra.mxu0 %v1484
      %v1604 = vpop.f32.mrf.mxu0
      %v1605 = vadd.f32 0.0, %v1604
      %v1606 = vpop.f32.mrf.mxu0
      %v1607 = vadd.f32 0.0, %v1606
      %1608 = vmatmul.bf16.gmra.mxu0 %v1487
      %v1609 = vpop.f32.mrf.mxu0
      %v1610 = vadd.f32 0.0, %v1609
      %v1611 = vpop.f32.mrf.mxu0
      %v1612 = vadd.f32 0.0, %v1611
      %1613 = vdwg.mxu0
      %1614 = vmatpush.bf16.msra.mxu0 0
      %1615 = vmatpush.bf16.msra.mxu0 0
      %1616 = vmatpush.bf16.msra.mxu0 0
      %1617 = vmatpush.bf16.msra.mxu0 0
      %1618 = vmatpush.bf16.msra.mxu0 0
      %1619 = vmatpush.bf16.msra.mxu0 0
      %1620 = vmatpush.bf16.msra.mxu0 0
      %1621 = vmatpush.bf16.msra.mxu0 %v1505
      %1622 = vmatmul.bf16.gmra.mxu0 %v1484
      %v1623 = vpop.f32.mrf.mxu0
      %v1624 = vadd.f32 0.0, %v1623
      %v1625 = vpop.f32.mrf.mxu0
      %v1626 = vadd.f32 0.0, %v1625
      %1627 = vmatmul.bf16.gmra.mxu0 %v1487
      %v1628 = vpop.f32.mrf.mxu0
      %v1629 = vadd.f32 0.0, %v1628
      %v1630 = vpop.f32.mrf.mxu0
      %v1631 = vadd.f32 0.0, %v1630
      %1632 = vdwg.mxu0
      %1633 = vmatpush.bf16.msra.mxu0 0
      %1634 = vmatpush.bf16.msra.mxu0 0
      %1635 = vmatpush.bf16.msra.mxu0 0
      %1636 = vmatpush.bf16.msra.mxu0 0
      %1637 = vmatpush.bf16.msra.mxu0 0
      %1638 = vmatpush.bf16.msra.mxu0 0
      %1639 = vmatpush.bf16.msra.mxu0 0
      %1640 = vmatpush.bf16.msra.mxu0 %v1508
      %1641 = vmatmul.bf16.gmra.mxu0 %v1484
      %v1642 = vpop.f32.mrf.mxu0
      %v1643 = vadd.f32 0.0, %v1642
      %v1644 = vpop.f32.mrf.mxu0
      %v1645 = vadd.f32 0.0, %v1644
      %1646 = vmatmul.bf16.gmra.mxu0 %v1487
      %v1647 = vpop.f32.mrf.mxu0
      %v1648 = vadd.f32 0.0, %v1647
      %v1649 = vpop.f32.mrf.mxu0
      %v1650 = vadd.f32 0.0, %v1649
      %1651 = vdwg.mxu0
      %1652 = vmatpush.bf16.msra.mxu0 0
      %1653 = vmatpush.bf16.msra.mxu0 0
      %1654 = vmatpush.bf16.msra.mxu0 0
      %1655 = vmatpush.bf16.msra.mxu0 0
      %1656 = vmatpush.bf16.msra.mxu0 0
      %1657 = vmatpush.bf16.msra.mxu0 0
      %1658 = vmatpush.bf16.msra.mxu0 0
      %1659 = vmatpush.bf16.msra.mxu0 %v1511
      %1660 = vmatmul.bf16.gmra.mxu0 %v1484
      %v1661 = vpop.f32.mrf.mxu0
      %v1662 = vadd.f32 0.0, %v1661
      %v1663 = vpop.f32.mrf.mxu0
      %v1664 = vadd.f32 0.0, %v1663
      %1665 = vmatmul.bf16.gmra.mxu0 %v1487
      %v1666 = vpop.f32.mrf.mxu0
      %v1667 = vadd.f32 0.0, %v1666
      %v1668 = vpop.f32.mrf.mxu0
      %v1669 = vadd.f32 0.0, %v1668
      %1670 = vdwg.mxu0
      %1671 = vmatpush.bf16.msra.mxu0 0
      %1672 = vmatpush.bf16.msra.mxu0 0
      %1673 = vmatpush.bf16.msra.mxu0 0
      %1674 = vmatpush.bf16.msra.mxu0 0
      %1675 = vmatpush.bf16.msra.mxu0 0
      %1676 = vmatpush.bf16.msra.mxu0 0
      %1677 = vmatpush.bf16.msra.mxu0 0
      %1678 = vmatpush.bf16.msra.mxu0 %v1514
      %1679 = vmatmul.bf16.gmra.mxu0 %v1484
      %v1680 = vpop.f32.mrf.mxu0
      %v1681 = vadd.f32 0.0, %v1680
      %v1682 = vpop.f32.mrf.mxu0
      %v1683 = vadd.f32 0.0, %v1682
      %1684 = vmatmul.bf16.gmra.mxu0 %v1487
      %v1685 = vpop.f32.mrf.mxu0
      %v1686 = vadd.f32 0.0, %v1685
      %v1687 = vpop.f32.mrf.mxu0
      %v1688 = vadd.f32 0.0, %v1687
      %1689 = vdwg.mxu0
      %1690 = vmatpush.bf16.msra.mxu0 0
      %1691 = vmatpush.bf16.msra.mxu0 0
      %1692 = vmatpush.bf16.msra.mxu0 0
      %1693 = vmatpush.bf16.msra.mxu0 0
      %1694 = vmatpush.bf16.msra.mxu0 0
      %1695 = vmatpush.bf16.msra.mxu0 0
      %1696 = vmatpush.bf16.msra.mxu0 0
      %1697 = vmatpush.bf16.msra.mxu0 %v1517
      %1698 = vmatmul.bf16.gmra.mxu0 %v1484
      %v1699 = vpop.f32.mrf.mxu0
      %v1700 = vadd.f32 0.0, %v1699
      %v1701 = vpop.f32.mrf.mxu0
      %v1702 = vadd.f32 0.0, %v1701
      %1703 = vmatmul.bf16.gmra.mxu0 %v1487
      %v1704 = vpop.f32.mrf.mxu0
      %v1705 = vadd.f32 0.0, %v1704
      %v1706 = vpop.f32.mrf.mxu0
      %v1707 = vadd.f32 0.0, %v1706
      %1708 = vdwg.mxu0
      %v1709 = vadd.f32 %v1376, %v1529
      %v1710 = vadd.f32 %v1377, %v1548
      %v1711 = vadd.f32 %v1378, %v1567
      %v1712 = vadd.f32 %v1379, %v1586
      %v1713 = vadd.f32 %v1380, %v1605
      %v1714 = vadd.f32 %v1381, %v1624
      %v1715 = vadd.f32 %v1382, %v1643
      %v1716 = vadd.f32 %v1383, %v1662
      %v1717 = vadd.f32 %v1384, %v1681
      %v1718 = vadd.f32 %v1385, %v1700
      %v1719 = vadd.f32 %v1386, %v1531
      %v1720 = vadd.f32 %v1387, %v1550
      %v1721 = vadd.f32 %v1388, %v1569
      %v1722 = vadd.f32 %v1389, %v1588
      %v1723 = vadd.f32 %v1390, %v1607
      %v1724 = vadd.f32 %v1391, %v1626
      %v1725 = vadd.f32 %v1392, %v1645
      %v1726 = vadd.f32 %v1393, %v1664
      %v1727 = vadd.f32 %v1394, %v1683
      %v1728 = vadd.f32 %v1395, %v1702
      %v1729 = vadd.f32 %v1396, %v1534
      %v1730 = vadd.f32 %v1397, %v1553
      %v1731 = vadd.f32 %v1398, %v1572
      %v1732 = vadd.f32 %v1399, %v1591
      %v1733 = vadd.f32 %v1400, %v1610
      %v1734 = vadd.f32 %v1401, %v1629
      %v1735 = vadd.f32 %v1402, %v1648
      %v1736 = vadd.f32 %v1403, %v1667
      %v1737 = vadd.f32 %v1404, %v1686
      %v1738 = vadd.f32 %v1405, %v1705
      %v1739 = vadd.f32 %v1406, %v1536
      %v1740 = vadd.f32 %v1407, %v1555
      %v1741 = vadd.f32 %v1408, %v1574
      %v1742 = vadd.f32 %v1409, %v1593
      %v1743 = vadd.f32 %v1410, %v1612
      %v1744 = vadd.f32 %v1411, %v1631
      %v1745 = vadd.f32 %v1412, %v1650
      %v1746 = vadd.f32 %v1413, %v1669
      %v1747 = vadd.f32 %v1414, %v1688
      %v1748 = vadd.f32 %v1415, %v1707
      %1749 = vst [vmem:[#allocation2] sm:$0xff] %v1709
      %1750 = vst [vmem:[#allocation2 + $0x8] sm:$0xff] %v1710
      %1751 = vst [vmem:[#allocation2 + $0x10] sm:$0xff] %v1711
      %1752 = vst [vmem:[#allocation2 + $0x18] sm:$0xff] %v1712
      %1753 = vst [vmem:[#allocation2 + $0x20] sm:$0xff] %v1713
      %1754 = vst [vmem:[#allocation2 + $0x28] sm:$0xff] %v1714
      %1755 = vst [vmem:[#allocation2 + $0x30] sm:$0xff] %v1715
      %1756 = vst [vmem:[#allocation2 + $0x38] sm:$0xff] %v1716
      %1757 = vst [vmem:[#allocation2 + $0x40] sm:$0xff] %v1717
      %1758 = vst.msk [vmem:[#allocation2 + $0x48] sm:$0xff] %vm563, %v1718
      %1759 = vst [vmem:[#allocation2 + $0x50] sm:$0xff] %v1719
      %1760 = vst [vmem:[#allocation2 + $0x58] sm:$0xff] %v1720
      %1761 = vst [vmem:[#allocation2 + $0x60] sm:$0xff] %v1721
      %1762 = vst [vmem:[#allocation2 + $0x68] sm:$0xff] %v1722
      %1763 = vst [vmem:[#allocation2 + $0x70] sm:$0xff] %v1723
      %1764 = vst [vmem:[#allocation2 + $0x78] sm:$0xff] %v1724
      %1765 = vst [vmem:[#allocation2 + $0x80] sm:$0xff] %v1725
      %1766 = vst [vmem:[#allocation2 + $0x88] sm:$0xff] %v1726
      %1767 = vst [vmem:[#allocation2 + $0x90] sm:$0xff] %v1727
      %1768 = vst.msk [vmem:[#allocation2 + $0x98] sm:$0xff] %vm563, %v1728
      %1769 = vst [vmem:[#allocation2 + $0xa0] sm:$0xff] %v1729
      %1770 = vst [vmem:[#allocation2 + $0xa8] sm:$0xff] %v1730
      %1771 = vst [vmem:[#allocation2 + $0xb0] sm:$0xff] %v1731
      %1772 = vst [vmem:[#allocation2 + $0xb8] sm:$0xff] %v1732
      %1773 = vst [vmem:[#allocation2 + $0xc0] sm:$0xff] %v1733
      %1774 = vst [vmem:[#allocation2 + $0xc8] sm:$0xff] %v1734
      %1775 = vst [vmem:[#allocation2 + $0xd0] sm:$0xff] %v1735
      %1776 = vst [vmem:[#allocation2 + $0xd8] sm:$0xff] %v1736
      %1777 = vst [vmem:[#allocation2 + $0xe0] sm:$0xff] %v1737
      %1778 = vst.msk [vmem:[#allocation2 + $0xe8] sm:$0xff] %vm563, %v1738
      %1779 = vst [vmem:[#allocation2 + $0xf0] sm:$0xff] %v1739
      %1780 = vst [vmem:[#allocation2 + $0xf8] sm:$0xff] %v1740
      %1781 = vst [vmem:[#allocation2 + $0x100] sm:$0xff] %v1741
      %1782 = vst [vmem:[#allocation2 + $0x108] sm:$0xff] %v1742
      %1783 = vst [vmem:[#allocation2 + $0x110] sm:$0xff] %v1743
      %1784 = vst [vmem:[#allocation2 + $0x118] sm:$0xff] %v1744
      %1785 = vst [vmem:[#allocation2 + $0x120] sm:$0xff] %v1745
      %1786 = vst [vmem:[#allocation2 + $0x128] sm:$0xff] %v1746
      %1787 = vst [vmem:[#allocation2 + $0x130] sm:$0xff] %v1747
      %1788 = vst.msk [vmem:[#allocation2 + $0x138] sm:$0xff] %vm563, %v1748
      %v1789 = vld [vmem:[#allocation2] sm:$0xff]
      %v1790 = vld [vmem:[#allocation2 + $0x8] sm:$0xff]
      %v1791 = vld [vmem:[#allocation2 + $0x10] sm:$0xff]
      %v1792 = vld [vmem:[#allocation2 + $0x18] sm:$0xff]
      %v1793 = vld [vmem:[#allocation2 + $0x20] sm:$0xff]
      %v1794 = vld [vmem:[#allocation2 + $0x28] sm:$0xff]
      %v1795 = vld [vmem:[#allocation2 + $0x30] sm:$0xff]
      %v1796 = vld [vmem:[#allocation2 + $0x38] sm:$0xff]
      %v1797 = vld [vmem:[#allocation2 + $0x40] sm:$0xff]
      %v1798 = vld [vmem:[#allocation2 + $0x48] sm:$0xff]
      %v1799 = vld [vmem:[#allocation2 + $0x50] sm:$0xff]
      %v1800 = vld [vmem:[#allocation2 + $0x58] sm:$0xff]
      %v1801 = vld [vmem:[#allocation2 + $0x60] sm:$0xff]
      %v1802 = vld [vmem:[#allocation2 + $0x68] sm:$0xff]
      %v1803 = vld [vmem:[#allocation2 + $0x70] sm:$0xff]
      %v1804 = vld [vmem:[#allocation2 + $0x78] sm:$0xff]
      %v1805 = vld [vmem:[#allocation2 + $0x80] sm:$0xff]
      %v1806 = vld [vmem:[#allocation2 + $0x88] sm:$0xff]
      %v1807 = vld [vmem:[#allocation2 + $0x90] sm:$0xff]
      %v1808 = vld [vmem:[#allocation2 + $0x98] sm:$0xff]
      %v1809 = vld [vmem:[#allocation2 + $0xa0] sm:$0xff]
      %v1810 = vld [vmem:[#allocation2 + $0xa8] sm:$0xff]
      %v1811 = vld [vmem:[#allocation2 + $0xb0] sm:$0xff]
      %v1812 = vld [vmem:[#allocation2 + $0xb8] sm:$0xff]
      %v1813 = vld [vmem:[#allocation2 + $0xc0] sm:$0xff]
      %v1814 = vld [vmem:[#allocation2 + $0xc8] sm:$0xff]
      %v1815 = vld [vmem:[#allocation2 + $0xd0] sm:$0xff]
      %v1816 = vld [vmem:[#allocation2 + $0xd8] sm:$0xff]
      %v1817 = vld [vmem:[#allocation2 + $0xe0] sm:$0xff]
      %v1818 = vld [vmem:[#allocation2 + $0xe8] sm:$0xff]
      %v1819 = vld [vmem:[#allocation2 + $0xf0] sm:$0xff]
      %v1820 = vld [vmem:[#allocation2 + $0xf8] sm:$0xff]
      %v1821 = vld [vmem:[#allocation2 + $0x100] sm:$0xff]
      %v1822 = vld [vmem:[#allocation2 + $0x108] sm:$0xff]
      %v1823 = vld [vmem:[#allocation2 + $0x110] sm:$0xff]
      %v1824 = vld [vmem:[#allocation2 + $0x118] sm:$0xff]
      %v1825 = vld [vmem:[#allocation2 + $0x120] sm:$0xff]
      %v1826 = vld [vmem:[#allocation2 + $0x128] sm:$0xff]
      %v1827 = vld [vmem:[#allocation2 + $0x130] sm:$0xff]
      %v1828 = vld [vmem:[#allocation2 + $0x138] sm:$0xff]
      %s1829 = scalar_lea.vmem %s1, 48
      %v1830 = vld [vmem:[%s1829] sm:$0xf]
      %v1831 = vld [vmem:[%s1829 + $0x4] sm:$0xf]
      %v1832 = vld [vmem:[%s1829 + $0x8] sm:$0xf]
      %v1833 = vld [vmem:[%s1829 + $0xc] sm:$0xf]
      %v1838 = vunpack.c.l.b16 %v1830
      %v1839 = vunpack.c.l.b16 %v1831
      %v1840 = vunpack.c.l.b16 %v1832
      %v1841 = vunpack.c.l.b16 %v1833
      %v1842 = vpack.c.b16 %v1839, %v1838
      %v1843 = vpack.c.b16 %v1841, %v1840
      %1844 = vst [vmem:[#allocation1] ss:$9 sm:$0xff] %v595
      %v1845 = vld [vmem:[#allocation1] sm:$0xff]
      %v1847 = vld [vmem:[#allocation1 + $0x9] sm:$0xff]
      %v1849 = vld [vmem:[#allocation1 + $0x12] sm:$0xff]
      %v1851 = vld [vmem:[#allocation1 + $0x1b] sm:$0xff]
      %v1853 = vld [vmem:[#allocation1 + $0x24] sm:$0xff]
      %v1855 = vld [vmem:[#allocation1 + $0x2d] sm:$0xff]
      %v1857 = vld [vmem:[#allocation1 + $0x36] sm:$0xff]
      %v1859 = vld [vmem:[#allocation1 + $0x3f] sm:$0xff]
      %1861 = vst [vmem:[#allocation1] ss:$9 sm:$0xff] %v596
      %v1862 = vld [vmem:[#allocation1] sm:$0xff]
      %v1864 = vld [vmem:[#allocation1 + $0x9] sm:$0xff]
      %1866 = vrot.lane.b32.xlu0 %v1845, 94
      %v1867 = vpop.permute.xlu0 %1866
      %1868 = vrot.lane.b32.xlu0 %v1847, 94
      %v1869 = vpop.permute.xlu0 %1868
      %1870 = vrot.lane.b32.xlu0 %v1849, 94
      %v1871 = vpop.permute.xlu0 %1870
      %1872 = vrot.lane.b32.xlu0 %v1851, 94
      %v1873 = vpop.permute.xlu0 %1872
      %1874 = vrot.lane.b32.xlu0 %v1853, 94
      %v1875 = vpop.permute.xlu0 %1874
      %1876 = vrot.lane.b32.xlu0 %v1855, 94
      %v1877 = vpop.permute.xlu0 %1876
      %1878 = vrot.lane.b32.xlu0 %v1857, 94
      %v1879 = vpop.permute.xlu0 %1878
      %1880 = vrot.lane.b32.xlu0 %v1859, 94
      %v1881 = vpop.permute.xlu0 %1880
      %1882 = vrot.lane.b32.xlu0 %v1862, 94
      %v1883 = vpop.permute.xlu0 %1882
      %1884 = vrot.lane.b32.xlu0 %v1864, 94
      %v1885 = vpop.permute.xlu0 %1884
      %vm1886 = vcmask 769024
      %v1887 = vsel %vm1886, %v1867, %v1869
      %v1888 = vsel %vm1886, %v1869, %v1871
      %v1889 = vsel %vm1886, %v1871, %v1873
      %v1890 = vsel %vm1886, %v1873, %v1875
      %v1891 = vsel %vm1886, %v1875, %v1877
      %v1892 = vsel %vm1886, %v1877, %v1879
      %v1893 = vsel %vm1886, %v1879, %v1881
      %v1894 = vsel %vm1886, %v1881, %v1883
      %v1895 = vsel %vm1886, %v1883, %v1885
      %v1897 = vsel %vm665, %v1842, 0
      %v1900 = vsel %vm665, %v1843, 0
      %v1903 = vsel %vm672, %v1887, 0
      %v1906 = vsel %vm672, %v1888, 0
      %v1909 = vsel %vm672, %v1889, 0
      %v1912 = vsel %vm672, %v1890, 0
      %v1915 = vsel %vm672, %v1891, 0
      %v1918 = vsel %vm672, %v1892, 0
      %v1921 = vsel %vm672, %v1893, 0
      %v1924 = vsel %vm672, %v1894, 0
      %v1927 = vsel %vm672, %v1895, 0
      %v1930 = vsel %vm672, %v1885, 0
      %1932 = vmatpush.bf16.msra.mxu0 0
      %1933 = vmatpush.bf16.msra.mxu0 0
      %1934 = vmatpush.bf16.msra.mxu0 0
      %1935 = vmatpush.bf16.msra.mxu0 0
      %1936 = vmatpush.bf16.msra.mxu0 0
      %1937 = vmatpush.bf16.msra.mxu0 0
      %1938 = vmatpush.bf16.msra.mxu0 0
      %1939 = vmatpush.bf16.msra.mxu0 %v1903
      %1940 = vmatmul.bf16.gmra.mxu0 %v1897
      %v1941 = vpop.f32.mrf.mxu0
      %v1942 = vadd.f32 0.0, %v1941
      %v1943 = vpop.f32.mrf.mxu0
      %v1944 = vadd.f32 0.0, %v1943
      %1945 = vmatmul.bf16.gmra.mxu0 %v1900
      %v1946 = vpop.f32.mrf.mxu0
      %v1947 = vadd.f32 0.0, %v1946
      %v1948 = vpop.f32.mrf.mxu0
      %v1949 = vadd.f32 0.0, %v1948
      %1950 = vdwg.mxu0
      %1951 = vmatpush.bf16.msra.mxu0 0
      %1952 = vmatpush.bf16.msra.mxu0 0
      %1953 = vmatpush.bf16.msra.mxu0 0
      %1954 = vmatpush.bf16.msra.mxu0 0
      %1955 = vmatpush.bf16.msra.mxu0 0
      %1956 = vmatpush.bf16.msra.mxu0 0
      %1957 = vmatpush.bf16.msra.mxu0 0
      %1958 = vmatpush.bf16.msra.mxu0 %v1906
      %1959 = vmatmul.bf16.gmra.mxu0 %v1897
      %v1960 = vpop.f32.mrf.mxu0
      %v1961 = vadd.f32 0.0, %v1960
      %v1962 = vpop.f32.mrf.mxu0
      %v1963 = vadd.f32 0.0, %v1962
      %1964 = vmatmul.bf16.gmra.mxu0 %v1900
      %v1965 = vpop.f32.mrf.mxu0
      %v1966 = vadd.f32 0.0, %v1965
      %v1967 = vpop.f32.mrf.mxu0
      %v1968 = vadd.f32 0.0, %v1967
      %1969 = vdwg.mxu0
      %1970 = vmatpush.bf16.msra.mxu0 0
      %1971 = vmatpush.bf16.msra.mxu0 0
      %1972 = vmatpush.bf16.msra.mxu0 0
      %1973 = vmatpush.bf16.msra.mxu0 0
      %1974 = vmatpush.bf16.msra.mxu0 0
      %1975 = vmatpush.bf16.msra.mxu0 0
      %1976 = vmatpush.bf16.msra.mxu0 0
      %1977 = vmatpush.bf16.msra.mxu0 %v1909
      %1978 = vmatmul.bf16.gmra.mxu0 %v1897
      %v1979 = vpop.f32.mrf.mxu0
      %v1980 = vadd.f32 0.0, %v1979
      %v1981 = vpop.f32.mrf.mxu0
      %v1982 = vadd.f32 0.0, %v1981
      %1983 = vmatmul.bf16.gmra.mxu0 %v1900
      %v1984 = vpop.f32.mrf.mxu0
      %v1985 = vadd.f32 0.0, %v1984
      %v1986 = vpop.f32.mrf.mxu0
      %v1987 = vadd.f32 0.0, %v1986
      %1988 = vdwg.mxu0
      %1989 = vmatpush.bf16.msra.mxu0 0
      %1990 = vmatpush.bf16.msra.mxu0 0
      %1991 = vmatpush.bf16.msra.mxu0 0
      %1992 = vmatpush.bf16.msra.mxu0 0
      %1993 = vmatpush.bf16.msra.mxu0 0
      %1994 = vmatpush.bf16.msra.mxu0 0
      %1995 = vmatpush.bf16.msra.mxu0 0
      %1996 = vmatpush.bf16.msra.mxu0 %v1912
      %1997 = vmatmul.bf16.gmra.mxu0 %v1897
      %v1998 = vpop.f32.mrf.mxu0
      %v1999 = vadd.f32 0.0, %v1998
      %v2000 = vpop.f32.mrf.mxu0
      %v2001 = vadd.f32 0.0, %v2000
      %2002 = vmatmul.bf16.gmra.mxu0 %v1900
      %v2003 = vpop.f32.mrf.mxu0
      %v2004 = vadd.f32 0.0, %v2003
      %v2005 = vpop.f32.mrf.mxu0
      %v2006 = vadd.f32 0.0, %v2005
      %2007 = vdwg.mxu0
      %2008 = vmatpush.bf16.msra.mxu0 0
      %2009 = vmatpush.bf16.msra.mxu0 0
      %2010 = vmatpush.bf16.msra.mxu0 0
      %2011 = vmatpush.bf16.msra.mxu0 0
      %2012 = vmatpush.bf16.msra.mxu0 0
      %2013 = vmatpush.bf16.msra.mxu0 0
      %2014 = vmatpush.bf16.msra.mxu0 0
      %2015 = vmatpush.bf16.msra.mxu0 %v1915
      %2016 = vmatmul.bf16.gmra.mxu0 %v1897
      %v2017 = vpop.f32.mrf.mxu0
      %v2018 = vadd.f32 0.0, %v2017
      %v2019 = vpop.f32.mrf.mxu0
      %v2020 = vadd.f32 0.0, %v2019
      %2021 = vmatmul.bf16.gmra.mxu0 %v1900
      %v2022 = vpop.f32.mrf.mxu0
      %v2023 = vadd.f32 0.0, %v2022
      %v2024 = vpop.f32.mrf.mxu0
      %v2025 = vadd.f32 0.0, %v2024
      %2026 = vdwg.mxu0
      %2027 = vmatpush.bf16.msra.mxu0 0
      %2028 = vmatpush.bf16.msra.mxu0 0
      %2029 = vmatpush.bf16.msra.mxu0 0
      %2030 = vmatpush.bf16.msra.mxu0 0
      %2031 = vmatpush.bf16.msra.mxu0 0
      %2032 = vmatpush.bf16.msra.mxu0 0
      %2033 = vmatpush.bf16.msra.mxu0 0
      %2034 = vmatpush.bf16.msra.mxu0 %v1918
      %2035 = vmatmul.bf16.gmra.mxu0 %v1897
      %v2036 = vpop.f32.mrf.mxu0
      %v2037 = vadd.f32 0.0, %v2036
      %v2038 = vpop.f32.mrf.mxu0
      %v2039 = vadd.f32 0.0, %v2038
      %2040 = vmatmul.bf16.gmra.mxu0 %v1900
      %v2041 = vpop.f32.mrf.mxu0
      %v2042 = vadd.f32 0.0, %v2041
      %v2043 = vpop.f32.mrf.mxu0
      %v2044 = vadd.f32 0.0, %v2043
      %2045 = vdwg.mxu0
      %2046 = vmatpush.bf16.msra.mxu0 0
      %2047 = vmatpush.bf16.msra.mxu0 0
      %2048 = vmatpush.bf16.msra.mxu0 0
      %2049 = vmatpush.bf16.msra.mxu0 0
      %2050 = vmatpush.bf16.msra.mxu0 0
      %2051 = vmatpush.bf16.msra.mxu0 0
      %2052 = vmatpush.bf16.msra.mxu0 0
      %2053 = vmatpush.bf16.msra.mxu0 %v1921
      %2054 = vmatmul.bf16.gmra.mxu0 %v1897
      %v2055 = vpop.f32.mrf.mxu0
      %v2056 = vadd.f32 0.0, %v2055
      %v2057 = vpop.f32.mrf.mxu0
      %v2058 = vadd.f32 0.0, %v2057
      %2059 = vmatmul.bf16.gmra.mxu0 %v1900
      %v2060 = vpop.f32.mrf.mxu0
      %v2061 = vadd.f32 0.0, %v2060
      %v2062 = vpop.f32.mrf.mxu0
      %v2063 = vadd.f32 0.0, %v2062
      %2064 = vdwg.mxu0
      %2065 = vmatpush.bf16.msra.mxu0 0
      %2066 = vmatpush.bf16.msra.mxu0 0
      %2067 = vmatpush.bf16.msra.mxu0 0
      %2068 = vmatpush.bf16.msra.mxu0 0
      %2069 = vmatpush.bf16.msra.mxu0 0
      %2070 = vmatpush.bf16.msra.mxu0 0
      %2071 = vmatpush.bf16.msra.mxu0 0
      %2072 = vmatpush.bf16.msra.mxu0 %v1924
      %2073 = vmatmul.bf16.gmra.mxu0 %v1897
      %v2074 = vpop.f32.mrf.mxu0
      %v2075 = vadd.f32 0.0, %v2074
      %v2076 = vpop.f32.mrf.mxu0
      %v2077 = vadd.f32 0.0, %v2076
      %2078 = vmatmul.bf16.gmra.mxu0 %v1900
      %v2079 = vpop.f32.mrf.mxu0
      %v2080 = vadd.f32 0.0, %v2079
      %v2081 = vpop.f32.mrf.mxu0
      %v2082 = vadd.f32 0.0, %v2081
      %2083 = vdwg.mxu0
      %2084 = vmatpush.bf16.msra.mxu0 0
      %2085 = vmatpush.bf16.msra.mxu0 0
      %2086 = vmatpush.bf16.msra.mxu0 0
      %2087 = vmatpush.bf16.msra.mxu0 0
      %2088 = vmatpush.bf16.msra.mxu0 0
      %2089 = vmatpush.bf16.msra.mxu0 0
      %2090 = vmatpush.bf16.msra.mxu0 0
      %2091 = vmatpush.bf16.msra.mxu0 %v1927
      %2092 = vmatmul.bf16.gmra.mxu0 %v1897
      %v2093 = vpop.f32.mrf.mxu0
      %v2094 = vadd.f32 0.0, %v2093
      %v2095 = vpop.f32.mrf.mxu0
      %v2096 = vadd.f32 0.0, %v2095
      %2097 = vmatmul.bf16.gmra.mxu0 %v1900
      %v2098 = vpop.f32.mrf.mxu0
      %v2099 = vadd.f32 0.0, %v2098
      %v2100 = vpop.f32.mrf.mxu0
      %v2101 = vadd.f32 0.0, %v2100
      %2102 = vdwg.mxu0
      %2103 = vmatpush.bf16.msra.mxu0 0
      %2104 = vmatpush.bf16.msra.mxu0 0
      %2105 = vmatpush.bf16.msra.mxu0 0
      %2106 = vmatpush.bf16.msra.mxu0 0
      %2107 = vmatpush.bf16.msra.mxu0 0
      %2108 = vmatpush.bf16.msra.mxu0 0
      %2109 = vmatpush.bf16.msra.mxu0 0
      %2110 = vmatpush.bf16.msra.mxu0 %v1930
      %2111 = vmatmul.bf16.gmra.mxu0 %v1897
      %v2112 = vpop.f32.mrf.mxu0
      %v2113 = vadd.f32 0.0, %v2112
      %v2114 = vpop.f32.mrf.mxu0
      %v2115 = vadd.f32 0.0, %v2114
      %2116 = vmatmul.bf16.gmra.mxu0 %v1900
      %v2117 = vpop.f32.mrf.mxu0
      %v2118 = vadd.f32 0.0, %v2117
      %v2119 = vpop.f32.mrf.mxu0
      %v2120 = vadd.f32 0.0, %v2119
      %2121 = vdwg.mxu0
      %v2122 = vadd.f32 %v1789, %v1942
      %v2123 = vadd.f32 %v1790, %v1961
      %v2124 = vadd.f32 %v1791, %v1980
      %v2125 = vadd.f32 %v1792, %v1999
      %v2126 = vadd.f32 %v1793, %v2018
      %v2127 = vadd.f32 %v1794, %v2037
      %v2128 = vadd.f32 %v1795, %v2056
      %v2129 = vadd.f32 %v1796, %v2075
      %v2130 = vadd.f32 %v1797, %v2094
      %v2131 = vadd.f32 %v1798, %v2113
      %v2132 = vadd.f32 %v1799, %v1944
      %v2133 = vadd.f32 %v1800, %v1963
      %v2134 = vadd.f32 %v1801, %v1982
      %v2135 = vadd.f32 %v1802, %v2001
      %v2136 = vadd.f32 %v1803, %v2020
      %v2137 = vadd.f32 %v1804, %v2039
      %v2138 = vadd.f32 %v1805, %v2058
      %v2139 = vadd.f32 %v1806, %v2077
      %v2140 = vadd.f32 %v1807, %v2096
      %v2141 = vadd.f32 %v1808, %v2115
      %v2142 = vadd.f32 %v1809, %v1947
      %v2143 = vadd.f32 %v1810, %v1966
      %v2144 = vadd.f32 %v1811, %v1985
      %v2145 = vadd.f32 %v1812, %v2004
      %v2146 = vadd.f32 %v1813, %v2023
      %v2147 = vadd.f32 %v1814, %v2042
      %v2148 = vadd.f32 %v1815, %v2061
      %v2149 = vadd.f32 %v1816, %v2080
      %v2150 = vadd.f32 %v1817, %v2099
      %v2151 = vadd.f32 %v1818, %v2118
      %v2152 = vadd.f32 %v1819, %v1949
      %v2153 = vadd.f32 %v1820, %v1968
      %v2154 = vadd.f32 %v1821, %v1987
      %v2155 = vadd.f32 %v1822, %v2006
      %v2156 = vadd.f32 %v1823, %v2025
      %v2157 = vadd.f32 %v1824, %v2044
      %v2158 = vadd.f32 %v1825, %v2063
      %v2159 = vadd.f32 %v1826, %v2082
      %v2160 = vadd.f32 %v1827, %v2101
      %v2161 = vadd.f32 %v1828, %v2120
      %2162 = vst [vmem:[#allocation2] sm:$0xff] %v2122
      %2163 = vst [vmem:[#allocation2 + $0x8] sm:$0xff] %v2123
      %2164 = vst [vmem:[#allocation2 + $0x10] sm:$0xff] %v2124
      %2165 = vst [vmem:[#allocation2 + $0x18] sm:$0xff] %v2125
      %2166 = vst [vmem:[#allocation2 + $0x20] sm:$0xff] %v2126
      %2167 = vst [vmem:[#allocation2 + $0x28] sm:$0xff] %v2127
      %2168 = vst [vmem:[#allocation2 + $0x30] sm:$0xff] %v2128
      %2169 = vst [vmem:[#allocation2 + $0x38] sm:$0xff] %v2129
      %2170 = vst [vmem:[#allocation2 + $0x40] sm:$0xff] %v2130
      %2171 = vst.msk [vmem:[#allocation2 + $0x48] sm:$0xff] %vm563, %v2131
      %2172 = vst [vmem:[#allocation2 + $0x50] sm:$0xff] %v2132
      %2173 = vst [vmem:[#allocation2 + $0x58] sm:$0xff] %v2133
      %2174 = vst [vmem:[#allocation2 + $0x60] sm:$0xff] %v2134
      %2175 = vst [vmem:[#allocation2 + $0x68] sm:$0xff] %v2135
      %2176 = vst [vmem:[#allocation2 + $0x70] sm:$0xff] %v2136
      %2177 = vst [vmem:[#allocation2 + $0x78] sm:$0xff] %v2137
      %2178 = vst [vmem:[#allocation2 + $0x80] sm:$0xff] %v2138
      %2179 = vst [vmem:[#allocation2 + $0x88] sm:$0xff] %v2139
      %2180 = vst [vmem:[#allocation2 + $0x90] sm:$0xff] %v2140
      %2181 = vst.msk [vmem:[#allocation2 + $0x98] sm:$0xff] %vm563, %v2141
      %2182 = vst [vmem:[#allocation2 + $0xa0] sm:$0xff] %v2142
      %2183 = vst [vmem:[#allocation2 + $0xa8] sm:$0xff] %v2143
      %2184 = vst [vmem:[#allocation2 + $0xb0] sm:$0xff] %v2144
      %2185 = vst [vmem:[#allocation2 + $0xb8] sm:$0xff] %v2145
      %2186 = vst [vmem:[#allocation2 + $0xc0] sm:$0xff] %v2146
      %2187 = vst [vmem:[#allocation2 + $0xc8] sm:$0xff] %v2147
      %2188 = vst [vmem:[#allocation2 + $0xd0] sm:$0xff] %v2148
      %2189 = vst [vmem:[#allocation2 + $0xd8] sm:$0xff] %v2149
      %2190 = vst [vmem:[#allocation2 + $0xe0] sm:$0xff] %v2150
      %2191 = vst.msk [vmem:[#allocation2 + $0xe8] sm:$0xff] %vm563, %v2151
      %2192 = vst [vmem:[#allocation2 + $0xf0] sm:$0xff] %v2152
      %2193 = vst [vmem:[#allocation2 + $0xf8] sm:$0xff] %v2153
      %2194 = vst [vmem:[#allocation2 + $0x100] sm:$0xff] %v2154
      %2195 = vst [vmem:[#allocation2 + $0x108] sm:$0xff] %v2155
      %2196 = vst [vmem:[#allocation2 + $0x110] sm:$0xff] %v2156
      %2197 = vst [vmem:[#allocation2 + $0x118] sm:$0xff] %v2157
      %2198 = vst [vmem:[#allocation2 + $0x120] sm:$0xff] %v2158
      %2199 = vst [vmem:[#allocation2 + $0x128] sm:$0xff] %v2159
      %2200 = vst [vmem:[#allocation2 + $0x130] sm:$0xff] %v2160
      %2201 = vst.msk [vmem:[#allocation2 + $0x138] sm:$0xff] %vm563, %v2161
      %v2202 = vld [vmem:[#allocation2] sm:$0xff]
      %v2203 = vld [vmem:[#allocation2 + $0x8] sm:$0xff]
      %v2204 = vld [vmem:[#allocation2 + $0x10] sm:$0xff]
      %v2205 = vld [vmem:[#allocation2 + $0x18] sm:$0xff]
      %v2206 = vld [vmem:[#allocation2 + $0x20] sm:$0xff]
      %v2207 = vld [vmem:[#allocation2 + $0x28] sm:$0xff]
      %v2208 = vld [vmem:[#allocation2 + $0x30] sm:$0xff]
      %v2209 = vld [vmem:[#allocation2 + $0x38] sm:$0xff]
      %v2210 = vld [vmem:[#allocation2 + $0x40] sm:$0xff]
      %v2211 = vld [vmem:[#allocation2 + $0x48] sm:$0xff]
      %v2212 = vld [vmem:[#allocation2 + $0x50] sm:$0xff]
      %v2213 = vld [vmem:[#allocation2 + $0x58] sm:$0xff]
      %v2214 = vld [vmem:[#allocation2 + $0x60] sm:$0xff]
      %v2215 = vld [vmem:[#allocation2 + $0x68] sm:$0xff]
      %v2216 = vld [vmem:[#allocation2 + $0x70] sm:$0xff]
      %v2217 = vld [vmem:[#allocation2 + $0x78] sm:$0xff]
      %v2218 = vld [vmem:[#allocation2 + $0x80] sm:$0xff]
      %v2219 = vld [vmem:[#allocation2 + $0x88] sm:$0xff]
      %v2220 = vld [vmem:[#allocation2 + $0x90] sm:$0xff]
      %v2221 = vld [vmem:[#allocation2 + $0x98] sm:$0xff]
      %v2222 = vld [vmem:[#allocation2 + $0xa0] sm:$0xff]
      %v2223 = vld [vmem:[#allocation2 + $0xa8] sm:$0xff]
      %v2224 = vld [vmem:[#allocation2 + $0xb0] sm:$0xff]
      %v2225 = vld [vmem:[#allocation2 + $0xb8] sm:$0xff]
      %v2226 = vld [vmem:[#allocation2 + $0xc0] sm:$0xff]
      %v2227 = vld [vmem:[#allocation2 + $0xc8] sm:$0xff]
      %v2228 = vld [vmem:[#allocation2 + $0xd0] sm:$0xff]
      %v2229 = vld [vmem:[#allocation2 + $0xd8] sm:$0xff]
      %v2230 = vld [vmem:[#allocation2 + $0xe0] sm:$0xff]
      %v2231 = vld [vmem:[#allocation2 + $0xe8] sm:$0xff]
      %v2232 = vld [vmem:[#allocation2 + $0xf0] sm:$0xff]
      %v2233 = vld [vmem:[#allocation2 + $0xf8] sm:$0xff]
      %v2234 = vld [vmem:[#allocation2 + $0x100] sm:$0xff]
      %v2235 = vld [vmem:[#allocation2 + $0x108] sm:$0xff]
      %v2236 = vld [vmem:[#allocation2 + $0x110] sm:$0xff]
      %v2237 = vld [vmem:[#allocation2 + $0x118] sm:$0xff]
      %v2238 = vld [vmem:[#allocation2 + $0x120] sm:$0xff]
      %v2239 = vld [vmem:[#allocation2 + $0x128] sm:$0xff]
      %v2240 = vld [vmem:[#allocation2 + $0x130] sm:$0xff]
      %v2241 = vld [vmem:[#allocation2 + $0x138] sm:$0xff]
      %s2242 = scalar_lea.vmem %s1, 64
      %v2243 = vld [vmem:[%s2242] sm:$0xf]
      %v2244 = vld [vmem:[%s2242 + $0x4] sm:$0xf]
      %v2245 = vld [vmem:[%s2242 + $0x8] sm:$0xf]
      %v2246 = vld [vmem:[%s2242 + $0xc] sm:$0xf]
      %v2251 = vunpack.c.l.b16 %v2243
      %v2252 = vunpack.c.l.b16 %v2244
      %v2253 = vunpack.c.l.b16 %v2245
      %v2254 = vunpack.c.l.b16 %v2246
      %v2255 = vpack.c.b16 %v2252, %v2251
      %v2256 = vpack.c.b16 %v2254, %v2253
      %2257 = vst [vmem:[#allocation1] ss:$9 sm:$0xff] %v595
      %v2258 = vld [vmem:[#allocation1] sm:$0xff]
      %v2260 = vld [vmem:[#allocation1 + $0x9] sm:$0xff]
      %v2262 = vld [vmem:[#allocation1 + $0x12] sm:$0xff]
      %v2264 = vld [vmem:[#allocation1 + $0x1b] sm:$0xff]
      %v2266 = vld [vmem:[#allocation1 + $0x24] sm:$0xff]
      %v2268 = vld [vmem:[#allocation1 + $0x2d] sm:$0xff]
      %v2270 = vld [vmem:[#allocation1 + $0x36] sm:$0xff]
      %v2272 = vld [vmem:[#allocation1 + $0x3f] sm:$0xff]
      %2274 = vst [vmem:[#allocation1] ss:$9 sm:$0xff] %v596
      %v2275 = vld [vmem:[#allocation1] sm:$0xff]
      %v2277 = vld [vmem:[#allocation1 + $0x9] sm:$0xff]
      %2279 = vrot.lane.b32.xlu0 %v2258, 93
      %v2280 = vpop.permute.xlu0 %2279
      %2281 = vrot.lane.b32.xlu0 %v2260, 93
      %v2282 = vpop.permute.xlu0 %2281
      %2283 = vrot.lane.b32.xlu0 %v2262, 93
      %v2284 = vpop.permute.xlu0 %2283
      %2285 = vrot.lane.b32.xlu0 %v2264, 93
      %v2286 = vpop.permute.xlu0 %2285
      %2287 = vrot.lane.b32.xlu0 %v2266, 93
      %v2288 = vpop.permute.xlu0 %2287
      %2289 = vrot.lane.b32.xlu0 %v2268, 93
      %v2290 = vpop.permute.xlu0 %2289
      %2291 = vrot.lane.b32.xlu0 %v2270, 93
      %v2292 = vpop.permute.xlu0 %2291
      %2293 = vrot.lane.b32.xlu0 %v2272, 93
      %v2294 = vpop.permute.xlu0 %2293
      %2295 = vrot.lane.b32.xlu0 %v2275, 93
      %v2296 = vpop.permute.xlu0 %2295
      %2297 = vrot.lane.b32.xlu0 %v2277, 93
      %v2298 = vpop.permute.xlu0 %2297
      %vm2299 = vcmask 760832
      %v2300 = vsel %vm2299, %v2280, %v2282
      %v2301 = vsel %vm2299, %v2282, %v2284
      %v2302 = vsel %vm2299, %v2284, %v2286
      %v2303 = vsel %vm2299, %v2286, %v2288
      %v2304 = vsel %vm2299, %v2288, %v2290
      %v2305 = vsel %vm2299, %v2290, %v2292
      %v2306 = vsel %vm2299, %v2292, %v2294
      %v2307 = vsel %vm2299, %v2294, %v2296
      %v2308 = vsel %vm2299, %v2296, %v2298
      %v2310 = vsel %vm665, %v2255, 0
      %v2313 = vsel %vm665, %v2256, 0
      %v2316 = vsel %vm672, %v2300, 0
      %v2319 = vsel %vm672, %v2301, 0
      %v2322 = vsel %vm672, %v2302, 0
      %v2325 = vsel %vm672, %v2303, 0
      %v2328 = vsel %vm672, %v2304, 0
      %v2331 = vsel %vm672, %v2305, 0
      %v2334 = vsel %vm672, %v2306, 0
      %v2337 = vsel %vm672, %v2307, 0
      %v2340 = vsel %vm672, %v2308, 0
      %v2343 = vsel %vm672, %v2298, 0
      %2345 = vmatpush.bf16.msra.mxu0 0
      %2346 = vmatpush.bf16.msra.mxu0 0
      %2347 = vmatpush.bf16.msra.mxu0 0
      %2348 = vmatpush.bf16.msra.mxu0 0
      %2349 = vmatpush.bf16.msra.mxu0 0
      %2350 = vmatpush.bf16.msra.mxu0 0
      %2351 = vmatpush.bf16.msra.mxu0 0
      %2352 = vmatpush.bf16.msra.mxu0 %v2316
      %2353 = vmatmul.bf16.gmra.mxu0 %v2310
      %v2354 = vpop.f32.mrf.mxu0
      %v2355 = vadd.f32 0.0, %v2354
      %v2356 = vpop.f32.mrf.mxu0
      %v2357 = vadd.f32 0.0, %v2356
      %2358 = vmatmul.bf16.gmra.mxu0 %v2313
      %v2359 = vpop.f32.mrf.mxu0
      %v2360 = vadd.f32 0.0, %v2359
      %v2361 = vpop.f32.mrf.mxu0
      %v2362 = vadd.f32 0.0, %v2361
      %2363 = vdwg.mxu0
      %2364 = vmatpush.bf16.msra.mxu0 0
      %2365 = vmatpush.bf16.msra.mxu0 0
      %2366 = vmatpush.bf16.msra.mxu0 0
      %2367 = vmatpush.bf16.msra.mxu0 0
      %2368 = vmatpush.bf16.msra.mxu0 0
      %2369 = vmatpush.bf16.msra.mxu0 0
      %2370 = vmatpush.bf16.msra.mxu0 0
      %2371 = vmatpush.bf16.msra.mxu0 %v2319
      %2372 = vmatmul.bf16.gmra.mxu0 %v2310
      %v2373 = vpop.f32.mrf.mxu0
      %v2374 = vadd.f32 0.0, %v2373
      %v2375 = vpop.f32.mrf.mxu0
      %v2376 = vadd.f32 0.0, %v2375
      %2377 = vmatmul.bf16.gmra.mxu0 %v2313
      %v2378 = vpop.f32.mrf.mxu0
      %v2379 = vadd.f32 0.0, %v2378
      %v2380 = vpop.f32.mrf.mxu0
      %v2381 = vadd.f32 0.0, %v2380
      %2382 = vdwg.mxu0
      %2383 = vmatpush.bf16.msra.mxu0 0
      %2384 = vmatpush.bf16.msra.mxu0 0
      %2385 = vmatpush.bf16.msra.mxu0 0
      %2386 = vmatpush.bf16.msra.mxu0 0
      %2387 = vmatpush.bf16.msra.mxu0 0
      %2388 = vmatpush.bf16.msra.mxu0 0
      %2389 = vmatpush.bf16.msra.mxu0 0
      %2390 = vmatpush.bf16.msra.mxu0 %v2322
      %2391 = vmatmul.bf16.gmra.mxu0 %v2310
      %v2392 = vpop.f32.mrf.mxu0
      %v2393 = vadd.f32 0.0, %v2392
      %v2394 = vpop.f32.mrf.mxu0
      %v2395 = vadd.f32 0.0, %v2394
      %2396 = vmatmul.bf16.gmra.mxu0 %v2313
      %v2397 = vpop.f32.mrf.mxu0
      %v2398 = vadd.f32 0.0, %v2397
      %v2399 = vpop.f32.mrf.mxu0
      %v2400 = vadd.f32 0.0, %v2399
      %2401 = vdwg.mxu0
      %2402 = vmatpush.bf16.msra.mxu0 0
      %2403 = vmatpush.bf16.msra.mxu0 0
      %2404 = vmatpush.bf16.msra.mxu0 0
      %2405 = vmatpush.bf16.msra.mxu0 0
      %2406 = vmatpush.bf16.msra.mxu0 0
      %2407 = vmatpush.bf16.msra.mxu0 0
      %2408 = vmatpush.bf16.msra.mxu0 0
      %2409 = vmatpush.bf16.msra.mxu0 %v2325
      %2410 = vmatmul.bf16.gmra.mxu0 %v2310
      %v2411 = vpop.f32.mrf.mxu0
      %v2412 = vadd.f32 0.0, %v2411
      %v2413 = vpop.f32.mrf.mxu0
      %v2414 = vadd.f32 0.0, %v2413
      %2415 = vmatmul.bf16.gmra.mxu0 %v2313
      %v2416 = vpop.f32.mrf.mxu0
      %v2417 = vadd.f32 0.0, %v2416
      %v2418 = vpop.f32.mrf.mxu0
      %v2419 = vadd.f32 0.0, %v2418
      %2420 = vdwg.mxu0
      %2421 = vmatpush.bf16.msra.mxu0 0
      %2422 = vmatpush.bf16.msra.mxu0 0
      %2423 = vmatpush.bf16.msra.mxu0 0
      %2424 = vmatpush.bf16.msra.mxu0 0
      %2425 = vmatpush.bf16.msra.mxu0 0
      %2426 = vmatpush.bf16.msra.mxu0 0
      %2427 = vmatpush.bf16.msra.mxu0 0
      %2428 = vmatpush.bf16.msra.mxu0 %v2328
      %2429 = vmatmul.bf16.gmra.mxu0 %v2310
      %v2430 = vpop.f32.mrf.mxu0
      %v2431 = vadd.f32 0.0, %v2430
      %v2432 = vpop.f32.mrf.mxu0
      %v2433 = vadd.f32 0.0, %v2432
      %2434 = vmatmul.bf16.gmra.mxu0 %v2313
      %v2435 = vpop.f32.mrf.mxu0
      %v2436 = vadd.f32 0.0, %v2435
      %v2437 = vpop.f32.mrf.mxu0
      %v2438 = vadd.f32 0.0, %v2437
      %2439 = vdwg.mxu0
      %2440 = vmatpush.bf16.msra.mxu0 0
      %2441 = vmatpush.bf16.msra.mxu0 0
      %2442 = vmatpush.bf16.msra.mxu0 0
      %2443 = vmatpush.bf16.msra.mxu0 0
      %2444 = vmatpush.bf16.msra.mxu0 0
      %2445 = vmatpush.bf16.msra.mxu0 0
      %2446 = vmatpush.bf16.msra.mxu0 0
      %2447 = vmatpush.bf16.msra.mxu0 %v2331
      %2448 = vmatmul.bf16.gmra.mxu0 %v2310
      %v2449 = vpop.f32.mrf.mxu0
      %v2450 = vadd.f32 0.0, %v2449
      %v2451 = vpop.f32.mrf.mxu0
      %v2452 = vadd.f32 0.0, %v2451
      %2453 = vmatmul.bf16.gmra.mxu0 %v2313
      %v2454 = vpop.f32.mrf.mxu0
      %v2455 = vadd.f32 0.0, %v2454
      %v2456 = vpop.f32.mrf.mxu0
      %v2457 = vadd.f32 0.0, %v2456
      %2458 = vdwg.mxu0
      %2459 = vmatpush.bf16.msra.mxu0 0
      %2460 = vmatpush.bf16.msra.mxu0 0
      %2461 = vmatpush.bf16.msra.mxu0 0
      %2462 = vmatpush.bf16.msra.mxu0 0
      %2463 = vmatpush.bf16.msra.mxu0 0
      %2464 = vmatpush.bf16.msra.mxu0 0
      %2465 = vmatpush.bf16.msra.mxu0 0
      %2466 = vmatpush.bf16.msra.mxu0 %v2334
      %2467 = vmatmul.bf16.gmra.mxu0 %v2310
      %v2468 = vpop.f32.mrf.mxu0
      %v2469 = vadd.f32 0.0, %v2468
      %v2470 = vpop.f32.mrf.mxu0
      %v2471 = vadd.f32 0.0, %v2470
      %2472 = vmatmul.bf16.gmra.mxu0 %v2313
      %v2473 = vpop.f32.mrf.mxu0
      %v2474 = vadd.f32 0.0, %v2473
      %v2475 = vpop.f32.mrf.mxu0
      %v2476 = vadd.f32 0.0, %v2475
      %2477 = vdwg.mxu0
      %2478 = vmatpush.bf16.msra.mxu0 0
      %2479 = vmatpush.bf16.msra.mxu0 0
      %2480 = vmatpush.bf16.msra.mxu0 0
      %2481 = vmatpush.bf16.msra.mxu0 0
      %2482 = vmatpush.bf16.msra.mxu0 0
      %2483 = vmatpush.bf16.msra.mxu0 0
      %2484 = vmatpush.bf16.msra.mxu0 0
      %2485 = vmatpush.bf16.msra.mxu0 %v2337
      %2486 = vmatmul.bf16.gmra.mxu0 %v2310
      %v2487 = vpop.f32.mrf.mxu0
      %v2488 = vadd.f32 0.0, %v2487
      %v2489 = vpop.f32.mrf.mxu0
      %v2490 = vadd.f32 0.0, %v2489
      %2491 = vmatmul.bf16.gmra.mxu0 %v2313
      %v2492 = vpop.f32.mrf.mxu0
      %v2493 = vadd.f32 0.0, %v2492
      %v2494 = vpop.f32.mrf.mxu0
      %v2495 = vadd.f32 0.0, %v2494
      %2496 = vdwg.mxu0
      %2497 = vmatpush.bf16.msra.mxu0 0
      %2498 = vmatpush.bf16.msra.mxu0 0
      %2499 = vmatpush.bf16.msra.mxu0 0
      %2500 = vmatpush.bf16.msra.mxu0 0
      %2501 = vmatpush.bf16.msra.mxu0 0
      %2502 = vmatpush.bf16.msra.mxu0 0
      %2503 = vmatpush.bf16.msra.mxu0 0
      %2504 = vmatpush.bf16.msra.mxu0 %v2340
      %2505 = vmatmul.bf16.gmra.mxu0 %v2310
      %v2506 = vpop.f32.mrf.mxu0
      %v2507 = vadd.f32 0.0, %v2506
      %v2508 = vpop.f32.mrf.mxu0
      %v2509 = vadd.f32 0.0, %v2508
      %2510 = vmatmul.bf16.gmra.mxu0 %v2313
      %v2511 = vpop.f32.mrf.mxu0
      %v2512 = vadd.f32 0.0, %v2511
      %v2513 = vpop.f32.mrf.mxu0
      %v2514 = vadd.f32 0.0, %v2513
      %2515 = vdwg.mxu0
      %2516 = vmatpush.bf16.msra.mxu0 0
      %2517 = vmatpush.bf16.msra.mxu0 0
      %2518 = vmatpush.bf16.msra.mxu0 0
      %2519 = vmatpush.bf16.msra.mxu0 0
      %2520 = vmatpush.bf16.msra.mxu0 0
      %2521 = vmatpush.bf16.msra.mxu0 0
      %2522 = vmatpush.bf16.msra.mxu0 0
      %2523 = vmatpush.bf16.msra.mxu0 %v2343
      %2524 = vmatmul.bf16.gmra.mxu0 %v2310
      %v2525 = vpop.f32.mrf.mxu0
      %v2526 = vadd.f32 0.0, %v2525
      %v2527 = vpop.f32.mrf.mxu0
      %v2528 = vadd.f32 0.0, %v2527
      %2529 = vmatmul.bf16.gmra.mxu0 %v2313
      %v2530 = vpop.f32.mrf.mxu0
      %v2531 = vadd.f32 0.0, %v2530
      %v2532 = vpop.f32.mrf.mxu0
      %v2533 = vadd.f32 0.0, %v2532
      %2534 = vdwg.mxu0
      %v2535 = vadd.f32 %v2202, %v2355
      %v2536 = vadd.f32 %v2203, %v2374
      %v2537 = vadd.f32 %v2204, %v2393
      %v2538 = vadd.f32 %v2205, %v2412
      %v2539 = vadd.f32 %v2206, %v2431
      %v2540 = vadd.f32 %v2207, %v2450
      %v2541 = vadd.f32 %v2208, %v2469
      %v2542 = vadd.f32 %v2209, %v2488
      %v2543 = vadd.f32 %v2210, %v2507
      %v2544 = vadd.f32 %v2211, %v2526
      %v2545 = vadd.f32 %v2212, %v2357
      %v2546 = vadd.f32 %v2213, %v2376
      %v2547 = vadd.f32 %v2214, %v2395
      %v2548 = vadd.f32 %v2215, %v2414
      %v2549 = vadd.f32 %v2216, %v2433
      %v2550 = vadd.f32 %v2217, %v2452
      %v2551 = vadd.f32 %v2218, %v2471
      %v2552 = vadd.f32 %v2219, %v2490
      %v2553 = vadd.f32 %v2220, %v2509
      %v2554 = vadd.f32 %v2221, %v2528
      %v2555 = vadd.f32 %v2222, %v2360
      %v2556 = vadd.f32 %v2223, %v2379
      %v2557 = vadd.f32 %v2224, %v2398
      %v2558 = vadd.f32 %v2225, %v2417
      %v2559 = vadd.f32 %v2226, %v2436
      %v2560 = vadd.f32 %v2227, %v2455
      %v2561 = vadd.f32 %v2228, %v2474
      %v2562 = vadd.f32 %v2229, %v2493
      %v2563 = vadd.f32 %v2230, %v2512
      %v2564 = vadd.f32 %v2231, %v2531
      %v2565 = vadd.f32 %v2232, %v2362
      %v2566 = vadd.f32 %v2233, %v2381
      %v2567 = vadd.f32 %v2234, %v2400
      %v2568 = vadd.f32 %v2235, %v2419
      %v2569 = vadd.f32 %v2236, %v2438
      %v2570 = vadd.f32 %v2237, %v2457
      %v2571 = vadd.f32 %v2238, %v2476
      %v2572 = vadd.f32 %v2239, %v2495
      %v2573 = vadd.f32 %v2240, %v2514
      %v2574 = vadd.f32 %v2241, %v2533
      %2575 = vst [vmem:[#allocation2] sm:$0xff] %v2535
      %2576 = vst [vmem:[#allocation2 + $0x8] sm:$0xff] %v2536
      %2577 = vst [vmem:[#allocation2 + $0x10] sm:$0xff] %v2537
      %2578 = vst [vmem:[#allocation2 + $0x18] sm:$0xff] %v2538
      %2579 = vst [vmem:[#allocation2 + $0x20] sm:$0xff] %v2539
      %2580 = vst [vmem:[#allocation2 + $0x28] sm:$0xff] %v2540
      %2581 = vst [vmem:[#allocation2 + $0x30] sm:$0xff] %v2541
      %2582 = vst [vmem:[#allocation2 + $0x38] sm:$0xff] %v2542
      %2583 = vst [vmem:[#allocation2 + $0x40] sm:$0xff] %v2543
      %2584 = vst.msk [vmem:[#allocation2 + $0x48] sm:$0xff] %vm563, %v2544
      %2585 = vst [vmem:[#allocation2 + $0x50] sm:$0xff] %v2545
      %2586 = vst [vmem:[#allocation2 + $0x58] sm:$0xff] %v2546
      %2587 = vst [vmem:[#allocation2 + $0x60] sm:$0xff] %v2547
      %2588 = vst [vmem:[#allocation2 + $0x68] sm:$0xff] %v2548
      %2589 = vst [vmem:[#allocation2 + $0x70] sm:$0xff] %v2549
      %2590 = vst [vmem:[#allocation2 + $0x78] sm:$0xff] %v2550
      %2591 = vst [vmem:[#allocation2 + $0x80] sm:$0xff] %v2551
      %2592 = vst [vmem:[#allocation2 + $0x88] sm:$0xff] %v2552
      %2593 = vst [vmem:[#allocation2 + $0x90] sm:$0xff] %v2553
      %2594 = vst.msk [vmem:[#allocation2 + $0x98] sm:$0xff] %vm563, %v2554
      %2595 = vst [vmem:[#allocation2 + $0xa0] sm:$0xff] %v2555
      %2596 = vst [vmem:[#allocation2 + $0xa8] sm:$0xff] %v2556
      %2597 = vst [vmem:[#allocation2 + $0xb0] sm:$0xff] %v2557
      %2598 = vst [vmem:[#allocation2 + $0xb8] sm:$0xff] %v2558
      %2599 = vst [vmem:[#allocation2 + $0xc0] sm:$0xff] %v2559
      %2600 = vst [vmem:[#allocation2 + $0xc8] sm:$0xff] %v2560
      %2601 = vst [vmem:[#allocation2 + $0xd0] sm:$0xff] %v2561
      %2602 = vst [vmem:[#allocation2 + $0xd8] sm:$0xff] %v2562
      %2603 = vst [vmem:[#allocation2 + $0xe0] sm:$0xff] %v2563
      %2604 = vst.msk [vmem:[#allocation2 + $0xe8] sm:$0xff] %vm563, %v2564
      %2605 = vst [vmem:[#allocation2 + $0xf0] sm:$0xff] %v2565
      %2606 = vst [vmem:[#allocation2 + $0xf8] sm:$0xff] %v2566
      %2607 = vst [vmem:[#allocation2 + $0x100] sm:$0xff] %v2567
      %2608 = vst [vmem:[#allocation2 + $0x108] sm:$0xff] %v2568
      %2609 = vst [vmem:[#allocation2 + $0x110] sm:$0xff] %v2569
      %2610 = vst [vmem:[#allocation2 + $0x118] sm:$0xff] %v2570
      %2611 = vst [vmem:[#allocation2 + $0x120] sm:$0xff] %v2571
      %2612 = vst [vmem:[#allocation2 + $0x128] sm:$0xff] %v2572
      %2613 = vst [vmem:[#allocation2 + $0x130] sm:$0xff] %v2573
      %2614 = vst.msk [vmem:[#allocation2 + $0x138] sm:$0xff] %vm563, %v2574
      %v2615 = vld [vmem:[#allocation2] sm:$0xff]
      %v2616 = vld [vmem:[#allocation2 + $0x8] sm:$0xff]
      %v2617 = vld [vmem:[#allocation2 + $0x10] sm:$0xff]
      %v2618 = vld [vmem:[#allocation2 + $0x18] sm:$0xff]
      %v2619 = vld [vmem:[#allocation2 + $0x20] sm:$0xff]
      %v2620 = vld [vmem:[#allocation2 + $0x28] sm:$0xff]
      %v2621 = vld [vmem:[#allocation2 + $0x30] sm:$0xff]
      %v2622 = vld [vmem:[#allocation2 + $0x38] sm:$0xff]
      %v2623 = vld [vmem:[#allocation2 + $0x40] sm:$0xff]
      %v2624 = vld [vmem:[#allocation2 + $0x48] sm:$0xff]
      %v2625 = vld [vmem:[#allocation2 + $0x50] sm:$0xff]
      %v2626 = vld [vmem:[#allocation2 + $0x58] sm:$0xff]
      %v2627 = vld [vmem:[#allocation2 + $0x60] sm:$0xff]
      %v2628 = vld [vmem:[#allocation2 + $0x68] sm:$0xff]
      %v2629 = vld [vmem:[#allocation2 + $0x70] sm:$0xff]
      %v2630 = vld [vmem:[#allocation2 + $0x78] sm:$0xff]
      %v2631 = vld [vmem:[#allocation2 + $0x80] sm:$0xff]
      %v2632 = vld [vmem:[#allocation2 + $0x88] sm:$0xff]
      %v2633 = vld [vmem:[#allocation2 + $0x90] sm:$0xff]
      %v2634 = vld [vmem:[#allocation2 + $0x98] sm:$0xff]
      %v2635 = vld [vmem:[#allocation2 + $0xa0] sm:$0xff]
      %v2636 = vld [vmem:[#allocation2 + $0xa8] sm:$0xff]
      %v2637 = vld [vmem:[#allocation2 + $0xb0] sm:$0xff]
      %v2638 = vld [vmem:[#allocation2 + $0xb8] sm:$0xff]
      %v2639 = vld [vmem:[#allocation2 + $0xc0] sm:$0xff]
      %v2640 = vld [vmem:[#allocation2 + $0xc8] sm:$0xff]
      %v2641 = vld [vmem:[#allocation2 + $0xd0] sm:$0xff]
      %v2642 = vld [vmem:[#allocation2 + $0xd8] sm:$0xff]
      %v2643 = vld [vmem:[#allocation2 + $0xe0] sm:$0xff]
      %v2644 = vld [vmem:[#allocation2 + $0xe8] sm:$0xff]
      %v2645 = vld [vmem:[#allocation2 + $0xf0] sm:$0xff]
      %v2646 = vld [vmem:[#allocation2 + $0xf8] sm:$0xff]
      %v2647 = vld [vmem:[#allocation2 + $0x100] sm:$0xff]
      %v2648 = vld [vmem:[#allocation2 + $0x108] sm:$0xff]
      %v2649 = vld [vmem:[#allocation2 + $0x110] sm:$0xff]
      %v2650 = vld [vmem:[#allocation2 + $0x118] sm:$0xff]
      %v2651 = vld [vmem:[#allocation2 + $0x120] sm:$0xff]
      %v2652 = vld [vmem:[#allocation2 + $0x128] sm:$0xff]
      %v2653 = vld [vmem:[#allocation2 + $0x130] sm:$0xff]
      %v2654 = vld [vmem:[#allocation2 + $0x138] sm:$0xff]
      %s2655 = scalar_lea.vmem %s1, 80
      %v2656 = vld [vmem:[%s2655] sm:$0xf]
      %v2657 = vld [vmem:[%s2655 + $0x4] sm:$0xf]
      %v2658 = vld [vmem:[%s2655 + $0x8] sm:$0xf]
      %v2659 = vld [vmem:[%s2655 + $0xc] sm:$0xf]
      %v2664 = vunpack.c.l.b16 %v2656
      %v2665 = vunpack.c.l.b16 %v2657
      %v2666 = vunpack.c.l.b16 %v2658
      %v2667 = vunpack.c.l.b16 %v2659
      %v2668 = vpack.c.b16 %v2665, %v2664
      %v2669 = vpack.c.b16 %v2667, %v2666
      %2670 = vst [vmem:[#allocation1] ss:$9 sm:$0xff] %v595
      %v2671 = vld [vmem:[#allocation1] sm:$0xff]
      %v2673 = vld [vmem:[#allocation1 + $0x9] sm:$0xff]
      %v2675 = vld [vmem:[#allocation1 + $0x12] sm:$0xff]
      %v2677 = vld [vmem:[#allocation1 + $0x1b] sm:$0xff]
      %v2679 = vld [vmem:[#allocation1 + $0x24] sm:$0xff]
      %v2681 = vld [vmem:[#allocation1 + $0x2d] sm:$0xff]
      %v2683 = vld [vmem:[#allocation1 + $0x36] sm:$0xff]
      %v2685 = vld [vmem:[#allocation1 + $0x3f] sm:$0xff]
      %2687 = vst [vmem:[#allocation1] ss:$9 sm:$0xff] %v596
      %v2688 = vld [vmem:[#allocation1] sm:$0xff]
      %v2690 = vld [vmem:[#allocation1 + $0x9] sm:$0xff]
      %2692 = vrot.lane.b32.xlu0 %v2671, 92
      %v2693 = vpop.permute.xlu0 %2692
      %2694 = vrot.lane.b32.xlu0 %v2673, 92
      %v2695 = vpop.permute.xlu0 %2694
      %2696 = vrot.lane.b32.xlu0 %v2675, 92
      %v2697 = vpop.permute.xlu0 %2696
      %2698 = vrot.lane.b32.xlu0 %v2677, 92
      %v2699 = vpop.permute.xlu0 %2698
      %2700 = vrot.lane.b32.xlu0 %v2679, 92
      %v2701 = vpop.permute.xlu0 %2700
      %2702 = vrot.lane.b32.xlu0 %v2681, 92
      %v2703 = vpop.permute.xlu0 %2702
      %2704 = vrot.lane.b32.xlu0 %v2683, 92
      %v2705 = vpop.permute.xlu0 %2704
      %2706 = vrot.lane.b32.xlu0 %v2685, 92
      %v2707 = vpop.permute.xlu0 %2706
      %2708 = vrot.lane.b32.xlu0 %v2688, 92
      %v2709 = vpop.permute.xlu0 %2708
      %2710 = vrot.lane.b32.xlu0 %v2690, 92
      %v2711 = vpop.permute.xlu0 %2710
      %vm2712 = vcmask 752640
      %v2713 = vsel %vm2712, %v2693, %v2695
      %v2714 = vsel %vm2712, %v2695, %v2697
      %v2715 = vsel %vm2712, %v2697, %v2699
      %v2716 = vsel %vm2712, %v2699, %v2701
      %v2717 = vsel %vm2712, %v2701, %v2703
      %v2718 = vsel %vm2712, %v2703, %v2705
      %v2719 = vsel %vm2712, %v2705, %v2707
      %v2720 = vsel %vm2712, %v2707, %v2709
      %v2721 = vsel %vm2712, %v2709, %v2711
      %v2723 = vsel %vm665, %v2668, 0
      %v2726 = vsel %vm665, %v2669, 0
      %v2729 = vsel %vm672, %v2713, 0
      %v2732 = vsel %vm672, %v2714, 0
      %v2735 = vsel %vm672, %v2715, 0
      %v2738 = vsel %vm672, %v2716, 0
      %v2741 = vsel %vm672, %v2717, 0
      %v2744 = vsel %vm672, %v2718, 0
      %v2747 = vsel %vm672, %v2719, 0
      %v2750 = vsel %vm672, %v2720, 0
      %v2753 = vsel %vm672, %v2721, 0
      %v2756 = vsel %vm672, %v2711, 0
      %2758 = vmatpush.bf16.msra.mxu0 0
      %2759 = vmatpush.bf16.msra.mxu0 0
      %2760 = vmatpush.bf16.msra.mxu0 0
      %2761 = vmatpush.bf16.msra.mxu0 0
      %2762 = vmatpush.bf16.msra.mxu0 0
      %2763 = vmatpush.bf16.msra.mxu0 0
      %2764 = vmatpush.bf16.msra.mxu0 0
      %2765 = vmatpush.bf16.msra.mxu0 %v2729
      %2766 = vmatmul.bf16.gmra.mxu0 %v2723
      %v2767 = vpop.f32.mrf.mxu0
      %v2768 = vadd.f32 0.0, %v2767
      %v2769 = vpop.f32.mrf.mxu0
      %v2770 = vadd.f32 0.0, %v2769
      %2771 = vmatmul.bf16.gmra.mxu0 %v2726
      %v2772 = vpop.f32.mrf.mxu0
      %v2773 = vadd.f32 0.0, %v2772
      %v2774 = vpop.f32.mrf.mxu0
      %v2775 = vadd.f32 0.0, %v2774
      %2776 = vdwg.mxu0
      %2777 = vmatpush.bf16.msra.mxu0 0
      %2778 = vmatpush.bf16.msra.mxu0 0
      %2779 = vmatpush.bf16.msra.mxu0 0
      %2780 = vmatpush.bf16.msra.mxu0 0
      %2781 = vmatpush.bf16.msra.mxu0 0
      %2782 = vmatpush.bf16.msra.mxu0 0
      %2783 = vmatpush.bf16.msra.mxu0 0
      %2784 = vmatpush.bf16.msra.mxu0 %v2732
      %2785 = vmatmul.bf16.gmra.mxu0 %v2723
      %v2786 = vpop.f32.mrf.mxu0
      %v2787 = vadd.f32 0.0, %v2786
      %v2788 = vpop.f32.mrf.mxu0
      %v2789 = vadd.f32 0.0, %v2788
      %2790 = vmatmul.bf16.gmra.mxu0 %v2726
      %v2791 = vpop.f32.mrf.mxu0
      %v2792 = vadd.f32 0.0, %v2791
      %v2793 = vpop.f32.mrf.mxu0
      %v2794 = vadd.f32 0.0, %v2793
      %2795 = vdwg.mxu0
      %2796 = vmatpush.bf16.msra.mxu0 0
      %2797 = vmatpush.bf16.msra.mxu0 0
      %2798 = vmatpush.bf16.msra.mxu0 0
      %2799 = vmatpush.bf16.msra.mxu0 0
      %2800 = vmatpush.bf16.msra.mxu0 0
      %2801 = vmatpush.bf16.msra.mxu0 0
      %2802 = vmatpush.bf16.msra.mxu0 0
      %2803 = vmatpush.bf16.msra.mxu0 %v2735
      %2804 = vmatmul.bf16.gmra.mxu0 %v2723
      %v2805 = vpop.f32.mrf.mxu0
      %v2806 = vadd.f32 0.0, %v2805
      %v2807 = vpop.f32.mrf.mxu0
      %v2808 = vadd.f32 0.0, %v2807
      %2809 = vmatmul.bf16.gmra.mxu0 %v2726
      %v2810 = vpop.f32.mrf.mxu0
      %v2811 = vadd.f32 0.0, %v2810
      %v2812 = vpop.f32.mrf.mxu0
      %v2813 = vadd.f32 0.0, %v2812
      %2814 = vdwg.mxu0
      %2815 = vmatpush.bf16.msra.mxu0 0
      %2816 = vmatpush.bf16.msra.mxu0 0
      %2817 = vmatpush.bf16.msra.mxu0 0
      %2818 = vmatpush.bf16.msra.mxu0 0
      %2819 = vmatpush.bf16.msra.mxu0 0
      %2820 = vmatpush.bf16.msra.mxu0 0
      %2821 = vmatpush.bf16.msra.mxu0 0
      %2822 = vmatpush.bf16.msra.mxu0 %v2738
      %2823 = vmatmul.bf16.gmra.mxu0 %v2723
      %v2824 = vpop.f32.mrf.mxu0
      %v2825 = vadd.f32 0.0, %v2824
      %v2826 = vpop.f32.mrf.mxu0
      %v2827 = vadd.f32 0.0, %v2826
      %2828 = vmatmul.bf16.gmra.mxu0 %v2726
      %v2829 = vpop.f32.mrf.mxu0
      %v2830 = vadd.f32 0.0, %v2829
      %v2831 = vpop.f32.mrf.mxu0
      %v2832 = vadd.f32 0.0, %v2831
      %2833 = vdwg.mxu0
      %2834 = vmatpush.bf16.msra.mxu0 0
      %2835 = vmatpush.bf16.msra.mxu0 0
      %2836 = vmatpush.bf16.msra.mxu0 0
      %2837 = vmatpush.bf16.msra.mxu0 0
      %2838 = vmatpush.bf16.msra.mxu0 0
      %2839 = vmatpush.bf16.msra.mxu0 0
      %2840 = vmatpush.bf16.msra.mxu0 0
      %2841 = vmatpush.bf16.msra.mxu0 %v2741
      %2842 = vmatmul.bf16.gmra.mxu0 %v2723
      %v2843 = vpop.f32.mrf.mxu0
      %v2844 = vadd.f32 0.0, %v2843
      %v2845 = vpop.f32.mrf.mxu0
      %v2846 = vadd.f32 0.0, %v2845
      %2847 = vmatmul.bf16.gmra.mxu0 %v2726
      %v2848 = vpop.f32.mrf.mxu0
      %v2849 = vadd.f32 0.0, %v2848
      %v2850 = vpop.f32.mrf.mxu0
      %v2851 = vadd.f32 0.0, %v2850
      %2852 = vdwg.mxu0
      %2853 = vmatpush.bf16.msra.mxu0 0
      %2854 = vmatpush.bf16.msra.mxu0 0
      %2855 = vmatpush.bf16.msra.mxu0 0
      %2856 = vmatpush.bf16.msra.mxu0 0
      %2857 = vmatpush.bf16.msra.mxu0 0
      %2858 = vmatpush.bf16.msra.mxu0 0
      %2859 = vmatpush.bf16.msra.mxu0 0
      %2860 = vmatpush.bf16.msra.mxu0 %v2744
      %2861 = vmatmul.bf16.gmra.mxu0 %v2723
      %v2862 = vpop.f32.mrf.mxu0
      %v2863 = vadd.f32 0.0, %v2862
      %v2864 = vpop.f32.mrf.mxu0
      %v2865 = vadd.f32 0.0, %v2864
      %2866 = vmatmul.bf16.gmra.mxu0 %v2726
      %v2867 = vpop.f32.mrf.mxu0
      %v2868 = vadd.f32 0.0, %v2867
      %v2869 = vpop.f32.mrf.mxu0
      %v2870 = vadd.f32 0.0, %v2869
      %2871 = vdwg.mxu0
      %2872 = vmatpush.bf16.msra.mxu0 0
      %2873 = vmatpush.bf16.msra.mxu0 0
      %2874 = vmatpush.bf16.msra.mxu0 0
      %2875 = vmatpush.bf16.msra.mxu0 0
      %2876 = vmatpush.bf16.msra.mxu0 0
      %2877 = vmatpush.bf16.msra.mxu0 0
      %2878 = vmatpush.bf16.msra.mxu0 0
      %2879 = vmatpush.bf16.msra.mxu0 %v2747
      %2880 = vmatmul.bf16.gmra.mxu0 %v2723
      %v2881 = vpop.f32.mrf.mxu0
      %v2882 = vadd.f32 0.0, %v2881
      %v2883 = vpop.f32.mrf.mxu0
      %v2884 = vadd.f32 0.0, %v2883
      %2885 = vmatmul.bf16.gmra.mxu0 %v2726
      %v2886 = vpop.f32.mrf.mxu0
      %v2887 = vadd.f32 0.0, %v2886
      %v2888 = vpop.f32.mrf.mxu0
      %v2889 = vadd.f32 0.0, %v2888
      %2890 = vdwg.mxu0
      %2891 = vmatpush.bf16.msra.mxu0 0
      %2892 = vmatpush.bf16.msra.mxu0 0
      %2893 = vmatpush.bf16.msra.mxu0 0
      %2894 = vmatpush.bf16.msra.mxu0 0
      %2895 = vmatpush.bf16.msra.mxu0 0
      %2896 = vmatpush.bf16.msra.mxu0 0
      %2897 = vmatpush.bf16.msra.mxu0 0
      %2898 = vmatpush.bf16.msra.mxu0 %v2750
      %2899 = vmatmul.bf16.gmra.mxu0 %v2723
      %v2900 = vpop.f32.mrf.mxu0
      %v2901 = vadd.f32 0.0, %v2900
      %v2902 = vpop.f32.mrf.mxu0
      %v2903 = vadd.f32 0.0, %v2902
      %2904 = vmatmul.bf16.gmra.mxu0 %v2726
      %v2905 = vpop.f32.mrf.mxu0
      %v2906 = vadd.f32 0.0, %v2905
      %v2907 = vpop.f32.mrf.mxu0
      %v2908 = vadd.f32 0.0, %v2907
      %2909 = vdwg.mxu0
      %2910 = vmatpush.bf16.msra.mxu0 0
      %2911 = vmatpush.bf16.msra.mxu0 0
      %2912 = vmatpush.bf16.msra.mxu0 0
      %2913 = vmatpush.bf16.msra.mxu0 0
      %2914 = vmatpush.bf16.msra.mxu0 0
      %2915 = vmatpush.bf16.msra.mxu0 0
      %2916 = vmatpush.bf16.msra.mxu0 0
      %2917 = vmatpush.bf16.msra.mxu0 %v2753
      %2918 = vmatmul.bf16.gmra.mxu0 %v2723
      %v2919 = vpop.f32.mrf.mxu0
      %v2920 = vadd.f32 0.0, %v2919
      %v2921 = vpop.f32.mrf.mxu0
      %v2922 = vadd.f32 0.0, %v2921
      %2923 = vmatmul.bf16.gmra.mxu0 %v2726
      %v2924 = vpop.f32.mrf.mxu0
      %v2925 = vadd.f32 0.0, %v2924
      %v2926 = vpop.f32.mrf.mxu0
      %v2927 = vadd.f32 0.0, %v2926
      %2928 = vdwg.mxu0
      %2929 = vmatpush.bf16.msra.mxu0 0
      %2930 = vmatpush.bf16.msra.mxu0 0
      %2931 = vmatpush.bf16.msra.mxu0 0
      %2932 = vmatpush.bf16.msra.mxu0 0
      %2933 = vmatpush.bf16.msra.mxu0 0
      %2934 = vmatpush.bf16.msra.mxu0 0
      %2935 = vmatpush.bf16.msra.mxu0 0
      %2936 = vmatpush.bf16.msra.mxu0 %v2756
      %2937 = vmatmul.bf16.gmra.mxu0 %v2723
      %v2938 = vpop.f32.mrf.mxu0
      %v2939 = vadd.f32 0.0, %v2938
      %v2940 = vpop.f32.mrf.mxu0
      %v2941 = vadd.f32 0.0, %v2940
      %2942 = vmatmul.bf16.gmra.mxu0 %v2726
      %v2943 = vpop.f32.mrf.mxu0
      %v2944 = vadd.f32 0.0, %v2943
      %v2945 = vpop.f32.mrf.mxu0
      %v2946 = vadd.f32 0.0, %v2945
      %2947 = vdwg.mxu0
      %v2948 = vadd.f32 %v2615, %v2768
      %v2949 = vadd.f32 %v2616, %v2787
      %v2950 = vadd.f32 %v2617, %v2806
      %v2951 = vadd.f32 %v2618, %v2825
      %v2952 = vadd.f32 %v2619, %v2844
      %v2953 = vadd.f32 %v2620, %v2863
      %v2954 = vadd.f32 %v2621, %v2882
      %v2955 = vadd.f32 %v2622, %v2901
      %v2956 = vadd.f32 %v2623, %v2920
      %v2957 = vadd.f32 %v2624, %v2939
      %v2958 = vadd.f32 %v2625, %v2770
      %v2959 = vadd.f32 %v2626, %v2789
      %v2960 = vadd.f32 %v2627, %v2808
      %v2961 = vadd.f32 %v2628, %v2827
      %v2962 = vadd.f32 %v2629, %v2846
      %v2963 = vadd.f32 %v2630, %v2865
      %v2964 = vadd.f32 %v2631, %v2884
      %v2965 = vadd.f32 %v2632, %v2903
      %v2966 = vadd.f32 %v2633, %v2922
      %v2967 = vadd.f32 %v2634, %v2941
      %v2968 = vadd.f32 %v2635, %v2773
      %v2969 = vadd.f32 %v2636, %v2792
      %v2970 = vadd.f32 %v2637, %v2811
      %v2971 = vadd.f32 %v2638, %v2830
      %v2972 = vadd.f32 %v2639, %v2849
      %v2973 = vadd.f32 %v2640, %v2868
      %v2974 = vadd.f32 %v2641, %v2887
      %v2975 = vadd.f32 %v2642, %v2906
      %v2976 = vadd.f32 %v2643, %v2925
      %v2977 = vadd.f32 %v2644, %v2944
      %v2978 = vadd.f32 %v2645, %v2775
      %v2979 = vadd.f32 %v2646, %v2794
      %v2980 = vadd.f32 %v2647, %v2813
      %v2981 = vadd.f32 %v2648, %v2832
      %v2982 = vadd.f32 %v2649, %v2851
      %v2983 = vadd.f32 %v2650, %v2870
      %v2984 = vadd.f32 %v2651, %v2889
      %v2985 = vadd.f32 %v2652, %v2908
      %v2986 = vadd.f32 %v2653, %v2927
      %v2987 = vadd.f32 %v2654, %v2946
      %2988 = vst [vmem:[#allocation2] sm:$0xff] %v2948
      %2989 = vst [vmem:[#allocation2 + $0x8] sm:$0xff] %v2949
      %2990 = vst [vmem:[#allocation2 + $0x10] sm:$0xff] %v2950
      %2991 = vst [vmem:[#allocation2 + $0x18] sm:$0xff] %v2951
      %2992 = vst [vmem:[#allocation2 + $0x20] sm:$0xff] %v2952
      %2993 = vst [vmem:[#allocation2 + $0x28] sm:$0xff] %v2953
      %2994 = vst [vmem:[#allocation2 + $0x30] sm:$0xff] %v2954
      %2995 = vst [vmem:[#allocation2 + $0x38] sm:$0xff] %v2955
      %2996 = vst [vmem:[#allocation2 + $0x40] sm:$0xff] %v2956
      %2997 = vst.msk [vmem:[#allocation2 + $0x48] sm:$0xff] %vm563, %v2957
      %2998 = vst [vmem:[#allocation2 + $0x50] sm:$0xff] %v2958
      %2999 = vst [vmem:[#allocation2 + $0x58] sm:$0xff] %v2959
      %3000 = vst [vmem:[#allocation2 + $0x60] sm:$0xff] %v2960
      %3001 = vst [vmem:[#allocation2 + $0x68] sm:$0xff] %v2961
      %3002 = vst [vmem:[#allocation2 + $0x70] sm:$0xff] %v2962
      %3003 = vst [vmem:[#allocation2 + $0x78] sm:$0xff] %v2963
      %3004 = vst [vmem:[#allocation2 + $0x80] sm:$0xff] %v2964
      %3005 = vst [vmem:[#allocation2 + $0x88] sm:$0xff] %v2965
      %3006 = vst [vmem:[#allocation2 + $0x90] sm:$0xff] %v2966
      %3007 = vst.msk [vmem:[#allocation2 + $0x98] sm:$0xff] %vm563, %v2967
      %3008 = vst [vmem:[#allocation2 + $0xa0] sm:$0xff] %v2968
      %3009 = vst [vmem:[#allocation2 + $0xa8] sm:$0xff] %v2969
      %3010 = vst [vmem:[#allocation2 + $0xb0] sm:$0xff] %v2970
      %3011 = vst [vmem:[#allocation2 + $0xb8] sm:$0xff] %v2971
      %3012 = vst [vmem:[#allocation2 + $0xc0] sm:$0xff] %v2972
      %3013 = vst [vmem:[#allocation2 + $0xc8] sm:$0xff] %v2973
      %3014 = vst [vmem:[#allocation2 + $0xd0] sm:$0xff] %v2974
      %3015 = vst [vmem:[#allocation2 + $0xd8] sm:$0xff] %v2975
      %3016 = vst [vmem:[#allocation2 + $0xe0] sm:$0xff] %v2976
      %3017 = vst.msk [vmem:[#allocation2 + $0xe8] sm:$0xff] %vm563, %v2977
      %3018 = vst [vmem:[#allocation2 + $0xf0] sm:$0xff] %v2978
      %3019 = vst [vmem:[#allocation2 + $0xf8] sm:$0xff] %v2979
      %3020 = vst [vmem:[#allocation2 + $0x100] sm:$0xff] %v2980
      %3021 = vst [vmem:[#allocation2 + $0x108] sm:$0xff] %v2981
      %3022 = vst [vmem:[#allocation2 + $0x110] sm:$0xff] %v2982
      %3023 = vst [vmem:[#allocation2 + $0x118] sm:$0xff] %v2983
      %3024 = vst [vmem:[#allocation2 + $0x120] sm:$0xff] %v2984
      %3025 = vst [vmem:[#allocation2 + $0x128] sm:$0xff] %v2985
      %3026 = vst [vmem:[#allocation2 + $0x130] sm:$0xff] %v2986
      %3027 = vst.msk [vmem:[#allocation2 + $0x138] sm:$0xff] %vm563, %v2987
      %v3028 = vld [vmem:[#allocation2] sm:$0xff]
      %v3029 = vld [vmem:[#allocation2 + $0x8] sm:$0xff]
      %v3030 = vld [vmem:[#allocation2 + $0x10] sm:$0xff]
      %v3031 = vld [vmem:[#allocation2 + $0x18] sm:$0xff]
      %v3032 = vld [vmem:[#allocation2 + $0x20] sm:$0xff]
      %v3033 = vld [vmem:[#allocation2 + $0x28] sm:$0xff]
      %v3034 = vld [vmem:[#allocation2 + $0x30] sm:$0xff]
      %v3035 = vld [vmem:[#allocation2 + $0x38] sm:$0xff]
      %v3036 = vld [vmem:[#allocation2 + $0x40] sm:$0xff]
      %v3037 = vld [vmem:[#allocation2 + $0x48] sm:$0xff]
      %v3038 = vld [vmem:[#allocation2 + $0x50] sm:$0xff]
      %v3039 = vld [vmem:[#allocation2 + $0x58] sm:$0xff]
      %v3040 = vld [vmem:[#allocation2 + $0x60] sm:$0xff]
      %v3041 = vld [vmem:[#allocation2 + $0x68] sm:$0xff]
      %v3042 = vld [vmem:[#allocation2 + $0x70] sm:$0xff]
      %v3043 = vld [vmem:[#allocation2 + $0x78] sm:$0xff]
      %v3044 = vld [vmem:[#allocation2 + $0x80] sm:$0xff]
      %v3045 = vld [vmem:[#allocation2 + $0x88] sm:$0xff]
      %v3046 = vld [vmem:[#allocation2 + $0x90] sm:$0xff]
      %v3047 = vld [vmem:[#allocation2 + $0x98] sm:$0xff]
      %v3048 = vld [vmem:[#allocation2 + $0xa0] sm:$0xff]
      %v3049 = vld [vmem:[#allocation2 + $0xa8] sm:$0xff]
      %v3050 = vld [vmem:[#allocation2 + $0xb0] sm:$0xff]
      %v3051 = vld [vmem:[#allocation2 + $0xb8] sm:$0xff]
      %v3052 = vld [vmem:[#allocation2 + $0xc0] sm:$0xff]
      %v3053 = vld [vmem:[#allocation2 + $0xc8] sm:$0xff]
      %v3054 = vld [vmem:[#allocation2 + $0xd0] sm:$0xff]
      %v3055 = vld [vmem:[#allocation2 + $0xd8] sm:$0xff]
      %v3056 = vld [vmem:[#allocation2 + $0xe0] sm:$0xff]
      %v3057 = vld [vmem:[#allocation2 + $0xe8] sm:$0xff]
      %v3058 = vld [vmem:[#allocation2 + $0xf0] sm:$0xff]
      %v3059 = vld [vmem:[#allocation2 + $0xf8] sm:$0xff]
      %v3060 = vld [vmem:[#allocation2 + $0x100] sm:$0xff]
      %v3061 = vld [vmem:[#allocation2 + $0x108] sm:$0xff]
      %v3062 = vld [vmem:[#allocation2 + $0x110] sm:$0xff]
      %v3063 = vld [vmem:[#allocation2 + $0x118] sm:$0xff]
      %v3064 = vld [vmem:[#allocation2 + $0x120] sm:$0xff]
      %v3065 = vld [vmem:[#allocation2 + $0x128] sm:$0xff]
      %v3066 = vld [vmem:[#allocation2 + $0x130] sm:$0xff]
      %v3067 = vld [vmem:[#allocation2 + $0x138] sm:$0xff]
      %s3068 = scalar_lea.vmem %s1, 96
      %v3069 = vld [vmem:[%s3068] sm:$0xf]
      %v3070 = vld [vmem:[%s3068 + $0x4] sm:$0xf]
      %v3071 = vld [vmem:[%s3068 + $0x8] sm:$0xf]
      %v3072 = vld [vmem:[%s3068 + $0xc] sm:$0xf]
      %v3077 = vunpack.c.l.b16 %v3069
      %v3078 = vunpack.c.l.b16 %v3070
      %v3079 = vunpack.c.l.b16 %v3071
      %v3080 = vunpack.c.l.b16 %v3072
      %v3081 = vpack.c.b16 %v3078, %v3077
      %v3082 = vpack.c.b16 %v3080, %v3079
      %3083 = vst [vmem:[#allocation1] ss:$9 sm:$0xff] %v595
      %v3084 = vld [vmem:[#allocation1] sm:$0xff]
      %v3086 = vld [vmem:[#allocation1 + $0x9] sm:$0xff]
      %v3088 = vld [vmem:[#allocation1 + $0x12] sm:$0xff]
      %v3090 = vld [vmem:[#allocation1 + $0x1b] sm:$0xff]
      %v3092 = vld [vmem:[#allocation1 + $0x24] sm:$0xff]
      %v3094 = vld [vmem:[#allocation1 + $0x2d] sm:$0xff]
      %v3096 = vld [vmem:[#allocation1 + $0x36] sm:$0xff]
      %v3098 = vld [vmem:[#allocation1 + $0x3f] sm:$0xff]
      %3100 = vst [vmem:[#allocation1] ss:$9 sm:$0xff] %v596
      %v3101 = vld [vmem:[#allocation1] sm:$0xff]
      %v3103 = vld [vmem:[#allocation1 + $0x9] sm:$0xff]
      %3105 = vrot.lane.b32.xlu0 %v3084, 60
      %v3106 = vpop.permute.xlu0 %3105
      %3107 = vrot.lane.b32.xlu0 %v3086, 60
      %v3108 = vpop.permute.xlu0 %3107
      %3109 = vrot.lane.b32.xlu0 %v3088, 60
      %v3110 = vpop.permute.xlu0 %3109
      %3111 = vrot.lane.b32.xlu0 %v3090, 60
      %v3112 = vpop.permute.xlu0 %3111
      %3113 = vrot.lane.b32.xlu0 %v3092, 60
      %v3114 = vpop.permute.xlu0 %3113
      %3115 = vrot.lane.b32.xlu0 %v3094, 60
      %v3116 = vpop.permute.xlu0 %3115
      %3117 = vrot.lane.b32.xlu0 %v3096, 60
      %v3118 = vpop.permute.xlu0 %3117
      %3119 = vrot.lane.b32.xlu0 %v3098, 60
      %v3120 = vpop.permute.xlu0 %3119
      %3121 = vrot.lane.b32.xlu0 %v3101, 60
      %v3122 = vpop.permute.xlu0 %3121
      %3123 = vrot.lane.b32.xlu0 %v3103, 60
      %v3124 = vpop.permute.xlu0 %3123
      %vm3125 = vcmask 490496
      %v3126 = vsel %vm3125, %v3106, %v3108
      %v3127 = vsel %vm3125, %v3108, %v3110
      %v3128 = vsel %vm3125, %v3110, %v3112
      %v3129 = vsel %vm3125, %v3112, %v3114
      %v3130 = vsel %vm3125, %v3114, %v3116
      %v3131 = vsel %vm3125, %v3116, %v3118
      %v3132 = vsel %vm3125, %v3118, %v3120
      %v3133 = vsel %vm3125, %v3120, %v3122
      %v3134 = vsel %vm3125, %v3122, %v3124
      %v3136 = vsel %vm665, %v3081, 0
      %v3139 = vsel %vm665, %v3082, 0
      %v3142 = vsel %vm672, %v3126, 0
      %v3145 = vsel %vm672, %v3127, 0
      %v3148 = vsel %vm672, %v3128, 0
      %v3151 = vsel %vm672, %v3129, 0
      %v3154 = vsel %vm672, %v3130, 0
      %v3157 = vsel %vm672, %v3131, 0
      %v3160 = vsel %vm672, %v3132, 0
      %v3163 = vsel %vm672, %v3133, 0
      %v3166 = vsel %vm672, %v3134, 0
      %v3169 = vsel %vm672, %v3124, 0
      %3171 = vmatpush.bf16.msra.mxu0 0
      %3172 = vmatpush.bf16.msra.mxu0 0
      %3173 = vmatpush.bf16.msra.mxu0 0
      %3174 = vmatpush.bf16.msra.mxu0 0
      %3175 = vmatpush.bf16.msra.mxu0 0
      %3176 = vmatpush.bf16.msra.mxu0 0
      %3177 = vmatpush.bf16.msra.mxu0 0
      %3178 = vmatpush.bf16.msra.mxu0 %v3142
      %3179 = vmatmul.bf16.gmra.mxu0 %v3136
      %v3180 = vpop.f32.mrf.mxu0
      %v3181 = vadd.f32 0.0, %v3180
      %v3182 = vpop.f32.mrf.mxu0
      %v3183 = vadd.f32 0.0, %v3182
      %3184 = vmatmul.bf16.gmra.mxu0 %v3139
      %v3185 = vpop.f32.mrf.mxu0
      %v3186 = vadd.f32 0.0, %v3185
      %v3187 = vpop.f32.mrf.mxu0
      %v3188 = vadd.f32 0.0, %v3187
      %3189 = vdwg.mxu0
      %3190 = vmatpush.bf16.msra.mxu0 0
      %3191 = vmatpush.bf16.msra.mxu0 0
      %3192 = vmatpush.bf16.msra.mxu0 0
      %3193 = vmatpush.bf16.msra.mxu0 0
      %3194 = vmatpush.bf16.msra.mxu0 0
      %3195 = vmatpush.bf16.msra.mxu0 0
      %3196 = vmatpush.bf16.msra.mxu0 0
      %3197 = vmatpush.bf16.msra.mxu0 %v3145
      %3198 = vmatmul.bf16.gmra.mxu0 %v3136
      %v3199 = vpop.f32.mrf.mxu0
      %v3200 = vadd.f32 0.0, %v3199
      %v3201 = vpop.f32.mrf.mxu0
      %v3202 = vadd.f32 0.0, %v3201
      %3203 = vmatmul.bf16.gmra.mxu0 %v3139
      %v3204 = vpop.f32.mrf.mxu0
      %v3205 = vadd.f32 0.0, %v3204
      %v3206 = vpop.f32.mrf.mxu0
      %v3207 = vadd.f32 0.0, %v3206
      %3208 = vdwg.mxu0
      %3209 = vmatpush.bf16.msra.mxu0 0
      %3210 = vmatpush.bf16.msra.mxu0 0
      %3211 = vmatpush.bf16.msra.mxu0 0
      %3212 = vmatpush.bf16.msra.mxu0 0
      %3213 = vmatpush.bf16.msra.mxu0 0
      %3214 = vmatpush.bf16.msra.mxu0 0
      %3215 = vmatpush.bf16.msra.mxu0 0
      %3216 = vmatpush.bf16.msra.mxu0 %v3148
      %3217 = vmatmul.bf16.gmra.mxu0 %v3136
      %v3218 = vpop.f32.mrf.mxu0
      %v3219 = vadd.f32 0.0, %v3218
      %v3220 = vpop.f32.mrf.mxu0
      %v3221 = vadd.f32 0.0, %v3220
      %3222 = vmatmul.bf16.gmra.mxu0 %v3139
      %v3223 = vpop.f32.mrf.mxu0
      %v3224 = vadd.f32 0.0, %v3223
      %v3225 = vpop.f32.mrf.mxu0
      %v3226 = vadd.f32 0.0, %v3225
      %3227 = vdwg.mxu0
      %3228 = vmatpush.bf16.msra.mxu0 0
      %3229 = vmatpush.bf16.msra.mxu0 0
      %3230 = vmatpush.bf16.msra.mxu0 0
      %3231 = vmatpush.bf16.msra.mxu0 0
      %3232 = vmatpush.bf16.msra.mxu0 0
      %3233 = vmatpush.bf16.msra.mxu0 0
      %3234 = vmatpush.bf16.msra.mxu0 0
      %3235 = vmatpush.bf16.msra.mxu0 %v3151
      %3236 = vmatmul.bf16.gmra.mxu0 %v3136
      %v3237 = vpop.f32.mrf.mxu0
      %v3238 = vadd.f32 0.0, %v3237
      %v3239 = vpop.f32.mrf.mxu0
      %v3240 = vadd.f32 0.0, %v3239
      %3241 = vmatmul.bf16.gmra.mxu0 %v3139
      %v3242 = vpop.f32.mrf.mxu0
      %v3243 = vadd.f32 0.0, %v3242
      %v3244 = vpop.f32.mrf.mxu0
      %v3245 = vadd.f32 0.0, %v3244
      %3246 = vdwg.mxu0
      %3247 = vmatpush.bf16.msra.mxu0 0
      %3248 = vmatpush.bf16.msra.mxu0 0
      %3249 = vmatpush.bf16.msra.mxu0 0
      %3250 = vmatpush.bf16.msra.mxu0 0
      %3251 = vmatpush.bf16.msra.mxu0 0
      %3252 = vmatpush.bf16.msra.mxu0 0
      %3253 = vmatpush.bf16.msra.mxu0 0
      %3254 = vmatpush.bf16.msra.mxu0 %v3154
      %3255 = vmatmul.bf16.gmra.mxu0 %v3136
      %v3256 = vpop.f32.mrf.mxu0
      %v3257 = vadd.f32 0.0, %v3256
      %v3258 = vpop.f32.mrf.mxu0
      %v3259 = vadd.f32 0.0, %v3258
      %3260 = vmatmul.bf16.gmra.mxu0 %v3139
      %v3261 = vpop.f32.mrf.mxu0
      %v3262 = vadd.f32 0.0, %v3261
      %v3263 = vpop.f32.mrf.mxu0
      %v3264 = vadd.f32 0.0, %v3263
      %3265 = vdwg.mxu0
      %3266 = vmatpush.bf16.msra.mxu0 0
      %3267 = vmatpush.bf16.msra.mxu0 0
      %3268 = vmatpush.bf16.msra.mxu0 0
      %3269 = vmatpush.bf16.msra.mxu0 0
      %3270 = vmatpush.bf16.msra.mxu0 0
      %3271 = vmatpush.bf16.msra.mxu0 0
      %3272 = vmatpush.bf16.msra.mxu0 0
      %3273 = vmatpush.bf16.msra.mxu0 %v3157
      %3274 = vmatmul.bf16.gmra.mxu0 %v3136
      %v3275 = vpop.f32.mrf.mxu0
      %v3276 = vadd.f32 0.0, %v3275
      %v3277 = vpop.f32.mrf.mxu0
      %v3278 = vadd.f32 0.0, %v3277
      %3279 = vmatmul.bf16.gmra.mxu0 %v3139
      %v3280 = vpop.f32.mrf.mxu0
      %v3281 = vadd.f32 0.0, %v3280
      %v3282 = vpop.f32.mrf.mxu0
      %v3283 = vadd.f32 0.0, %v3282
      %3284 = vdwg.mxu0
      %3285 = vmatpush.bf16.msra.mxu0 0
      %3286 = vmatpush.bf16.msra.mxu0 0
      %3287 = vmatpush.bf16.msra.mxu0 0
      %3288 = vmatpush.bf16.msra.mxu0 0
      %3289 = vmatpush.bf16.msra.mxu0 0
      %3290 = vmatpush.bf16.msra.mxu0 0
      %3291 = vmatpush.bf16.msra.mxu0 0
      %3292 = vmatpush.bf16.msra.mxu0 %v3160
      %3293 = vmatmul.bf16.gmra.mxu0 %v3136
      %v3294 = vpop.f32.mrf.mxu0
      %v3295 = vadd.f32 0.0, %v3294
      %v3296 = vpop.f32.mrf.mxu0
      %v3297 = vadd.f32 0.0, %v3296
      %3298 = vmatmul.bf16.gmra.mxu0 %v3139
      %v3299 = vpop.f32.mrf.mxu0
      %v3300 = vadd.f32 0.0, %v3299
      %v3301 = vpop.f32.mrf.mxu0
      %v3302 = vadd.f32 0.0, %v3301
      %3303 = vdwg.mxu0
      %3304 = vmatpush.bf16.msra.mxu0 0
      %3305 = vmatpush.bf16.msra.mxu0 0
      %3306 = vmatpush.bf16.msra.mxu0 0
      %3307 = vmatpush.bf16.msra.mxu0 0
      %3308 = vmatpush.bf16.msra.mxu0 0
      %3309 = vmatpush.bf16.msra.mxu0 0
      %3310 = vmatpush.bf16.msra.mxu0 0
      %3311 = vmatpush.bf16.msra.mxu0 %v3163
      %3312 = vmatmul.bf16.gmra.mxu0 %v3136
      %v3313 = vpop.f32.mrf.mxu0
      %v3314 = vadd.f32 0.0, %v3313
      %v3315 = vpop.f32.mrf.mxu0
      %v3316 = vadd.f32 0.0, %v3315
      %3317 = vmatmul.bf16.gmra.mxu0 %v3139
      %v3318 = vpop.f32.mrf.mxu0
      %v3319 = vadd.f32 0.0, %v3318
      %v3320 = vpop.f32.mrf.mxu0
      %v3321 = vadd.f32 0.0, %v3320
      %3322 = vdwg.mxu0
      %3323 = vmatpush.bf16.msra.mxu0 0
      %3324 = vmatpush.bf16.msra.mxu0 0
      %3325 = vmatpush.bf16.msra.mxu0 0
      %3326 = vmatpush.bf16.msra.mxu0 0
      %3327 = vmatpush.bf16.msra.mxu0 0
      %3328 = vmatpush.bf16.msra.mxu0 0
      %3329 = vmatpush.bf16.msra.mxu0 0
      %3330 = vmatpush.bf16.msra.mxu0 %v3166
      %3331 = vmatmul.bf16.gmra.mxu0 %v3136
      %v3332 = vpop.f32.mrf.mxu0
      %v3333 = vadd.f32 0.0, %v3332
      %v3334 = vpop.f32.mrf.mxu0
      %v3335 = vadd.f32 0.0, %v3334
      %3336 = vmatmul.bf16.gmra.mxu0 %v3139
      %v3337 = vpop.f32.mrf.mxu0
      %v3338 = vadd.f32 0.0, %v3337
      %v3339 = vpop.f32.mrf.mxu0
      %v3340 = vadd.f32 0.0, %v3339
      %3341 = vdwg.mxu0
      %3342 = vmatpush.bf16.msra.mxu0 0
      %3343 = vmatpush.bf16.msra.mxu0 0
      %3344 = vmatpush.bf16.msra.mxu0 0
      %3345 = vmatpush.bf16.msra.mxu0 0
      %3346 = vmatpush.bf16.msra.mxu0 0
      %3347 = vmatpush.bf16.msra.mxu0 0
      %3348 = vmatpush.bf16.msra.mxu0 0
      %3349 = vmatpush.bf16.msra.mxu0 %v3169
      %3350 = vmatmul.bf16.gmra.mxu0 %v3136
      %v3351 = vpop.f32.mrf.mxu0
      %v3352 = vadd.f32 0.0, %v3351
      %v3353 = vpop.f32.mrf.mxu0
      %v3354 = vadd.f32 0.0, %v3353
      %3355 = vmatmul.bf16.gmra.mxu0 %v3139
      %v3356 = vpop.f32.mrf.mxu0
      %v3357 = vadd.f32 0.0, %v3356
      %v3358 = vpop.f32.mrf.mxu0
      %v3359 = vadd.f32 0.0, %v3358
      %3360 = vdwg.mxu0
      %v3361 = vadd.f32 %v3028, %v3181
      %v3362 = vadd.f32 %v3029, %v3200
      %v3363 = vadd.f32 %v3030, %v3219
      %v3364 = vadd.f32 %v3031, %v3238
      %v3365 = vadd.f32 %v3032, %v3257
      %v3366 = vadd.f32 %v3033, %v3276
      %v3367 = vadd.f32 %v3034, %v3295
      %v3368 = vadd.f32 %v3035, %v3314
      %v3369 = vadd.f32 %v3036, %v3333
      %v3370 = vadd.f32 %v3037, %v3352
      %v3371 = vadd.f32 %v3038, %v3183
      %v3372 = vadd.f32 %v3039, %v3202
      %v3373 = vadd.f32 %v3040, %v3221
      %v3374 = vadd.f32 %v3041, %v3240
      %v3375 = vadd.f32 %v3042, %v3259
      %v3376 = vadd.f32 %v3043, %v3278
      %v3377 = vadd.f32 %v3044, %v3297
      %v3378 = vadd.f32 %v3045, %v3316
      %v3379 = vadd.f32 %v3046, %v3335
      %v3380 = vadd.f32 %v3047, %v3354
      %v3381 = vadd.f32 %v3048, %v3186
      %v3382 = vadd.f32 %v3049, %v3205
      %v3383 = vadd.f32 %v3050, %v3224
      %v3384 = vadd.f32 %v3051, %v3243
      %v3385 = vadd.f32 %v3052, %v3262
      %v3386 = vadd.f32 %v3053, %v3281
      %v3387 = vadd.f32 %v3054, %v3300
      %v3388 = vadd.f32 %v3055, %v3319
      %v3389 = vadd.f32 %v3056, %v3338
      %v3390 = vadd.f32 %v3057, %v3357
      %v3391 = vadd.f32 %v3058, %v3188
      %v3392 = vadd.f32 %v3059, %v3207
      %v3393 = vadd.f32 %v3060, %v3226
      %v3394 = vadd.f32 %v3061, %v3245
      %v3395 = vadd.f32 %v3062, %v3264
      %v3396 = vadd.f32 %v3063, %v3283
      %v3397 = vadd.f32 %v3064, %v3302
      %v3398 = vadd.f32 %v3065, %v3321
      %v3399 = vadd.f32 %v3066, %v3340
      %v3400 = vadd.f32 %v3067, %v3359
      %3401 = vst [vmem:[#allocation2] sm:$0xff] %v3361
      %3402 = vst [vmem:[#allocation2 + $0x8] sm:$0xff] %v3362
      %3403 = vst [vmem:[#allocation2 + $0x10] sm:$0xff] %v3363
      %3404 = vst [vmem:[#allocation2 + $0x18] sm:$0xff] %v3364
      %3405 = vst [vmem:[#allocation2 + $0x20] sm:$0xff] %v3365
      %3406 = vst [vmem:[#allocation2 + $0x28] sm:$0xff] %v3366
      %3407 = vst [vmem:[#allocation2 + $0x30] sm:$0xff] %v3367
      %3408 = vst [vmem:[#allocation2 + $0x38] sm:$0xff] %v3368
      %3409 = vst [vmem:[#allocation2 + $0x40] sm:$0xff] %v3369
      %3410 = vst.msk [vmem:[#allocation2 + $0x48] sm:$0xff] %vm563, %v3370
      %3411 = vst [vmem:[#allocation2 + $0x50] sm:$0xff] %v3371
      %3412 = vst [vmem:[#allocation2 + $0x58] sm:$0xff] %v3372
      %3413 = vst [vmem:[#allocation2 + $0x60] sm:$0xff] %v3373
      %3414 = vst [vmem:[#allocation2 + $0x68] sm:$0xff] %v3374
      %3415 = vst [vmem:[#allocation2 + $0x70] sm:$0xff] %v3375
      %3416 = vst [vmem:[#allocation2 + $0x78] sm:$0xff] %v3376
      %3417 = vst [vmem:[#allocation2 + $0x80] sm:$0xff] %v3377
      %3418 = vst [vmem:[#allocation2 + $0x88] sm:$0xff] %v3378
      %3419 = vst [vmem:[#allocation2 + $0x90] sm:$0xff] %v3379
      %3420 = vst.msk [vmem:[#allocation2 + $0x98] sm:$0xff] %vm563, %v3380
      %3421 = vst [vmem:[#allocation2 + $0xa0] sm:$0xff] %v3381
      %3422 = vst [vmem:[#allocation2 + $0xa8] sm:$0xff] %v3382
      %3423 = vst [vmem:[#allocation2 + $0xb0] sm:$0xff] %v3383
      %3424 = vst [vmem:[#allocation2 + $0xb8] sm:$0xff] %v3384
      %3425 = vst [vmem:[#allocation2 + $0xc0] sm:$0xff] %v3385
      %3426 = vst [vmem:[#allocation2 + $0xc8] sm:$0xff] %v3386
      %3427 = vst [vmem:[#allocation2 + $0xd0] sm:$0xff] %v3387
      %3428 = vst [vmem:[#allocation2 + $0xd8] sm:$0xff] %v3388
      %3429 = vst [vmem:[#allocation2 + $0xe0] sm:$0xff] %v3389
      %3430 = vst.msk [vmem:[#allocation2 + $0xe8] sm:$0xff] %vm563, %v3390
      %3431 = vst [vmem:[#allocation2 + $0xf0] sm:$0xff] %v3391
      %3432 = vst [vmem:[#allocation2 + $0xf8] sm:$0xff] %v3392
      %3433 = vst [vmem:[#allocation2 + $0x100] sm:$0xff] %v3393
      %3434 = vst [vmem:[#allocation2 + $0x108] sm:$0xff] %v3394
      %3435 = vst [vmem:[#allocation2 + $0x110] sm:$0xff] %v3395
      %3436 = vst [vmem:[#allocation2 + $0x118] sm:$0xff] %v3396
      %3437 = vst [vmem:[#allocation2 + $0x120] sm:$0xff] %v3397
      %3438 = vst [vmem:[#allocation2 + $0x128] sm:$0xff] %v3398
      %3439 = vst [vmem:[#allocation2 + $0x130] sm:$0xff] %v3399
      %3440 = vst.msk [vmem:[#allocation2 + $0x138] sm:$0xff] %vm563, %v3400
      %v3441 = vld [vmem:[#allocation2] sm:$0xff]
      %v3442 = vld [vmem:[#allocation2 + $0x8] sm:$0xff]
      %v3443 = vld [vmem:[#allocation2 + $0x10] sm:$0xff]
      %v3444 = vld [vmem:[#allocation2 + $0x18] sm:$0xff]
      %v3445 = vld [vmem:[#allocation2 + $0x20] sm:$0xff]
      %v3446 = vld [vmem:[#allocation2 + $0x28] sm:$0xff]
      %v3447 = vld [vmem:[#allocation2 + $0x30] sm:$0xff]
      %v3448 = vld [vmem:[#allocation2 + $0x38] sm:$0xff]
      %v3449 = vld [vmem:[#allocation2 + $0x40] sm:$0xff]
      %v3450 = vld [vmem:[#allocation2 + $0x48] sm:$0xff]
      %v3451 = vld [vmem:[#allocation2 + $0x50] sm:$0xff]
      %v3452 = vld [vmem:[#allocation2 + $0x58] sm:$0xff]
      %v3453 = vld [vmem:[#allocation2 + $0x60] sm:$0xff]
      %v3454 = vld [vmem:[#allocation2 + $0x68] sm:$0xff]
      %v3455 = vld [vmem:[#allocation2 + $0x70] sm:$0xff]
      %v3456 = vld [vmem:[#allocation2 + $0x78] sm:$0xff]
      %v3457 = vld [vmem:[#allocation2 + $0x80] sm:$0xff]
      %v3458 = vld [vmem:[#allocation2 + $0x88] sm:$0xff]
      %v3459 = vld [vmem:[#allocation2 + $0x90] sm:$0xff]
      %v3460 = vld [vmem:[#allocation2 + $0x98] sm:$0xff]
      %v3461 = vld [vmem:[#allocation2 + $0xa0] sm:$0xff]
      %v3462 = vld [vmem:[#allocation2 + $0xa8] sm:$0xff]
      %v3463 = vld [vmem:[#allocation2 + $0xb0] sm:$0xff]
      %v3464 = vld [vmem:[#allocation2 + $0xb8] sm:$0xff]
      %v3465 = vld [vmem:[#allocation2 + $0xc0] sm:$0xff]
      %v3466 = vld [vmem:[#allocation2 + $0xc8] sm:$0xff]
      %v3467 = vld [vmem:[#allocation2 + $0xd0] sm:$0xff]
      %v3468 = vld [vmem:[#allocation2 + $0xd8] sm:$0xff]
      %v3469 = vld [vmem:[#allocation2 + $0xe0] sm:$0xff]
      %v3470 = vld [vmem:[#allocation2 + $0xe8] sm:$0xff]
      %v3471 = vld [vmem:[#allocation2 + $0xf0] sm:$0xff]
      %v3472 = vld [vmem:[#allocation2 + $0xf8] sm:$0xff]
      %v3473 = vld [vmem:[#allocation2 + $0x100] sm:$0xff]
      %v3474 = vld [vmem:[#allocation2 + $0x108] sm:$0xff]
      %v3475 = vld [vmem:[#allocation2 + $0x110] sm:$0xff]
      %v3476 = vld [vmem:[#allocation2 + $0x118] sm:$0xff]
      %v3477 = vld [vmem:[#allocation2 + $0x120] sm:$0xff]
      %v3478 = vld [vmem:[#allocation2 + $0x128] sm:$0xff]
      %v3479 = vld [vmem:[#allocation2 + $0x130] sm:$0xff]
      %v3480 = vld [vmem:[#allocation2 + $0x138] sm:$0xff]
      %s3481 = scalar_lea.vmem %s1, 112
      %v3482 = vld [vmem:[%s3481] sm:$0xf]
      %v3483 = vld [vmem:[%s3481 + $0x4] sm:$0xf]
      %v3484 = vld [vmem:[%s3481 + $0x8] sm:$0xf]
      %v3485 = vld [vmem:[%s3481 + $0xc] sm:$0xf]
      %v3490 = vunpack.c.l.b16 %v3482
      %v3491 = vunpack.c.l.b16 %v3483
      %v3492 = vunpack.c.l.b16 %v3484
      %v3493 = vunpack.c.l.b16 %v3485
      %v3494 = vpack.c.b16 %v3491, %v3490
      %v3495 = vpack.c.b16 %v3493, %v3492
      %3496 = vst [vmem:[#allocation1] ss:$9 sm:$0xff] %v595
      %v3497 = vld [vmem:[#allocation1] sm:$0xff]
      %v3499 = vld [vmem:[#allocation1 + $0x9] sm:$0xff]
      %v3501 = vld [vmem:[#allocation1 + $0x12] sm:$0xff]
      %v3503 = vld [vmem:[#allocation1 + $0x1b] sm:$0xff]
      %v3505 = vld [vmem:[#allocation1 + $0x24] sm:$0xff]
      %v3507 = vld [vmem:[#allocation1 + $0x2d] sm:$0xff]
      %v3509 = vld [vmem:[#allocation1 + $0x36] sm:$0xff]
      %v3511 = vld [vmem:[#allocation1 + $0x3f] sm:$0xff]
      %3513 = vst [vmem:[#allocation1] ss:$9 sm:$0xff] %v596
      %v3514 = vld [vmem:[#allocation1] sm:$0xff]
      %v3516 = vld [vmem:[#allocation1 + $0x9] sm:$0xff]
      %3518 = vrot.lane.b32.xlu0 %v3497, 59
      %v3519 = vpop.permute.xlu0 %3518
      %3520 = vrot.lane.b32.xlu0 %v3499, 59
      %v3521 = vpop.permute.xlu0 %3520
      %3522 = vrot.lane.b32.xlu0 %v3501, 59
      %v3523 = vpop.permute.xlu0 %3522
      %3524 = vrot.lane.b32.xlu0 %v3503, 59
      %v3525 = vpop.permute.xlu0 %3524
      %3526 = vrot.lane.b32.xlu0 %v3505, 59
      %v3527 = vpop.permute.xlu0 %3526
      %3528 = vrot.lane.b32.xlu0 %v3507, 59
      %v3529 = vpop.permute.xlu0 %3528
      %3530 = vrot.lane.b32.xlu0 %v3509, 59
      %v3531 = vpop.permute.xlu0 %3530
      %3532 = vrot.lane.b32.xlu0 %v3511, 59
      %v3533 = vpop.permute.xlu0 %3532
      %3534 = vrot.lane.b32.xlu0 %v3514, 59
      %v3535 = vpop.permute.xlu0 %3534
      %3536 = vrot.lane.b32.xlu0 %v3516, 59
      %v3537 = vpop.permute.xlu0 %3536
      %vm3538 = vcmask 482304
      %v3539 = vsel %vm3538, %v3519, %v3521
      %v3540 = vsel %vm3538, %v3521, %v3523
      %v3541 = vsel %vm3538, %v3523, %v3525
      %v3542 = vsel %vm3538, %v3525, %v3527
      %v3543 = vsel %vm3538, %v3527, %v3529
      %v3544 = vsel %vm3538, %v3529, %v3531
      %v3545 = vsel %vm3538, %v3531, %v3533
      %v3546 = vsel %vm3538, %v3533, %v3535
      %v3547 = vsel %vm3538, %v3535, %v3537
      %v3549 = vsel %vm665, %v3494, 0
      %v3552 = vsel %vm665, %v3495, 0
      %v3555 = vsel %vm672, %v3539, 0
      %v3558 = vsel %vm672, %v3540, 0
      %v3561 = vsel %vm672, %v3541, 0
      %v3564 = vsel %vm672, %v3542, 0
      %v3567 = vsel %vm672, %v3543, 0
      %v3570 = vsel %vm672, %v3544, 0
      %v3573 = vsel %vm672, %v3545, 0
      %v3576 = vsel %vm672, %v3546, 0
      %v3579 = vsel %vm672, %v3547, 0
      %v3582 = vsel %vm672, %v3537, 0
      %3584 = vmatpush.bf16.msra.mxu0 0
      %3585 = vmatpush.bf16.msra.mxu0 0
      %3586 = vmatpush.bf16.msra.mxu0 0
      %3587 = vmatpush.bf16.msra.mxu0 0
      %3588 = vmatpush.bf16.msra.mxu0 0
      %3589 = vmatpush.bf16.msra.mxu0 0
      %3590 = vmatpush.bf16.msra.mxu0 0
      %3591 = vmatpush.bf16.msra.mxu0 %v3555
      %3592 = vmatmul.bf16.gmra.mxu0 %v3549
      %v3593 = vpop.f32.mrf.mxu0
      %v3594 = vadd.f32 0.0, %v3593
      %v3595 = vpop.f32.mrf.mxu0
      %v3596 = vadd.f32 0.0, %v3595
      %3597 = vmatmul.bf16.gmra.mxu0 %v3552
      %v3598 = vpop.f32.mrf.mxu0
      %v3599 = vadd.f32 0.0, %v3598
      %v3600 = vpop.f32.mrf.mxu0
      %v3601 = vadd.f32 0.0, %v3600
      %3602 = vdwg.mxu0
      %3603 = vmatpush.bf16.msra.mxu0 0
      %3604 = vmatpush.bf16.msra.mxu0 0
      %3605 = vmatpush.bf16.msra.mxu0 0
      %3606 = vmatpush.bf16.msra.mxu0 0
      %3607 = vmatpush.bf16.msra.mxu0 0
      %3608 = vmatpush.bf16.msra.mxu0 0
      %3609 = vmatpush.bf16.msra.mxu0 0
      %3610 = vmatpush.bf16.msra.mxu0 %v3558
      %3611 = vmatmul.bf16.gmra.mxu0 %v3549
      %v3612 = vpop.f32.mrf.mxu0
      %v3613 = vadd.f32 0.0, %v3612
      %v3614 = vpop.f32.mrf.mxu0
      %v3615 = vadd.f32 0.0, %v3614
      %3616 = vmatmul.bf16.gmra.mxu0 %v3552
      %v3617 = vpop.f32.mrf.mxu0
      %v3618 = vadd.f32 0.0, %v3617
      %v3619 = vpop.f32.mrf.mxu0
      %v3620 = vadd.f32 0.0, %v3619
      %3621 = vdwg.mxu0
      %3622 = vmatpush.bf16.msra.mxu0 0
      %3623 = vmatpush.bf16.msra.mxu0 0
      %3624 = vmatpush.bf16.msra.mxu0 0
      %3625 = vmatpush.bf16.msra.mxu0 0
      %3626 = vmatpush.bf16.msra.mxu0 0
      %3627 = vmatpush.bf16.msra.mxu0 0
      %3628 = vmatpush.bf16.msra.mxu0 0
      %3629 = vmatpush.bf16.msra.mxu0 %v3561
      %3630 = vmatmul.bf16.gmra.mxu0 %v3549
      %v3631 = vpop.f32.mrf.mxu0
      %v3632 = vadd.f32 0.0, %v3631
      %v3633 = vpop.f32.mrf.mxu0
      %v3634 = vadd.f32 0.0, %v3633
      %3635 = vmatmul.bf16.gmra.mxu0 %v3552
      %v3636 = vpop.f32.mrf.mxu0
      %v3637 = vadd.f32 0.0, %v3636
      %v3638 = vpop.f32.mrf.mxu0
      %v3639 = vadd.f32 0.0, %v3638
      %3640 = vdwg.mxu0
      %3641 = vmatpush.bf16.msra.mxu0 0
      %3642 = vmatpush.bf16.msra.mxu0 0
      %3643 = vmatpush.bf16.msra.mxu0 0
      %3644 = vmatpush.bf16.msra.mxu0 0
      %3645 = vmatpush.bf16.msra.mxu0 0
      %3646 = vmatpush.bf16.msra.mxu0 0
      %3647 = vmatpush.bf16.msra.mxu0 0
      %3648 = vmatpush.bf16.msra.mxu0 %v3564
      %3649 = vmatmul.bf16.gmra.mxu0 %v3549
      %v3650 = vpop.f32.mrf.mxu0
      %v3651 = vadd.f32 0.0, %v3650
      %v3652 = vpop.f32.mrf.mxu0
      %v3653 = vadd.f32 0.0, %v3652
      %3654 = vmatmul.bf16.gmra.mxu0 %v3552
      %v3655 = vpop.f32.mrf.mxu0
      %v3656 = vadd.f32 0.0, %v3655
      %v3657 = vpop.f32.mrf.mxu0
      %v3658 = vadd.f32 0.0, %v3657
      %3659 = vdwg.mxu0
      %3660 = vmatpush.bf16.msra.mxu0 0
      %3661 = vmatpush.bf16.msra.mxu0 0
      %3662 = vmatpush.bf16.msra.mxu0 0
      %3663 = vmatpush.bf16.msra.mxu0 0
      %3664 = vmatpush.bf16.msra.mxu0 0
      %3665 = vmatpush.bf16.msra.mxu0 0
      %3666 = vmatpush.bf16.msra.mxu0 0
      %3667 = vmatpush.bf16.msra.mxu0 %v3567
      %3668 = vmatmul.bf16.gmra.mxu0 %v3549
      %v3669 = vpop.f32.mrf.mxu0
      %v3670 = vadd.f32 0.0, %v3669
      %v3671 = vpop.f32.mrf.mxu0
      %v3672 = vadd.f32 0.0, %v3671
      %3673 = vmatmul.bf16.gmra.mxu0 %v3552
      %v3674 = vpop.f32.mrf.mxu0
      %v3675 = vadd.f32 0.0, %v3674
      %v3676 = vpop.f32.mrf.mxu0
      %v3677 = vadd.f32 0.0, %v3676
      %3678 = vdwg.mxu0
      %3679 = vmatpush.bf16.msra.mxu0 0
      %3680 = vmatpush.bf16.msra.mxu0 0
      %3681 = vmatpush.bf16.msra.mxu0 0
      %3682 = vmatpush.bf16.msra.mxu0 0
      %3683 = vmatpush.bf16.msra.mxu0 0
      %3684 = vmatpush.bf16.msra.mxu0 0
      %3685 = vmatpush.bf16.msra.mxu0 0
      %3686 = vmatpush.bf16.msra.mxu0 %v3570
      %3687 = vmatmul.bf16.gmra.mxu0 %v3549
      %v3688 = vpop.f32.mrf.mxu0
      %v3689 = vadd.f32 0.0, %v3688
      %v3690 = vpop.f32.mrf.mxu0
      %v3691 = vadd.f32 0.0, %v3690
      %3692 = vmatmul.bf16.gmra.mxu0 %v3552
      %v3693 = vpop.f32.mrf.mxu0
      %v3694 = vadd.f32 0.0, %v3693
      %v3695 = vpop.f32.mrf.mxu0
      %v3696 = vadd.f32 0.0, %v3695
      %3697 = vdwg.mxu0
      %3698 = vmatpush.bf16.msra.mxu0 0
      %3699 = vmatpush.bf16.msra.mxu0 0
      %3700 = vmatpush.bf16.msra.mxu0 0
      %3701 = vmatpush.bf16.msra.mxu0 0
      %3702 = vmatpush.bf16.msra.mxu0 0
      %3703 = vmatpush.bf16.msra.mxu0 0
      %3704 = vmatpush.bf16.msra.mxu0 0
      %3705 = vmatpush.bf16.msra.mxu0 %v3573
      %3706 = vmatmul.bf16.gmra.mxu0 %v3549
      %v3707 = vpop.f32.mrf.mxu0
      %v3708 = vadd.f32 0.0, %v3707
      %v3709 = vpop.f32.mrf.mxu0
      %v3710 = vadd.f32 0.0, %v3709
      %3711 = vmatmul.bf16.gmra.mxu0 %v3552
      %v3712 = vpop.f32.mrf.mxu0
      %v3713 = vadd.f32 0.0, %v3712
      %v3714 = vpop.f32.mrf.mxu0
      %v3715 = vadd.f32 0.0, %v3714
      %3716 = vdwg.mxu0
      %3717 = vmatpush.bf16.msra.mxu0 0
      %3718 = vmatpush.bf16.msra.mxu0 0
      %3719 = vmatpush.bf16.msra.mxu0 0
      %3720 = vmatpush.bf16.msra.mxu0 0
      %3721 = vmatpush.bf16.msra.mxu0 0
      %3722 = vmatpush.bf16.msra.mxu0 0
      %3723 = vmatpush.bf16.msra.mxu0 0
      %3724 = vmatpush.bf16.msra.mxu0 %v3576
      %3725 = vmatmul.bf16.gmra.mxu0 %v3549
      %v3726 = vpop.f32.mrf.mxu0
      %v3727 = vadd.f32 0.0, %v3726
      %v3728 = vpop.f32.mrf.mxu0
      %v3729 = vadd.f32 0.0, %v3728
      %3730 = vmatmul.bf16.gmra.mxu0 %v3552
      %v3731 = vpop.f32.mrf.mxu0
      %v3732 = vadd.f32 0.0, %v3731
      %v3733 = vpop.f32.mrf.mxu0
      %v3734 = vadd.f32 0.0, %v3733
      %3735 = vdwg.mxu0
      %3736 = vmatpush.bf16.msra.mxu0 0
      %3737 = vmatpush.bf16.msra.mxu0 0
      %3738 = vmatpush.bf16.msra.mxu0 0
      %3739 = vmatpush.bf16.msra.mxu0 0
      %3740 = vmatpush.bf16.msra.mxu0 0
      %3741 = vmatpush.bf16.msra.mxu0 0
      %3742 = vmatpush.bf16.msra.mxu0 0
      %3743 = vmatpush.bf16.msra.mxu0 %v3579
      %3744 = vmatmul.bf16.gmra.mxu0 %v3549
      %v3745 = vpop.f32.mrf.mxu0
      %v3746 = vadd.f32 0.0, %v3745
      %v3747 = vpop.f32.mrf.mxu0
      %v3748 = vadd.f32 0.0, %v3747
      %3749 = vmatmul.bf16.gmra.mxu0 %v3552
      %v3750 = vpop.f32.mrf.mxu0
      %v3751 = vadd.f32 0.0, %v3750
      %v3752 = vpop.f32.mrf.mxu0
      %v3753 = vadd.f32 0.0, %v3752
      %3754 = vdwg.mxu0
      %3755 = vmatpush.bf16.msra.mxu0 0
      %3756 = vmatpush.bf16.msra.mxu0 0
      %3757 = vmatpush.bf16.msra.mxu0 0
      %3758 = vmatpush.bf16.msra.mxu0 0
      %3759 = vmatpush.bf16.msra.mxu0 0
      %3760 = vmatpush.bf16.msra.mxu0 0
      %3761 = vmatpush.bf16.msra.mxu0 0
      %3762 = vmatpush.bf16.msra.mxu0 %v3582
      %3763 = vmatmul.bf16.gmra.mxu0 %v3549
      %v3764 = vpop.f32.mrf.mxu0
      %v3765 = vadd.f32 0.0, %v3764
      %v3766 = vpop.f32.mrf.mxu0
      %v3767 = vadd.f32 0.0, %v3766
      %3768 = vmatmul.bf16.gmra.mxu0 %v3552
      %v3769 = vpop.f32.mrf.mxu0
      %v3770 = vadd.f32 0.0, %v3769
      %v3771 = vpop.f32.mrf.mxu0
      %v3772 = vadd.f32 0.0, %v3771
      %3773 = vdwg.mxu0
      %v3774 = vadd.f32 %v3441, %v3594
      %v3775 = vadd.f32 %v3442, %v3613
      %v3776 = vadd.f32 %v3443, %v3632
      %v3777 = vadd.f32 %v3444, %v3651
      %v3778 = vadd.f32 %v3445, %v3670
      %v3779 = vadd.f32 %v3446, %v3689
      %v3780 = vadd.f32 %v3447, %v3708
      %v3781 = vadd.f32 %v3448, %v3727
      %v3782 = vadd.f32 %v3449, %v3746
      %v3783 = vadd.f32 %v3450, %v3765
      %v3784 = vadd.f32 %v3451, %v3596
      %v3785 = vadd.f32 %v3452, %v3615
      %v3786 = vadd.f32 %v3453, %v3634
      %v3787 = vadd.f32 %v3454, %v3653
      %v3788 = vadd.f32 %v3455, %v3672
      %v3789 = vadd.f32 %v3456, %v3691
      %v3790 = vadd.f32 %v3457, %v3710
      %v3791 = vadd.f32 %v3458, %v3729
      %v3792 = vadd.f32 %v3459, %v3748
      %v3793 = vadd.f32 %v3460, %v3767
      %v3794 = vadd.f32 %v3461, %v3599
      %v3795 = vadd.f32 %v3462, %v3618
      %v3796 = vadd.f32 %v3463, %v3637
      %v3797 = vadd.f32 %v3464, %v3656
      %v3798 = vadd.f32 %v3465, %v3675
      %v3799 = vadd.f32 %v3466, %v3694
      %v3800 = vadd.f32 %v3467, %v3713
      %v3801 = vadd.f32 %v3468, %v3732
      %v3802 = vadd.f32 %v3469, %v3751
      %v3803 = vadd.f32 %v3470, %v3770
      %v3804 = vadd.f32 %v3471, %v3601
      %v3805 = vadd.f32 %v3472, %v3620
      %v3806 = vadd.f32 %v3473, %v3639
      %v3807 = vadd.f32 %v3474, %v3658
      %v3808 = vadd.f32 %v3475, %v3677
      %v3809 = vadd.f32 %v3476, %v3696
      %v3810 = vadd.f32 %v3477, %v3715
      %v3811 = vadd.f32 %v3478, %v3734
      %v3812 = vadd.f32 %v3479, %v3753
      %v3813 = vadd.f32 %v3480, %v3772
      %3814 = vst [vmem:[#allocation2] sm:$0xff] %v3774
      %3815 = vst [vmem:[#allocation2 + $0x8] sm:$0xff] %v3775
      %3816 = vst [vmem:[#allocation2 + $0x10] sm:$0xff] %v3776
      %3817 = vst [vmem:[#allocation2 + $0x18] sm:$0xff] %v3777
      %3818 = vst [vmem:[#allocation2 + $0x20] sm:$0xff] %v3778
      %3819 = vst [vmem:[#allocation2 + $0x28] sm:$0xff] %v3779
      %3820 = vst [vmem:[#allocation2 + $0x30] sm:$0xff] %v3780
      %3821 = vst [vmem:[#allocation2 + $0x38] sm:$0xff] %v3781
      %3822 = vst [vmem:[#allocation2 + $0x40] sm:$0xff] %v3782
      %3823 = vst.msk [vmem:[#allocation2 + $0x48] sm:$0xff] %vm563, %v3783
      %3824 = vst [vmem:[#allocation2 + $0x50] sm:$0xff] %v3784
      %3825 = vst [vmem:[#allocation2 + $0x58] sm:$0xff] %v3785
      %3826 = vst [vmem:[#allocation2 + $0x60] sm:$0xff] %v3786
      %3827 = vst [vmem:[#allocation2 + $0x68] sm:$0xff] %v3787
      %3828 = vst [vmem:[#allocation2 + $0x70] sm:$0xff] %v3788
      %3829 = vst [vmem:[#allocation2 + $0x78] sm:$0xff] %v3789
      %3830 = vst [vmem:[#allocation2 + $0x80] sm:$0xff] %v3790
      %3831 = vst [vmem:[#allocation2 + $0x88] sm:$0xff] %v3791
      %3832 = vst [vmem:[#allocation2 + $0x90] sm:$0xff] %v3792
      %3833 = vst.msk [vmem:[#allocation2 + $0x98] sm:$0xff] %vm563, %v3793
      %3834 = vst [vmem:[#allocation2 + $0xa0] sm:$0xff] %v3794
      %3835 = vst [vmem:[#allocation2 + $0xa8] sm:$0xff] %v3795
      %3836 = vst [vmem:[#allocation2 + $0xb0] sm:$0xff] %v3796
      %3837 = vst [vmem:[#allocation2 + $0xb8] sm:$0xff] %v3797
      %3838 = vst [vmem:[#allocation2 + $0xc0] sm:$0xff] %v3798
      %3839 = vst [vmem:[#allocation2 + $0xc8] sm:$0xff] %v3799
      %3840 = vst [vmem:[#allocation2 + $0xd0] sm:$0xff] %v3800
      %3841 = vst [vmem:[#allocation2 + $0xd8] sm:$0xff] %v3801
      %3842 = vst [vmem:[#allocation2 + $0xe0] sm:$0xff] %v3802
      %3843 = vst.msk [vmem:[#allocation2 + $0xe8] sm:$0xff] %vm563, %v3803
      %3844 = vst [vmem:[#allocation2 + $0xf0] sm:$0xff] %v3804
      %3845 = vst [vmem:[#allocation2 + $0xf8] sm:$0xff] %v3805
      %3846 = vst [vmem:[#allocation2 + $0x100] sm:$0xff] %v3806
      %3847 = vst [vmem:[#allocation2 + $0x108] sm:$0xff] %v3807
      %3848 = vst [vmem:[#allocation2 + $0x110] sm:$0xff] %v3808
      %3849 = vst [vmem:[#allocation2 + $0x118] sm:$0xff] %v3809
      %3850 = vst [vmem:[#allocation2 + $0x120] sm:$0xff] %v3810
      %3851 = vst [vmem:[#allocation2 + $0x128] sm:$0xff] %v3811
      %3852 = vst [vmem:[#allocation2 + $0x130] sm:$0xff] %v3812
      %3853 = vst.msk [vmem:[#allocation2 + $0x138] sm:$0xff] %vm563, %v3813
      %v3854 = vld [vmem:[#allocation2] sm:$0xff]
      %v3855 = vld [vmem:[#allocation2 + $0x8] sm:$0xff]
      %v3856 = vld [vmem:[#allocation2 + $0x10] sm:$0xff]
      %v3857 = vld [vmem:[#allocation2 + $0x18] sm:$0xff]
      %v3858 = vld [vmem:[#allocation2 + $0x20] sm:$0xff]
      %v3859 = vld [vmem:[#allocation2 + $0x28] sm:$0xff]
      %v3860 = vld [vmem:[#allocation2 + $0x30] sm:$0xff]
      %v3861 = vld [vmem:[#allocation2 + $0x38] sm:$0xff]
      %v3862 = vld [vmem:[#allocation2 + $0x40] sm:$0xff]
      %v3863 = vld [vmem:[#allocation2 + $0x48] sm:$0xff]
      %v3864 = vld [vmem:[#allocation2 + $0x50] sm:$0xff]
      %v3865 = vld [vmem:[#allocation2 + $0x58] sm:$0xff]
      %v3866 = vld [vmem:[#allocation2 + $0x60] sm:$0xff]
      %v3867 = vld [vmem:[#allocation2 + $0x68] sm:$0xff]
      %v3868 = vld [vmem:[#allocation2 + $0x70] sm:$0xff]
      %v3869 = vld [vmem:[#allocation2 + $0x78] sm:$0xff]
      %v3870 = vld [vmem:[#allocation2 + $0x80] sm:$0xff]
      %v3871 = vld [vmem:[#allocation2 + $0x88] sm:$0xff]
      %v3872 = vld [vmem:[#allocation2 + $0x90] sm:$0xff]
      %v3873 = vld [vmem:[#allocation2 + $0x98] sm:$0xff]
      %v3874 = vld [vmem:[#allocation2 + $0xa0] sm:$0xff]
      %v3875 = vld [vmem:[#allocation2 + $0xa8] sm:$0xff]
      %v3876 = vld [vmem:[#allocation2 + $0xb0] sm:$0xff]
      %v3877 = vld [vmem:[#allocation2 + $0xb8] sm:$0xff]
      %v3878 = vld [vmem:[#allocation2 + $0xc0] sm:$0xff]
      %v3879 = vld [vmem:[#allocation2 + $0xc8] sm:$0xff]
      %v3880 = vld [vmem:[#allocation2 + $0xd0] sm:$0xff]
      %v3881 = vld [vmem:[#allocation2 + $0xd8] sm:$0xff]
      %v3882 = vld [vmem:[#allocation2 + $0xe0] sm:$0xff]
      %v3883 = vld [vmem:[#allocation2 + $0xe8] sm:$0xff]
      %v3884 = vld [vmem:[#allocation2 + $0xf0] sm:$0xff]
      %v3885 = vld [vmem:[#allocation2 + $0xf8] sm:$0xff]
      %v3886 = vld [vmem:[#allocation2 + $0x100] sm:$0xff]
      %v3887 = vld [vmem:[#allocation2 + $0x108] sm:$0xff]
      %v3888 = vld [vmem:[#allocation2 + $0x110] sm:$0xff]
      %v3889 = vld [vmem:[#allocation2 + $0x118] sm:$0xff]
      %v3890 = vld [vmem:[#allocation2 + $0x120] sm:$0xff]
      %v3891 = vld [vmem:[#allocation2 + $0x128] sm:$0xff]
      %v3892 = vld [vmem:[#allocation2 + $0x130] sm:$0xff]
      %v3893 = vld [vmem:[#allocation2 + $0x138] sm:$0xff]
      %s3894 = scalar_lea.vmem %s1, 128
      %v3895 = vld [vmem:[%s3894] sm:$0xf]
      %v3896 = vld [vmem:[%s3894 + $0x4] sm:$0xf]
      %v3897 = vld [vmem:[%s3894 + $0x8] sm:$0xf]
      %v3898 = vld [vmem:[%s3894 + $0xc] sm:$0xf]
      %v3903 = vunpack.c.l.b16 %v3895
      %v3904 = vunpack.c.l.b16 %v3896
      %v3905 = vunpack.c.l.b16 %v3897
      %v3906 = vunpack.c.l.b16 %v3898
      %v3907 = vpack.c.b16 %v3904, %v3903
      %v3908 = vpack.c.b16 %v3906, %v3905
      %3909 = vst [vmem:[#allocation1] ss:$9 sm:$0xff] %v595
      %v3910 = vld [vmem:[#allocation1] sm:$0xff]
      %v3912 = vld [vmem:[#allocation1 + $0x9] sm:$0xff]
      %v3914 = vld [vmem:[#allocation1 + $0x12] sm:$0xff]
      %v3916 = vld [vmem:[#allocation1 + $0x1b] sm:$0xff]
      %v3918 = vld [vmem:[#allocation1 + $0x24] sm:$0xff]
      %v3920 = vld [vmem:[#allocation1 + $0x2d] sm:$0xff]
      %v3922 = vld [vmem:[#allocation1 + $0x36] sm:$0xff]
      %v3924 = vld [vmem:[#allocation1 + $0x3f] sm:$0xff]
      %3926 = vst [vmem:[#allocation1] ss:$9 sm:$0xff] %v596
      %v3927 = vld [vmem:[#allocation1] sm:$0xff]
      %v3929 = vld [vmem:[#allocation1 + $0x9] sm:$0xff]
      %3931 = vrot.lane.b32.xlu0 %v3910, 58
      %v3932 = vpop.permute.xlu0 %3931
      %3933 = vrot.lane.b32.xlu0 %v3912, 58
      %v3934 = vpop.permute.xlu0 %3933
      %3935 = vrot.lane.b32.xlu0 %v3914, 58
      %v3936 = vpop.permute.xlu0 %3935
      %3937 = vrot.lane.b32.xlu0 %v3916, 58
      %v3938 = vpop.permute.xlu0 %3937
      %3939 = vrot.lane.b32.xlu0 %v3918, 58
      %v3940 = vpop.permute.xlu0 %3939
      %3941 = vrot.lane.b32.xlu0 %v3920, 58
      %v3942 = vpop.permute.xlu0 %3941
      %3943 = vrot.lane.b32.xlu0 %v3922, 58
      %v3944 = vpop.permute.xlu0 %3943
      %3945 = vrot.lane.b32.xlu0 %v3924, 58
      %v3946 = vpop.permute.xlu0 %3945
      %3947 = vrot.lane.b32.xlu0 %v3927, 58
      %v3948 = vpop.permute.xlu0 %3947
      %3949 = vrot.lane.b32.xlu0 %v3929, 58
      %v3950 = vpop.permute.xlu0 %3949
      %vm3951 = vcmask 474112
      %v3952 = vsel %vm3951, %v3932, %v3934
      %v3953 = vsel %vm3951, %v3934, %v3936
      %v3954 = vsel %vm3951, %v3936, %v3938
      %v3955 = vsel %vm3951, %v3938, %v3940
      %v3956 = vsel %vm3951, %v3940, %v3942
      %v3957 = vsel %vm3951, %v3942, %v3944
      %v3958 = vsel %vm3951, %v3944, %v3946
      %v3959 = vsel %vm3951, %v3946, %v3948
      %v3960 = vsel %vm3951, %v3948, %v3950
      %v3962 = vsel %vm665, %v3907, 0
      %v3965 = vsel %vm665, %v3908, 0
      %v3968 = vsel %vm672, %v3952, 0
      %v3971 = vsel %vm672, %v3953, 0
      %v3974 = vsel %vm672, %v3954, 0
      %v3977 = vsel %vm672, %v3955, 0
      %v3980 = vsel %vm672, %v3956, 0
      %v3983 = vsel %vm672, %v3957, 0
      %v3986 = vsel %vm672, %v3958, 0
      %v3989 = vsel %vm672, %v3959, 0
      %v3992 = vsel %vm672, %v3960, 0
      %v3995 = vsel %vm672, %v3950, 0
      %3997 = vmatpush.bf16.msra.mxu0 0
      %3998 = vmatpush.bf16.msra.mxu0 0
      %3999 = vmatpush.bf16.msra.mxu0 0
      %4000 = vmatpush.bf16.msra.mxu0 0
      %4001 = vmatpush.bf16.msra.mxu0 0
      %4002 = vmatpush.bf16.msra.mxu0 0
      %4003 = vmatpush.bf16.msra.mxu0 0
      %4004 = vmatpush.bf16.msra.mxu0 %v3968
      %4005 = vmatmul.bf16.gmra.mxu0 %v3962
      %v4006 = vpop.f32.mrf.mxu0
      %v4007 = vadd.f32 0.0, %v4006
      %v4008 = vpop.f32.mrf.mxu0
      %v4009 = vadd.f32 0.0, %v4008
      %4010 = vmatmul.bf16.gmra.mxu0 %v3965
      %v4011 = vpop.f32.mrf.mxu0
      %v4012 = vadd.f32 0.0, %v4011
      %v4013 = vpop.f32.mrf.mxu0
      %v4014 = vadd.f32 0.0, %v4013
      %4015 = vdwg.mxu0
      %4016 = vmatpush.bf16.msra.mxu0 0
      %4017 = vmatpush.bf16.msra.mxu0 0
      %4018 = vmatpush.bf16.msra.mxu0 0
      %4019 = vmatpush.bf16.msra.mxu0 0
      %4020 = vmatpush.bf16.msra.mxu0 0
      %4021 = vmatpush.bf16.msra.mxu0 0
      %4022 = vmatpush.bf16.msra.mxu0 0
      %4023 = vmatpush.bf16.msra.mxu0 %v3971
      %4024 = vmatmul.bf16.gmra.mxu0 %v3962
      %v4025 = vpop.f32.mrf.mxu0
      %v4026 = vadd.f32 0.0, %v4025
      %v4027 = vpop.f32.mrf.mxu0
      %v4028 = vadd.f32 0.0, %v4027
      %4029 = vmatmul.bf16.gmra.mxu0 %v3965
      %v4030 = vpop.f32.mrf.mxu0
      %v4031 = vadd.f32 0.0, %v4030
      %v4032 = vpop.f32.mrf.mxu0
      %v4033 = vadd.f32 0.0, %v4032
      %4034 = vdwg.mxu0
      %4035 = vmatpush.bf16.msra.mxu0 0
      %4036 = vmatpush.bf16.msra.mxu0 0
      %4037 = vmatpush.bf16.msra.mxu0 0
      %4038 = vmatpush.bf16.msra.mxu0 0
      %4039 = vmatpush.bf16.msra.mxu0 0
      %4040 = vmatpush.bf16.msra.mxu0 0
      %4041 = vmatpush.bf16.msra.mxu0 0
      %4042 = vmatpush.bf16.msra.mxu0 %v3974
      %4043 = vmatmul.bf16.gmra.mxu0 %v3962
      %v4044 = vpop.f32.mrf.mxu0
      %v4045 = vadd.f32 0.0, %v4044
      %v4046 = vpop.f32.mrf.mxu0
      %v4047 = vadd.f32 0.0, %v4046
      %4048 = vmatmul.bf16.gmra.mxu0 %v3965
      %v4049 = vpop.f32.mrf.mxu0
      %v4050 = vadd.f32 0.0, %v4049
      %v4051 = vpop.f32.mrf.mxu0
      %v4052 = vadd.f32 0.0, %v4051
      %4053 = vdwg.mxu0
      %4054 = vmatpush.bf16.msra.mxu0 0
      %4055 = vmatpush.bf16.msra.mxu0 0
      %4056 = vmatpush.bf16.msra.mxu0 0
      %4057 = vmatpush.bf16.msra.mxu0 0
      %4058 = vmatpush.bf16.msra.mxu0 0
      %4059 = vmatpush.bf16.msra.mxu0 0
      %4060 = vmatpush.bf16.msra.mxu0 0
      %4061 = vmatpush.bf16.msra.mxu0 %v3977
      %4062 = vmatmul.bf16.gmra.mxu0 %v3962
      %v4063 = vpop.f32.mrf.mxu0
      %v4064 = vadd.f32 0.0, %v4063
      %v4065 = vpop.f32.mrf.mxu0
      %v4066 = vadd.f32 0.0, %v4065
      %4067 = vmatmul.bf16.gmra.mxu0 %v3965
      %v4068 = vpop.f32.mrf.mxu0
      %v4069 = vadd.f32 0.0, %v4068
      %v4070 = vpop.f32.mrf.mxu0
      %v4071 = vadd.f32 0.0, %v4070
      %4072 = vdwg.mxu0
      %4073 = vmatpush.bf16.msra.mxu0 0
      %4074 = vmatpush.bf16.msra.mxu0 0
      %4075 = vmatpush.bf16.msra.mxu0 0
      %4076 = vmatpush.bf16.msra.mxu0 0
      %4077 = vmatpush.bf16.msra.mxu0 0
      %4078 = vmatpush.bf16.msra.mxu0 0
      %4079 = vmatpush.bf16.msra.mxu0 0
      %4080 = vmatpush.bf16.msra.mxu0 %v3980
      %4081 = vmatmul.bf16.gmra.mxu0 %v3962
      %v4082 = vpop.f32.mrf.mxu0
      %v4083 = vadd.f32 0.0, %v4082
      %v4084 = vpop.f32.mrf.mxu0
      %v4085 = vadd.f32 0.0, %v4084
      %4086 = vmatmul.bf16.gmra.mxu0 %v3965
      %v4087 = vpop.f32.mrf.mxu0
      %v4088 = vadd.f32 0.0, %v4087
      %v4089 = vpop.f32.mrf.mxu0
      %v4090 = vadd.f32 0.0, %v4089
      %4091 = vdwg.mxu0
      %4092 = vmatpush.bf16.msra.mxu0 0
      %4093 = vmatpush.bf16.msra.mxu0 0
      %4094 = vmatpush.bf16.msra.mxu0 0
      %4095 = vmatpush.bf16.msra.mxu0 0
      %4096 = vmatpush.bf16.msra.mxu0 0
      %4097 = vmatpush.bf16.msra.mxu0 0
      %4098 = vmatpush.bf16.msra.mxu0 0
      %4099 = vmatpush.bf16.msra.mxu0 %v3983
      %4100 = vmatmul.bf16.gmra.mxu0 %v3962
      %v4101 = vpop.f32.mrf.mxu0
      %v4102 = vadd.f32 0.0, %v4101
      %v4103 = vpop.f32.mrf.mxu0
      %v4104 = vadd.f32 0.0, %v4103
      %4105 = vmatmul.bf16.gmra.mxu0 %v3965
      %v4106 = vpop.f32.mrf.mxu0
      %v4107 = vadd.f32 0.0, %v4106
      %v4108 = vpop.f32.mrf.mxu0
      %v4109 = vadd.f32 0.0, %v4108
      %4110 = vdwg.mxu0
      %4111 = vmatpush.bf16.msra.mxu0 0
      %4112 = vmatpush.bf16.msra.mxu0 0
      %4113 = vmatpush.bf16.msra.mxu0 0
      %4114 = vmatpush.bf16.msra.mxu0 0
      %4115 = vmatpush.bf16.msra.mxu0 0
      %4116 = vmatpush.bf16.msra.mxu0 0
      %4117 = vmatpush.bf16.msra.mxu0 0
      %4118 = vmatpush.bf16.msra.mxu0 %v3986
      %4119 = vmatmul.bf16.gmra.mxu0 %v3962
      %v4120 = vpop.f32.mrf.mxu0
      %v4121 = vadd.f32 0.0, %v4120
      %v4122 = vpop.f32.mrf.mxu0
      %v4123 = vadd.f32 0.0, %v4122
      %4124 = vmatmul.bf16.gmra.mxu0 %v3965
      %v4125 = vpop.f32.mrf.mxu0
      %v4126 = vadd.f32 0.0, %v4125
      %v4127 = vpop.f32.mrf.mxu0
      %v4128 = vadd.f32 0.0, %v4127
      %4129 = vdwg.mxu0
      %4130 = vmatpush.bf16.msra.mxu0 0
      %4131 = vmatpush.bf16.msra.mxu0 0
      %4132 = vmatpush.bf16.msra.mxu0 0
      %4133 = vmatpush.bf16.msra.mxu0 0
      %4134 = vmatpush.bf16.msra.mxu0 0
      %4135 = vmatpush.bf16.msra.mxu0 0
      %4136 = vmatpush.bf16.msra.mxu0 0
      %4137 = vmatpush.bf16.msra.mxu0 %v3989
      %4138 = vmatmul.bf16.gmra.mxu0 %v3962
      %v4139 = vpop.f32.mrf.mxu0
      %v4140 = vadd.f32 0.0, %v4139
      %v4141 = vpop.f32.mrf.mxu0
      %v4142 = vadd.f32 0.0, %v4141
      %4143 = vmatmul.bf16.gmra.mxu0 %v3965
      %v4144 = vpop.f32.mrf.mxu0
      %v4145 = vadd.f32 0.0, %v4144
      %v4146 = vpop.f32.mrf.mxu0
      %v4147 = vadd.f32 0.0, %v4146
      %4148 = vdwg.mxu0
      %4149 = vmatpush.bf16.msra.mxu0 0
      %4150 = vmatpush.bf16.msra.mxu0 0
      %4151 = vmatpush.bf16.msra.mxu0 0
      %4152 = vmatpush.bf16.msra.mxu0 0
      %4153 = vmatpush.bf16.msra.mxu0 0
      %4154 = vmatpush.bf16.msra.mxu0 0
      %4155 = vmatpush.bf16.msra.mxu0 0
      %4156 = vmatpush.bf16.msra.mxu0 %v3992
      %4157 = vmatmul.bf16.gmra.mxu0 %v3962
      %v4158 = vpop.f32.mrf.mxu0
      %v4159 = vadd.f32 0.0, %v4158
      %v4160 = vpop.f32.mrf.mxu0
      %v4161 = vadd.f32 0.0, %v4160
      %4162 = vmatmul.bf16.gmra.mxu0 %v3965
      %v4163 = vpop.f32.mrf.mxu0
      %v4164 = vadd.f32 0.0, %v4163
      %v4165 = vpop.f32.mrf.mxu0
      %v4166 = vadd.f32 0.0, %v4165
      %4167 = vdwg.mxu0
      %4168 = vmatpush.bf16.msra.mxu0 0
      %4169 = vmatpush.bf16.msra.mxu0 0
      %4170 = vmatpush.bf16.msra.mxu0 0
      %4171 = vmatpush.bf16.msra.mxu0 0
      %4172 = vmatpush.bf16.msra.mxu0 0
      %4173 = vmatpush.bf16.msra.mxu0 0
      %4174 = vmatpush.bf16.msra.mxu0 0
      %4175 = vmatpush.bf16.msra.mxu0 %v3995
      %4176 = vmatmul.bf16.gmra.mxu0 %v3962
      %v4177 = vpop.f32.mrf.mxu0
      %v4178 = vadd.f32 0.0, %v4177
      %v4179 = vpop.f32.mrf.mxu0
      %v4180 = vadd.f32 0.0, %v4179
      %4181 = vmatmul.bf16.gmra.mxu0 %v3965
      %v4182 = vpop.f32.mrf.mxu0
      %v4183 = vadd.f32 0.0, %v4182
      %v4184 = vpop.f32.mrf.mxu0
      %v4185 = vadd.f32 0.0, %v4184
      %4186 = vdwg.mxu0
      %v4187 = vadd.f32 %v3854, %v4007
      %v4188 = vadd.f32 %v3855, %v4026
      %v4189 = vadd.f32 %v3856, %v4045
      %v4190 = vadd.f32 %v3857, %v4064
      %v4191 = vadd.f32 %v3858, %v4083
      %v4192 = vadd.f32 %v3859, %v4102
      %v4193 = vadd.f32 %v3860, %v4121
      %v4194 = vadd.f32 %v3861, %v4140
      %v4195 = vadd.f32 %v3862, %v4159
      %v4196 = vadd.f32 %v3863, %v4178
      %v4197 = vadd.f32 %v3864, %v4009
      %v4198 = vadd.f32 %v3865, %v4028
      %v4199 = vadd.f32 %v3866, %v4047
      %v4200 = vadd.f32 %v3867, %v4066
      %v4201 = vadd.f32 %v3868, %v4085
      %v4202 = vadd.f32 %v3869, %v4104
      %v4203 = vadd.f32 %v3870, %v4123
      %v4204 = vadd.f32 %v3871, %v4142
      %v4205 = vadd.f32 %v3872, %v4161
      %v4206 = vadd.f32 %v3873, %v4180
      %v4207 = vadd.f32 %v3874, %v4012
      %v4208 = vadd.f32 %v3875, %v4031
      %v4209 = vadd.f32 %v3876, %v4050
      %v4210 = vadd.f32 %v3877, %v4069
      %v4211 = vadd.f32 %v3878, %v4088
      %v4212 = vadd.f32 %v3879, %v4107
      %v4213 = vadd.f32 %v3880, %v4126
      %v4214 = vadd.f32 %v3881, %v4145
      %v4215 = vadd.f32 %v3882, %v4164
      %v4216 = vadd.f32 %v3883, %v4183
      %v4217 = vadd.f32 %v3884, %v4014
      %v4218 = vadd.f32 %v3885, %v4033
      %v4219 = vadd.f32 %v3886, %v4052
      %v4220 = vadd.f32 %v3887, %v4071
      %v4221 = vadd.f32 %v3888, %v4090
      %v4222 = vadd.f32 %v3889, %v4109
      %v4223 = vadd.f32 %v3890, %v4128
      %v4224 = vadd.f32 %v3891, %v4147
      %v4225 = vadd.f32 %v3892, %v4166
      %v4226 = vadd.f32 %v3893, %v4185
      %4227 = vst [vmem:[#allocation2] sm:$0xff] %v4187
      %4228 = vst [vmem:[#allocation2 + $0x8] sm:$0xff] %v4188
      %4229 = vst [vmem:[#allocation2 + $0x10] sm:$0xff] %v4189
      %4230 = vst [vmem:[#allocation2 + $0x18] sm:$0xff] %v4190
      %4231 = vst [vmem:[#allocation2 + $0x20] sm:$0xff] %v4191
      %4232 = vst [vmem:[#allocation2 + $0x28] sm:$0xff] %v4192
      %4233 = vst [vmem:[#allocation2 + $0x30] sm:$0xff] %v4193
      %4234 = vst [vmem:[#allocation2 + $0x38] sm:$0xff] %v4194
      %4235 = vst [vmem:[#allocation2 + $0x40] sm:$0xff] %v4195
      %4236 = vst.msk [vmem:[#allocation2 + $0x48] sm:$0xff] %vm563, %v4196
      %4237 = vst [vmem:[#allocation2 + $0x50] sm:$0xff] %v4197
      %4238 = vst [vmem:[#allocation2 + $0x58] sm:$0xff] %v4198
      %4239 = vst [vmem:[#allocation2 + $0x60] sm:$0xff] %v4199
      %4240 = vst [vmem:[#allocation2 + $0x68] sm:$0xff] %v4200
      %4241 = vst [vmem:[#allocation2 + $0x70] sm:$0xff] %v4201
      %4242 = vst [vmem:[#allocation2 + $0x78] sm:$0xff] %v4202
      %4243 = vst [vmem:[#allocation2 + $0x80] sm:$0xff] %v4203
      %4244 = vst [vmem:[#allocation2 + $0x88] sm:$0xff] %v4204
      %4245 = vst [vmem:[#allocation2 + $0x90] sm:$0xff] %v4205
      %4246 = vst.msk [vmem:[#allocation2 + $0x98] sm:$0xff] %vm563, %v4206
      %4247 = vst [vmem:[#allocation2 + $0xa0] sm:$0xff] %v4207
      %4248 = vst [vmem:[#allocation2 + $0xa8] sm:$0xff] %v4208
      %4249 = vst [vmem:[#allocation2 + $0xb0] sm:$0xff] %v4209
      %4250 = vst [vmem:[#allocation2 + $0xb8] sm:$0xff] %v4210
      %4251 = vst [vmem:[#allocation2 + $0xc0] sm:$0xff] %v4211
      %4252 = vst [vmem:[#allocation2 + $0xc8] sm:$0xff] %v4212
      %4253 = vst [vmem:[#allocation2 + $0xd0] sm:$0xff] %v4213
      %4254 = vst [vmem:[#allocation2 + $0xd8] sm:$0xff] %v4214
      %4255 = vst [vmem:[#allocation2 + $0xe0] sm:$0xff] %v4215
      %4256 = vst.msk [vmem:[#allocation2 + $0xe8] sm:$0xff] %vm563, %v4216
      %4257 = vst [vmem:[#allocation2 + $0xf0] sm:$0xff] %v4217
      %4258 = vst [vmem:[#allocation2 + $0xf8] sm:$0xff] %v4218
      %4259 = vst [vmem:[#allocation2 + $0x100] sm:$0xff] %v4219
      %4260 = vst [vmem:[#allocation2 + $0x108] sm:$0xff] %v4220
      %4261 = vst [vmem:[#allocation2 + $0x110] sm:$0xff] %v4221
      %4262 = vst [vmem:[#allocation2 + $0x118] sm:$0xff] %v4222
      %4263 = vst [vmem:[#allocation2 + $0x120] sm:$0xff] %v4223
      %4264 = vst [vmem:[#allocation2 + $0x128] sm:$0xff] %v4224
      %4265 = vst [vmem:[#allocation2 + $0x130] sm:$0xff] %v4225
      %4266 = vst.msk [vmem:[#allocation2 + $0x138] sm:$0xff] %vm563, %v4226
      %v4267 = vld [vmem:[#allocation2] sm:$0xff]
      %v4268 = vld [vmem:[#allocation2 + $0x8] sm:$0xff]
      %v4269 = vld [vmem:[#allocation2 + $0x10] sm:$0xff]
      %v4270 = vld [vmem:[#allocation2 + $0x18] sm:$0xff]
      %v4271 = vld [vmem:[#allocation2 + $0x20] sm:$0xff]
      %v4272 = vld [vmem:[#allocation2 + $0x28] sm:$0xff]
      %v4273 = vld [vmem:[#allocation2 + $0x30] sm:$0xff]
      %v4274 = vld [vmem:[#allocation2 + $0x38] sm:$0xff]
      %v4275 = vld [vmem:[#allocation2 + $0x40] sm:$0xff]
      %v4276 = vld [vmem:[#allocation2 + $0x48] sm:$0xff]
      %v4277 = vld [vmem:[#allocation2 + $0x50] sm:$0xff]
      %v4278 = vld [vmem:[#allocation2 + $0x58] sm:$0xff]
      %v4279 = vld [vmem:[#allocation2 + $0x60] sm:$0xff]
      %v4280 = vld [vmem:[#allocation2 + $0x68] sm:$0xff]
      %v4281 = vld [vmem:[#allocation2 + $0x70] sm:$0xff]
      %v4282 = vld [vmem:[#allocation2 + $0x78] sm:$0xff]
      %v4283 = vld [vmem:[#allocation2 + $0x80] sm:$0xff]
      %v4284 = vld [vmem:[#allocation2 + $0x88] sm:$0xff]
      %v4285 = vld [vmem:[#allocation2 + $0x90] sm:$0xff]
      %v4286 = vld [vmem:[#allocation2 + $0x98] sm:$0xff]
      %v4287 = vld [vmem:[#allocation2 + $0xa0] sm:$0xff]
      %v4288 = vld [vmem:[#allocation2 + $0xa8] sm:$0xff]
      %v4289 = vld [vmem:[#allocation2 + $0xb0] sm:$0xff]
      %v4290 = vld [vmem:[#allocation2 + $0xb8] sm:$0xff]
      %v4291 = vld [vmem:[#allocation2 + $0xc0] sm:$0xff]
      %v4292 = vld [vmem:[#allocation2 + $0xc8] sm:$0xff]
      %v4293 = vld [vmem:[#allocation2 + $0xd0] sm:$0xff]
      %v4294 = vld [vmem:[#allocation2 + $0xd8] sm:$0xff]
      %v4295 = vld [vmem:[#allocation2 + $0xe0] sm:$0xff]
      %v4296 = vld [vmem:[#allocation2 + $0xe8] sm:$0xff]
      %v4297 = vld [vmem:[#allocation2 + $0xf0] sm:$0xff]
      %v4298 = vld [vmem:[#allocation2 + $0xf8] sm:$0xff]
      %v4299 = vld [vmem:[#allocation2 + $0x100] sm:$0xff]
      %v4300 = vld [vmem:[#allocation2 + $0x108] sm:$0xff]
      %v4301 = vld [vmem:[#allocation2 + $0x110] sm:$0xff]
      %v4302 = vld [vmem:[#allocation2 + $0x118] sm:$0xff]
      %v4303 = vld [vmem:[#allocation2 + $0x120] sm:$0xff]
      %v4304 = vld [vmem:[#allocation2 + $0x128] sm:$0xff]
      %v4305 = vld [vmem:[#allocation2 + $0x130] sm:$0xff]
      %v4306 = vld [vmem:[#allocation2 + $0x138] sm:$0xff]
      %vm4307 = vcmp.gt.f32.partialorder %v4267, 0.5
      %vm4308 = vcmp.gt.f32.partialorder %v4268, 0.5
      %vm4309 = vcmp.gt.f32.partialorder %v4269, 0.5
      %vm4310 = vcmp.gt.f32.partialorder %v4270, 0.5
      %vm4311 = vcmp.gt.f32.partialorder %v4271, 0.5
      %vm4312 = vcmp.gt.f32.partialorder %v4272, 0.5
      %vm4313 = vcmp.gt.f32.partialorder %v4273, 0.5
      %vm4314 = vcmp.gt.f32.partialorder %v4274, 0.5
      %vm4315 = vcmp.gt.f32.partialorder %v4275, 0.5
      %vm4316 = vcmp.gt.f32.partialorder %v4276, 0.5
      %vm4317 = vcmp.gt.f32.partialorder %v4277, 0.5
      %vm4318 = vcmp.gt.f32.partialorder %v4278, 0.5
      %vm4319 = vcmp.gt.f32.partialorder %v4279, 0.5
      %vm4320 = vcmp.gt.f32.partialorder %v4280, 0.5
      %vm4321 = vcmp.gt.f32.partialorder %v4281, 0.5
      %vm4322 = vcmp.gt.f32.partialorder %v4282, 0.5
      %vm4323 = vcmp.gt.f32.partialorder %v4283, 0.5
      %vm4324 = vcmp.gt.f32.partialorder %v4284, 0.5
      %vm4325 = vcmp.gt.f32.partialorder %v4285, 0.5
      %vm4326 = vcmp.gt.f32.partialorder %v4286, 0.5
      %vm4327 = vcmp.gt.f32.partialorder %v4287, 0.5
      %vm4328 = vcmp.gt.f32.partialorder %v4288, 0.5
      %vm4329 = vcmp.gt.f32.partialorder %v4289, 0.5
      %vm4330 = vcmp.gt.f32.partialorder %v4290, 0.5
      %vm4331 = vcmp.gt.f32.partialorder %v4291, 0.5
      %vm4332 = vcmp.gt.f32.partialorder %v4292, 0.5
      %vm4333 = vcmp.gt.f32.partialorder %v4293, 0.5
      %vm4334 = vcmp.gt.f32.partialorder %v4294, 0.5
      %vm4335 = vcmp.gt.f32.partialorder %v4295, 0.5
      %vm4336 = vcmp.gt.f32.partialorder %v4296, 0.5
      %vm4337 = vcmp.gt.f32.partialorder %v4297, 0.5
      %vm4338 = vcmp.gt.f32.partialorder %v4298, 0.5
      %vm4339 = vcmp.gt.f32.partialorder %v4299, 0.5
      %vm4340 = vcmp.gt.f32.partialorder %v4300, 0.5
      %vm4341 = vcmp.gt.f32.partialorder %v4301, 0.5
      %vm4342 = vcmp.gt.f32.partialorder %v4302, 0.5
      %vm4343 = vcmp.gt.f32.partialorder %v4303, 0.5
      %vm4344 = vcmp.gt.f32.partialorder %v4304, 0.5
      %vm4345 = vcmp.gt.f32.partialorder %v4305, 0.5
      %vm4346 = vcmp.gt.f32.partialorder %v4306, 0.5
      %v4347 = vsel %vm4307, 1, 0
      %v4348 = vsel %vm4308, 1, 0
      %v4349 = vsel %vm4309, 1, 0
      %v4350 = vsel %vm4310, 1, 0
      %v4351 = vsel %vm4311, 1, 0
      %v4352 = vsel %vm4312, 1, 0
      %v4353 = vsel %vm4313, 1, 0
      %v4354 = vsel %vm4314, 1, 0
      %v4355 = vsel %vm4315, 1, 0
      %v4356 = vsel %vm4316, 1, 0
      %v4357 = vsel %vm4317, 1, 0
      %v4358 = vsel %vm4318, 1, 0
      %v4359 = vsel %vm4319, 1, 0
      %v4360 = vsel %vm4320, 1, 0
      %v4361 = vsel %vm4321, 1, 0
      %v4362 = vsel %vm4322, 1, 0
      %v4363 = vsel %vm4323, 1, 0
      %v4364 = vsel %vm4324, 1, 0
      %v4365 = vsel %vm4325, 1, 0
      %v4366 = vsel %vm4326, 1, 0
      %v4367 = vsel %vm4327, 1, 0
      %v4368 = vsel %vm4328, 1, 0
      %v4369 = vsel %vm4329, 1, 0
      %v4370 = vsel %vm4330, 1, 0
      %v4371 = vsel %vm4331, 1, 0
      %v4372 = vsel %vm4332, 1, 0
      %v4373 = vsel %vm4333, 1, 0
      %v4374 = vsel %vm4334, 1, 0
      %v4375 = vsel %vm4335, 1, 0
      %v4376 = vsel %vm4336, 1, 0
      %v4377 = vsel %vm4337, 1, 0
      %v4378 = vsel %vm4338, 1, 0
      %v4379 = vsel %vm4339, 1, 0
      %v4380 = vsel %vm4340, 1, 0
      %v4381 = vsel %vm4341, 1, 0
      %v4382 = vsel %vm4342, 1, 0
      %v4383 = vsel %vm4343, 1, 0
      %v4384 = vsel %vm4344, 1, 0
      %v4385 = vsel %vm4345, 1, 0
      %v4386 = vsel %vm4346, 1, 0
      %v4387 = vcvt.s32.f32 %v4347
      %v4388 = vcvt.s32.f32 %v4348
      %v4389 = vcvt.s32.f32 %v4349
      %v4390 = vcvt.s32.f32 %v4350
      %v4391 = vcvt.s32.f32 %v4351
      %v4392 = vcvt.s32.f32 %v4352
      %v4393 = vcvt.s32.f32 %v4353
      %v4394 = vcvt.s32.f32 %v4354
      %v4395 = vcvt.s32.f32 %v4355
      %v4396 = vcvt.s32.f32 %v4356
      %v4397 = vcvt.s32.f32 %v4357
      %v4398 = vcvt.s32.f32 %v4358
      %v4399 = vcvt.s32.f32 %v4359
      %v4400 = vcvt.s32.f32 %v4360
      %v4401 = vcvt.s32.f32 %v4361
      %v4402 = vcvt.s32.f32 %v4362
      %v4403 = vcvt.s32.f32 %v4363
      %v4404 = vcvt.s32.f32 %v4364
      %v4405 = vcvt.s32.f32 %v4365
      %v4406 = vcvt.s32.f32 %v4366
      %v4407 = vcvt.s32.f32 %v4367
      %v4408 = vcvt.s32.f32 %v4368
      %v4409 = vcvt.s32.f32 %v4369
      %v4410 = vcvt.s32.f32 %v4370
      %v4411 = vcvt.s32.f32 %v4371
      %v4412 = vcvt.s32.f32 %v4372
      %v4413 = vcvt.s32.f32 %v4373
      %v4414 = vcvt.s32.f32 %v4374
      %v4415 = vcvt.s32.f32 %v4375
      %v4416 = vcvt.s32.f32 %v4376
      %v4417 = vcvt.s32.f32 %v4377
      %v4418 = vcvt.s32.f32 %v4378
      %v4419 = vcvt.s32.f32 %v4379
      %v4420 = vcvt.s32.f32 %v4380
      %v4421 = vcvt.s32.f32 %v4381
      %v4422 = vcvt.s32.f32 %v4382
      %v4423 = vcvt.s32.f32 %v4383
      %v4424 = vcvt.s32.f32 %v4384
      %v4425 = vcvt.s32.f32 %v4385
      %v4426 = vcvt.s32.f32 %v4386
      %4427 = vst [vmem:[#allocation3] sm:$0xff] %v4387
      %4428 = vst [vmem:[#allocation3 + $0x8] sm:$0xff] %v4388
      %4429 = vst [vmem:[#allocation3 + $0x10] sm:$0xff] %v4389
      %4430 = vst [vmem:[#allocation3 + $0x18] sm:$0xff] %v4390
      %4431 = vst [vmem:[#allocation3 + $0x20] sm:$0xff] %v4391
      %4432 = vst [vmem:[#allocation3 + $0x28] sm:$0xff] %v4392
      %4433 = vst [vmem:[#allocation3 + $0x30] sm:$0xff] %v4393
      %4434 = vst [vmem:[#allocation3 + $0x38] sm:$0xff] %v4394
      %4435 = vst [vmem:[#allocation3 + $0x40] sm:$0xff] %v4395
      %4436 = vst.msk [vmem:[#allocation3 + $0x48] sm:$0xff] %vm563, %v4396
      %4437 = vst [vmem:[#allocation3 + $0x50] sm:$0xff] %v4397
      %4438 = vst [vmem:[#allocation3 + $0x58] sm:$0xff] %v4398
      %4439 = vst [vmem:[#allocation3 + $0x60] sm:$0xff] %v4399
      %4440 = vst [vmem:[#allocation3 + $0x68] sm:$0xff] %v4400
      %4441 = vst [vmem:[#allocation3 + $0x70] sm:$0xff] %v4401
      %4442 = vst [vmem:[#allocation3 + $0x78] sm:$0xff] %v4402
      %4443 = vst [vmem:[#allocation3 + $0x80] sm:$0xff] %v4403
      %4444 = vst [vmem:[#allocation3 + $0x88] sm:$0xff] %v4404
      %4445 = vst [vmem:[#allocation3 + $0x90] sm:$0xff] %v4405
      %4446 = vst.msk [vmem:[#allocation3 + $0x98] sm:$0xff] %vm563, %v4406
      %4447 = vst [vmem:[#allocation3 + $0xa0] sm:$0xff] %v4407
      %4448 = vst [vmem:[#allocation3 + $0xa8] sm:$0xff] %v4408
      %4449 = vst [vmem:[#allocation3 + $0xb0] sm:$0xff] %v4409
      %4450 = vst [vmem:[#allocation3 + $0xb8] sm:$0xff] %v4410
      %4451 = vst [vmem:[#allocation3 + $0xc0] sm:$0xff] %v4411
      %4452 = vst [vmem:[#allocation3 + $0xc8] sm:$0xff] %v4412
      %4453 = vst [vmem:[#allocation3 + $0xd0] sm:$0xff] %v4413
      %4454 = vst [vmem:[#allocation3 + $0xd8] sm:$0xff] %v4414
      %4455 = vst [vmem:[#allocation3 + $0xe0] sm:$0xff] %v4415
      %4456 = vst.msk [vmem:[#allocation3 + $0xe8] sm:$0xff] %vm563, %v4416
      %4457 = vst [vmem:[#allocation3 + $0xf0] sm:$0xff] %v4417
      %4458 = vst [vmem:[#allocation3 + $0xf8] sm:$0xff] %v4418
      %4459 = vst [vmem:[#allocation3 + $0x100] sm:$0xff] %v4419
      %4460 = vst [vmem:[#allocation3 + $0x108] sm:$0xff] %v4420
      %4461 = vst [vmem:[#allocation3 + $0x110] sm:$0xff] %v4421
      %4462 = vst [vmem:[#allocation3 + $0x118] sm:$0xff] %v4422
      %4463 = vst [vmem:[#allocation3 + $0x120] sm:$0xff] %v4423
      %4464 = vst [vmem:[#allocation3 + $0x128] sm:$0xff] %v4424
      %4465 = vst [vmem:[#allocation3 + $0x130] sm:$0xff] %v4425
      %4466 = vst.msk [vmem:[#allocation3 + $0x138] sm:$0xff] %vm563, %v4426
      %v4467 = vpack.c.bf16 %v4388, %v4387
      %v4468 = vpack.c.bf16 %v4390, %v4389
      %v4469 = vpack.c.bf16 %v4392, %v4391
      %v4470 = vpack.c.bf16 %v4394, %v4393
      %v4471 = vpack.c.bf16 %v4396, %v4395
      %v4472 = vpack.c.bf16 %v4398, %v4397
      %v4473 = vpack.c.bf16 %v4400, %v4399
      %v4474 = vpack.c.bf16 %v4402, %v4401
      %v4475 = vpack.c.bf16 %v4404, %v4403
      %v4476 = vpack.c.bf16 %v4406, %v4405
      %v4477 = vpack.c.bf16 %v4408, %v4407
      %v4478 = vpack.c.bf16 %v4410, %v4409
      %v4479 = vpack.c.bf16 %v4412, %v4411
      %v4480 = vpack.c.bf16 %v4414, %v4413
      %v4481 = vpack.c.bf16 %v4416, %v4415
      %v4482 = vpack.c.bf16 %v4418, %v4417
      %v4483 = vpack.c.bf16 %v4420, %v4419
      %v4484 = vpack.c.bf16 %v4422, %v4421
      %v4485 = vpack.c.bf16 %v4424, %v4423
      %v4486 = vpack.c.bf16 %v4426, %v4425
      %4487 = vst [vmem:[%s203] sm:$0xff] %v4467
      %4488 = vst [vmem:[%s203 + $0x8] sm:$0xff] %v4468
      %4489 = vst [vmem:[%s203 + $0x10] sm:$0xff] %v4469
      %4490 = vst [vmem:[%s203 + $0x18] sm:$0xff] %v4470
      %vm4491 = vcmask 1043456
      %vm4492 = vcmask 31748
      %vm4493 = vmor %vm4492, %vm4491
      %4494 = vst.msk [vmem:[%s203 + $0x20] sm:$0xff] %vm4493, %v4471
      %4495 = vst [vmem:[%s203 + $0x28] sm:$0xff] %v4472
      %4496 = vst [vmem:[%s203 + $0x30] sm:$0xff] %v4473
      %4497 = vst [vmem:[%s203 + $0x38] sm:$0xff] %v4474
      %4498 = vst [vmem:[%s203 + $0x40] sm:$0xff] %v4475
      %4499 = vst.msk [vmem:[%s203 + $0x48] sm:$0xff] %vm4493, %v4476
      %4500 = vst [vmem:[%s203 + $0x50] sm:$0xff] %v4477
      %4501 = vst [vmem:[%s203 + $0x58] sm:$0xff] %v4478
      %4502 = vst [vmem:[%s203 + $0x60] sm:$0xff] %v4479
      %4503 = vst [vmem:[%s203 + $0x68] sm:$0xff] %v4480
      %4504 = vst.msk [vmem:[%s203 + $0x70] sm:$0xff] %vm4493, %v4481
      %4505 = vst [vmem:[%s203 + $0x78] sm:$0xff] %v4482
      %4506 = vst [vmem:[%s203 + $0x80] sm:$0xff] %v4483
      %4507 = vst [vmem:[%s203 + $0x88] sm:$0xff] %v4484
      %4508 = vst [vmem:[%s203 + $0x90] sm:$0xff] %v4485
      %4509 = vst.msk [vmem:[%s203 + $0x98] sm:$0xff] %vm4493, %v4486
      %p4510 = scmp.lt.s32.totalorder %s19, 3
      %s4511 = scalar_select %p4510, %s19, 3
      %p4512 = scmp.lt.s32.totalorder %s18, 1
      %s4513 = scalar_select %p4512, %s18, 1
      %s4514 = smul.addr %s4513, 40
      %s4515 = smul.addr %s4511, 80
      %s4516 = sadd.s32 %s4514, %s4515
      %s4517 = smul.addr %s4516, 4
      %s4518 = scalar_lea.vmem %s3, %s4517
      // Predicated region
      $region37: #{scnn_forward.4} parent=31 // pred_check
        %p4519 = pneg %p116
      $region38: #{scnn_forward.4} parent=31 // pred_check_branch
        %4521 = sbr.rel (%p4519) target = $region40
      $region39: #{scnn_forward.4} parent=31 // pred_region
        _
      $region40: #{scnn_forward.4} parent=31 // pred_fallthru
        _
    $region32: #{scnn_forward.4} parent=5 // pred_fallthru
      _
    %p4522 = scmp.le.s32.totalorder 2, %s9
    // Predicated region
    $region41: #{scnn_forward.4} parent=5 // pred_check
      %p4523 = pneg %p4522
    $region42: #{scnn_forward.4} parent=5 // pred_check_branch
      %4525 = sbr.rel (%p4523) target = $region44
    $region43: #{scnn_forward.4} parent=5 // pred_region
      %s4526 = ssub.s32 %s9, 2
      // Predicated region
      $region45: #{scnn_forward.4} parent=43 // pred_check
        %p4527 = pneg %p122
      $region46: #{scnn_forward.4} parent=43 // pred_check_branch
        %4529 = sbr.rel (%p4527) target = $region48
      $region47: #{scnn_forward.4} parent=43 // pred_region
        %p4530 = scmp.lt.s32.totalorder %s21, 3
        %s4531 = scalar_select %p4530, %s21, 3
        %p4532 = scmp.lt.s32.totalorder %s20, 1
        %s4533 = scalar_select %p4532, %s20, 1
        %s4534 = smul.addr %s4533, 40
        %s4535 = smul.addr %s4531, 80
        %s4536 = sadd.s32 %s4534, %s4535
        %s4537 = smul.addr %s4536, 4
        %s4538 = scalar_lea.vmem %s3, %s4537
      $region48: #{scnn_forward.4} parent=43 // pred_fallthru
        _
    $region44: #{scnn_forward.4} parent=5 // pred_fallthru
      _
  $region6: #{scnn_forward.4} parent=0 // loop_footer
    %s13 = sadd.s32 1, %s9
  $region7: #{scnn_forward.4} parent=0 // loop_footer_branch
    %8 = sbr.rel target = $region3
  $region8: #{scnn_forward.4} parent=0 // loop_exit
    _

// kernel: scnn_forward.5
$region0: #{scnn_forward.5}
  #allocation0 [shape = 'u32[]', space=smem, size = 0x4, offset = 0x4, fixed_abs, tag = 'smem constant byte address 0x4 - core index']
  #allocation1 [shape = 'u32[72,128]{1,0:T(1,128)}', space=vmem, size = 0x9000, scoped, tag = 'internal scratch']
  #allocation2 [shape = 'f32[32,324]{1,0:T(8,128)}', space=vmem, size = 0xc000, scoped, tag = 'scratch operand']
  #allocation3 [shape = 'f32[32,324]{1,0:T(8,128)}', space=vmem, size = 0xc000, scoped, tag = 'scratch operand']
  %s0 = inlined_call_operand.vmem [shape: bf16[4,2,32,362], index: 0, kind: input, shape index: {}]
  %s1 = inlined_call_operand.vmem [shape: bf16[9,32,32], index: 1, kind: input, shape index: {}]
  %s2 = inlined_call_operand.vmem [shape: f32[32,1], index: 2, kind: input, shape index: {}]
  %s3 = inlined_call_operand.vmem [shape: bf16[4,2,32,324], index: 3, kind: output, shape index: {}]
  %s4 = sld [smem:[#allocation0]]
  $region49: #{scnn_forward.5} parent=0
    _
  %s6 = ssub.s32 1, %s4
  %s7 = scalar_select 0, %s6, %s4
  loop: start=0, step=1, limit=10
  $region2: #{scnn_forward.5} parent=0 // loop_pre_header
    _
  $region3: #{scnn_forward.5} parent=0 // loop_header
    %s9 = sphi 0, %s13
    %p10 = scmp.ge.s32.totalorder %s9, 10
    %s16 = sphi 0, %s28
    %s17 = sphi 0, %s24
    %s18 = sphi 0, %s16
    %s19 = sphi 0, %s17
    %s20 = sphi 0, %s18
    %s21 = sphi 0, %s19
    %s33 = sphi 0, %s35
    %s36 = sphi 0, %s33
    %s37 = sphi 0, %s36
    %s53 = sphi 0, %s37
    %s57 = sphi 0, %s57
    %s59 = sphi 0, %s57
    %s60 = sphi 0, %s59
    %s74 = sphi 0, %s60
    %s78 = sphi 0, %s78
    %s80 = sphi 0, %s78
    %s81 = sphi 0, %s80
    %s95 = sphi 0, %s81
    %s103 = sphi 0, %s105
    %s106 = sphi 0, %s103
    %s107 = sphi 0, %s106
    %s123 = sphi 0, %s107
  $region4: #{scnn_forward.5} parent=0 // loop_header_branch
    %12 = sbr.rel (%p10) target = $region8
  $region5: #{scnn_forward.5} parent=0 // loop_body
    %s14 = ssub.s32 %s9, 1
    %s15 = ssub.s32 %s9, 2
    %s22 = sadd.s32 1, %s17
    %p23 = scmp.ge.s32.totalorder %s22, 4
    %s24 = scalar_select %p23, 0, %s22
    %s25 = sadd.s32 1, %s16
    %s26 = scalar_select %p23, %s25, %s16
    %p27 = scmp.ge.s32.totalorder %s26, 2
    %s28 = scalar_select %p27, 0, %s26
    %s29 = ssub.s32 %s17, %s24
    %s30 = ssub.s32 %s16, %s28
    %s31 = sor.u32 %s29, %s30
    %p32 = scmp.eq.s32.totalorder %s31, 0
    %s34 = sadd.s32 %s33, 1
    %s35 = scalar_select %p32, %s33, %s34
    %p38 = pneg %p32
    %p39 = scmp.eq.s32.totalorder %s9, 7
    %p40 = por %p38, %p39
    %p41 = scmp.ne.s32.totalorder %s33, %s36
    %p42 = scmp.eq.s32.totalorder %s9, 0
    %p43 = por %p41, %p42
    %p44 = scmp.ne.s32.totalorder %s33, %s36
    %p45 = scmp.eq.s32.totalorder %s14, 7
    %p46 = por %p44, %p45
    %p47 = scmp.ne.s32.totalorder %s36, %s37
    %p48 = scmp.eq.s32.totalorder %s14, 0
    %p49 = por %p47, %p48
    %p50 = scmp.ne.s32.totalorder %s36, %s37
    %p51 = scmp.eq.s32.totalorder %s15, 7
    %p52 = por %p50, %p51
    %p54 = scmp.ne.s32.totalorder %s37, %s53
    %p55 = scmp.eq.s32.totalorder %s15, 0
    %p56 = por %p54, %p55
    %s58 = sadd.s32 %s57, 1
    %p61 = scmp.eq.s32.totalorder %s9, 7
    %p62 = scmp.ne.s32.totalorder %s57, %s59
    %p63 = scmp.eq.s32.totalorder %s9, 0
    %p64 = por %p62, %p63
    %p65 = scmp.ne.s32.totalorder %s57, %s59
    %p66 = scmp.eq.s32.totalorder %s14, 7
    %p67 = por %p65, %p66
    %p68 = scmp.ne.s32.totalorder %s59, %s60
    %p69 = scmp.eq.s32.totalorder %s14, 0
    %p70 = por %p68, %p69
    %p71 = scmp.ne.s32.totalorder %s59, %s60
    %p72 = scmp.eq.s32.totalorder %s15, 7
    %p73 = por %p71, %p72
    %p75 = scmp.ne.s32.totalorder %s60, %s74
    %p76 = scmp.eq.s32.totalorder %s15, 0
    %p77 = por %p75, %p76
    %s79 = sadd.s32 %s78, 1
    %p82 = scmp.eq.s32.totalorder %s9, 7
    %p83 = scmp.ne.s32.totalorder %s78, %s80
    %p84 = scmp.eq.s32.totalorder %s9, 0
    %p85 = por %p83, %p84
    %p86 = scmp.ne.s32.totalorder %s78, %s80
    %p87 = scmp.eq.s32.totalorder %s14, 7
    %p88 = por %p86, %p87
    %p89 = scmp.ne.s32.totalorder %s80, %s81
    %p90 = scmp.eq.s32.totalorder %s14, 0
    %p91 = por %p89, %p90
    %p92 = scmp.ne.s32.totalorder %s80, %s81
    %p93 = scmp.eq.s32.totalorder %s15, 7
    %p94 = por %p92, %p93
    %p96 = scmp.ne.s32.totalorder %s81, %s95
    %p97 = scmp.eq.s32.totalorder %s15, 0
    %p98 = por %p96, %p97
    %s99 = ssub.s32 %s17, %s24
    %s100 = ssub.s32 %s16, %s28
    %s101 = sor.u32 %s99, %s100
    %p102 = scmp.eq.s32.totalorder %s101, 0
    %s104 = sadd.s32 %s103, 1
    %s105 = scalar_select %p102, %s103, %s104
    %p108 = pneg %p102
    %p109 = scmp.eq.s32.totalorder %s9, 7
    %p110 = por %p108, %p109
    %p111 = scmp.ne.s32.totalorder %s103, %s106
    %p112 = scmp.eq.s32.totalorder %s9, 0
    %p113 = por %p111, %p112
    %p114 = scmp.ne.s32.totalorder %s103, %s106
    %p115 = scmp.eq.s32.totalorder %s14, 7
    %p116 = por %p114, %p115
    %p117 = scmp.ne.s32.totalorder %s106, %s107
    %p118 = scmp.eq.s32.totalorder %s14, 0
    %p119 = por %p117, %p118
    %p120 = scmp.ne.s32.totalorder %s106, %s107
    %p121 = scmp.eq.s32.totalorder %s15, 7
    %p122 = por %p120, %p121
    %p124 = scmp.ne.s32.totalorder %s107, %s123
    %p125 = scmp.eq.s32.totalorder %s15, 0
    %p126 = por %p124, %p125
    %p127 = scmp.le.s32.totalorder 1, %s9
    %p128 = scmp.lt.s32.totalorder %s9, 9
    %p129 = pnand %p127, %p128
    %p130 = pneg %p129
    // Predicated region
    $region9: #{scnn_forward.5} parent=5 // pred_check
      _
    $region10: #{scnn_forward.5} parent=5 // pred_check_branch
      %132 = sbr.rel (%p129) target = $region12
    $region11: #{scnn_forward.5} parent=5 // pred_region
      %s133 = ssub.s32 %s9, 1
      // Predicated region
      $region13: #{scnn_forward.5} parent=11 // pred_check
        %p134 = pneg %p70
      $region14: #{scnn_forward.5} parent=11 // pred_check_branch
        %136 = sbr.rel (%p134) target = $region16
      $region15: #{scnn_forward.5} parent=11 // pred_region
        _
      $region16: #{scnn_forward.5} parent=11 // pred_fallthru
        _
      // Predicated region
      $region17: #{scnn_forward.5} parent=11 // pred_check
        %p137 = pneg %p91
      $region18: #{scnn_forward.5} parent=11 // pred_check_branch
        %139 = sbr.rel (%p137) target = $region20
      $region19: #{scnn_forward.5} parent=11 // pred_region
        _
      $region20: #{scnn_forward.5} parent=11 // pred_fallthru
        _
    $region12: #{scnn_forward.5} parent=5 // pred_fallthru
      _
    %p140 = scmp.lt.s32.totalorder %s9, 8
    // Predicated region
    $region21: #{scnn_forward.5} parent=5 // pred_check
      %p141 = pneg %p140
    $region22: #{scnn_forward.5} parent=5 // pred_check_branch
      %143 = sbr.rel (%p141) target = $region24
    $region23: #{scnn_forward.5} parent=5 // pred_region
      // Predicated region
      $region25: #{scnn_forward.5} parent=23 // pred_check
        %p144 = pneg %p43
      $region26: #{scnn_forward.5} parent=23 // pred_check_branch
        %146 = sbr.rel (%p144) target = $region28
      $region27: #{scnn_forward.5} parent=23 // pred_region
        %p147 = scmp.lt.s32.totalorder %s17, 3
        %s148 = scalar_select %p147, %s17, 3
        %p149 = scmp.lt.s32.totalorder %s16, 1
        %s150 = scalar_select %p149, %s16, 1
        %s151 = smul.addr %s150, 12
        %s152 = smul.addr %s148, 24
        %s153 = sadd.s32 %s151, %s152
        %s154 = smul.addr %s153, 4
        %s155 = scalar_lea.vmem %s0, %s154
      $region28: #{scnn_forward.5} parent=23 // pred_fallthru
        _
    $region24: #{scnn_forward.5} parent=5 // pred_fallthru
      _
    %p156 = scmp.le.s32.totalorder 1, %s9
    %p157 = scmp.lt.s32.totalorder %s9, 9
    %p158 = pnand %p156, %p157
    %p159 = pneg %p158
    // Predicated region
    $region29: #{scnn_forward.5} parent=5 // pred_check
      _
    $region30: #{scnn_forward.5} parent=5 // pred_check_branch
      %161 = sbr.rel (%p158) target = $region32
    $region31: #{scnn_forward.5} parent=5 // pred_region
      %s162 = ssub.s32 %s9, 1
      %p163 = scmp.lt.s32.totalorder %s19, 3
      %s164 = scalar_select %p163, %s19, 3
      %p165 = scmp.lt.s32.totalorder %s18, 1
      %s166 = scalar_select %p165, %s18, 1
      %s167 = smul.addr %s166, 12
      %s168 = smul.addr %s164, 24
      %s169 = sadd.s32 %s167, %s168
      %s170 = smul.addr %s169, 4
      %s171 = scalar_lea.vmem %s0, %s170
      %p172 = pneg %p49
      %p173 = pneg %p46
      %p174 = pneg %p70
      %p175 = pneg %p67
      %p176 = pneg %p91
      %p177 = pneg %p88
      %p178 = pneg %p119
      %p179 = pneg %p116
      %p180 = scmp.lt.s32.totalorder %s19, 3
      %s181 = scalar_select %p180, %s19, 3
      %p182 = scmp.lt.s32.totalorder %s18, 1
      %s183 = scalar_select %p182, %s18, 1
      %s184 = smul.addr %s183, 12
      %s185 = smul.addr %s181, 24
      %s186 = sadd.s32 %s184, %s185
      %s187 = smul.addr %s186, 4
      %s188 = scalar_lea.vmem %s3, %s187
      %p189 = scmp.lt.s32.totalorder %s19, 3
      %s190 = scalar_select %p189, %s19, 3
      %p191 = scmp.lt.s32.totalorder %s18, 1
      %s192 = scalar_select %p191, %s18, 1
      %s193 = smul.addr %s192, 12
      %s194 = smul.addr %s190, 24
      %s195 = sadd.s32 %s193, %s194
      %s196 = smul.addr %s195, 4
      %s197 = scalar_lea.vmem %s0, %s196
      %p198 = scmp.lt.s32.totalorder %s19, 3
      %s199 = scalar_select %p198, %s19, 3
      %p200 = scmp.lt.s32.totalorder %s18, 1
      %s201 = scalar_select %p200, %s18, 1
      %s202 = smul.addr %s201, 12
      %s203 = smul.addr %s199, 24
      %s204 = sadd.s32 %s202, %s203
      %s205 = smul.addr %s204, 4
      %s206 = scalar_lea.vmem %s3, %s205
      %p208 = scmp.eq.s32.totalorder %s19, 0
      // Predicated region
      $region33: #{scnn_forward.5} parent=31 // pred_check
        %p209 = pneg %p208
      $region34: #{scnn_forward.5} parent=31 // pred_check_branch
        %211 = sbr.rel (%p209) target = $region36
      $region35: #{scnn_forward.5} parent=31 // pred_region
        %212 = vst [vmem:[#allocation2] sm:$0xff] 0.0
        %213 = vst [vmem:[#allocation2 + $0x8] sm:$0xff] 0.0
        %vm214 = vcmask 556032
        %215 = vst.msk [vmem:[#allocation2 + $0x10] sm:$0xff] %vm214, 0.0
        %216 = vst [vmem:[#allocation2 + $0x18] sm:$0xff] 0.0
        %217 = vst [vmem:[#allocation2 + $0x20] sm:$0xff] 0.0
        %218 = vst.msk [vmem:[#allocation2 + $0x28] sm:$0xff] %vm214, 0.0
        %219 = vst [vmem:[#allocation2 + $0x30] sm:$0xff] 0.0
        %220 = vst [vmem:[#allocation2 + $0x38] sm:$0xff] 0.0
        %221 = vst.msk [vmem:[#allocation2 + $0x40] sm:$0xff] %vm214, 0.0
        %222 = vst [vmem:[#allocation2 + $0x48] sm:$0xff] 0.0
        %223 = vst [vmem:[#allocation2 + $0x50] sm:$0xff] 0.0
        %224 = vst.msk [vmem:[#allocation2 + $0x58] sm:$0xff] %vm214, 0.0
        %225 = vst [vmem:[#allocation3] sm:$0xff] 0.0
        %226 = vst [vmem:[#allocation3 + $0x8] sm:$0xff] 0.0
        %227 = vst.msk [vmem:[#allocation3 + $0x10] sm:$0xff] %vm214, 0.0
        %228 = vst [vmem:[#allocation3 + $0x18] sm:$0xff] 0.0
        %229 = vst [vmem:[#allocation3 + $0x20] sm:$0xff] 0.0
        %230 = vst.msk [vmem:[#allocation3 + $0x28] sm:$0xff] %vm214, 0.0
        %231 = vst [vmem:[#allocation3 + $0x30] sm:$0xff] 0.0
        %232 = vst [vmem:[#allocation3 + $0x38] sm:$0xff] 0.0
        %233 = vst.msk [vmem:[#allocation3 + $0x40] sm:$0xff] %vm214, 0.0
        %234 = vst [vmem:[#allocation3 + $0x48] sm:$0xff] 0.0
        %235 = vst [vmem:[#allocation3 + $0x50] sm:$0xff] 0.0
        %236 = vst.msk [vmem:[#allocation3 + $0x58] sm:$0xff] %vm214, 0.0
      $region36: #{scnn_forward.5} parent=31 // pred_fallthru
        _
      %v237 = vld [vmem:[#allocation2] sm:$0xff]
      %v238 = vld [vmem:[#allocation2 + $0x8] sm:$0xff]
      %v239 = vld [vmem:[#allocation2 + $0x10] sm:$0xff]
      %v240 = vld [vmem:[#allocation2 + $0x18] sm:$0xff]
      %v241 = vld [vmem:[#allocation2 + $0x20] sm:$0xff]
      %v242 = vld [vmem:[#allocation2 + $0x28] sm:$0xff]
      %v243 = vld [vmem:[#allocation2 + $0x30] sm:$0xff]
      %v244 = vld [vmem:[#allocation2 + $0x38] sm:$0xff]
      %v245 = vld [vmem:[#allocation2 + $0x40] sm:$0xff]
      %v246 = vld [vmem:[#allocation2 + $0x48] sm:$0xff]
      %v247 = vld [vmem:[#allocation2 + $0x50] sm:$0xff]
      %v248 = vld [vmem:[#allocation2 + $0x58] sm:$0xff]
      %v249 = vmul.f32 %v237, 0.2
      %v250 = vmul.f32 %v238, 0.2
      %v251 = vmul.f32 %v239, 0.2
      %v252 = vmul.f32 %v240, 0.2
      %v253 = vmul.f32 %v241, 0.2
      %v254 = vmul.f32 %v242, 0.2
      %v255 = vmul.f32 %v243, 0.2
      %v256 = vmul.f32 %v244, 0.2
      %v257 = vmul.f32 %v245, 0.2
      %v258 = vmul.f32 %v246, 0.2
      %v259 = vmul.f32 %v247, 0.2
      %v260 = vmul.f32 %v248, 0.2
      %v261 = vld [vmem:[#allocation3] sm:$0xff]
      %v262 = vld [vmem:[#allocation3 + $0x8] sm:$0xff]
      %v263 = vld [vmem:[#allocation3 + $0x10] sm:$0xff]
      %v264 = vld [vmem:[#allocation3 + $0x18] sm:$0xff]
      %v265 = vld [vmem:[#allocation3 + $0x20] sm:$0xff]
      %v266 = vld [vmem:[#allocation3 + $0x28] sm:$0xff]
      %v267 = vld [vmem:[#allocation3 + $0x30] sm:$0xff]
      %v268 = vld [vmem:[#allocation3 + $0x38] sm:$0xff]
      %v269 = vld [vmem:[#allocation3 + $0x40] sm:$0xff]
      %v270 = vld [vmem:[#allocation3 + $0x48] sm:$0xff]
      %v271 = vld [vmem:[#allocation3 + $0x50] sm:$0xff]
      %v272 = vld [vmem:[#allocation3 + $0x58] sm:$0xff]
      %v273 = vsub.f32 1.0, %v261
      %v274 = vsub.f32 1.0, %v262
      %v275 = vsub.f32 1.0, %v263
      %v276 = vsub.f32 1.0, %v264
      %v277 = vsub.f32 1.0, %v265
      %v278 = vsub.f32 1.0, %v266
      %v279 = vsub.f32 1.0, %v267
      %v280 = vsub.f32 1.0, %v268
      %v281 = vsub.f32 1.0, %v269
      %v282 = vsub.f32 1.0, %v270
      %v283 = vsub.f32 1.0, %v271
      %v284 = vsub.f32 1.0, %v272
      %v285 = vmul.f32 %v249, %v273
      %v286 = vmul.f32 %v250, %v274
      %v287 = vmul.f32 %v251, %v275
      %v288 = vmul.f32 %v252, %v276
      %v289 = vmul.f32 %v253, %v277
      %v290 = vmul.f32 %v254, %v278
      %v291 = vmul.f32 %v255, %v279
      %v292 = vmul.f32 %v256, %v280
      %v293 = vmul.f32 %v257, %v281
      %v294 = vmul.f32 %v258, %v282
      %v295 = vmul.f32 %v259, %v283
      %v296 = vmul.f32 %v260, %v284
      %v297 = vld [vmem:[%s2] sm:$0xff]
      %v298 = vld [vmem:[%s2 + $0x8] sm:$0xff]
      %v299 = vld [vmem:[%s2 + $0x10] sm:$0xff]
      %v300 = vld [vmem:[%s2 + $0x18] sm:$0xff]
      %302 = vset.pattern.permute.xlu0 0
      %303 = vperm.xlu0 %302, %v297
      %v304 = vpop.permute.xlu0 %303
      %307 = vset.pattern.permute.xlu0 0
      %308 = vperm.xlu0 %307, %v298
      %v309 = vpop.permute.xlu0 %308
      %312 = vset.pattern.permute.xlu0 0
      %313 = vperm.xlu0 %312, %v299
      %v314 = vpop.permute.xlu0 %313
      %317 = vset.pattern.permute.xlu0 0
      %318 = vperm.xlu0 %317, %v300
      %v319 = vpop.permute.xlu0 %318
      %v321 = vadd.f32 %v285, %v304
      %v322 = vadd.f32 %v286, %v304
      %v323 = vadd.f32 %v287, %v304
      %v324 = vadd.f32 %v288, %v309
      %v325 = vadd.f32 %v289, %v309
      %v326 = vadd.f32 %v290, %v309
      %v327 = vadd.f32 %v291, %v314
      %v328 = vadd.f32 %v292, %v314
      %v329 = vadd.f32 %v293, %v314
      %v330 = vadd.f32 %v294, %v319
      %v331 = vadd.f32 %v295, %v319
      %v332 = vadd.f32 %v296, %v319
      %333 = vst [vmem:[#allocation2] sm:$0xff] %v321
      %334 = vst [vmem:[#allocation2 + $0x8] sm:$0xff] %v322
      %vm335 = vcmask 556032
      %336 = vst.msk [vmem:[#allocation2 + $0x10] sm:$0xff] %vm335, %v323
      %337 = vst [vmem:[#allocation2 + $0x18] sm:$0xff] %v324
      %338 = vst [vmem:[#allocation2 + $0x20] sm:$0xff] %v325
      %339 = vst.msk [vmem:[#allocation2 + $0x28] sm:$0xff] %vm335, %v326
      %340 = vst [vmem:[#allocation2 + $0x30] sm:$0xff] %v327
      %341 = vst [vmem:[#allocation2 + $0x38] sm:$0xff] %v328
      %342 = vst.msk [vmem:[#allocation2 + $0x40] sm:$0xff] %vm335, %v329
      %343 = vst [vmem:[#allocation2 + $0x48] sm:$0xff] %v330
      %344 = vst [vmem:[#allocation2 + $0x50] sm:$0xff] %v331
      %345 = vst.msk [vmem:[#allocation2 + $0x58] sm:$0xff] %vm335, %v332
      %v346 = vld [vmem:[%s197] sm:$0xff]
      %v347 = vld [vmem:[%s197 + $0x8] sm:$0xf]
      %v348 = vld [vmem:[%s197 + $0xc] sm:$0xff]
      %v349 = vld [vmem:[%s197 + $0x14] sm:$0xf]
      %v350 = vld [vmem:[%s197 + $0x18] sm:$0xff]
      %v351 = vld [vmem:[%s197 + $0x20] sm:$0xf]
      %v352 = vld [vmem:[%s197 + $0x24] sm:$0xff]
      %v353 = vld [vmem:[%s197 + $0x2c] sm:$0xf]
      %v354 = vld [vmem:[#allocation2] sm:$0xff]
      %v355 = vld [vmem:[#allocation2 + $0x8] sm:$0xff]
      %v356 = vld [vmem:[#allocation2 + $0x10] sm:$0xff]
      %v357 = vld [vmem:[#allocation2 + $0x18] sm:$0xff]
      %v358 = vld [vmem:[#allocation2 + $0x20] sm:$0xff]
      %v359 = vld [vmem:[#allocation2 + $0x28] sm:$0xff]
      %v360 = vld [vmem:[#allocation2 + $0x30] sm:$0xff]
      %v361 = vld [vmem:[#allocation2 + $0x38] sm:$0xff]
      %v362 = vld [vmem:[#allocation2 + $0x40] sm:$0xff]
      %v363 = vld [vmem:[#allocation2 + $0x48] sm:$0xff]
      %v364 = vld [vmem:[#allocation2 + $0x50] sm:$0xff]
      %v365 = vld [vmem:[#allocation2 + $0x58] sm:$0xff]
      %v366 = vld [vmem:[%s1] sm:$0xf]
      %v367 = vld [vmem:[%s1 + $0x4] sm:$0xf]
      %v368 = vld [vmem:[%s1 + $0x8] sm:$0xf]
      %v369 = vld [vmem:[%s1 + $0xc] sm:$0xf]
      %v374 = vunpack.c.l.b16 %v366
      %v375 = vunpack.c.l.b16 %v367
      %v376 = vunpack.c.l.b16 %v368
      %v377 = vunpack.c.l.b16 %v369
      %v378 = vpack.c.b16 %v375, %v374
      %v379 = vpack.c.b16 %v377, %v376
      %v388 = vunpack.c.l.b16 %v346
      %v389 = vunpack.c.h.b16 %v346
      %v390 = vunpack.c.l.b16 %v347
      %v391 = vunpack.c.l.b16 %v348
      %v392 = vunpack.c.h.b16 %v348
      %v393 = vunpack.c.l.b16 %v349
      %v394 = vunpack.c.l.b16 %v350
      %v395 = vunpack.c.h.b16 %v350
      %v396 = vunpack.c.l.b16 %v351
      %v397 = vunpack.c.l.b16 %v352
      %v398 = vunpack.c.h.b16 %v352
      %v399 = vunpack.c.l.b16 %v353
      %v400 = vpack.c.b16 %v391, %v388
      %v401 = vpack.c.b16 %v392, %v389
      %v402 = vpack.c.b16 %v393, %v390
      %v403 = vpack.c.b16 %v397, %v394
      %v404 = vpack.c.b16 %v398, %v395
      %v405 = vpack.c.b16 %v399, %v396
      %vm412 = vcmask 261120
      %v414 = vsel %vm412, %v378, 0
      %v417 = vsel %vm412, %v379, 0
      %419 = vmatpush.bf16.msra.mxu0 0
      %420 = vmatpush.bf16.msra.mxu0 0
      %421 = vmatpush.bf16.msra.mxu0 0
      %422 = vmatpush.bf16.msra.mxu0 0
      %423 = vmatpush.bf16.msra.mxu0 0
      %424 = vmatpush.bf16.msra.mxu0 0
      %425 = vmatpush.bf16.msra.mxu0 %v403
      %426 = vmatpush.bf16.msra.mxu0 %v400
      %427 = vmatmul.bf16.gmra.mxu0 %v414
      %v428 = vpop.f32.mrf.mxu0
      %v429 = vadd.f32 0.0, %v428
      %v430 = vpop.f32.mrf.mxu0
      %v431 = vadd.f32 0.0, %v430
      %432 = vmatmul.bf16.gmra.mxu0 %v417
      %v433 = vpop.f32.mrf.mxu0
      %v434 = vadd.f32 0.0, %v433
      %v435 = vpop.f32.mrf.mxu0
      %v436 = vadd.f32 0.0, %v435
      %437 = vdwg.mxu0
      %438 = vmatpush.bf16.msra.mxu0 0
      %439 = vmatpush.bf16.msra.mxu0 0
      %440 = vmatpush.bf16.msra.mxu0 0
      %441 = vmatpush.bf16.msra.mxu0 0
      %442 = vmatpush.bf16.msra.mxu0 0
      %443 = vmatpush.bf16.msra.mxu0 0
      %444 = vmatpush.bf16.msra.mxu0 %v404
      %445 = vmatpush.bf16.msra.mxu0 %v401
      %446 = vmatmul.bf16.gmra.mxu0 %v414
      %v447 = vpop.f32.mrf.mxu0
      %v448 = vadd.f32 0.0, %v447
      %v449 = vpop.f32.mrf.mxu0
      %v450 = vadd.f32 0.0, %v449
      %451 = vmatmul.bf16.gmra.mxu0 %v417
      %v452 = vpop.f32.mrf.mxu0
      %v453 = vadd.f32 0.0, %v452
      %v454 = vpop.f32.mrf.mxu0
      %v455 = vadd.f32 0.0, %v454
      %456 = vdwg.mxu0
      %457 = vmatpush.bf16.msra.mxu0 0
      %458 = vmatpush.bf16.msra.mxu0 0
      %459 = vmatpush.bf16.msra.mxu0 0
      %460 = vmatpush.bf16.msra.mxu0 0
      %461 = vmatpush.bf16.msra.mxu0 0
      %462 = vmatpush.bf16.msra.mxu0 0
      %463 = vmatpush.bf16.msra.mxu0 %v405
      %464 = vmatpush.bf16.msra.mxu0 %v402
      %465 = vmatmul.bf16.gmra.mxu0 %v414
      %v466 = vpop.f32.mrf.mxu0
      %v467 = vadd.f32 0.0, %v466
      %v468 = vpop.f32.mrf.mxu0
      %v469 = vadd.f32 0.0, %v468
      %470 = vmatmul.bf16.gmra.mxu0 %v417
      %v471 = vpop.f32.mrf.mxu0
      %v472 = vadd.f32 0.0, %v471
      %v473 = vpop.f32.mrf.mxu0
      %v474 = vadd.f32 0.0, %v473
      %475 = vdwg.mxu0
      %v476 = vadd.f32 %v354, %v429
      %v477 = vadd.f32 %v355, %v448
      %v478 = vadd.f32 %v356, %v467
      %v479 = vadd.f32 %v357, %v431
      %v480 = vadd.f32 %v358, %v450
      %v481 = vadd.f32 %v359, %v469
      %v482 = vadd.f32 %v360, %v434
      %v483 = vadd.f32 %v361, %v453
      %v484 = vadd.f32 %v362, %v472
      %v485 = vadd.f32 %v363, %v436
      %v486 = vadd.f32 %v364, %v455
      %v487 = vadd.f32 %v365, %v474
      %488 = vst [vmem:[#allocation2] sm:$0xff] %v476
      %489 = vst [vmem:[#allocation2 + $0x8] sm:$0xff] %v477
      %490 = vst.msk [vmem:[#allocation2 + $0x10] sm:$0xff] %vm335, %v478
      %491 = vst [vmem:[#allocation2 + $0x18] sm:$0xff] %v479
      %492 = vst [vmem:[#allocation2 + $0x20] sm:$0xff] %v480
      %493 = vst.msk [vmem:[#allocation2 + $0x28] sm:$0xff] %vm335, %v481
      %494 = vst [vmem:[#allocation2 + $0x30] sm:$0xff] %v482
      %495 = vst [vmem:[#allocation2 + $0x38] sm:$0xff] %v483
      %496 = vst.msk [vmem:[#allocation2 + $0x40] sm:$0xff] %vm335, %v484
      %497 = vst [vmem:[#allocation2 + $0x48] sm:$0xff] %v485
      %498 = vst [vmem:[#allocation2 + $0x50] sm:$0xff] %v486
      %499 = vst.msk [vmem:[#allocation2 + $0x58] sm:$0xff] %vm335, %v487
      %v500 = vld [vmem:[#allocation2] sm:$0xff]
      %v501 = vld [vmem:[#allocation2 + $0x8] sm:$0xff]
      %v502 = vld [vmem:[#allocation2 + $0x10] sm:$0xff]
      %v503 = vld [vmem:[#allocation2 + $0x18] sm:$0xff]
      %v504 = vld [vmem:[#allocation2 + $0x20] sm:$0xff]
      %v505 = vld [vmem:[#allocation2 + $0x28] sm:$0xff]
      %v506 = vld [vmem:[#allocation2 + $0x30] sm:$0xff]
      %v507 = vld [vmem:[#allocation2 + $0x38] sm:$0xff]
      %v508 = vld [vmem:[#allocation2 + $0x40] sm:$0xff]
      %v509 = vld [vmem:[#allocation2 + $0x48] sm:$0xff]
      %v510 = vld [vmem:[#allocation2 + $0x50] sm:$0xff]
      %v511 = vld [vmem:[#allocation2 + $0x58] sm:$0xff]
      %s512 = scalar_lea.vmem %s1, 16
      %v513 = vld [vmem:[%s512] sm:$0xf]
      %v514 = vld [vmem:[%s512 + $0x4] sm:$0xf]
      %v515 = vld [vmem:[%s512 + $0x8] sm:$0xf]
      %v516 = vld [vmem:[%s512 + $0xc] sm:$0xf]
      %v521 = vunpack.c.l.b16 %v513
      %v522 = vunpack.c.l.b16 %v514
      %v523 = vunpack.c.l.b16 %v515
      %v524 = vunpack.c.l.b16 %v516
      %v525 = vpack.c.b16 %v522, %v521
      %v526 = vpack.c.b16 %v524, %v523
      %527 = vrot.lane.b32.xlu0 %v400, 127
      %v528 = vpop.permute.xlu0 %527
      %529 = vrot.lane.b32.xlu0 %v401, 127
      %v530 = vpop.permute.xlu0 %529
      %531 = vrot.lane.b32.xlu0 %v402, 127
      %v532 = vpop.permute.xlu0 %531
      %533 = vrot.lane.b32.xlu0 %v403, 127
      %v534 = vpop.permute.xlu0 %533
      %535 = vrot.lane.b32.xlu0 %v404, 127
      %v536 = vpop.permute.xlu0 %535
      %537 = vrot.lane.b32.xlu0 %v405, 127
      %v538 = vpop.permute.xlu0 %537
      %vm539 = vcmask 1039360
      %v540 = vsel %vm539, %v528, %v530
      %v541 = vsel %vm539, %v530, %v532
      %v542 = vsel %vm539, %v534, %v536
      %v543 = vsel %vm539, %v536, %v538
      %v551 = vsel %vm412, %v525, 0
      %v554 = vsel %vm412, %v526, 0
      %556 = vmatpush.bf16.msra.mxu0 0
      %557 = vmatpush.bf16.msra.mxu0 0
      %558 = vmatpush.bf16.msra.mxu0 0
      %559 = vmatpush.bf16.msra.mxu0 0
      %560 = vmatpush.bf16.msra.mxu0 0
      %561 = vmatpush.bf16.msra.mxu0 0
      %562 = vmatpush.bf16.msra.mxu0 %v542
      %563 = vmatpush.bf16.msra.mxu0 %v540
      %564 = vmatmul.bf16.gmra.mxu0 %v551
      %v565 = vpop.f32.mrf.mxu0
      %v566 = vadd.f32 0.0, %v565
      %v567 = vpop.f32.mrf.mxu0
      %v568 = vadd.f32 0.0, %v567
      %569 = vmatmul.bf16.gmra.mxu0 %v554
      %v570 = vpop.f32.mrf.mxu0
      %v571 = vadd.f32 0.0, %v570
      %v572 = vpop.f32.mrf.mxu0
      %v573 = vadd.f32 0.0, %v572
      %574 = vdwg.mxu0
      %575 = vmatpush.bf16.msra.mxu0 0
      %576 = vmatpush.bf16.msra.mxu0 0
      %577 = vmatpush.bf16.msra.mxu0 0
      %578 = vmatpush.bf16.msra.mxu0 0
      %579 = vmatpush.bf16.msra.mxu0 0
      %580 = vmatpush.bf16.msra.mxu0 0
      %581 = vmatpush.bf16.msra.mxu0 %v543
      %582 = vmatpush.bf16.msra.mxu0 %v541
      %583 = vmatmul.bf16.gmra.mxu0 %v551
      %v584 = vpop.f32.mrf.mxu0
      %v585 = vadd.f32 0.0, %v584
      %v586 = vpop.f32.mrf.mxu0
      %v587 = vadd.f32 0.0, %v586
      %588 = vmatmul.bf16.gmra.mxu0 %v554
      %v589 = vpop.f32.mrf.mxu0
      %v590 = vadd.f32 0.0, %v589
      %v591 = vpop.f32.mrf.mxu0
      %v592 = vadd.f32 0.0, %v591
      %593 = vdwg.mxu0
      %594 = vmatpush.bf16.msra.mxu0 0
      %595 = vmatpush.bf16.msra.mxu0 0
      %596 = vmatpush.bf16.msra.mxu0 0
      %597 = vmatpush.bf16.msra.mxu0 0
      %598 = vmatpush.bf16.msra.mxu0 0
      %599 = vmatpush.bf16.msra.mxu0 0
      %600 = vmatpush.bf16.msra.mxu0 %v538
      %601 = vmatpush.bf16.msra.mxu0 %v532
      %602 = vmatmul.bf16.gmra.mxu0 %v551
      %v603 = vpop.f32.mrf.mxu0
      %v604 = vadd.f32 0.0, %v603
      %v605 = vpop.f32.mrf.mxu0
      %v606 = vadd.f32 0.0, %v605
      %607 = vmatmul.bf16.gmra.mxu0 %v554
      %v608 = vpop.f32.mrf.mxu0
      %v609 = vadd.f32 0.0, %v608
      %v610 = vpop.f32.mrf.mxu0
      %v611 = vadd.f32 0.0, %v610
      %612 = vdwg.mxu0
      %v613 = vadd.f32 %v500, %v566
      %v614 = vadd.f32 %v501, %v585
      %v615 = vadd.f32 %v502, %v604
      %v616 = vadd.f32 %v503, %v568
      %v617 = vadd.f32 %v504, %v587
      %v618 = vadd.f32 %v505, %v606
      %v619 = vadd.f32 %v506, %v571
      %v620 = vadd.f32 %v507, %v590
      %v621 = vadd.f32 %v508, %v609
      %v622 = vadd.f32 %v509, %v573
      %v623 = vadd.f32 %v510, %v592
      %v624 = vadd.f32 %v511, %v611
      %625 = vst [vmem:[#allocation2] sm:$0xff] %v613
      %626 = vst [vmem:[#allocation2 + $0x8] sm:$0xff] %v614
      %627 = vst.msk [vmem:[#allocation2 + $0x10] sm:$0xff] %vm335, %v615
      %628 = vst [vmem:[#allocation2 + $0x18] sm:$0xff] %v616
      %629 = vst [vmem:[#allocation2 + $0x20] sm:$0xff] %v617
      %630 = vst.msk [vmem:[#allocation2 + $0x28] sm:$0xff] %vm335, %v618
      %631 = vst [vmem:[#allocation2 + $0x30] sm:$0xff] %v619
      %632 = vst [vmem:[#allocation2 + $0x38] sm:$0xff] %v620
      %633 = vst.msk [vmem:[#allocation2 + $0x40] sm:$0xff] %vm335, %v621
      %634 = vst [vmem:[#allocation2 + $0x48] sm:$0xff] %v622
      %635 = vst [vmem:[#allocation2 + $0x50] sm:$0xff] %v623
      %636 = vst.msk [vmem:[#allocation2 + $0x58] sm:$0xff] %vm335, %v624
      %v637 = vld [vmem:[#allocation2] sm:$0xff]
      %v638 = vld [vmem:[#allocation2 + $0x8] sm:$0xff]
      %v639 = vld [vmem:[#allocation2 + $0x10] sm:$0xff]
      %v640 = vld [vmem:[#allocation2 + $0x18] sm:$0xff]
      %v641 = vld [vmem:[#allocation2 + $0x20] sm:$0xff]
      %v642 = vld [vmem:[#allocation2 + $0x28] sm:$0xff]
      %v643 = vld [vmem:[#allocation2 + $0x30] sm:$0xff]
      %v644 = vld [vmem:[#allocation2 + $0x38] sm:$0xff]
      %v645 = vld [vmem:[#allocation2 + $0x40] sm:$0xff]
      %v646 = vld [vmem:[#allocation2 + $0x48] sm:$0xff]
      %v647 = vld [vmem:[#allocation2 + $0x50] sm:$0xff]
      %v648 = vld [vmem:[#allocation2 + $0x58] sm:$0xff]
      %s649 = scalar_lea.vmem %s1, 32
      %v650 = vld [vmem:[%s649] sm:$0xf]
      %v651 = vld [vmem:[%s649 + $0x4] sm:$0xf]
      %v652 = vld [vmem:[%s649 + $0x8] sm:$0xf]
      %v653 = vld [vmem:[%s649 + $0xc] sm:$0xf]
      %v658 = vunpack.c.l.b16 %v650
      %v659 = vunpack.c.l.b16 %v651
      %v660 = vunpack.c.l.b16 %v652
      %v661 = vunpack.c.l.b16 %v653
      %v662 = vpack.c.b16 %v659, %v658
      %v663 = vpack.c.b16 %v661, %v660
      %664 = vrot.lane.b32.xlu0 %v400, 126
      %v665 = vpop.permute.xlu0 %664
      %666 = vrot.lane.b32.xlu0 %v401, 126
      %v667 = vpop.permute.xlu0 %666
      %668 = vrot.lane.b32.xlu0 %v402, 126
      %v669 = vpop.permute.xlu0 %668
      %670 = vrot.lane.b32.xlu0 %v403, 126
      %v671 = vpop.permute.xlu0 %670
      %672 = vrot.lane.b32.xlu0 %v404, 126
      %v673 = vpop.permute.xlu0 %672
      %674 = vrot.lane.b32.xlu0 %v405, 126
      %v675 = vpop.permute.xlu0 %674
      %vm676 = vcmask 1031168
      %v677 = vsel %vm676, %v665, %v667
      %v678 = vsel %vm676, %v667, %v669
      %v679 = vsel %vm676, %v671, %v673
      %v680 = vsel %vm676, %v673, %v675
      %v688 = vsel %vm412, %v662, 0
      %v691 = vsel %vm412, %v663, 0
      %693 = vmatpush.bf16.msra.mxu0 0
      %694 = vmatpush.bf16.msra.mxu0 0
      %695 = vmatpush.bf16.msra.mxu0 0
      %696 = vmatpush.bf16.msra.mxu0 0
      %697 = vmatpush.bf16.msra.mxu0 0
      %698 = vmatpush.bf16.msra.mxu0 0
      %699 = vmatpush.bf16.msra.mxu0 %v679
      %700 = vmatpush.bf16.msra.mxu0 %v677
      %701 = vmatmul.bf16.gmra.mxu0 %v688
      %v702 = vpop.f32.mrf.mxu0
      %v703 = vadd.f32 0.0, %v702
      %v704 = vpop.f32.mrf.mxu0
      %v705 = vadd.f32 0.0, %v704
      %706 = vmatmul.bf16.gmra.mxu0 %v691
      %v707 = vpop.f32.mrf.mxu0
      %v708 = vadd.f32 0.0, %v707
      %v709 = vpop.f32.mrf.mxu0
      %v710 = vadd.f32 0.0, %v709
      %711 = vdwg.mxu0
      %712 = vmatpush.bf16.msra.mxu0 0
      %713 = vmatpush.bf16.msra.mxu0 0
      %714 = vmatpush.bf16.msra.mxu0 0
      %715 = vmatpush.bf16.msra.mxu0 0
      %716 = vmatpush.bf16.msra.mxu0 0
      %717 = vmatpush.bf16.msra.mxu0 0
      %718 = vmatpush.bf16.msra.mxu0 %v680
      %719 = vmatpush.bf16.msra.mxu0 %v678
      %720 = vmatmul.bf16.gmra.mxu0 %v688
      %v721 = vpop.f32.mrf.mxu0
      %v722 = vadd.f32 0.0, %v721
      %v723 = vpop.f32.mrf.mxu0
      %v724 = vadd.f32 0.0, %v723
      %725 = vmatmul.bf16.gmra.mxu0 %v691
      %v726 = vpop.f32.mrf.mxu0
      %v727 = vadd.f32 0.0, %v726
      %v728 = vpop.f32.mrf.mxu0
      %v729 = vadd.f32 0.0, %v728
      %730 = vdwg.mxu0
      %731 = vmatpush.bf16.msra.mxu0 0
      %732 = vmatpush.bf16.msra.mxu0 0
      %733 = vmatpush.bf16.msra.mxu0 0
      %734 = vmatpush.bf16.msra.mxu0 0
      %735 = vmatpush.bf16.msra.mxu0 0
      %736 = vmatpush.bf16.msra.mxu0 0
      %737 = vmatpush.bf16.msra.mxu0 %v675
      %738 = vmatpush.bf16.msra.mxu0 %v669
      %739 = vmatmul.bf16.gmra.mxu0 %v688
      %v740 = vpop.f32.mrf.mxu0
      %v741 = vadd.f32 0.0, %v740
      %v742 = vpop.f32.mrf.mxu0
      %v743 = vadd.f32 0.0, %v742
      %744 = vmatmul.bf16.gmra.mxu0 %v691
      %v745 = vpop.f32.mrf.mxu0
      %v746 = vadd.f32 0.0, %v745
      %v747 = vpop.f32.mrf.mxu0
      %v748 = vadd.f32 0.0, %v747
      %749 = vdwg.mxu0
      %v750 = vadd.f32 %v637, %v703
      %v751 = vadd.f32 %v638, %v722
      %v752 = vadd.f32 %v639, %v741
      %v753 = vadd.f32 %v640, %v705
      %v754 = vadd.f32 %v641, %v724
      %v755 = vadd.f32 %v642, %v743
      %v756 = vadd.f32 %v643, %v708
      %v757 = vadd.f32 %v644, %v727
      %v758 = vadd.f32 %v645, %v746
      %v759 = vadd.f32 %v646, %v710
      %v760 = vadd.f32 %v647, %v729
      %v761 = vadd.f32 %v648, %v748
      %762 = vst [vmem:[#allocation2] sm:$0xff] %v750
      %763 = vst [vmem:[#allocation2 + $0x8] sm:$0xff] %v751
      %764 = vst.msk [vmem:[#allocation2 + $0x10] sm:$0xff] %vm335, %v752
      %765 = vst [vmem:[#allocation2 + $0x18] sm:$0xff] %v753
      %766 = vst [vmem:[#allocation2 + $0x20] sm:$0xff] %v754
      %767 = vst.msk [vmem:[#allocation2 + $0x28] sm:$0xff] %vm335, %v755
      %768 = vst [vmem:[#allocation2 + $0x30] sm:$0xff] %v756
      %769 = vst [vmem:[#allocation2 + $0x38] sm:$0xff] %v757
      %770 = vst.msk [vmem:[#allocation2 + $0x40] sm:$0xff] %vm335, %v758
      %771 = vst [vmem:[#allocation2 + $0x48] sm:$0xff] %v759
      %772 = vst [vmem:[#allocation2 + $0x50] sm:$0xff] %v760
      %773 = vst.msk [vmem:[#allocation2 + $0x58] sm:$0xff] %vm335, %v761
      %v774 = vld [vmem:[#allocation2] sm:$0xff]
      %v775 = vld [vmem:[#allocation2 + $0x8] sm:$0xff]
      %v776 = vld [vmem:[#allocation2 + $0x10] sm:$0xff]
      %v777 = vld [vmem:[#allocation2 + $0x18] sm:$0xff]
      %v778 = vld [vmem:[#allocation2 + $0x20] sm:$0xff]
      %v779 = vld [vmem:[#allocation2 + $0x28] sm:$0xff]
      %v780 = vld [vmem:[#allocation2 + $0x30] sm:$0xff]
      %v781 = vld [vmem:[#allocation2 + $0x38] sm:$0xff]
      %v782 = vld [vmem:[#allocation2 + $0x40] sm:$0xff]
      %v783 = vld [vmem:[#allocation2 + $0x48] sm:$0xff]
      %v784 = vld [vmem:[#allocation2 + $0x50] sm:$0xff]
      %v785 = vld [vmem:[#allocation2 + $0x58] sm:$0xff]
      %s786 = scalar_lea.vmem %s1, 48
      %v787 = vld [vmem:[%s786] sm:$0xf]
      %v788 = vld [vmem:[%s786 + $0x4] sm:$0xf]
      %v789 = vld [vmem:[%s786 + $0x8] sm:$0xf]
      %v790 = vld [vmem:[%s786 + $0xc] sm:$0xf]
      %v795 = vunpack.c.l.b16 %v787
      %v796 = vunpack.c.l.b16 %v788
      %v797 = vunpack.c.l.b16 %v789
      %v798 = vunpack.c.l.b16 %v790
      %v799 = vpack.c.b16 %v796, %v795
      %v800 = vpack.c.b16 %v798, %v797
      %801 = vrot.lane.b32.xlu0 %v400, 110
      %v802 = vpop.permute.xlu0 %801
      %803 = vrot.lane.b32.xlu0 %v401, 110
      %v804 = vpop.permute.xlu0 %803
      %805 = vrot.lane.b32.xlu0 %v402, 110
      %v806 = vpop.permute.xlu0 %805
      %807 = vrot.lane.b32.xlu0 %v403, 110
      %v808 = vpop.permute.xlu0 %807
      %809 = vrot.lane.b32.xlu0 %v404, 110
      %v810 = vpop.permute.xlu0 %809
      %811 = vrot.lane.b32.xlu0 %v405, 110
      %v812 = vpop.permute.xlu0 %811
      %vm813 = vcmask 900096
      %v814 = vsel %vm813, %v802, %v804
      %v815 = vsel %vm813, %v804, %v806
      %v816 = vsel %vm813, %v808, %v810
      %v817 = vsel %vm813, %v810, %v812
      %v825 = vsel %vm412, %v799, 0
      %v828 = vsel %vm412, %v800, 0
      %830 = vmatpush.bf16.msra.mxu0 0
      %831 = vmatpush.bf16.msra.mxu0 0
      %832 = vmatpush.bf16.msra.mxu0 0
      %833 = vmatpush.bf16.msra.mxu0 0
      %834 = vmatpush.bf16.msra.mxu0 0
      %835 = vmatpush.bf16.msra.mxu0 0
      %836 = vmatpush.bf16.msra.mxu0 %v816
      %837 = vmatpush.bf16.msra.mxu0 %v814
      %838 = vmatmul.bf16.gmra.mxu0 %v825
      %v839 = vpop.f32.mrf.mxu0
      %v840 = vadd.f32 0.0, %v839
      %v841 = vpop.f32.mrf.mxu0
      %v842 = vadd.f32 0.0, %v841
      %843 = vmatmul.bf16.gmra.mxu0 %v828
      %v844 = vpop.f32.mrf.mxu0
      %v845 = vadd.f32 0.0, %v844
      %v846 = vpop.f32.mrf.mxu0
      %v847 = vadd.f32 0.0, %v846
      %848 = vdwg.mxu0
      %849 = vmatpush.bf16.msra.mxu0 0
      %850 = vmatpush.bf16.msra.mxu0 0
      %851 = vmatpush.bf16.msra.mxu0 0
      %852 = vmatpush.bf16.msra.mxu0 0
      %853 = vmatpush.bf16.msra.mxu0 0
      %854 = vmatpush.bf16.msra.mxu0 0
      %855 = vmatpush.bf16.msra.mxu0 %v817
      %856 = vmatpush.bf16.msra.mxu0 %v815
      %857 = vmatmul.bf16.gmra.mxu0 %v825
      %v858 = vpop.f32.mrf.mxu0
      %v859 = vadd.f32 0.0, %v858
      %v860 = vpop.f32.mrf.mxu0
      %v861 = vadd.f32 0.0, %v860
      %862 = vmatmul.bf16.gmra.mxu0 %v828
      %v863 = vpop.f32.mrf.mxu0
      %v864 = vadd.f32 0.0, %v863
      %v865 = vpop.f32.mrf.mxu0
      %v866 = vadd.f32 0.0, %v865
      %867 = vdwg.mxu0
      %868 = vmatpush.bf16.msra.mxu0 0
      %869 = vmatpush.bf16.msra.mxu0 0
      %870 = vmatpush.bf16.msra.mxu0 0
      %871 = vmatpush.bf16.msra.mxu0 0
      %872 = vmatpush.bf16.msra.mxu0 0
      %873 = vmatpush.bf16.msra.mxu0 0
      %874 = vmatpush.bf16.msra.mxu0 %v812
      %875 = vmatpush.bf16.msra.mxu0 %v806
      %876 = vmatmul.bf16.gmra.mxu0 %v825
      %v877 = vpop.f32.mrf.mxu0
      %v878 = vadd.f32 0.0, %v877
      %v879 = vpop.f32.mrf.mxu0
      %v880 = vadd.f32 0.0, %v879
      %881 = vmatmul.bf16.gmra.mxu0 %v828
      %v882 = vpop.f32.mrf.mxu0
      %v883 = vadd.f32 0.0, %v882
      %v884 = vpop.f32.mrf.mxu0
      %v885 = vadd.f32 0.0, %v884
      %886 = vdwg.mxu0
      %v887 = vadd.f32 %v774, %v840
      %v888 = vadd.f32 %v775, %v859
      %v889 = vadd.f32 %v776, %v878
      %v890 = vadd.f32 %v777, %v842
      %v891 = vadd.f32 %v778, %v861
      %v892 = vadd.f32 %v779, %v880
      %v893 = vadd.f32 %v780, %v845
      %v894 = vadd.f32 %v781, %v864
      %v895 = vadd.f32 %v782, %v883
      %v896 = vadd.f32 %v783, %v847
      %v897 = vadd.f32 %v784, %v866
      %v898 = vadd.f32 %v785, %v885
      %899 = vst [vmem:[#allocation2] sm:$0xff] %v887
      %900 = vst [vmem:[#allocation2 + $0x8] sm:$0xff] %v888
      %901 = vst.msk [vmem:[#allocation2 + $0x10] sm:$0xff] %vm335, %v889
      %902 = vst [vmem:[#allocation2 + $0x18] sm:$0xff] %v890
      %903 = vst [vmem:[#allocation2 + $0x20] sm:$0xff] %v891
      %904 = vst.msk [vmem:[#allocation2 + $0x28] sm:$0xff] %vm335, %v892
      %905 = vst [vmem:[#allocation2 + $0x30] sm:$0xff] %v893
      %906 = vst [vmem:[#allocation2 + $0x38] sm:$0xff] %v894
      %907 = vst.msk [vmem:[#allocation2 + $0x40] sm:$0xff] %vm335, %v895
      %908 = vst [vmem:[#allocation2 + $0x48] sm:$0xff] %v896
      %909 = vst [vmem:[#allocation2 + $0x50] sm:$0xff] %v897
      %910 = vst.msk [vmem:[#allocation2 + $0x58] sm:$0xff] %vm335, %v898
      %v911 = vld [vmem:[#allocation2] sm:$0xff]
      %v912 = vld [vmem:[#allocation2 + $0x8] sm:$0xff]
      %v913 = vld [vmem:[#allocation2 + $0x10] sm:$0xff]
      %v914 = vld [vmem:[#allocation2 + $0x18] sm:$0xff]
      %v915 = vld [vmem:[#allocation2 + $0x20] sm:$0xff]
      %v916 = vld [vmem:[#allocation2 + $0x28] sm:$0xff]
      %v917 = vld [vmem:[#allocation2 + $0x30] sm:$0xff]
      %v918 = vld [vmem:[#allocation2 + $0x38] sm:$0xff]
      %v919 = vld [vmem:[#allocation2 + $0x40] sm:$0xff]
      %v920 = vld [vmem:[#allocation2 + $0x48] sm:$0xff]
      %v921 = vld [vmem:[#allocation2 + $0x50] sm:$0xff]
      %v922 = vld [vmem:[#allocation2 + $0x58] sm:$0xff]
      %s923 = scalar_lea.vmem %s1, 64
      %v924 = vld [vmem:[%s923] sm:$0xf]
      %v925 = vld [vmem:[%s923 + $0x4] sm:$0xf]
      %v926 = vld [vmem:[%s923 + $0x8] sm:$0xf]
      %v927 = vld [vmem:[%s923 + $0xc] sm:$0xf]
      %v932 = vunpack.c.l.b16 %v924
      %v933 = vunpack.c.l.b16 %v925
      %v934 = vunpack.c.l.b16 %v926
      %v935 = vunpack.c.l.b16 %v927
      %v936 = vpack.c.b16 %v933, %v932
      %v937 = vpack.c.b16 %v935, %v934
      %938 = vrot.lane.b32.xlu0 %v400, 109
      %v939 = vpop.permute.xlu0 %938
      %940 = vrot.lane.b32.xlu0 %v401, 109
      %v941 = vpop.permute.xlu0 %940
      %942 = vrot.lane.b32.xlu0 %v402, 109
      %v943 = vpop.permute.xlu0 %942
      %944 = vrot.lane.b32.xlu0 %v403, 109
      %v945 = vpop.permute.xlu0 %944
      %946 = vrot.lane.b32.xlu0 %v404, 109
      %v947 = vpop.permute.xlu0 %946
      %948 = vrot.lane.b32.xlu0 %v405, 109
      %v949 = vpop.permute.xlu0 %948
      %vm950 = vcmask 891904
      %v951 = vsel %vm950, %v939, %v941
      %v952 = vsel %vm950, %v941, %v943
      %v953 = vsel %vm950, %v945, %v947
      %v954 = vsel %vm950, %v947, %v949
      %v962 = vsel %vm412, %v936, 0
      %v965 = vsel %vm412, %v937, 0
      %967 = vmatpush.bf16.msra.mxu0 0
      %968 = vmatpush.bf16.msra.mxu0 0
      %969 = vmatpush.bf16.msra.mxu0 0
      %970 = vmatpush.bf16.msra.mxu0 0
      %971 = vmatpush.bf16.msra.mxu0 0
      %972 = vmatpush.bf16.msra.mxu0 0
      %973 = vmatpush.bf16.msra.mxu0 %v953
      %974 = vmatpush.bf16.msra.mxu0 %v951
      %975 = vmatmul.bf16.gmra.mxu0 %v962
      %v976 = vpop.f32.mrf.mxu0
      %v977 = vadd.f32 0.0, %v976
      %v978 = vpop.f32.mrf.mxu0
      %v979 = vadd.f32 0.0, %v978
      %980 = vmatmul.bf16.gmra.mxu0 %v965
      %v981 = vpop.f32.mrf.mxu0
      %v982 = vadd.f32 0.0, %v981
      %v983 = vpop.f32.mrf.mxu0
      %v984 = vadd.f32 0.0, %v983
      %985 = vdwg.mxu0
      %986 = vmatpush.bf16.msra.mxu0 0
      %987 = vmatpush.bf16.msra.mxu0 0
      %988 = vmatpush.bf16.msra.mxu0 0
      %989 = vmatpush.bf16.msra.mxu0 0
      %990 = vmatpush.bf16.msra.mxu0 0
      %991 = vmatpush.bf16.msra.mxu0 0
      %992 = vmatpush.bf16.msra.mxu0 %v954
      %993 = vmatpush.bf16.msra.mxu0 %v952
      %994 = vmatmul.bf16.gmra.mxu0 %v962
      %v995 = vpop.f32.mrf.mxu0
      %v996 = vadd.f32 0.0, %v995
      %v997 = vpop.f32.mrf.mxu0
      %v998 = vadd.f32 0.0, %v997
      %999 = vmatmul.bf16.gmra.mxu0 %v965
      %v1000 = vpop.f32.mrf.mxu0
      %v1001 = vadd.f32 0.0, %v1000
      %v1002 = vpop.f32.mrf.mxu0
      %v1003 = vadd.f32 0.0, %v1002
      %1004 = vdwg.mxu0
      %1005 = vmatpush.bf16.msra.mxu0 0
      %1006 = vmatpush.bf16.msra.mxu0 0
      %1007 = vmatpush.bf16.msra.mxu0 0
      %1008 = vmatpush.bf16.msra.mxu0 0
      %1009 = vmatpush.bf16.msra.mxu0 0
      %1010 = vmatpush.bf16.msra.mxu0 0
      %1011 = vmatpush.bf16.msra.mxu0 %v949
      %1012 = vmatpush.bf16.msra.mxu0 %v943
      %1013 = vmatmul.bf16.gmra.mxu0 %v962
      %v1014 = vpop.f32.mrf.mxu0
      %v1015 = vadd.f32 0.0, %v1014
      %v1016 = vpop.f32.mrf.mxu0
      %v1017 = vadd.f32 0.0, %v1016
      %1018 = vmatmul.bf16.gmra.mxu0 %v965
      %v1019 = vpop.f32.mrf.mxu0
      %v1020 = vadd.f32 0.0, %v1019
      %v1021 = vpop.f32.mrf.mxu0
      %v1022 = vadd.f32 0.0, %v1021
      %1023 = vdwg.mxu0
      %v1024 = vadd.f32 %v911, %v977
      %v1025 = vadd.f32 %v912, %v996
      %v1026 = vadd.f32 %v913, %v1015
      %v1027 = vadd.f32 %v914, %v979
      %v1028 = vadd.f32 %v915, %v998
      %v1029 = vadd.f32 %v916, %v1017
      %v1030 = vadd.f32 %v917, %v982
      %v1031 = vadd.f32 %v918, %v1001
      %v1032 = vadd.f32 %v919, %v1020
      %v1033 = vadd.f32 %v920, %v984
      %v1034 = vadd.f32 %v921, %v1003
      %v1035 = vadd.f32 %v922, %v1022
      %1036 = vst [vmem:[#allocation2] sm:$0xff] %v1024
      %1037 = vst [vmem:[#allocation2 + $0x8] sm:$0xff] %v1025
      %1038 = vst.msk [vmem:[#allocation2 + $0x10] sm:$0xff] %vm335, %v1026
      %1039 = vst [vmem:[#allocation2 + $0x18] sm:$0xff] %v1027
      %1040 = vst [vmem:[#allocation2 + $0x20] sm:$0xff] %v1028
      %1041 = vst.msk [vmem:[#allocation2 + $0x28] sm:$0xff] %vm335, %v1029
      %1042 = vst [vmem:[#allocation2 + $0x30] sm:$0xff] %v1030
      %1043 = vst [vmem:[#allocation2 + $0x38] sm:$0xff] %v1031
      %1044 = vst.msk [vmem:[#allocation2 + $0x40] sm:$0xff] %vm335, %v1032
      %1045 = vst [vmem:[#allocation2 + $0x48] sm:$0xff] %v1033
      %1046 = vst [vmem:[#allocation2 + $0x50] sm:$0xff] %v1034
      %1047 = vst.msk [vmem:[#allocation2 + $0x58] sm:$0xff] %vm335, %v1035
      %v1048 = vld [vmem:[#allocation2] sm:$0xff]
      %v1049 = vld [vmem:[#allocation2 + $0x8] sm:$0xff]
      %v1050 = vld [vmem:[#allocation2 + $0x10] sm:$0xff]
      %v1051 = vld [vmem:[#allocation2 + $0x18] sm:$0xff]
      %v1052 = vld [vmem:[#allocation2 + $0x20] sm:$0xff]
      %v1053 = vld [vmem:[#allocation2 + $0x28] sm:$0xff]
      %v1054 = vld [vmem:[#allocation2 + $0x30] sm:$0xff]
      %v1055 = vld [vmem:[#allocation2 + $0x38] sm:$0xff]
      %v1056 = vld [vmem:[#allocation2 + $0x40] sm:$0xff]
      %v1057 = vld [vmem:[#allocation2 + $0x48] sm:$0xff]
      %v1058 = vld [vmem:[#allocation2 + $0x50] sm:$0xff]
      %v1059 = vld [vmem:[#allocation2 + $0x58] sm:$0xff]
      %s1060 = scalar_lea.vmem %s1, 80
      %v1061 = vld [vmem:[%s1060] sm:$0xf]
      %v1062 = vld [vmem:[%s1060 + $0x4] sm:$0xf]
      %v1063 = vld [vmem:[%s1060 + $0x8] sm:$0xf]
      %v1064 = vld [vmem:[%s1060 + $0xc] sm:$0xf]
      %v1069 = vunpack.c.l.b16 %v1061
      %v1070 = vunpack.c.l.b16 %v1062
      %v1071 = vunpack.c.l.b16 %v1063
      %v1072 = vunpack.c.l.b16 %v1064
      %v1073 = vpack.c.b16 %v1070, %v1069
      %v1074 = vpack.c.b16 %v1072, %v1071
      %1075 = vrot.lane.b32.xlu0 %v400, 108
      %v1076 = vpop.permute.xlu0 %1075
      %1077 = vrot.lane.b32.xlu0 %v401, 108
      %v1078 = vpop.permute.xlu0 %1077
      %1079 = vrot.lane.b32.xlu0 %v402, 108
      %v1080 = vpop.permute.xlu0 %1079
      %1081 = vrot.lane.b32.xlu0 %v403, 108
      %v1082 = vpop.permute.xlu0 %1081
      %1083 = vrot.lane.b32.xlu0 %v404, 108
      %v1084 = vpop.permute.xlu0 %1083
      %1085 = vrot.lane.b32.xlu0 %v405, 108
      %v1086 = vpop.permute.xlu0 %1085
      %vm1087 = vcmask 883712
      %v1088 = vsel %vm1087, %v1076, %v1078
      %v1089 = vsel %vm1087, %v1078, %v1080
      %v1090 = vsel %vm1087, %v1082, %v1084
      %v1091 = vsel %vm1087, %v1084, %v1086
      %v1099 = vsel %vm412, %v1073, 0
      %v1102 = vsel %vm412, %v1074, 0
      %1104 = vmatpush.bf16.msra.mxu0 0
      %1105 = vmatpush.bf16.msra.mxu0 0
      %1106 = vmatpush.bf16.msra.mxu0 0
      %1107 = vmatpush.bf16.msra.mxu0 0
      %1108 = vmatpush.bf16.msra.mxu0 0
      %1109 = vmatpush.bf16.msra.mxu0 0
      %1110 = vmatpush.bf16.msra.mxu0 %v1090
      %1111 = vmatpush.bf16.msra.mxu0 %v1088
      %1112 = vmatmul.bf16.gmra.mxu0 %v1099
      %v1113 = vpop.f32.mrf.mxu0
      %v1114 = vadd.f32 0.0, %v1113
      %v1115 = vpop.f32.mrf.mxu0
      %v1116 = vadd.f32 0.0, %v1115
      %1117 = vmatmul.bf16.gmra.mxu0 %v1102
      %v1118 = vpop.f32.mrf.mxu0
      %v1119 = vadd.f32 0.0, %v1118
      %v1120 = vpop.f32.mrf.mxu0
      %v1121 = vadd.f32 0.0, %v1120
      %1122 = vdwg.mxu0
      %1123 = vmatpush.bf16.msra.mxu0 0
      %1124 = vmatpush.bf16.msra.mxu0 0
      %1125 = vmatpush.bf16.msra.mxu0 0
      %1126 = vmatpush.bf16.msra.mxu0 0
      %1127 = vmatpush.bf16.msra.mxu0 0
      %1128 = vmatpush.bf16.msra.mxu0 0
      %1129 = vmatpush.bf16.msra.mxu0 %v1091
      %1130 = vmatpush.bf16.msra.mxu0 %v1089
      %1131 = vmatmul.bf16.gmra.mxu0 %v1099
      %v1132 = vpop.f32.mrf.mxu0
      %v1133 = vadd.f32 0.0, %v1132
      %v1134 = vpop.f32.mrf.mxu0
      %v1135 = vadd.f32 0.0, %v1134
      %1136 = vmatmul.bf16.gmra.mxu0 %v1102
      %v1137 = vpop.f32.mrf.mxu0
      %v1138 = vadd.f32 0.0, %v1137
      %v1139 = vpop.f32.mrf.mxu0
      %v1140 = vadd.f32 0.0, %v1139
      %1141 = vdwg.mxu0
      %1142 = vmatpush.bf16.msra.mxu0 0
      %1143 = vmatpush.bf16.msra.mxu0 0
      %1144 = vmatpush.bf16.msra.mxu0 0
      %1145 = vmatpush.bf16.msra.mxu0 0
      %1146 = vmatpush.bf16.msra.mxu0 0
      %1147 = vmatpush.bf16.msra.mxu0 0
      %1148 = vmatpush.bf16.msra.mxu0 %v1086
      %1149 = vmatpush.bf16.msra.mxu0 %v1080
      %1150 = vmatmul.bf16.gmra.mxu0 %v1099
      %v1151 = vpop.f32.mrf.mxu0
      %v1152 = vadd.f32 0.0, %v1151
      %v1153 = vpop.f32.mrf.mxu0
      %v1154 = vadd.f32 0.0, %v1153
      %1155 = vmatmul.bf16.gmra.mxu0 %v1102
      %v1156 = vpop.f32.mrf.mxu0
      %v1157 = vadd.f32 0.0, %v1156
      %v1158 = vpop.f32.mrf.mxu0
      %v1159 = vadd.f32 0.0, %v1158
      %1160 = vdwg.mxu0
      %v1161 = vadd.f32 %v1048, %v1114
      %v1162 = vadd.f32 %v1049, %v1133
      %v1163 = vadd.f32 %v1050, %v1152
      %v1164 = vadd.f32 %v1051, %v1116
      %v1165 = vadd.f32 %v1052, %v1135
      %v1166 = vadd.f32 %v1053, %v1154
      %v1167 = vadd.f32 %v1054, %v1119
      %v1168 = vadd.f32 %v1055, %v1138
      %v1169 = vadd.f32 %v1056, %v1157
      %v1170 = vadd.f32 %v1057, %v1121
      %v1171 = vadd.f32 %v1058, %v1140
      %v1172 = vadd.f32 %v1059, %v1159
      %1173 = vst [vmem:[#allocation2] sm:$0xff] %v1161
      %1174 = vst [vmem:[#allocation2 + $0x8] sm:$0xff] %v1162
      %1175 = vst.msk [vmem:[#allocation2 + $0x10] sm:$0xff] %vm335, %v1163
      %1176 = vst [vmem:[#allocation2 + $0x18] sm:$0xff] %v1164
      %1177 = vst [vmem:[#allocation2 + $0x20] sm:$0xff] %v1165
      %1178 = vst.msk [vmem:[#allocation2 + $0x28] sm:$0xff] %vm335, %v1166
      %1179 = vst [vmem:[#allocation2 + $0x30] sm:$0xff] %v1167
      %1180 = vst [vmem:[#allocation2 + $0x38] sm:$0xff] %v1168
      %1181 = vst.msk [vmem:[#allocation2 + $0x40] sm:$0xff] %vm335, %v1169
      %1182 = vst [vmem:[#allocation2 + $0x48] sm:$0xff] %v1170
      %1183 = vst [vmem:[#allocation2 + $0x50] sm:$0xff] %v1171
      %1184 = vst.msk [vmem:[#allocation2 + $0x58] sm:$0xff] %vm335, %v1172
      %v1185 = vld [vmem:[#allocation2] sm:$0xff]
      %v1186 = vld [vmem:[#allocation2 + $0x8] sm:$0xff]
      %v1187 = vld [vmem:[#allocation2 + $0x10] sm:$0xff]
      %v1188 = vld [vmem:[#allocation2 + $0x18] sm:$0xff]
      %v1189 = vld [vmem:[#allocation2 + $0x20] sm:$0xff]
      %v1190 = vld [vmem:[#allocation2 + $0x28] sm:$0xff]
      %v1191 = vld [vmem:[#allocation2 + $0x30] sm:$0xff]
      %v1192 = vld [vmem:[#allocation2 + $0x38] sm:$0xff]
      %v1193 = vld [vmem:[#allocation2 + $0x40] sm:$0xff]
      %v1194 = vld [vmem:[#allocation2 + $0x48] sm:$0xff]
      %v1195 = vld [vmem:[#allocation2 + $0x50] sm:$0xff]
      %v1196 = vld [vmem:[#allocation2 + $0x58] sm:$0xff]
      %s1197 = scalar_lea.vmem %s1, 96
      %v1198 = vld [vmem:[%s1197] sm:$0xf]
      %v1199 = vld [vmem:[%s1197 + $0x4] sm:$0xf]
      %v1200 = vld [vmem:[%s1197 + $0x8] sm:$0xf]
      %v1201 = vld [vmem:[%s1197 + $0xc] sm:$0xf]
      %v1206 = vunpack.c.l.b16 %v1198
      %v1207 = vunpack.c.l.b16 %v1199
      %v1208 = vunpack.c.l.b16 %v1200
      %v1209 = vunpack.c.l.b16 %v1201
      %v1210 = vpack.c.b16 %v1207, %v1206
      %v1211 = vpack.c.b16 %v1209, %v1208
      %1212 = vrot.lane.b32.xlu0 %v400, 92
      %v1213 = vpop.permute.xlu0 %1212
      %1214 = vrot.lane.b32.xlu0 %v401, 92
      %v1215 = vpop.permute.xlu0 %1214
      %1216 = vrot.lane.b32.xlu0 %v402, 92
      %v1217 = vpop.permute.xlu0 %1216
      %1218 = vrot.lane.b32.xlu0 %v403, 92
      %v1219 = vpop.permute.xlu0 %1218
      %1220 = vrot.lane.b32.xlu0 %v404, 92
      %v1221 = vpop.permute.xlu0 %1220
      %1222 = vrot.lane.b32.xlu0 %v405, 92
      %v1223 = vpop.permute.xlu0 %1222
      %vm1224 = vcmask 752640
      %v1225 = vsel %vm1224, %v1213, %v1215
      %v1226 = vsel %vm1224, %v1215, %v1217
      %v1227 = vsel %vm1224, %v1219, %v1221
      %v1228 = vsel %vm1224, %v1221, %v1223
      %v1236 = vsel %vm412, %v1210, 0
      %v1239 = vsel %vm412, %v1211, 0
      %1241 = vmatpush.bf16.msra.mxu0 0
      %1242 = vmatpush.bf16.msra.mxu0 0
      %1243 = vmatpush.bf16.msra.mxu0 0
      %1244 = vmatpush.bf16.msra.mxu0 0
      %1245 = vmatpush.bf16.msra.mxu0 0
      %1246 = vmatpush.bf16.msra.mxu0 0
      %1247 = vmatpush.bf16.msra.mxu0 %v1227
      %1248 = vmatpush.bf16.msra.mxu0 %v1225
      %1249 = vmatmul.bf16.gmra.mxu0 %v1236
      %v1250 = vpop.f32.mrf.mxu0
      %v1251 = vadd.f32 0.0, %v1250
      %v1252 = vpop.f32.mrf.mxu0
      %v1253 = vadd.f32 0.0, %v1252
      %1254 = vmatmul.bf16.gmra.mxu0 %v1239
      %v1255 = vpop.f32.mrf.mxu0
      %v1256 = vadd.f32 0.0, %v1255
      %v1257 = vpop.f32.mrf.mxu0
      %v1258 = vadd.f32 0.0, %v1257
      %1259 = vdwg.mxu0
      %1260 = vmatpush.bf16.msra.mxu0 0
      %1261 = vmatpush.bf16.msra.mxu0 0
      %1262 = vmatpush.bf16.msra.mxu0 0
      %1263 = vmatpush.bf16.msra.mxu0 0
      %1264 = vmatpush.bf16.msra.mxu0 0
      %1265 = vmatpush.bf16.msra.mxu0 0
      %1266 = vmatpush.bf16.msra.mxu0 %v1228
      %1267 = vmatpush.bf16.msra.mxu0 %v1226
      %1268 = vmatmul.bf16.gmra.mxu0 %v1236
      %v1269 = vpop.f32.mrf.mxu0
      %v1270 = vadd.f32 0.0, %v1269
      %v1271 = vpop.f32.mrf.mxu0
      %v1272 = vadd.f32 0.0, %v1271
      %1273 = vmatmul.bf16.gmra.mxu0 %v1239
      %v1274 = vpop.f32.mrf.mxu0
      %v1275 = vadd.f32 0.0, %v1274
      %v1276 = vpop.f32.mrf.mxu0
      %v1277 = vadd.f32 0.0, %v1276
      %1278 = vdwg.mxu0
      %1279 = vmatpush.bf16.msra.mxu0 0
      %1280 = vmatpush.bf16.msra.mxu0 0
      %1281 = vmatpush.bf16.msra.mxu0 0
      %1282 = vmatpush.bf16.msra.mxu0 0
      %1283 = vmatpush.bf16.msra.mxu0 0
      %1284 = vmatpush.bf16.msra.mxu0 0
      %1285 = vmatpush.bf16.msra.mxu0 %v1223
      %1286 = vmatpush.bf16.msra.mxu0 %v1217
      %1287 = vmatmul.bf16.gmra.mxu0 %v1236
      %v1288 = vpop.f32.mrf.mxu0
      %v1289 = vadd.f32 0.0, %v1288
      %v1290 = vpop.f32.mrf.mxu0
      %v1291 = vadd.f32 0.0, %v1290
      %1292 = vmatmul.bf16.gmra.mxu0 %v1239
      %v1293 = vpop.f32.mrf.mxu0
      %v1294 = vadd.f32 0.0, %v1293
      %v1295 = vpop.f32.mrf.mxu0
      %v1296 = vadd.f32 0.0, %v1295
      %1297 = vdwg.mxu0
      %v1298 = vadd.f32 %v1185, %v1251
      %v1299 = vadd.f32 %v1186, %v1270
      %v1300 = vadd.f32 %v1187, %v1289
      %v1301 = vadd.f32 %v1188, %v1253
      %v1302 = vadd.f32 %v1189, %v1272
      %v1303 = vadd.f32 %v1190, %v1291
      %v1304 = vadd.f32 %v1191, %v1256
      %v1305 = vadd.f32 %v1192, %v1275
      %v1306 = vadd.f32 %v1193, %v1294
      %v1307 = vadd.f32 %v1194, %v1258
      %v1308 = vadd.f32 %v1195, %v1277
      %v1309 = vadd.f32 %v1196, %v1296
      %1310 = vst [vmem:[#allocation2] sm:$0xff] %v1298
      %1311 = vst [vmem:[#allocation2 + $0x8] sm:$0xff] %v1299
      %1312 = vst.msk [vmem:[#allocation2 + $0x10] sm:$0xff] %vm335, %v1300
      %1313 = vst [vmem:[#allocation2 + $0x18] sm:$0xff] %v1301
      %1314 = vst [vmem:[#allocation2 + $0x20] sm:$0xff] %v1302
      %1315 = vst.msk [vmem:[#allocation2 + $0x28] sm:$0xff] %vm335, %v1303
      %1316 = vst [vmem:[#allocation2 + $0x30] sm:$0xff] %v1304
      %1317 = vst [vmem:[#allocation2 + $0x38] sm:$0xff] %v1305
      %1318 = vst.msk [vmem:[#allocation2 + $0x40] sm:$0xff] %vm335, %v1306
      %1319 = vst [vmem:[#allocation2 + $0x48] sm:$0xff] %v1307
      %1320 = vst [vmem:[#allocation2 + $0x50] sm:$0xff] %v1308
      %1321 = vst.msk [vmem:[#allocation2 + $0x58] sm:$0xff] %vm335, %v1309
      %v1322 = vld [vmem:[#allocation2] sm:$0xff]
      %v1323 = vld [vmem:[#allocation2 + $0x8] sm:$0xff]
      %v1324 = vld [vmem:[#allocation2 + $0x10] sm:$0xff]
      %v1325 = vld [vmem:[#allocation2 + $0x18] sm:$0xff]
      %v1326 = vld [vmem:[#allocation2 + $0x20] sm:$0xff]
      %v1327 = vld [vmem:[#allocation2 + $0x28] sm:$0xff]
      %v1328 = vld [vmem:[#allocation2 + $0x30] sm:$0xff]
      %v1329 = vld [vmem:[#allocation2 + $0x38] sm:$0xff]
      %v1330 = vld [vmem:[#allocation2 + $0x40] sm:$0xff]
      %v1331 = vld [vmem:[#allocation2 + $0x48] sm:$0xff]
      %v1332 = vld [vmem:[#allocation2 + $0x50] sm:$0xff]
      %v1333 = vld [vmem:[#allocation2 + $0x58] sm:$0xff]
      %s1334 = scalar_lea.vmem %s1, 112
      %v1335 = vld [vmem:[%s1334] sm:$0xf]
      %v1336 = vld [vmem:[%s1334 + $0x4] sm:$0xf]
      %v1337 = vld [vmem:[%s1334 + $0x8] sm:$0xf]
      %v1338 = vld [vmem:[%s1334 + $0xc] sm:$0xf]
      %v1343 = vunpack.c.l.b16 %v1335
      %v1344 = vunpack.c.l.b16 %v1336
      %v1345 = vunpack.c.l.b16 %v1337
      %v1346 = vunpack.c.l.b16 %v1338
      %v1347 = vpack.c.b16 %v1344, %v1343
      %v1348 = vpack.c.b16 %v1346, %v1345
      %1349 = vrot.lane.b32.xlu0 %v400, 91
      %v1350 = vpop.permute.xlu0 %1349
      %1351 = vrot.lane.b32.xlu0 %v401, 91
      %v1352 = vpop.permute.xlu0 %1351
      %1353 = vrot.lane.b32.xlu0 %v402, 91
      %v1354 = vpop.permute.xlu0 %1353
      %1355 = vrot.lane.b32.xlu0 %v403, 91
      %v1356 = vpop.permute.xlu0 %1355
      %1357 = vrot.lane.b32.xlu0 %v404, 91
      %v1358 = vpop.permute.xlu0 %1357
      %1359 = vrot.lane.b32.xlu0 %v405, 91
      %v1360 = vpop.permute.xlu0 %1359
      %vm1361 = vcmask 744448
      %v1362 = vsel %vm1361, %v1350, %v1352
      %v1363 = vsel %vm1361, %v1352, %v1354
      %v1364 = vsel %vm1361, %v1356, %v1358
      %v1365 = vsel %vm1361, %v1358, %v1360
      %v1373 = vsel %vm412, %v1347, 0
      %v1376 = vsel %vm412, %v1348, 0
      %1378 = vmatpush.bf16.msra.mxu0 0
      %1379 = vmatpush.bf16.msra.mxu0 0
      %1380 = vmatpush.bf16.msra.mxu0 0
      %1381 = vmatpush.bf16.msra.mxu0 0
      %1382 = vmatpush.bf16.msra.mxu0 0
      %1383 = vmatpush.bf16.msra.mxu0 0
      %1384 = vmatpush.bf16.msra.mxu0 %v1364
      %1385 = vmatpush.bf16.msra.mxu0 %v1362
      %1386 = vmatmul.bf16.gmra.mxu0 %v1373
      %v1387 = vpop.f32.mrf.mxu0
      %v1388 = vadd.f32 0.0, %v1387
      %v1389 = vpop.f32.mrf.mxu0
      %v1390 = vadd.f32 0.0, %v1389
      %1391 = vmatmul.bf16.gmra.mxu0 %v1376
      %v1392 = vpop.f32.mrf.mxu0
      %v1393 = vadd.f32 0.0, %v1392
      %v1394 = vpop.f32.mrf.mxu0
      %v1395 = vadd.f32 0.0, %v1394
      %1396 = vdwg.mxu0
      %1397 = vmatpush.bf16.msra.mxu0 0
      %1398 = vmatpush.bf16.msra.mxu0 0
      %1399 = vmatpush.bf16.msra.mxu0 0
      %1400 = vmatpush.bf16.msra.mxu0 0
      %1401 = vmatpush.bf16.msra.mxu0 0
      %1402 = vmatpush.bf16.msra.mxu0 0
      %1403 = vmatpush.bf16.msra.mxu0 %v1365
      %1404 = vmatpush.bf16.msra.mxu0 %v1363
      %1405 = vmatmul.bf16.gmra.mxu0 %v1373
      %v1406 = vpop.f32.mrf.mxu0
      %v1407 = vadd.f32 0.0, %v1406
      %v1408 = vpop.f32.mrf.mxu0
      %v1409 = vadd.f32 0.0, %v1408
      %1410 = vmatmul.bf16.gmra.mxu0 %v1376
      %v1411 = vpop.f32.mrf.mxu0
      %v1412 = vadd.f32 0.0, %v1411
      %v1413 = vpop.f32.mrf.mxu0
      %v1414 = vadd.f32 0.0, %v1413
      %1415 = vdwg.mxu0
      %1416 = vmatpush.bf16.msra.mxu0 0
      %1417 = vmatpush.bf16.msra.mxu0 0
      %1418 = vmatpush.bf16.msra.mxu0 0
      %1419 = vmatpush.bf16.msra.mxu0 0
      %1420 = vmatpush.bf16.msra.mxu0 0
      %1421 = vmatpush.bf16.msra.mxu0 0
      %1422 = vmatpush.bf16.msra.mxu0 %v1360
      %1423 = vmatpush.bf16.msra.mxu0 %v1354
      %1424 = vmatmul.bf16.gmra.mxu0 %v1373
      %v1425 = vpop.f32.mrf.mxu0
      %v1426 = vadd.f32 0.0, %v1425
      %v1427 = vpop.f32.mrf.mxu0
      %v1428 = vadd.f32 0.0, %v1427
      %1429 = vmatmul.bf16.gmra.mxu0 %v1376
      %v1430 = vpop.f32.mrf.mxu0
      %v1431 = vadd.f32 0.0, %v1430
      %v1432 = vpop.f32.mrf.mxu0
      %v1433 = vadd.f32 0.0, %v1432
      %1434 = vdwg.mxu0
      %v1435 = vadd.f32 %v1322, %v1388
      %v1436 = vadd.f32 %v1323, %v1407
      %v1437 = vadd.f32 %v1324, %v1426
      %v1438 = vadd.f32 %v1325, %v1390
      %v1439 = vadd.f32 %v1326, %v1409
      %v1440 = vadd.f32 %v1327, %v1428
      %v1441 = vadd.f32 %v1328, %v1393
      %v1442 = vadd.f32 %v1329, %v1412
      %v1443 = vadd.f32 %v1330, %v1431
      %v1444 = vadd.f32 %v1331, %v1395
      %v1445 = vadd.f32 %v1332, %v1414
      %v1446 = vadd.f32 %v1333, %v1433
      %1447 = vst [vmem:[#allocation2] sm:$0xff] %v1435
      %1448 = vst [vmem:[#allocation2 + $0x8] sm:$0xff] %v1436
      %1449 = vst.msk [vmem:[#allocation2 + $0x10] sm:$0xff] %vm335, %v1437
      %1450 = vst [vmem:[#allocation2 + $0x18] sm:$0xff] %v1438
      %1451 = vst [vmem:[#allocation2 + $0x20] sm:$0xff] %v1439
      %1452 = vst.msk [vmem:[#allocation2 + $0x28] sm:$0xff] %vm335, %v1440
      %1453 = vst [vmem:[#allocation2 + $0x30] sm:$0xff] %v1441
      %1454 = vst [vmem:[#allocation2 + $0x38] sm:$0xff] %v1442
      %1455 = vst.msk [vmem:[#allocation2 + $0x40] sm:$0xff] %vm335, %v1443
      %1456 = vst [vmem:[#allocation2 + $0x48] sm:$0xff] %v1444
      %1457 = vst [vmem:[#allocation2 + $0x50] sm:$0xff] %v1445
      %1458 = vst.msk [vmem:[#allocation2 + $0x58] sm:$0xff] %vm335, %v1446
      %v1459 = vld [vmem:[#allocation2] sm:$0xff]
      %v1460 = vld [vmem:[#allocation2 + $0x8] sm:$0xff]
      %v1461 = vld [vmem:[#allocation2 + $0x10] sm:$0xff]
      %v1462 = vld [vmem:[#allocation2 + $0x18] sm:$0xff]
      %v1463 = vld [vmem:[#allocation2 + $0x20] sm:$0xff]
      %v1464 = vld [vmem:[#allocation2 + $0x28] sm:$0xff]
      %v1465 = vld [vmem:[#allocation2 + $0x30] sm:$0xff]
      %v1466 = vld [vmem:[#allocation2 + $0x38] sm:$0xff]
      %v1467 = vld [vmem:[#allocation2 + $0x40] sm:$0xff]
      %v1468 = vld [vmem:[#allocation2 + $0x48] sm:$0xff]
      %v1469 = vld [vmem:[#allocation2 + $0x50] sm:$0xff]
      %v1470 = vld [vmem:[#allocation2 + $0x58] sm:$0xff]
      %s1471 = scalar_lea.vmem %s1, 128
      %v1472 = vld [vmem:[%s1471] sm:$0xf]
      %v1473 = vld [vmem:[%s1471 + $0x4] sm:$0xf]
      %v1474 = vld [vmem:[%s1471 + $0x8] sm:$0xf]
      %v1475 = vld [vmem:[%s1471 + $0xc] sm:$0xf]
      %v1480 = vunpack.c.l.b16 %v1472
      %v1481 = vunpack.c.l.b16 %v1473
      %v1482 = vunpack.c.l.b16 %v1474
      %v1483 = vunpack.c.l.b16 %v1475
      %v1484 = vpack.c.b16 %v1481, %v1480
      %v1485 = vpack.c.b16 %v1483, %v1482
      %1486 = vrot.lane.b32.xlu0 %v400, 90
      %v1487 = vpop.permute.xlu0 %1486
      %1488 = vrot.lane.b32.xlu0 %v401, 90
      %v1489 = vpop.permute.xlu0 %1488
      %1490 = vrot.lane.b32.xlu0 %v402, 90
      %v1491 = vpop.permute.xlu0 %1490
      %1492 = vrot.lane.b32.xlu0 %v403, 90
      %v1493 = vpop.permute.xlu0 %1492
      %1494 = vrot.lane.b32.xlu0 %v404, 90
      %v1495 = vpop.permute.xlu0 %1494
      %1496 = vrot.lane.b32.xlu0 %v405, 90
      %v1497 = vpop.permute.xlu0 %1496
      %vm1498 = vcmask 736256
      %v1499 = vsel %vm1498, %v1487, %v1489
      %v1500 = vsel %vm1498, %v1489, %v1491
      %v1501 = vsel %vm1498, %v1493, %v1495
      %v1502 = vsel %vm1498, %v1495, %v1497
      %v1510 = vsel %vm412, %v1484, 0
      %v1513 = vsel %vm412, %v1485, 0
      %1515 = vmatpush.bf16.msra.mxu0 0
      %1516 = vmatpush.bf16.msra.mxu0 0
      %1517 = vmatpush.bf16.msra.mxu0 0
      %1518 = vmatpush.bf16.msra.mxu0 0
      %1519 = vmatpush.bf16.msra.mxu0 0
      %1520 = vmatpush.bf16.msra.mxu0 0
      %1521 = vmatpush.bf16.msra.mxu0 %v1501
      %1522 = vmatpush.bf16.msra.mxu0 %v1499
      %1523 = vmatmul.bf16.gmra.mxu0 %v1510
      %v1524 = vpop.f32.mrf.mxu0
      %v1525 = vadd.f32 0.0, %v1524
      %v1526 = vpop.f32.mrf.mxu0
      %v1527 = vadd.f32 0.0, %v1526
      %1528 = vmatmul.bf16.gmra.mxu0 %v1513
      %v1529 = vpop.f32.mrf.mxu0
      %v1530 = vadd.f32 0.0, %v1529
      %v1531 = vpop.f32.mrf.mxu0
      %v1532 = vadd.f32 0.0, %v1531
      %1533 = vdwg.mxu0
      %1534 = vmatpush.bf16.msra.mxu0 0
      %1535 = vmatpush.bf16.msra.mxu0 0
      %1536 = vmatpush.bf16.msra.mxu0 0
      %1537 = vmatpush.bf16.msra.mxu0 0
      %1538 = vmatpush.bf16.msra.mxu0 0
      %1539 = vmatpush.bf16.msra.mxu0 0
      %1540 = vmatpush.bf16.msra.mxu0 %v1502
      %1541 = vmatpush.bf16.msra.mxu0 %v1500
      %1542 = vmatmul.bf16.gmra.mxu0 %v1510
      %v1543 = vpop.f32.mrf.mxu0
      %v1544 = vadd.f32 0.0, %v1543
      %v1545 = vpop.f32.mrf.mxu0
      %v1546 = vadd.f32 0.0, %v1545
      %1547 = vmatmul.bf16.gmra.mxu0 %v1513
      %v1548 = vpop.f32.mrf.mxu0
      %v1549 = vadd.f32 0.0, %v1548
      %v1550 = vpop.f32.mrf.mxu0
      %v1551 = vadd.f32 0.0, %v1550
      %1552 = vdwg.mxu0
      %1553 = vmatpush.bf16.msra.mxu0 0
      %1554 = vmatpush.bf16.msra.mxu0 0
      %1555 = vmatpush.bf16.msra.mxu0 0
      %1556 = vmatpush.bf16.msra.mxu0 0
      %1557 = vmatpush.bf16.msra.mxu0 0
      %1558 = vmatpush.bf16.msra.mxu0 0
      %1559 = vmatpush.bf16.msra.mxu0 %v1497
      %1560 = vmatpush.bf16.msra.mxu0 %v1491
      %1561 = vmatmul.bf16.gmra.mxu0 %v1510
      %v1562 = vpop.f32.mrf.mxu0
      %v1563 = vadd.f32 0.0, %v1562
      %v1564 = vpop.f32.mrf.mxu0
      %v1565 = vadd.f32 0.0, %v1564
      %1566 = vmatmul.bf16.gmra.mxu0 %v1513
      %v1567 = vpop.f32.mrf.mxu0
      %v1568 = vadd.f32 0.0, %v1567
      %v1569 = vpop.f32.mrf.mxu0
      %v1570 = vadd.f32 0.0, %v1569
      %1571 = vdwg.mxu0
      %v1572 = vadd.f32 %v1459, %v1525
      %v1573 = vadd.f32 %v1460, %v1544
      %v1574 = vadd.f32 %v1461, %v1563
      %v1575 = vadd.f32 %v1462, %v1527
      %v1576 = vadd.f32 %v1463, %v1546
      %v1577 = vadd.f32 %v1464, %v1565
      %v1578 = vadd.f32 %v1465, %v1530
      %v1579 = vadd.f32 %v1466, %v1549
      %v1580 = vadd.f32 %v1467, %v1568
      %v1581 = vadd.f32 %v1468, %v1532
      %v1582 = vadd.f32 %v1469, %v1551
      %v1583 = vadd.f32 %v1470, %v1570
      %1584 = vst [vmem:[#allocation2] sm:$0xff] %v1572
      %1585 = vst [vmem:[#allocation2 + $0x8] sm:$0xff] %v1573
      %1586 = vst.msk [vmem:[#allocation2 + $0x10] sm:$0xff] %vm335, %v1574
      %1587 = vst [vmem:[#allocation2 + $0x18] sm:$0xff] %v1575
      %1588 = vst [vmem:[#allocation2 + $0x20] sm:$0xff] %v1576
      %1589 = vst.msk [vmem:[#allocation2 + $0x28] sm:$0xff] %vm335, %v1577
      %1590 = vst [vmem:[#allocation2 + $0x30] sm:$0xff] %v1578
      %1591 = vst [vmem:[#allocation2 + $0x38] sm:$0xff] %v1579
      %1592 = vst.msk [vmem:[#allocation2 + $0x40] sm:$0xff] %vm335, %v1580
      %1593 = vst [vmem:[#allocation2 + $0x48] sm:$0xff] %v1581
      %1594 = vst [vmem:[#allocation2 + $0x50] sm:$0xff] %v1582
      %1595 = vst.msk [vmem:[#allocation2 + $0x58] sm:$0xff] %vm335, %v1583
      %v1596 = vld [vmem:[#allocation2] sm:$0xff]
      %v1597 = vld [vmem:[#allocation2 + $0x8] sm:$0xff]
      %v1598 = vld [vmem:[#allocation2 + $0x10] sm:$0xff]
      %v1599 = vld [vmem:[#allocation2 + $0x18] sm:$0xff]
      %v1600 = vld [vmem:[#allocation2 + $0x20] sm:$0xff]
      %v1601 = vld [vmem:[#allocation2 + $0x28] sm:$0xff]
      %v1602 = vld [vmem:[#allocation2 + $0x30] sm:$0xff]
      %v1603 = vld [vmem:[#allocation2 + $0x38] sm:$0xff]
      %v1604 = vld [vmem:[#allocation2 + $0x40] sm:$0xff]
      %v1605 = vld [vmem:[#allocation2 + $0x48] sm:$0xff]
      %v1606 = vld [vmem:[#allocation2 + $0x50] sm:$0xff]
      %v1607 = vld [vmem:[#allocation2 + $0x58] sm:$0xff]
      %vm1608 = vcmp.gt.f32.partialorder %v1596, 0.5
      %vm1609 = vcmp.gt.f32.partialorder %v1597, 0.5
      %vm1610 = vcmp.gt.f32.partialorder %v1598, 0.5
      %vm1611 = vcmp.gt.f32.partialorder %v1599, 0.5
      %vm1612 = vcmp.gt.f32.partialorder %v1600, 0.5
      %vm1613 = vcmp.gt.f32.partialorder %v1601, 0.5
      %vm1614 = vcmp.gt.f32.partialorder %v1602, 0.5
      %vm1615 = vcmp.gt.f32.partialorder %v1603, 0.5
      %vm1616 = vcmp.gt.f32.partialorder %v1604, 0.5
      %vm1617 = vcmp.gt.f32.partialorder %v1605, 0.5
      %vm1618 = vcmp.gt.f32.partialorder %v1606, 0.5
      %vm1619 = vcmp.gt.f32.partialorder %v1607, 0.5
      %v1620 = vsel %vm1608, 1, 0
      %v1621 = vsel %vm1609, 1, 0
      %v1622 = vsel %vm1610, 1, 0
      %v1623 = vsel %vm1611, 1, 0
      %v1624 = vsel %vm1612, 1, 0
      %v1625 = vsel %vm1613, 1, 0
      %v1626 = vsel %vm1614, 1, 0
      %v1627 = vsel %vm1615, 1, 0
      %v1628 = vsel %vm1616, 1, 0
      %v1629 = vsel %vm1617, 1, 0
      %v1630 = vsel %vm1618, 1, 0
      %v1631 = vsel %vm1619, 1, 0
      %v1632 = vcvt.s32.f32 %v1620
      %v1633 = vcvt.s32.f32 %v1621
      %v1634 = vcvt.s32.f32 %v1622
      %v1635 = vcvt.s32.f32 %v1623
      %v1636 = vcvt.s32.f32 %v1624
      %v1637 = vcvt.s32.f32 %v1625
      %v1638 = vcvt.s32.f32 %v1626
      %v1639 = vcvt.s32.f32 %v1627
      %v1640 = vcvt.s32.f32 %v1628
      %v1641 = vcvt.s32.f32 %v1629
      %v1642 = vcvt.s32.f32 %v1630
      %v1643 = vcvt.s32.f32 %v1631
      %1644 = vst [vmem:[#allocation3] sm:$0xff] %v1632
      %1645 = vst [vmem:[#allocation3 + $0x8] sm:$0xff] %v1633
      %1646 = vst.msk [vmem:[#allocation3 + $0x10] sm:$0xff] %vm335, %v1634
      %1647 = vst [vmem:[#allocation3 + $0x18] sm:$0xff] %v1635
      %1648 = vst [vmem:[#allocation3 + $0x20] sm:$0xff] %v1636
      %1649 = vst.msk [vmem:[#allocation3 + $0x28] sm:$0xff] %vm335, %v1637
      %1650 = vst [vmem:[#allocation3 + $0x30] sm:$0xff] %v1638
      %1651 = vst [vmem:[#allocation3 + $0x38] sm:$0xff] %v1639
      %1652 = vst.msk [vmem:[#allocation3 + $0x40] sm:$0xff] %vm335, %v1640
      %1653 = vst [vmem:[#allocation3 + $0x48] sm:$0xff] %v1641
      %1654 = vst [vmem:[#allocation3 + $0x50] sm:$0xff] %v1642
      %1655 = vst.msk [vmem:[#allocation3 + $0x58] sm:$0xff] %vm335, %v1643
      %v1656 = vpack.c.bf16 %v1633, %v1632
      %v1657 = vpack.c.bf16 %v1634, %v1634
      %v1658 = vpack.c.bf16 %v1636, %v1635
      %v1659 = vpack.c.bf16 %v1637, %v1637
      %v1660 = vpack.c.bf16 %v1639, %v1638
      %v1661 = vpack.c.bf16 %v1640, %v1640
      %v1662 = vpack.c.bf16 %v1642, %v1641
      %v1663 = vpack.c.bf16 %v1643, %v1643
      %1664 = vst [vmem:[%s206] sm:$0xff] %v1656
      %vm1665 = vcmask 551936
      %1666 = vst.msk [vmem:[%s206 + $0x8] sm:$0xf] %vm1665, %v1657
      %1667 = vst [vmem:[%s206 + $0xc] sm:$0xff] %v1658
      %1668 = vst.msk [vmem:[%s206 + $0x14] sm:$0xf] %vm1665, %v1659
      %1669 = vst [vmem:[%s206 + $0x18] sm:$0xff] %v1660
      %1670 = vst.msk [vmem:[%s206 + $0x20] sm:$0xf] %vm1665, %v1661
      %1671 = vst [vmem:[%s206 + $0x24] sm:$0xff] %v1662
      %1672 = vst.msk [vmem:[%s206 + $0x2c] sm:$0xf] %vm1665, %v1663
      %p1673 = scmp.lt.s32.totalorder %s19, 3
      %s1674 = scalar_select %p1673, %s19, 3
      %p1675 = scmp.lt.s32.totalorder %s18, 1
      %s1676 = scalar_select %p1675, %s18, 1
      %s1677 = smul.addr %s1676, 12
      %s1678 = smul.addr %s1674, 24
      %s1679 = sadd.s32 %s1677, %s1678
      %s1680 = smul.addr %s1679, 4
      %s1681 = scalar_lea.vmem %s3, %s1680
      // Predicated region
      $region37: #{scnn_forward.5} parent=31 // pred_check
        %p1682 = pneg %p116
      $region38: #{scnn_forward.5} parent=31 // pred_check_branch
        %1684 = sbr.rel (%p1682) target = $region40
      $region39: #{scnn_forward.5} parent=31 // pred_region
        _
      $region40: #{scnn_forward.5} parent=31 // pred_fallthru
        _
    $region32: #{scnn_forward.5} parent=5 // pred_fallthru
      _
    %p1685 = scmp.le.s32.totalorder 2, %s9
    // Predicated region
    $region41: #{scnn_forward.5} parent=5 // pred_check
      %p1686 = pneg %p1685
    $region42: #{scnn_forward.5} parent=5 // pred_check_branch
      %1688 = sbr.rel (%p1686) target = $region44
    $region43: #{scnn_forward.5} parent=5 // pred_region
      %s1689 = ssub.s32 %s9, 2
      // Predicated region
      $region45: #{scnn_forward.5} parent=43 // pred_check
        %p1690 = pneg %p122
      $region46: #{scnn_forward.5} parent=43 // pred_check_branch
        %1692 = sbr.rel (%p1690) target = $region48
      $region47: #{scnn_forward.5} parent=43 // pred_region
        %p1693 = scmp.lt.s32.totalorder %s21, 3
        %s1694 = scalar_select %p1693, %s21, 3
        %p1695 = scmp.lt.s32.totalorder %s20, 1
        %s1696 = scalar_select %p1695, %s20, 1
        %s1697 = smul.addr %s1696, 12
        %s1698 = smul.addr %s1694, 24
        %s1699 = sadd.s32 %s1697, %s1698
        %s1700 = smul.addr %s1699, 4
        %s1701 = scalar_lea.vmem %s3, %s1700
      $region48: #{scnn_forward.5} parent=43 // pred_fallthru
        _
    $region44: #{scnn_forward.5} parent=5 // pred_fallthru
      _
  $region6: #{scnn_forward.5} parent=0 // loop_footer
    %s13 = sadd.s32 1, %s9
  $region7: #{scnn_forward.5} parent=0 // loop_footer_branch
    %8 = sbr.rel target = $region3
  $region8: #{scnn_forward.5} parent=0 // loop_exit
    _

// kernel: scnn_forward.6
$region0: #{scnn_forward.6}
  #allocation0 [shape = 'u32[]', space=smem, size = 0x4, offset = 0x4, fixed_abs, tag = 'smem constant byte address 0x4 - core index']
  #allocation1 [shape = 'u32[72,128]{1,0:T(1,128)}', space=vmem, size = 0x9000, scoped, tag = 'internal scratch']
  #allocation2 [shape = 'f32[32,100]{1,0:T(8,128)}', space=vmem, size = 0x4000, scoped, tag = 'scratch operand']
  #allocation3 [shape = 'f32[32,100]{1,0:T(8,128)}', space=vmem, size = 0x4000, scoped, tag = 'scratch operand']
  %s0 = inlined_call_operand.vmem [shape: bf16[4,2,32,122], index: 0, kind: input, shape index: {}]
  %s1 = inlined_call_operand.vmem [shape: bf16[9,32,32], index: 1, kind: input, shape index: {}]
  %s2 = inlined_call_operand.vmem [shape: f32[32,1], index: 2, kind: input, shape index: {}]
  %s3 = inlined_call_operand.vmem [shape: bf16[4,2,32,100], index: 3, kind: output, shape index: {}]
  %s4 = sld [smem:[#allocation0]]
  $region49: #{scnn_forward.6} parent=0
    _
  %s6 = ssub.s32 1, %s4
  %s7 = scalar_select 0, %s6, %s4
  loop: start=0, step=1, limit=10
  $region2: #{scnn_forward.6} parent=0 // loop_pre_header
    _
  $region3: #{scnn_forward.6} parent=0 // loop_header
    %s9 = sphi 0, %s13
    %p10 = scmp.ge.s32.totalorder %s9, 10
    %s16 = sphi 0, %s28
    %s17 = sphi 0, %s24
    %s18 = sphi 0, %s16
    %s19 = sphi 0, %s17
    %s20 = sphi 0, %s18
    %s21 = sphi 0, %s19
    %s33 = sphi 0, %s35
    %s36 = sphi 0, %s33
    %s37 = sphi 0, %s36
    %s53 = sphi 0, %s37
    %s57 = sphi 0, %s57
    %s59 = sphi 0, %s57
    %s60 = sphi 0, %s59
    %s74 = sphi 0, %s60
    %s78 = sphi 0, %s78
    %s80 = sphi 0, %s78
    %s81 = sphi 0, %s80
    %s95 = sphi 0, %s81
    %s103 = sphi 0, %s105
    %s106 = sphi 0, %s103
    %s107 = sphi 0, %s106
    %s123 = sphi 0, %s107
  $region4: #{scnn_forward.6} parent=0 // loop_header_branch
    %12 = sbr.rel (%p10) target = $region8
  $region5: #{scnn_forward.6} parent=0 // loop_body
    %s14 = ssub.s32 %s9, 1
    %s15 = ssub.s32 %s9, 2
    %s22 = sadd.s32 1, %s17
    %p23 = scmp.ge.s32.totalorder %s22, 4
    %s24 = scalar_select %p23, 0, %s22
    %s25 = sadd.s32 1, %s16
    %s26 = scalar_select %p23, %s25, %s16
    %p27 = scmp.ge.s32.totalorder %s26, 2
    %s28 = scalar_select %p27, 0, %s26
    %s29 = ssub.s32 %s17, %s24
    %s30 = ssub.s32 %s16, %s28
    %s31 = sor.u32 %s29, %s30
    %p32 = scmp.eq.s32.totalorder %s31, 0
    %s34 = sadd.s32 %s33, 1
    %s35 = scalar_select %p32, %s33, %s34
    %p38 = pneg %p32
    %p39 = scmp.eq.s32.totalorder %s9, 7
    %p40 = por %p38, %p39
    %p41 = scmp.ne.s32.totalorder %s33, %s36
    %p42 = scmp.eq.s32.totalorder %s9, 0
    %p43 = por %p41, %p42
    %p44 = scmp.ne.s32.totalorder %s33, %s36
    %p45 = scmp.eq.s32.totalorder %s14, 7
    %p46 = por %p44, %p45
    %p47 = scmp.ne.s32.totalorder %s36, %s37
    %p48 = scmp.eq.s32.totalorder %s14, 0
    %p49 = por %p47, %p48
    %p50 = scmp.ne.s32.totalorder %s36, %s37
    %p51 = scmp.eq.s32.totalorder %s15, 7
    %p52 = por %p50, %p51
    %p54 = scmp.ne.s32.totalorder %s37, %s53
    %p55 = scmp.eq.s32.totalorder %s15, 0
    %p56 = por %p54, %p55
    %s58 = sadd.s32 %s57, 1
    %p61 = scmp.eq.s32.totalorder %s9, 7
    %p62 = scmp.ne.s32.totalorder %s57, %s59
    %p63 = scmp.eq.s32.totalorder %s9, 0
    %p64 = por %p62, %p63
    %p65 = scmp.ne.s32.totalorder %s57, %s59
    %p66 = scmp.eq.s32.totalorder %s14, 7
    %p67 = por %p65, %p66
    %p68 = scmp.ne.s32.totalorder %s59, %s60
    %p69 = scmp.eq.s32.totalorder %s14, 0
    %p70 = por %p68, %p69
    %p71 = scmp.ne.s32.totalorder %s59, %s60
    %p72 = scmp.eq.s32.totalorder %s15, 7
    %p73 = por %p71, %p72
    %p75 = scmp.ne.s32.totalorder %s60, %s74
    %p76 = scmp.eq.s32.totalorder %s15, 0
    %p77 = por %p75, %p76
    %s79 = sadd.s32 %s78, 1
    %p82 = scmp.eq.s32.totalorder %s9, 7
    %p83 = scmp.ne.s32.totalorder %s78, %s80
    %p84 = scmp.eq.s32.totalorder %s9, 0
    %p85 = por %p83, %p84
    %p86 = scmp.ne.s32.totalorder %s78, %s80
    %p87 = scmp.eq.s32.totalorder %s14, 7
    %p88 = por %p86, %p87
    %p89 = scmp.ne.s32.totalorder %s80, %s81
    %p90 = scmp.eq.s32.totalorder %s14, 0
    %p91 = por %p89, %p90
    %p92 = scmp.ne.s32.totalorder %s80, %s81
    %p93 = scmp.eq.s32.totalorder %s15, 7
    %p94 = por %p92, %p93
    %p96 = scmp.ne.s32.totalorder %s81, %s95
    %p97 = scmp.eq.s32.totalorder %s15, 0
    %p98 = por %p96, %p97
    %s99 = ssub.s32 %s17, %s24
    %s100 = ssub.s32 %s16, %s28
    %s101 = sor.u32 %s99, %s100
    %p102 = scmp.eq.s32.totalorder %s101, 0
    %s104 = sadd.s32 %s103, 1
    %s105 = scalar_select %p102, %s103, %s104
    %p108 = pneg %p102
    %p109 = scmp.eq.s32.totalorder %s9, 7
    %p110 = por %p108, %p109
    %p111 = scmp.ne.s32.totalorder %s103, %s106
    %p112 = scmp.eq.s32.totalorder %s9, 0
    %p113 = por %p111, %p112
    %p114 = scmp.ne.s32.totalorder %s103, %s106
    %p115 = scmp.eq.s32.totalorder %s14, 7
    %p116 = por %p114, %p115
    %p117 = scmp.ne.s32.totalorder %s106, %s107
    %p118 = scmp.eq.s32.totalorder %s14, 0
    %p119 = por %p117, %p118
    %p120 = scmp.ne.s32.totalorder %s106, %s107
    %p121 = scmp.eq.s32.totalorder %s15, 7
    %p122 = por %p120, %p121
    %p124 = scmp.ne.s32.totalorder %s107, %s123
    %p125 = scmp.eq.s32.totalorder %s15, 0
    %p126 = por %p124, %p125
    %p127 = scmp.le.s32.totalorder 1, %s9
    %p128 = scmp.lt.s32.totalorder %s9, 9
    %p129 = pnand %p127, %p128
    %p130 = pneg %p129
    // Predicated region
    $region9: #{scnn_forward.6} parent=5 // pred_check
      _
    $region10: #{scnn_forward.6} parent=5 // pred_check_branch
      %132 = sbr.rel (%p129) target = $region12
    $region11: #{scnn_forward.6} parent=5 // pred_region
      %s133 = ssub.s32 %s9, 1
      // Predicated region
      $region13: #{scnn_forward.6} parent=11 // pred_check
        %p134 = pneg %p70
      $region14: #{scnn_forward.6} parent=11 // pred_check_branch
        %136 = sbr.rel (%p134) target = $region16
      $region15: #{scnn_forward.6} parent=11 // pred_region
        _
      $region16: #{scnn_forward.6} parent=11 // pred_fallthru
        _
      // Predicated region
      $region17: #{scnn_forward.6} parent=11 // pred_check
        %p137 = pneg %p91
      $region18: #{scnn_forward.6} parent=11 // pred_check_branch
        %139 = sbr.rel (%p137) target = $region20
      $region19: #{scnn_forward.6} parent=11 // pred_region
        _
      $region20: #{scnn_forward.6} parent=11 // pred_fallthru
        _
    $region12: #{scnn_forward.6} parent=5 // pred_fallthru
      _
    %p140 = scmp.lt.s32.totalorder %s9, 8
    // Predicated region
    $region21: #{scnn_forward.6} parent=5 // pred_check
      %p141 = pneg %p140
    $region22: #{scnn_forward.6} parent=5 // pred_check_branch
      %143 = sbr.rel (%p141) target = $region24
    $region23: #{scnn_forward.6} parent=5 // pred_region
      // Predicated region
      $region25: #{scnn_forward.6} parent=23 // pred_check
        %p144 = pneg %p43
      $region26: #{scnn_forward.6} parent=23 // pred_check_branch
        %146 = sbr.rel (%p144) target = $region28
      $region27: #{scnn_forward.6} parent=23 // pred_region
        %p147 = scmp.lt.s32.totalorder %s17, 3
        %s148 = scalar_select %p147, %s17, 3
        %p149 = scmp.lt.s32.totalorder %s16, 1
        %s150 = scalar_select %p149, %s16, 1
        %s151 = smul.addr %s150, 4
        %s152 = smul.addr %s148, 8
        %s153 = sadd.s32 %s151, %s152
        %s154 = smul.addr %s153, 4
        %s155 = scalar_lea.vmem %s0, %s154
      $region28: #{scnn_forward.6} parent=23 // pred_fallthru
        _
    $region24: #{scnn_forward.6} parent=5 // pred_fallthru
      _
    %p156 = scmp.le.s32.totalorder 1, %s9
    %p157 = scmp.lt.s32.totalorder %s9, 9
    %p158 = pnand %p156, %p157
    %p159 = pneg %p158
    // Predicated region
    $region29: #{scnn_forward.6} parent=5 // pred_check
      _
    $region30: #{scnn_forward.6} parent=5 // pred_check_branch
      %161 = sbr.rel (%p158) target = $region32
    $region31: #{scnn_forward.6} parent=5 // pred_region
      %s162 = ssub.s32 %s9, 1
      %p163 = scmp.lt.s32.totalorder %s19, 3
      %s164 = scalar_select %p163, %s19, 3
      %p165 = scmp.lt.s32.totalorder %s18, 1
      %s166 = scalar_select %p165, %s18, 1
      %s167 = smul.addr %s166, 4
      %s168 = smul.addr %s164, 8
      %s169 = sadd.s32 %s167, %s168
      %s170 = smul.addr %s169, 4
      %s171 = scalar_lea.vmem %s0, %s170
      %p172 = pneg %p49
      %p173 = pneg %p46
      %p174 = pneg %p70
      %p175 = pneg %p67
      %p176 = pneg %p91
      %p177 = pneg %p88
      %p178 = pneg %p119
      %p179 = pneg %p116
      %p180 = scmp.lt.s32.totalorder %s19, 3
      %s181 = scalar_select %p180, %s19, 3
      %p182 = scmp.lt.s32.totalorder %s18, 1
      %s183 = scalar_select %p182, %s18, 1
      %s184 = smul.addr %s183, 4
      %s185 = smul.addr %s181, 8
      %s186 = sadd.s32 %s184, %s185
      %s187 = smul.addr %s186, 4
      %s188 = scalar_lea.vmem %s3, %s187
      %p189 = scmp.lt.s32.totalorder %s19, 3
      %s190 = scalar_select %p189, %s19, 3
      %p191 = scmp.lt.s32.totalorder %s18, 1
      %s192 = scalar_select %p191, %s18, 1
      %s193 = smul.addr %s192, 4
      %s194 = smul.addr %s190, 8
      %s195 = sadd.s32 %s193, %s194
      %s196 = smul.addr %s195, 4
      %s197 = scalar_lea.vmem %s0, %s196
      %p198 = scmp.lt.s32.totalorder %s19, 3
      %s199 = scalar_select %p198, %s19, 3
      %p200 = scmp.lt.s32.totalorder %s18, 1
      %s201 = scalar_select %p200, %s18, 1
      %s202 = smul.addr %s201, 4
      %s203 = smul.addr %s199, 8
      %s204 = sadd.s32 %s202, %s203
      %s205 = smul.addr %s204, 4
      %s206 = scalar_lea.vmem %s3, %s205
      %p208 = scmp.eq.s32.totalorder %s19, 0
      // Predicated region
      $region33: #{scnn_forward.6} parent=31 // pred_check
        %p209 = pneg %p208
      $region34: #{scnn_forward.6} parent=31 // pred_check_branch
        %211 = sbr.rel (%p209) target = $region36
      $region35: #{scnn_forward.6} parent=31 // pred_region
        %vm212 = vcmask 818176
        %213 = vst.msk [vmem:[#allocation2] sm:$0xff] %vm212, 0.0
        %214 = vst.msk [vmem:[#allocation2 + $0x8] sm:$0xff] %vm212, 0.0
        %215 = vst.msk [vmem:[#allocation2 + $0x10] sm:$0xff] %vm212, 0.0
        %216 = vst.msk [vmem:[#allocation2 + $0x18] sm:$0xff] %vm212, 0.0
        %217 = vst.msk [vmem:[#allocation3] sm:$0xff] %vm212, 0.0
        %218 = vst.msk [vmem:[#allocation3 + $0x8] sm:$0xff] %vm212, 0.0
        %219 = vst.msk [vmem:[#allocation3 + $0x10] sm:$0xff] %vm212, 0.0
        %220 = vst.msk [vmem:[#allocation3 + $0x18] sm:$0xff] %vm212, 0.0
      $region36: #{scnn_forward.6} parent=31 // pred_fallthru
        _
      %v221 = vld [vmem:[#allocation2] sm:$0xff]
      %v222 = vld [vmem:[#allocation2 + $0x8] sm:$0xff]
      %v223 = vld [vmem:[#allocation2 + $0x10] sm:$0xff]
      %v224 = vld [vmem:[#allocation2 + $0x18] sm:$0xff]
      %v225 = vmul.f32 %v221, 0.2
      %v226 = vmul.f32 %v222, 0.2
      %v227 = vmul.f32 %v223, 0.2
      %v228 = vmul.f32 %v224, 0.2
      %v229 = vld [vmem:[#allocation3] sm:$0xff]
      %v230 = vld [vmem:[#allocation3 + $0x8] sm:$0xff]
      %v231 = vld [vmem:[#allocation3 + $0x10] sm:$0xff]
      %v232 = vld [vmem:[#allocation3 + $0x18] sm:$0xff]
      %v233 = vsub.f32 1.0, %v229
      %v234 = vsub.f32 1.0, %v230
      %v235 = vsub.f32 1.0, %v231
      %v236 = vsub.f32 1.0, %v232
      %v237 = vmul.f32 %v225, %v233
      %v238 = vmul.f32 %v226, %v234
      %v239 = vmul.f32 %v227, %v235
      %v240 = vmul.f32 %v228, %v236
      %v241 = vld [vmem:[%s2] sm:$0xff]
      %v242 = vld [vmem:[%s2 + $0x8] sm:$0xff]
      %v243 = vld [vmem:[%s2 + $0x10] sm:$0xff]
      %v244 = vld [vmem:[%s2 + $0x18] sm:$0xff]
      %246 = vset.pattern.permute.xlu0 0
      %247 = vperm.xlu0 %246, %v241
      %v248 = vpop.permute.xlu0 %247
      %251 = vset.pattern.permute.xlu0 0
      %252 = vperm.xlu0 %251, %v242
      %v253 = vpop.permute.xlu0 %252
      %256 = vset.pattern.permute.xlu0 0
      %257 = vperm.xlu0 %256, %v243
      %v258 = vpop.permute.xlu0 %257
      %261 = vset.pattern.permute.xlu0 0
      %262 = vperm.xlu0 %261, %v244
      %v263 = vpop.permute.xlu0 %262
      %v265 = vadd.f32 %v237, %v248
      %v266 = vadd.f32 %v238, %v253
      %v267 = vadd.f32 %v239, %v258
      %v268 = vadd.f32 %v240, %v263
      %vm269 = vcmask 818176
      %270 = vst.msk [vmem:[#allocation2] sm:$0xff] %vm269, %v265
      %271 = vst.msk [vmem:[#allocation2 + $0x8] sm:$0xff] %vm269, %v266
      %272 = vst.msk [vmem:[#allocation2 + $0x10] sm:$0xff] %vm269, %v267
      %273 = vst.msk [vmem:[#allocation2 + $0x18] sm:$0xff] %vm269, %v268
      %v274 = vld [vmem:[%s197] sm:$0xf]
      %v275 = vld [vmem:[%s197 + $0x4] sm:$0xf]
      %v276 = vld [vmem:[%s197 + $0x8] sm:$0xf]
      %v277 = vld [vmem:[%s197 + $0xc] sm:$0xf]
      %v278 = vld [vmem:[#allocation2] sm:$0xff]
      %v279 = vld [vmem:[#allocation2 + $0x8] sm:$0xff]
      %v280 = vld [vmem:[#allocation2 + $0x10] sm:$0xff]
      %v281 = vld [vmem:[#allocation2 + $0x18] sm:$0xff]
      %v282 = vld [vmem:[%s1] sm:$0xf]
      %v283 = vld [vmem:[%s1 + $0x4] sm:$0xf]
      %v284 = vld [vmem:[%s1 + $0x8] sm:$0xf]
      %v285 = vld [vmem:[%s1 + $0xc] sm:$0xf]
      %v290 = vunpack.c.l.b16 %v282
      %v291 = vunpack.c.l.b16 %v283
      %v292 = vunpack.c.l.b16 %v284
      %v293 = vunpack.c.l.b16 %v285
      %v294 = vpack.c.b16 %v291, %v290
      %v295 = vpack.c.b16 %v293, %v292
      %v300 = vunpack.c.l.b16 %v274
      %v301 = vunpack.c.l.b16 %v275
      %v302 = vunpack.c.l.b16 %v276
      %v303 = vunpack.c.l.b16 %v277
      %v304 = vpack.c.b16 %v301, %v300
      %v305 = vpack.c.b16 %v303, %v302
      %vm308 = vcmask 261120
      %v310 = vsel %vm308, %v294, 0
      %v313 = vsel %vm308, %v295, 0
      %315 = vmatpush.bf16.msra.mxu0 0
      %316 = vmatpush.bf16.msra.mxu0 0
      %317 = vmatpush.bf16.msra.mxu0 0
      %318 = vmatpush.bf16.msra.mxu0 0
      %319 = vmatpush.bf16.msra.mxu0 0
      %320 = vmatpush.bf16.msra.mxu0 0
      %321 = vmatpush.bf16.msra.mxu0 %v305
      %322 = vmatpush.bf16.msra.mxu0 %v304
      %323 = vmatmul.bf16.gmra.mxu0 %v310
      %v324 = vpop.f32.mrf.mxu0
      %v325 = vadd.f32 0.0, %v324
      %v326 = vpop.f32.mrf.mxu0
      %v327 = vadd.f32 0.0, %v326
      %328 = vmatmul.bf16.gmra.mxu0 %v313
      %v329 = vpop.f32.mrf.mxu0
      %v330 = vadd.f32 0.0, %v329
      %v331 = vpop.f32.mrf.mxu0
      %v332 = vadd.f32 0.0, %v331
      %333 = vdwg.mxu0
      %v334 = vadd.f32 %v278, %v325
      %v335 = vadd.f32 %v279, %v327
      %v336 = vadd.f32 %v280, %v330
      %v337 = vadd.f32 %v281, %v332
      %338 = vst.msk [vmem:[#allocation2] sm:$0xff] %vm269, %v334
      %339 = vst.msk [vmem:[#allocation2 + $0x8] sm:$0xff] %vm269, %v335
      %340 = vst.msk [vmem:[#allocation2 + $0x10] sm:$0xff] %vm269, %v336
      %341 = vst.msk [vmem:[#allocation2 + $0x18] sm:$0xff] %vm269, %v337
      %v342 = vld [vmem:[#allocation2] sm:$0xff]
      %v343 = vld [vmem:[#allocation2 + $0x8] sm:$0xff]
      %v344 = vld [vmem:[#allocation2 + $0x10] sm:$0xff]
      %v345 = vld [vmem:[#allocation2 + $0x18] sm:$0xff]
      %s346 = scalar_lea.vmem %s1, 16
      %v347 = vld [vmem:[%s346] sm:$0xf]
      %v348 = vld [vmem:[%s346 + $0x4] sm:$0xf]
      %v349 = vld [vmem:[%s346 + $0x8] sm:$0xf]
      %v350 = vld [vmem:[%s346 + $0xc] sm:$0xf]
      %v355 = vunpack.c.l.b16 %v347
      %v356 = vunpack.c.l.b16 %v348
      %v357 = vunpack.c.l.b16 %v349
      %v358 = vunpack.c.l.b16 %v350
      %v359 = vpack.c.b16 %v356, %v355
      %v360 = vpack.c.b16 %v358, %v357
      %361 = vrot.lane.b32.xlu0 %v304, 127
      %v362 = vpop.permute.xlu0 %361
      %363 = vrot.lane.b32.xlu0 %v305, 127
      %v364 = vpop.permute.xlu0 %363
      %v368 = vsel %vm308, %v359, 0
      %v371 = vsel %vm308, %v360, 0
      %373 = vmatpush.bf16.msra.mxu0 0
      %374 = vmatpush.bf16.msra.mxu0 0
      %375 = vmatpush.bf16.msra.mxu0 0
      %376 = vmatpush.bf16.msra.mxu0 0
      %377 = vmatpush.bf16.msra.mxu0 0
      %378 = vmatpush.bf16.msra.mxu0 0
      %379 = vmatpush.bf16.msra.mxu0 %v364
      %380 = vmatpush.bf16.msra.mxu0 %v362
      %381 = vmatmul.bf16.gmra.mxu0 %v368
      %v382 = vpop.f32.mrf.mxu0
      %v383 = vadd.f32 0.0, %v382
      %v384 = vpop.f32.mrf.mxu0
      %v385 = vadd.f32 0.0, %v384
      %386 = vmatmul.bf16.gmra.mxu0 %v371
      %v387 = vpop.f32.mrf.mxu0
      %v388 = vadd.f32 0.0, %v387
      %v389 = vpop.f32.mrf.mxu0
      %v390 = vadd.f32 0.0, %v389
      %391 = vdwg.mxu0
      %v392 = vadd.f32 %v342, %v383
      %v393 = vadd.f32 %v343, %v385
      %v394 = vadd.f32 %v344, %v388
      %v395 = vadd.f32 %v345, %v390
      %396 = vst.msk [vmem:[#allocation2] sm:$0xff] %vm269, %v392
      %397 = vst.msk [vmem:[#allocation2 + $0x8] sm:$0xff] %vm269, %v393
      %398 = vst.msk [vmem:[#allocation2 + $0x10] sm:$0xff] %vm269, %v394
      %399 = vst.msk [vmem:[#allocation2 + $0x18] sm:$0xff] %vm269, %v395
      %v400 = vld [vmem:[#allocation2] sm:$0xff]
      %v401 = vld [vmem:[#allocation2 + $0x8] sm:$0xff]
      %v402 = vld [vmem:[#allocation2 + $0x10] sm:$0xff]
      %v403 = vld [vmem:[#allocation2 + $0x18] sm:$0xff]
      %s404 = scalar_lea.vmem %s1, 32
      %v405 = vld [vmem:[%s404] sm:$0xf]
      %v406 = vld [vmem:[%s404 + $0x4] sm:$0xf]
      %v407 = vld [vmem:[%s404 + $0x8] sm:$0xf]
      %v408 = vld [vmem:[%s404 + $0xc] sm:$0xf]
      %v413 = vunpack.c.l.b16 %v405
      %v414 = vunpack.c.l.b16 %v406
      %v415 = vunpack.c.l.b16 %v407
      %v416 = vunpack.c.l.b16 %v408
      %v417 = vpack.c.b16 %v414, %v413
      %v418 = vpack.c.b16 %v416, %v415
      %419 = vrot.lane.b32.xlu0 %v304, 126
      %v420 = vpop.permute.xlu0 %419
      %421 = vrot.lane.b32.xlu0 %v305, 126
      %v422 = vpop.permute.xlu0 %421
      %v426 = vsel %vm308, %v417, 0
      %v429 = vsel %vm308, %v418, 0
      %431 = vmatpush.bf16.msra.mxu0 0
      %432 = vmatpush.bf16.msra.mxu0 0
      %433 = vmatpush.bf16.msra.mxu0 0
      %434 = vmatpush.bf16.msra.mxu0 0
      %435 = vmatpush.bf16.msra.mxu0 0
      %436 = vmatpush.bf16.msra.mxu0 0
      %437 = vmatpush.bf16.msra.mxu0 %v422
      %438 = vmatpush.bf16.msra.mxu0 %v420
      %439 = vmatmul.bf16.gmra.mxu0 %v426
      %v440 = vpop.f32.mrf.mxu0
      %v441 = vadd.f32 0.0, %v440
      %v442 = vpop.f32.mrf.mxu0
      %v443 = vadd.f32 0.0, %v442
      %444 = vmatmul.bf16.gmra.mxu0 %v429
      %v445 = vpop.f32.mrf.mxu0
      %v446 = vadd.f32 0.0, %v445
      %v447 = vpop.f32.mrf.mxu0
      %v448 = vadd.f32 0.0, %v447
      %449 = vdwg.mxu0
      %v450 = vadd.f32 %v400, %v441
      %v451 = vadd.f32 %v401, %v443
      %v452 = vadd.f32 %v402, %v446
      %v453 = vadd.f32 %v403, %v448
      %454 = vst.msk [vmem:[#allocation2] sm:$0xff] %vm269, %v450
      %455 = vst.msk [vmem:[#allocation2 + $0x8] sm:$0xff] %vm269, %v451
      %456 = vst.msk [vmem:[#allocation2 + $0x10] sm:$0xff] %vm269, %v452
      %457 = vst.msk [vmem:[#allocation2 + $0x18] sm:$0xff] %vm269, %v453
      %v458 = vld [vmem:[#allocation2] sm:$0xff]
      %v459 = vld [vmem:[#allocation2 + $0x8] sm:$0xff]
      %v460 = vld [vmem:[#allocation2 + $0x10] sm:$0xff]
      %v461 = vld [vmem:[#allocation2 + $0x18] sm:$0xff]
      %s462 = scalar_lea.vmem %s1, 48
      %v463 = vld [vmem:[%s462] sm:$0xf]
      %v464 = vld [vmem:[%s462 + $0x4] sm:$0xf]
      %v465 = vld [vmem:[%s462 + $0x8] sm:$0xf]
      %v466 = vld [vmem:[%s462 + $0xc] sm:$0xf]
      %v471 = vunpack.c.l.b16 %v463
      %v472 = vunpack.c.l.b16 %v464
      %v473 = vunpack.c.l.b16 %v465
      %v474 = vunpack.c.l.b16 %v466
      %v475 = vpack.c.b16 %v472, %v471
      %v476 = vpack.c.b16 %v474, %v473
      %477 = vrot.lane.b32.xlu0 %v304, 118
      %v478 = vpop.permute.xlu0 %477
      %479 = vrot.lane.b32.xlu0 %v305, 118
      %v480 = vpop.permute.xlu0 %479
      %v484 = vsel %vm308, %v475, 0
      %v487 = vsel %vm308, %v476, 0
      %489 = vmatpush.bf16.msra.mxu0 0
      %490 = vmatpush.bf16.msra.mxu0 0
      %491 = vmatpush.bf16.msra.mxu0 0
      %492 = vmatpush.bf16.msra.mxu0 0
      %493 = vmatpush.bf16.msra.mxu0 0
      %494 = vmatpush.bf16.msra.mxu0 0
      %495 = vmatpush.bf16.msra.mxu0 %v480
      %496 = vmatpush.bf16.msra.mxu0 %v478
      %497 = vmatmul.bf16.gmra.mxu0 %v484
      %v498 = vpop.f32.mrf.mxu0
      %v499 = vadd.f32 0.0, %v498
      %v500 = vpop.f32.mrf.mxu0
      %v501 = vadd.f32 0.0, %v500
      %502 = vmatmul.bf16.gmra.mxu0 %v487
      %v503 = vpop.f32.mrf.mxu0
      %v504 = vadd.f32 0.0, %v503
      %v505 = vpop.f32.mrf.mxu0
      %v506 = vadd.f32 0.0, %v505
      %507 = vdwg.mxu0
      %v508 = vadd.f32 %v458, %v499
      %v509 = vadd.f32 %v459, %v501
      %v510 = vadd.f32 %v460, %v504
      %v511 = vadd.f32 %v461, %v506
      %512 = vst.msk [vmem:[#allocation2] sm:$0xff] %vm269, %v508
      %513 = vst.msk [vmem:[#allocation2 + $0x8] sm:$0xff] %vm269, %v509
      %514 = vst.msk [vmem:[#allocation2 + $0x10] sm:$0xff] %vm269, %v510
      %515 = vst.msk [vmem:[#allocation2 + $0x18] sm:$0xff] %vm269, %v511
      %v516 = vld [vmem:[#allocation2] sm:$0xff]
      %v517 = vld [vmem:[#allocation2 + $0x8] sm:$0xff]
      %v518 = vld [vmem:[#allocation2 + $0x10] sm:$0xff]
      %v519 = vld [vmem:[#allocation2 + $0x18] sm:$0xff]
      %s520 = scalar_lea.vmem %s1, 64
      %v521 = vld [vmem:[%s520] sm:$0xf]
      %v522 = vld [vmem:[%s520 + $0x4] sm:$0xf]
      %v523 = vld [vmem:[%s520 + $0x8] sm:$0xf]
      %v524 = vld [vmem:[%s520 + $0xc] sm:$0xf]
      %v529 = vunpack.c.l.b16 %v521
      %v530 = vunpack.c.l.b16 %v522
      %v531 = vunpack.c.l.b16 %v523
      %v532 = vunpack.c.l.b16 %v524
      %v533 = vpack.c.b16 %v530, %v529
      %v534 = vpack.c.b16 %v532, %v531
      %535 = vrot.lane.b32.xlu0 %v304, 117
      %v536 = vpop.permute.xlu0 %535
      %537 = vrot.lane.b32.xlu0 %v305, 117
      %v538 = vpop.permute.xlu0 %537
      %v542 = vsel %vm308, %v533, 0
      %v545 = vsel %vm308, %v534, 0
      %547 = vmatpush.bf16.msra.mxu0 0
      %548 = vmatpush.bf16.msra.mxu0 0
      %549 = vmatpush.bf16.msra.mxu0 0
      %550 = vmatpush.bf16.msra.mxu0 0
      %551 = vmatpush.bf16.msra.mxu0 0
      %552 = vmatpush.bf16.msra.mxu0 0
      %553 = vmatpush.bf16.msra.mxu0 %v538
      %554 = vmatpush.bf16.msra.mxu0 %v536
      %555 = vmatmul.bf16.gmra.mxu0 %v542
      %v556 = vpop.f32.mrf.mxu0
      %v557 = vadd.f32 0.0, %v556
      %v558 = vpop.f32.mrf.mxu0
      %v559 = vadd.f32 0.0, %v558
      %560 = vmatmul.bf16.gmra.mxu0 %v545
      %v561 = vpop.f32.mrf.mxu0
      %v562 = vadd.f32 0.0, %v561
      %v563 = vpop.f32.mrf.mxu0
      %v564 = vadd.f32 0.0, %v563
      %565 = vdwg.mxu0
      %v566 = vadd.f32 %v516, %v557
      %v567 = vadd.f32 %v517, %v559
      %v568 = vadd.f32 %v518, %v562
      %v569 = vadd.f32 %v519, %v564
      %570 = vst.msk [vmem:[#allocation2] sm:$0xff] %vm269, %v566
      %571 = vst.msk [vmem:[#allocation2 + $0x8] sm:$0xff] %vm269, %v567
      %572 = vst.msk [vmem:[#allocation2 + $0x10] sm:$0xff] %vm269, %v568
      %573 = vst.msk [vmem:[#allocation2 + $0x18] sm:$0xff] %vm269, %v569
      %v574 = vld [vmem:[#allocation2] sm:$0xff]
      %v575 = vld [vmem:[#allocation2 + $0x8] sm:$0xff]
      %v576 = vld [vmem:[#allocation2 + $0x10] sm:$0xff]
      %v577 = vld [vmem:[#allocation2 + $0x18] sm:$0xff]
      %s578 = scalar_lea.vmem %s1, 80
      %v579 = vld [vmem:[%s578] sm:$0xf]
      %v580 = vld [vmem:[%s578 + $0x4] sm:$0xf]
      %v581 = vld [vmem:[%s578 + $0x8] sm:$0xf]
      %v582 = vld [vmem:[%s578 + $0xc] sm:$0xf]
      %v587 = vunpack.c.l.b16 %v579
      %v588 = vunpack.c.l.b16 %v580
      %v589 = vunpack.c.l.b16 %v581
      %v590 = vunpack.c.l.b16 %v582
      %v591 = vpack.c.b16 %v588, %v587
      %v592 = vpack.c.b16 %v590, %v589
      %593 = vrot.lane.b32.xlu0 %v304, 116
      %v594 = vpop.permute.xlu0 %593
      %595 = vrot.lane.b32.xlu0 %v305, 116
      %v596 = vpop.permute.xlu0 %595
      %v600 = vsel %vm308, %v591, 0
      %v603 = vsel %vm308, %v592, 0
      %605 = vmatpush.bf16.msra.mxu0 0
      %606 = vmatpush.bf16.msra.mxu0 0
      %607 = vmatpush.bf16.msra.mxu0 0
      %608 = vmatpush.bf16.msra.mxu0 0
      %609 = vmatpush.bf16.msra.mxu0 0
      %610 = vmatpush.bf16.msra.mxu0 0
      %611 = vmatpush.bf16.msra.mxu0 %v596
      %612 = vmatpush.bf16.msra.mxu0 %v594
      %613 = vmatmul.bf16.gmra.mxu0 %v600
      %v614 = vpop.f32.mrf.mxu0
      %v615 = vadd.f32 0.0, %v614
      %v616 = vpop.f32.mrf.mxu0
      %v617 = vadd.f32 0.0, %v616
      %618 = vmatmul.bf16.gmra.mxu0 %v603
      %v619 = vpop.f32.mrf.mxu0
      %v620 = vadd.f32 0.0, %v619
      %v621 = vpop.f32.mrf.mxu0
      %v622 = vadd.f32 0.0, %v621
      %623 = vdwg.mxu0
      %v624 = vadd.f32 %v574, %v615
      %v625 = vadd.f32 %v575, %v617
      %v626 = vadd.f32 %v576, %v620
      %v627 = vadd.f32 %v577, %v622
      %628 = vst.msk [vmem:[#allocation2] sm:$0xff] %vm269, %v624
      %629 = vst.msk [vmem:[#allocation2 + $0x8] sm:$0xff] %vm269, %v625
      %630 = vst.msk [vmem:[#allocation2 + $0x10] sm:$0xff] %vm269, %v626
      %631 = vst.msk [vmem:[#allocation2 + $0x18] sm:$0xff] %vm269, %v627
      %v632 = vld [vmem:[#allocation2] sm:$0xff]
      %v633 = vld [vmem:[#allocation2 + $0x8] sm:$0xff]
      %v634 = vld [vmem:[#allocation2 + $0x10] sm:$0xff]
      %v635 = vld [vmem:[#allocation2 + $0x18] sm:$0xff]
      %s636 = scalar_lea.vmem %s1, 96
      %v637 = vld [vmem:[%s636] sm:$0xf]
      %v638 = vld [vmem:[%s636 + $0x4] sm:$0xf]
      %v639 = vld [vmem:[%s636 + $0x8] sm:$0xf]
      %v640 = vld [vmem:[%s636 + $0xc] sm:$0xf]
      %v645 = vunpack.c.l.b16 %v637
      %v646 = vunpack.c.l.b16 %v638
      %v647 = vunpack.c.l.b16 %v639
      %v648 = vunpack.c.l.b16 %v640
      %v649 = vpack.c.b16 %v646, %v645
      %v650 = vpack.c.b16 %v648, %v647
      %651 = vrot.lane.b32.xlu0 %v304, 108
      %v652 = vpop.permute.xlu0 %651
      %653 = vrot.lane.b32.xlu0 %v305, 108
      %v654 = vpop.permute.xlu0 %653
      %v658 = vsel %vm308, %v649, 0
      %v661 = vsel %vm308, %v650, 0
      %663 = vmatpush.bf16.msra.mxu0 0
      %664 = vmatpush.bf16.msra.mxu0 0
      %665 = vmatpush.bf16.msra.mxu0 0
      %666 = vmatpush.bf16.msra.mxu0 0
      %667 = vmatpush.bf16.msra.mxu0 0
      %668 = vmatpush.bf16.msra.mxu0 0
      %669 = vmatpush.bf16.msra.mxu0 %v654
      %670 = vmatpush.bf16.msra.mxu0 %v652
      %671 = vmatmul.bf16.gmra.mxu0 %v658
      %v672 = vpop.f32.mrf.mxu0
      %v673 = vadd.f32 0.0, %v672
      %v674 = vpop.f32.mrf.mxu0
      %v675 = vadd.f32 0.0, %v674
      %676 = vmatmul.bf16.gmra.mxu0 %v661
      %v677 = vpop.f32.mrf.mxu0
      %v678 = vadd.f32 0.0, %v677
      %v679 = vpop.f32.mrf.mxu0
      %v680 = vadd.f32 0.0, %v679
      %681 = vdwg.mxu0
      %v682 = vadd.f32 %v632, %v673
      %v683 = vadd.f32 %v633, %v675
      %v684 = vadd.f32 %v634, %v678
      %v685 = vadd.f32 %v635, %v680
      %686 = vst.msk [vmem:[#allocation2] sm:$0xff] %vm269, %v682
      %687 = vst.msk [vmem:[#allocation2 + $0x8] sm:$0xff] %vm269, %v683
      %688 = vst.msk [vmem:[#allocation2 + $0x10] sm:$0xff] %vm269, %v684
      %689 = vst.msk [vmem:[#allocation2 + $0x18] sm:$0xff] %vm269, %v685
      %v690 = vld [vmem:[#allocation2] sm:$0xff]
      %v691 = vld [vmem:[#allocation2 + $0x8] sm:$0xff]
      %v692 = vld [vmem:[#allocation2 + $0x10] sm:$0xff]
      %v693 = vld [vmem:[#allocation2 + $0x18] sm:$0xff]
      %s694 = scalar_lea.vmem %s1, 112
      %v695 = vld [vmem:[%s694] sm:$0xf]
      %v696 = vld [vmem:[%s694 + $0x4] sm:$0xf]
      %v697 = vld [vmem:[%s694 + $0x8] sm:$0xf]
      %v698 = vld [vmem:[%s694 + $0xc] sm:$0xf]
      %v703 = vunpack.c.l.b16 %v695
      %v704 = vunpack.c.l.b16 %v696
      %v705 = vunpack.c.l.b16 %v697
      %v706 = vunpack.c.l.b16 %v698
      %v707 = vpack.c.b16 %v704, %v703
      %v708 = vpack.c.b16 %v706, %v705
      %709 = vrot.lane.b32.xlu0 %v304, 107
      %v710 = vpop.permute.xlu0 %709
      %711 = vrot.lane.b32.xlu0 %v305, 107
      %v712 = vpop.permute.xlu0 %711
      %v716 = vsel %vm308, %v707, 0
      %v719 = vsel %vm308, %v708, 0
      %721 = vmatpush.bf16.msra.mxu0 0
      %722 = vmatpush.bf16.msra.mxu0 0
      %723 = vmatpush.bf16.msra.mxu0 0
      %724 = vmatpush.bf16.msra.mxu0 0
      %725 = vmatpush.bf16.msra.mxu0 0
      %726 = vmatpush.bf16.msra.mxu0 0
      %727 = vmatpush.bf16.msra.mxu0 %v712
      %728 = vmatpush.bf16.msra.mxu0 %v710
      %729 = vmatmul.bf16.gmra.mxu0 %v716
      %v730 = vpop.f32.mrf.mxu0
      %v731 = vadd.f32 0.0, %v730
      %v732 = vpop.f32.mrf.mxu0
      %v733 = vadd.f32 0.0, %v732
      %734 = vmatmul.bf16.gmra.mxu0 %v719
      %v735 = vpop.f32.mrf.mxu0
      %v736 = vadd.f32 0.0, %v735
      %v737 = vpop.f32.mrf.mxu0
      %v738 = vadd.f32 0.0, %v737
      %739 = vdwg.mxu0
      %v740 = vadd.f32 %v690, %v731
      %v741 = vadd.f32 %v691, %v733
      %v742 = vadd.f32 %v692, %v736
      %v743 = vadd.f32 %v693, %v738
      %744 = vst.msk [vmem:[#allocation2] sm:$0xff] %vm269, %v740
      %745 = vst.msk [vmem:[#allocation2 + $0x8] sm:$0xff] %vm269, %v741
      %746 = vst.msk [vmem:[#allocation2 + $0x10] sm:$0xff] %vm269, %v742
      %747 = vst.msk [vmem:[#allocation2 + $0x18] sm:$0xff] %vm269, %v743
      %v748 = vld [vmem:[#allocation2] sm:$0xff]
      %v749 = vld [vmem:[#allocation2 + $0x8] sm:$0xff]
      %v750 = vld [vmem:[#allocation2 + $0x10] sm:$0xff]
      %v751 = vld [vmem:[#allocation2 + $0x18] sm:$0xff]
      %s752 = scalar_lea.vmem %s1, 128
      %v753 = vld [vmem:[%s752] sm:$0xf]
      %v754 = vld [vmem:[%s752 + $0x4] sm:$0xf]
      %v755 = vld [vmem:[%s752 + $0x8] sm:$0xf]
      %v756 = vld [vmem:[%s752 + $0xc] sm:$0xf]
      %v761 = vunpack.c.l.b16 %v753
      %v762 = vunpack.c.l.b16 %v754
      %v763 = vunpack.c.l.b16 %v755
      %v764 = vunpack.c.l.b16 %v756
      %v765 = vpack.c.b16 %v762, %v761
      %v766 = vpack.c.b16 %v764, %v763
      %767 = vrot.lane.b32.xlu0 %v304, 106
      %v768 = vpop.permute.xlu0 %767
      %769 = vrot.lane.b32.xlu0 %v305, 106
      %v770 = vpop.permute.xlu0 %769
      %v774 = vsel %vm308, %v765, 0
      %v777 = vsel %vm308, %v766, 0
      %779 = vmatpush.bf16.msra.mxu0 0
      %780 = vmatpush.bf16.msra.mxu0 0
      %781 = vmatpush.bf16.msra.mxu0 0
      %782 = vmatpush.bf16.msra.mxu0 0
      %783 = vmatpush.bf16.msra.mxu0 0
      %784 = vmatpush.bf16.msra.mxu0 0
      %785 = vmatpush.bf16.msra.mxu0 %v770
      %786 = vmatpush.bf16.msra.mxu0 %v768
      %787 = vmatmul.bf16.gmra.mxu0 %v774
      %v788 = vpop.f32.mrf.mxu0
      %v789 = vadd.f32 0.0, %v788
      %v790 = vpop.f32.mrf.mxu0
      %v791 = vadd.f32 0.0, %v790
      %792 = vmatmul.bf16.gmra.mxu0 %v777
      %v793 = vpop.f32.mrf.mxu0
      %v794 = vadd.f32 0.0, %v793
      %v795 = vpop.f32.mrf.mxu0
      %v796 = vadd.f32 0.0, %v795
      %797 = vdwg.mxu0
      %v798 = vadd.f32 %v748, %v789
      %v799 = vadd.f32 %v749, %v791
      %v800 = vadd.f32 %v750, %v794
      %v801 = vadd.f32 %v751, %v796
      %802 = vst.msk [vmem:[#allocation2] sm:$0xff] %vm269, %v798
      %803 = vst.msk [vmem:[#allocation2 + $0x8] sm:$0xff] %vm269, %v799
      %804 = vst.msk [vmem:[#allocation2 + $0x10] sm:$0xff] %vm269, %v800
      %805 = vst.msk [vmem:[#allocation2 + $0x18] sm:$0xff] %vm269, %v801
      %v806 = vld [vmem:[#allocation2] sm:$0xff]
      %v807 = vld [vmem:[#allocation2 + $0x8] sm:$0xff]
      %v808 = vld [vmem:[#allocation2 + $0x10] sm:$0xff]
      %v809 = vld [vmem:[#allocation2 + $0x18] sm:$0xff]
      %vm810 = vcmp.gt.f32.partialorder %v806, 0.5
      %vm811 = vcmp.gt.f32.partialorder %v807, 0.5
      %vm812 = vcmp.gt.f32.partialorder %v808, 0.5
      %vm813 = vcmp.gt.f32.partialorder %v809, 0.5
      %v814 = vsel %vm810, 1, 0
      %v815 = vsel %vm811, 1, 0
      %v816 = vsel %vm812, 1, 0
      %v817 = vsel %vm813, 1, 0
      %v818 = vcvt.s32.f32 %v814
      %v819 = vcvt.s32.f32 %v815
      %v820 = vcvt.s32.f32 %v816
      %v821 = vcvt.s32.f32 %v817
      %822 = vst.msk [vmem:[#allocation3] sm:$0xff] %vm269, %v818
      %823 = vst.msk [vmem:[#allocation3 + $0x8] sm:$0xff] %vm269, %v819
      %824 = vst.msk [vmem:[#allocation3 + $0x10] sm:$0xff] %vm269, %v820
      %825 = vst.msk [vmem:[#allocation3 + $0x18] sm:$0xff] %vm269, %v821
      %v826 = vpack.c.bf16 %v818, %v818
      %v827 = vpack.c.bf16 %v819, %v819
      %v828 = vpack.c.bf16 %v820, %v820
      %v829 = vpack.c.bf16 %v821, %v821
      %vm830 = vcmask 814080
      %831 = vst.msk [vmem:[%s206] sm:$0xf] %vm830, %v826
      %832 = vst.msk [vmem:[%s206 + $0x4] sm:$0xf] %vm830, %v827
      %833 = vst.msk [vmem:[%s206 + $0x8] sm:$0xf] %vm830, %v828
      %834 = vst.msk [vmem:[%s206 + $0xc] sm:$0xf] %vm830, %v829
      %p835 = scmp.lt.s32.totalorder %s19, 3
      %s836 = scalar_select %p835, %s19, 3
      %p837 = scmp.lt.s32.totalorder %s18, 1
      %s838 = scalar_select %p837, %s18, 1
      %s839 = smul.addr %s838, 4
      %s840 = smul.addr %s836, 8
      %s841 = sadd.s32 %s839, %s840
      %s842 = smul.addr %s841, 4
      %s843 = scalar_lea.vmem %s3, %s842
      // Predicated region
      $region37: #{scnn_forward.6} parent=31 // pred_check
        %p844 = pneg %p116
      $region38: #{scnn_forward.6} parent=31 // pred_check_branch
        %846 = sbr.rel (%p844) target = $region40
      $region39: #{scnn_forward.6} parent=31 // pred_region
        _
      $region40: #{scnn_forward.6} parent=31 // pred_fallthru
        _
    $region32: #{scnn_forward.6} parent=5 // pred_fallthru
      _
    %p847 = scmp.le.s32.totalorder 2, %s9
    // Predicated region
    $region41: #{scnn_forward.6} parent=5 // pred_check
      %p848 = pneg %p847
    $region42: #{scnn_forward.6} parent=5 // pred_check_branch
      %850 = sbr.rel (%p848) target = $region44
    $region43: #{scnn_forward.6} parent=5 // pred_region
      %s851 = ssub.s32 %s9, 2
      // Predicated region
      $region45: #{scnn_forward.6} parent=43 // pred_check
        %p852 = pneg %p122
      $region46: #{scnn_forward.6} parent=43 // pred_check_branch
        %854 = sbr.rel (%p852) target = $region48
      $region47: #{scnn_forward.6} parent=43 // pred_region
        %p855 = scmp.lt.s32.totalorder %s21, 3
        %s856 = scalar_select %p855, %s21, 3
        %p857 = scmp.lt.s32.totalorder %s20, 1
        %s858 = scalar_select %p857, %s20, 1
        %s859 = smul.addr %s858, 4
        %s860 = smul.addr %s856, 8
        %s861 = sadd.s32 %s859, %s860
        %s862 = smul.addr %s861, 4
        %s863 = scalar_lea.vmem %s3, %s862
      $region48: #{scnn_forward.6} parent=43 // pred_fallthru
        _
    $region44: #{scnn_forward.6} parent=5 // pred_fallthru
      _
  $region6: #{scnn_forward.6} parent=0 // loop_footer
    %s13 = sadd.s32 1, %s9
  $region7: #{scnn_forward.6} parent=0 // loop_footer_branch
    %8 = sbr.rel target = $region3
  $region8: #{scnn_forward.6} parent=0 // loop_exit
    _

// kernel: scnn_forward.7
$region0: #{scnn_forward.7}
  #allocation0 [shape = 'u32[]', space=smem, size = 0x4, offset = 0x4, fixed_abs, tag = 'smem constant byte address 0x4 - core index']
  #allocation1 [shape = 'u32[72,128]{1,0:T(1,128)}', space=vmem, size = 0x9000, scoped, tag = 'internal scratch']
  #allocation2 [shape = 'f32[2,128]{1,0:T(2,128)}', space=vmem, size = 0x400, scoped, tag = 'scratch operand']
  #allocation3 [shape = 'f32[2,128]{1,0:T(2,128)}', space=vmem, size = 0x400, scoped, tag = 'scratch operand']
  #allocation4 [shape = 'f32[2,10]{1,0:T(2,128)}', space=vmem, size = 0x400, scoped, tag = 'scratch operand']
  #allocation5 [shape = 'f32[2,10]{1,0:T(2,128)}', space=vmem, size = 0x400, scoped, tag = 'scratch operand']
  %s0 = inlined_call_operand.vmem [shape: bf16[4,2,512], index: 0, kind: input, shape index: {}]
  %s1 = inlined_call_operand.vmem [shape: bf16[512,128], index: 1, kind: input, shape index: {}]
  %s2 = inlined_call_operand.vmem [shape: f32[1,128], index: 2, kind: input, shape index: {}]
  %s3 = inlined_call_operand.vmem [shape: bf16[128,10], index: 3, kind: input, shape index: {}]
  %s4 = inlined_call_operand.vmem [shape: f32[1,10], index: 4, kind: input, shape index: {}]
  %s5 = inlined_call_operand.hbm [shape: f32[2,10], index: 5, kind: output, shape index: {}]
  %s6 = sld [smem:[#allocation0]]
  $region61: #{scnn_forward.7} parent=0
    _
  %s8 = ssub.s32 1, %s6
  %s9 = scalar_select 0, %s8, %s6
  $region1: #{scnn_forward.7} parent=0
    #allocation6 [shape = 'u8[1024]{0}', space=vmem, size = 0x400, scoped, tag = 'output window, operand 0, single buffered']
    #allocation7 [shape = 's32[2]{0}', space=sflag, size = 0x8, scoped, tag = 'scoped memory for scnn_forward.7']
    %10 = vsyncpa [#allocation7], 0
    loop: start=0, step=1, limit=6
    $region2: #{scnn_forward.7} parent=1 // loop_pre_header
      _
    $region3: #{scnn_forward.7} parent=1 // loop_header
      %s12 = sphi 0, %s16
      %p13 = scmp.ge.s32.totalorder %s12, 6
      %s22 = sphi 0, %s24
      %s25 = sphi 0, %s22
      %s26 = sphi 0, %s25
      %s42 = sphi 0, %s26
      %s46 = sphi 0, %s46
      %s48 = sphi 0, %s46
      %s49 = sphi 0, %s48
      %s63 = sphi 0, %s49
      %s67 = sphi 0, %s67
      %s69 = sphi 0, %s67
      %s70 = sphi 0, %s69
      %s84 = sphi 0, %s70
      %s88 = sphi 0, %s88
      %s90 = sphi 0, %s88
      %s91 = sphi 0, %s90
      %s105 = sphi 0, %s91
      %s109 = sphi 0, %s109
      %s111 = sphi 0, %s109
      %s112 = sphi 0, %s111
      %s126 = sphi 0, %s112
      %s130 = sphi 0, %s130
      %s132 = sphi 0, %s130
      %s133 = sphi 0, %s132
      %s147 = sphi 0, %s133
    $region4: #{scnn_forward.7} parent=1 // loop_header_branch
      %15 = sbr.rel (%p13) target = $region8
    $region5: #{scnn_forward.7} parent=1 // loop_body
      %s17 = ssub.s32 %s12, 1
      %s18 = ssub.s32 %s12, 2
      %s19 = sadd.s32 %s12, 1
      %s20 = ssub.s32 %s12, %s19
      %p21 = scmp.eq.s32.totalorder %s20, 0
      %s23 = sadd.s32 %s22, 1
      %s24 = scalar_select %p21, %s22, %s23
      %p27 = pneg %p21
      %p28 = scmp.eq.s32.totalorder %s12, 3
      %p29 = por %p27, %p28
      %p30 = scmp.ne.s32.totalorder %s22, %s25
      %p31 = scmp.eq.s32.totalorder %s12, 0
      %p32 = por %p30, %p31
      %p33 = scmp.ne.s32.totalorder %s22, %s25
      %p34 = scmp.eq.s32.totalorder %s17, 3
      %p35 = por %p33, %p34
      %p36 = scmp.ne.s32.totalorder %s25, %s26
      %p37 = scmp.eq.s32.totalorder %s17, 0
      %p38 = por %p36, %p37
      %p39 = scmp.ne.s32.totalorder %s25, %s26
      %p40 = scmp.eq.s32.totalorder %s18, 3
      %p41 = por %p39, %p40
      %p43 = scmp.ne.s32.totalorder %s26, %s42
      %p44 = scmp.eq.s32.totalorder %s18, 0
      %p45 = por %p43, %p44
      %s47 = sadd.s32 %s46, 1
      %p50 = scmp.eq.s32.totalorder %s12, 3
      %p51 = scmp.ne.s32.totalorder %s46, %s48
      %p52 = scmp.eq.s32.totalorder %s12, 0
      %p53 = por %p51, %p52
      %p54 = scmp.ne.s32.totalorder %s46, %s48
      %p55 = scmp.eq.s32.totalorder %s17, 3
      %p56 = por %p54, %p55
      %p57 = scmp.ne.s32.totalorder %s48, %s49
      %p58 = scmp.eq.s32.totalorder %s17, 0
      %p59 = por %p57, %p58
      %p60 = scmp.ne.s32.totalorder %s48, %s49
      %p61 = scmp.eq.s32.totalorder %s18, 3
      %p62 = por %p60, %p61
      %p64 = scmp.ne.s32.totalorder %s49, %s63
      %p65 = scmp.eq.s32.totalorder %s18, 0
      %p66 = por %p64, %p65
      %s68 = sadd.s32 %s67, 1
      %p71 = scmp.eq.s32.totalorder %s12, 3
      %p72 = scmp.ne.s32.totalorder %s67, %s69
      %p73 = scmp.eq.s32.totalorder %s12, 0
      %p74 = por %p72, %p73
      %p75 = scmp.ne.s32.totalorder %s67, %s69
      %p76 = scmp.eq.s32.totalorder %s17, 3
      %p77 = por %p75, %p76
      %p78 = scmp.ne.s32.totalorder %s69, %s70
      %p79 = scmp.eq.s32.totalorder %s17, 0
      %p80 = por %p78, %p79
      %p81 = scmp.ne.s32.totalorder %s69, %s70
      %p82 = scmp.eq.s32.totalorder %s18, 3
      %p83 = por %p81, %p82
      %p85 = scmp.ne.s32.totalorder %s70, %s84
      %p86 = scmp.eq.s32.totalorder %s18, 0
      %p87 = por %p85, %p86
      %s89 = sadd.s32 %s88, 1
      %p92 = scmp.eq.s32.totalorder %s12, 3
      %p93 = scmp.ne.s32.totalorder %s88, %s90
      %p94 = scmp.eq.s32.totalorder %s12, 0
      %p95 = por %p93, %p94
      %p96 = scmp.ne.s32.totalorder %s88, %s90
      %p97 = scmp.eq.s32.totalorder %s17, 3
      %p98 = por %p96, %p97
      %p99 = scmp.ne.s32.totalorder %s90, %s91
      %p100 = scmp.eq.s32.totalorder %s17, 0
      %p101 = por %p99, %p100
      %p102 = scmp.ne.s32.totalorder %s90, %s91
      %p103 = scmp.eq.s32.totalorder %s18, 3
      %p104 = por %p102, %p103
      %p106 = scmp.ne.s32.totalorder %s91, %s105
      %p107 = scmp.eq.s32.totalorder %s18, 0
      %p108 = por %p106, %p107
      %s110 = sadd.s32 %s109, 1
      %p113 = scmp.eq.s32.totalorder %s12, 3
      %p114 = scmp.ne.s32.totalorder %s109, %s111
      %p115 = scmp.eq.s32.totalorder %s12, 0
      %p116 = por %p114, %p115
      %p117 = scmp.ne.s32.totalorder %s109, %s111
      %p118 = scmp.eq.s32.totalorder %s17, 3
      %p119 = por %p117, %p118
      %p120 = scmp.ne.s32.totalorder %s111, %s112
      %p121 = scmp.eq.s32.totalorder %s17, 0
      %p122 = por %p120, %p121
      %p123 = scmp.ne.s32.totalorder %s111, %s112
      %p124 = scmp.eq.s32.totalorder %s18, 3
      %p125 = por %p123, %p124
      %p127 = scmp.ne.s32.totalorder %s112, %s126
      %p128 = scmp.eq.s32.totalorder %s18, 0
      %p129 = por %p127, %p128
      %s131 = sadd.s32 %s130, 1
      %p134 = scmp.eq.s32.totalorder %s12, 3
      %p135 = scmp.ne.s32.totalorder %s130, %s132
      %p136 = scmp.eq.s32.totalorder %s12, 0
      %p137 = por %p135, %p136
      %p138 = scmp.ne.s32.totalorder %s130, %s132
      %p139 = scmp.eq.s32.totalorder %s17, 3
      %p140 = por %p138, %p139
      %p141 = scmp.ne.s32.totalorder %s132, %s133
      %p142 = scmp.eq.s32.totalorder %s17, 0
      %p143 = por %p141, %p142
      %p144 = scmp.ne.s32.totalorder %s132, %s133
      %p145 = scmp.eq.s32.totalorder %s18, 3
      %p146 = por %p144, %p145
      %p148 = scmp.ne.s32.totalorder %s133, %s147
      %p149 = scmp.eq.s32.totalorder %s18, 0
      %p150 = por %p148, %p149
      %p151 = scmp.le.s32.totalorder 1, %s12
      %p152 = scmp.lt.s32.totalorder %s12, 5
      %p153 = pnand %p151, %p152
      %p154 = pneg %p153
      // Predicated region
      $region9: #{scnn_forward.7} parent=5 // pred_check
        _
      $region10: #{scnn_forward.7} parent=5 // pred_check_branch
        %156 = sbr.rel (%p153) target = $region12
      $region11: #{scnn_forward.7} parent=5 // pred_region
        %s157 = ssub.s32 %s12, 1
        // Predicated region
        $region13: #{scnn_forward.7} parent=11 // pred_check
          %p158 = pneg %p59
        $region14: #{scnn_forward.7} parent=11 // pred_check_branch
          %160 = sbr.rel (%p158) target = $region16
        $region15: #{scnn_forward.7} parent=11 // pred_region
          _
        $region16: #{scnn_forward.7} parent=11 // pred_fallthru
          _
        // Predicated region
        $region17: #{scnn_forward.7} parent=11 // pred_check
          %p161 = pneg %p80
        $region18: #{scnn_forward.7} parent=11 // pred_check_branch
          %163 = sbr.rel (%p161) target = $region20
        $region19: #{scnn_forward.7} parent=11 // pred_region
          _
        $region20: #{scnn_forward.7} parent=11 // pred_fallthru
          _
        // Predicated region
        $region21: #{scnn_forward.7} parent=11 // pred_check
          %p164 = pneg %p101
        $region22: #{scnn_forward.7} parent=11 // pred_check_branch
          %166 = sbr.rel (%p164) target = $region24
        $region23: #{scnn_forward.7} parent=11 // pred_region
          _
        $region24: #{scnn_forward.7} parent=11 // pred_fallthru
          _
        // Predicated region
        $region25: #{scnn_forward.7} parent=11 // pred_check
          %p167 = pneg %p122
        $region26: #{scnn_forward.7} parent=11 // pred_check_branch
          %169 = sbr.rel (%p167) target = $region28
        $region27: #{scnn_forward.7} parent=11 // pred_region
          _
        $region28: #{scnn_forward.7} parent=11 // pred_fallthru
          _
      $region12: #{scnn_forward.7} parent=5 // pred_fallthru
        _
      %p170 = scmp.lt.s32.totalorder %s12, 4
      // Predicated region
      $region29: #{scnn_forward.7} parent=5 // pred_check
        %p171 = pneg %p170
      $region30: #{scnn_forward.7} parent=5 // pred_check_branch
        %173 = sbr.rel (%p171) target = $region32
      $region31: #{scnn_forward.7} parent=5 // pred_region
        // Predicated region
        $region33: #{scnn_forward.7} parent=31 // pred_check
          %p174 = pneg %p32
        $region34: #{scnn_forward.7} parent=31 // pred_check_branch
          %176 = sbr.rel (%p174) target = $region36
        $region35: #{scnn_forward.7} parent=31 // pred_region
          %p177 = scmp.lt.s32.totalorder %s12, 3
          %s178 = scalar_select %p177, %s12, 3
          %s179 = smul.addr %s178, 4
          %s180 = scalar_lea.vmem %s0, %s179
        $region36: #{scnn_forward.7} parent=31 // pred_fallthru
          _
      $region32: #{scnn_forward.7} parent=5 // pred_fallthru
        _
      %p181 = scmp.le.s32.totalorder 1, %s12
      %p182 = scmp.lt.s32.totalorder %s12, 5
      %p183 = pnand %p181, %p182
      %p184 = pneg %p183
      // Predicated region
      $region37: #{scnn_forward.7} parent=5 // pred_check
        _
      $region38: #{scnn_forward.7} parent=5 // pred_check_branch
        %186 = sbr.rel (%p183) target = $region40
      $region39: #{scnn_forward.7} parent=5 // pred_region
        %s187 = ssub.s32 %s12, 1
        %p188 = scmp.lt.s32.totalorder %s17, 3
        %s189 = scalar_select %p188, %s17, 3
        %s190 = smul.addr %s189, 4
        %s191 = scalar_lea.vmem %s0, %s190
        %p192 = pneg %p38
        %p193 = pneg %p35
        %p194 = pneg %p59
        %p195 = pneg %p56
        %p196 = pneg %p80
        %p197 = pneg %p77
        %p198 = pneg %p101
        %p199 = pneg %p98
        %p200 = pneg %p122
        %p201 = pneg %p119
        %p202 = pneg %p143
        %p203 = pneg %p140
        %p204 = scmp.lt.s32.totalorder %s17, 3
        %s205 = scalar_select %p204, %s17, 3
        %s206 = smul.addr %s205, 4
        %s207 = scalar_lea.vmem %s0, %s206
        %p208 = scmp.eq.s32.totalorder %s17, 0
        // Predicated region
        $region41: #{scnn_forward.7} parent=39 // pred_check
          %p209 = pneg %p208
        $region42: #{scnn_forward.7} parent=39 // pred_check_branch
          %211 = sbr.rel (%p209) target = $region44
        $region43: #{scnn_forward.7} parent=39 // pred_region
          %212 = vst [vmem:[#allocation2] sm:$0x3] 0.0
          %213 = vst [vmem:[#allocation3] sm:$0x3] 0.0
          %vm214 = vcmask 74752
          %215 = vst.msk [vmem:[#allocation4] sm:$0x3] %vm214, 0.0
          %216 = vst.msk [vmem:[#allocation5] sm:$0x3] %vm214, 0.0
          %217 = vst.msk [vmem:[#allocation6] sm:$0x3] %vm214, 0.0
        $region44: #{scnn_forward.7} parent=39 // pred_fallthru
          _
        %v218 = vld [vmem:[%s207] sm:$0xf]
        %v219 = vld [vmem:[%s1] sm:$0xf]
        %v220 = vld [vmem:[%s1 + $0x4] sm:$0xf]
        %v221 = vld [vmem:[%s1 + $0x8] sm:$0xf]
        %v222 = vld [vmem:[%s1 + $0xc] sm:$0xf]
        %v223 = vld [vmem:[%s1 + $0x10] sm:$0xf]
        %v224 = vld [vmem:[%s1 + $0x14] sm:$0xf]
        %v225 = vld [vmem:[%s1 + $0x18] sm:$0xf]
        %v226 = vld [vmem:[%s1 + $0x1c] sm:$0xf]
        %v227 = vld [vmem:[%s1 + $0x20] sm:$0xf]
        %v228 = vld [vmem:[%s1 + $0x24] sm:$0xf]
        %v229 = vld [vmem:[%s1 + $0x28] sm:$0xf]
        %v230 = vld [vmem:[%s1 + $0x2c] sm:$0xf]
        %v231 = vld [vmem:[%s1 + $0x30] sm:$0xf]
        %v232 = vld [vmem:[%s1 + $0x34] sm:$0xf]
        %v233 = vld [vmem:[%s1 + $0x38] sm:$0xf]
        %v234 = vld [vmem:[%s1 + $0x3c] sm:$0xf]
        %v235 = vld [vmem:[%s1 + $0x40] sm:$0xf]
        %v236 = vld [vmem:[%s1 + $0x44] sm:$0xf]
        %v237 = vld [vmem:[%s1 + $0x48] sm:$0xf]
        %v238 = vld [vmem:[%s1 + $0x4c] sm:$0xf]
        %v239 = vld [vmem:[%s1 + $0x50] sm:$0xf]
        %v240 = vld [vmem:[%s1 + $0x54] sm:$0xf]
        %v241 = vld [vmem:[%s1 + $0x58] sm:$0xf]
        %v242 = vld [vmem:[%s1 + $0x5c] sm:$0xf]
        %v243 = vld [vmem:[%s1 + $0x60] sm:$0xf]
        %v244 = vld [vmem:[%s1 + $0x64] sm:$0xf]
        %v245 = vld [vmem:[%s1 + $0x68] sm:$0xf]
        %v246 = vld [vmem:[%s1 + $0x6c] sm:$0xf]
        %v247 = vld [vmem:[%s1 + $0x70] sm:$0xf]
        %v248 = vld [vmem:[%s1 + $0x74] sm:$0xf]
        %v249 = vld [vmem:[%s1 + $0x78] sm:$0xf]
        %v250 = vld [vmem:[%s1 + $0x7c] sm:$0xf]
        %v251 = vld [vmem:[%s1 + $0x80] sm:$0xf]
        %v252 = vld [vmem:[%s1 + $0x84] sm:$0xf]
        %v253 = vld [vmem:[%s1 + $0x88] sm:$0xf]
        %v254 = vld [vmem:[%s1 + $0x8c] sm:$0xf]
        %v255 = vld [vmem:[%s1 + $0x90] sm:$0xf]
        %v256 = vld [vmem:[%s1 + $0x94] sm:$0xf]
        %v257 = vld [vmem:[%s1 + $0x98] sm:$0xf]
        %v258 = vld [vmem:[%s1 + $0x9c] sm:$0xf]
        %v259 = vld [vmem:[%s1 + $0xa0] sm:$0xf]
        %v260 = vld [vmem:[%s1 + $0xa4] sm:$0xf]
        %v261 = vld [vmem:[%s1 + $0xa8] sm:$0xf]
        %v262 = vld [vmem:[%s1 + $0xac] sm:$0xf]
        %v263 = vld [vmem:[%s1 + $0xb0] sm:$0xf]
        %v264 = vld [vmem:[%s1 + $0xb4] sm:$0xf]
        %v265 = vld [vmem:[%s1 + $0xb8] sm:$0xf]
        %v266 = vld [vmem:[%s1 + $0xbc] sm:$0xf]
        %v267 = vld [vmem:[%s1 + $0xc0] sm:$0xf]
        %v268 = vld [vmem:[%s1 + $0xc4] sm:$0xf]
        %v269 = vld [vmem:[%s1 + $0xc8] sm:$0xf]
        %v270 = vld [vmem:[%s1 + $0xcc] sm:$0xf]
        %v271 = vld [vmem:[%s1 + $0xd0] sm:$0xf]
        %v272 = vld [vmem:[%s1 + $0xd4] sm:$0xf]
        %v273 = vld [vmem:[%s1 + $0xd8] sm:$0xf]
        %v274 = vld [vmem:[%s1 + $0xdc] sm:$0xf]
        %v275 = vld [vmem:[%s1 + $0xe0] sm:$0xf]
        %v276 = vld [vmem:[%s1 + $0xe4] sm:$0xf]
        %v277 = vld [vmem:[%s1 + $0xe8] sm:$0xf]
        %v278 = vld [vmem:[%s1 + $0xec] sm:$0xf]
        %v279 = vld [vmem:[%s1 + $0xf0] sm:$0xf]
        %v280 = vld [vmem:[%s1 + $0xf4] sm:$0xf]
        %v281 = vld [vmem:[%s1 + $0xf8] sm:$0xf]
        %v282 = vld [vmem:[%s1 + $0xfc] sm:$0xf]
        %v283 = vld [vmem:[%s2] sm:$0x1]
        %v285 = vperm.slane %v283, 0
        %288 = vst [vmem:[#allocation1] ss:$9 sm:$0xff] %v218
        %v289 = vld [vmem:[#allocation1] sm:$0xff]
        %v290 = vld [vmem:[#allocation1 + $0x9] sm:$0xff]
        %v291 = vld [vmem:[#allocation1 + $0x12] sm:$0xff]
        %v292 = vld [vmem:[#allocation1 + $0x1b] sm:$0xff]
        %v361 = vunpack.c.l.b16 %v219
        %v362 = vunpack.c.l.b16 %v220
        %v363 = vunpack.c.l.b16 %v221
        %v364 = vunpack.c.l.b16 %v222
        %v365 = vunpack.c.l.b16 %v223
        %v366 = vunpack.c.l.b16 %v224
        %v367 = vunpack.c.l.b16 %v225
        %v368 = vunpack.c.l.b16 %v226
        %v369 = vunpack.c.l.b16 %v227
        %v370 = vunpack.c.l.b16 %v228
        %v371 = vunpack.c.l.b16 %v229
        %v372 = vunpack.c.l.b16 %v230
        %v373 = vunpack.c.l.b16 %v231
        %v374 = vunpack.c.l.b16 %v232
        %v375 = vunpack.c.l.b16 %v233
        %v376 = vunpack.c.l.b16 %v234
        %v377 = vunpack.c.l.b16 %v235
        %v378 = vunpack.c.l.b16 %v236
        %v379 = vunpack.c.l.b16 %v237
        %v380 = vunpack.c.l.b16 %v238
        %v381 = vunpack.c.l.b16 %v239
        %v382 = vunpack.c.l.b16 %v240
        %v383 = vunpack.c.l.b16 %v241
        %v384 = vunpack.c.l.b16 %v242
        %v385 = vunpack.c.l.b16 %v243
        %v386 = vunpack.c.l.b16 %v244
        %v387 = vunpack.c.l.b16 %v245
        %v388 = vunpack.c.l.b16 %v246
        %v389 = vunpack.c.l.b16 %v247
        %v390 = vunpack.c.l.b16 %v248
        %v391 = vunpack.c.l.b16 %v249
        %v392 = vunpack.c.l.b16 %v250
        %v393 = vunpack.c.l.b16 %v251
        %v394 = vunpack.c.l.b16 %v252
        %v395 = vunpack.c.l.b16 %v253
        %v396 = vunpack.c.l.b16 %v254
        %v397 = vunpack.c.l.b16 %v255
        %v398 = vunpack.c.l.b16 %v256
        %v399 = vunpack.c.l.b16 %v257
        %v400 = vunpack.c.l.b16 %v258
        %v401 = vunpack.c.l.b16 %v259
        %v402 = vunpack.c.l.b16 %v260
        %v403 = vunpack.c.l.b16 %v261
        %v404 = vunpack.c.l.b16 %v262
        %v405 = vunpack.c.l.b16 %v263
        %v406 = vunpack.c.l.b16 %v264
        %v407 = vunpack.c.l.b16 %v265
        %v408 = vunpack.c.l.b16 %v266
        %v409 = vunpack.c.l.b16 %v267
        %v410 = vunpack.c.l.b16 %v268
        %v411 = vunpack.c.l.b16 %v269
        %v412 = vunpack.c.l.b16 %v270
        %v413 = vunpack.c.l.b16 %v271
        %v414 = vunpack.c.l.b16 %v272
        %v415 = vunpack.c.l.b16 %v273
        %v416 = vunpack.c.l.b16 %v274
        %v417 = vunpack.c.l.b16 %v275
        %v418 = vunpack.c.l.b16 %v276
        %v419 = vunpack.c.l.b16 %v277
        %v420 = vunpack.c.l.b16 %v278
        %v421 = vunpack.c.l.b16 %v279
        %v422 = vunpack.c.l.b16 %v280
        %v423 = vunpack.c.l.b16 %v281
        %v424 = vunpack.c.l.b16 %v282
        %v425 = vpack.c.b16 %v362, %v361
        %v426 = vpack.c.b16 %v364, %v363
        %v427 = vpack.c.b16 %v366, %v365
        %v428 = vpack.c.b16 %v368, %v367
        %v429 = vpack.c.b16 %v370, %v369
        %v430 = vpack.c.b16 %v372, %v371
        %v431 = vpack.c.b16 %v374, %v373
        %v432 = vpack.c.b16 %v376, %v375
        %v433 = vpack.c.b16 %v378, %v377
        %v434 = vpack.c.b16 %v380, %v379
        %v435 = vpack.c.b16 %v382, %v381
        %v436 = vpack.c.b16 %v384, %v383
        %v437 = vpack.c.b16 %v386, %v385
        %v438 = vpack.c.b16 %v388, %v387
        %v439 = vpack.c.b16 %v390, %v389
        %v440 = vpack.c.b16 %v392, %v391
        %v441 = vpack.c.b16 %v394, %v393
        %v442 = vpack.c.b16 %v396, %v395
        %v443 = vpack.c.b16 %v398, %v397
        %v444 = vpack.c.b16 %v400, %v399
        %v445 = vpack.c.b16 %v402, %v401
        %v446 = vpack.c.b16 %v404, %v403
        %v447 = vpack.c.b16 %v406, %v405
        %v448 = vpack.c.b16 %v408, %v407
        %v449 = vpack.c.b16 %v410, %v409
        %v450 = vpack.c.b16 %v412, %v411
        %v451 = vpack.c.b16 %v414, %v413
        %v452 = vpack.c.b16 %v416, %v415
        %v453 = vpack.c.b16 %v418, %v417
        %v454 = vpack.c.b16 %v420, %v419
        %v455 = vpack.c.b16 %v422, %v421
        %v456 = vpack.c.b16 %v424, %v423
        %489 = vmatpush.bf16.msra.mxu0 %v432
        %490 = vmatpush.bf16.msra.mxu0 %v431
        %491 = vmatpush.bf16.msra.mxu0 %v430
        %492 = vmatpush.bf16.msra.mxu0 %v429
        %493 = vmatpush.bf16.msra.mxu0 %v428
        %494 = vmatpush.bf16.msra.mxu0 %v427
        %495 = vmatpush.bf16.msra.mxu0 %v426
        %496 = vmatpush.bf16.msra.mxu0 %v425
        %497 = vmatmul.bf16.gmra.mxu0 %v289
        %v498 = vpop.f32.mrf.mxu0
        %v499 = vadd.f32 %v285, %v498
        %v500 = vpop.f32.mrf.mxu0
        %501 = vdwg.mxu0
        %502 = vmatpush.bf16.msra.mxu0 %v440
        %503 = vmatpush.bf16.msra.mxu0 %v439
        %504 = vmatpush.bf16.msra.mxu0 %v438
        %505 = vmatpush.bf16.msra.mxu0 %v437
        %506 = vmatpush.bf16.msra.mxu0 %v436
        %507 = vmatpush.bf16.msra.mxu0 %v435
        %508 = vmatpush.bf16.msra.mxu0 %v434
        %509 = vmatpush.bf16.msra.mxu0 %v433
        %510 = vmatmul.bf16.gmra.mxu0 %v290
        %v511 = vpop.f32.mrf.mxu0
        %v512 = vadd.f32 %v499, %v511
        %v513 = vpop.f32.mrf.mxu0
        %514 = vdwg.mxu0
        %515 = vmatpush.bf16.msra.mxu0 %v448
        %516 = vmatpush.bf16.msra.mxu0 %v447
        %517 = vmatpush.bf16.msra.mxu0 %v446
        %518 = vmatpush.bf16.msra.mxu0 %v445
        %519 = vmatpush.bf16.msra.mxu0 %v444
        %520 = vmatpush.bf16.msra.mxu0 %v443
        %521 = vmatpush.bf16.msra.mxu0 %v442
        %522 = vmatpush.bf16.msra.mxu0 %v441
        %523 = vmatmul.bf16.gmra.mxu0 %v291
        %v524 = vpop.f32.mrf.mxu0
        %v525 = vadd.f32 %v512, %v524
        %v526 = vpop.f32.mrf.mxu0
        %527 = vdwg.mxu0
        %528 = vmatpush.bf16.msra.mxu0 %v456
        %529 = vmatpush.bf16.msra.mxu0 %v455
        %530 = vmatpush.bf16.msra.mxu0 %v454
        %531 = vmatpush.bf16.msra.mxu0 %v453
        %532 = vmatpush.bf16.msra.mxu0 %v452
        %533 = vmatpush.bf16.msra.mxu0 %v451
        %534 = vmatpush.bf16.msra.mxu0 %v450
        %535 = vmatpush.bf16.msra.mxu0 %v449
        %536 = vmatmul.bf16.gmra.mxu0 %v292
        %v537 = vpop.f32.mrf.mxu0
        %v538 = vadd.f32 %v525, %v537
        %v539 = vpop.f32.mrf.mxu0
        %540 = vdwg.mxu0
        %v541 = vld [vmem:[#allocation2] sm:$0x3]
        %v542 = vmul.f32 %v541, 0.2
        %v543 = vld [vmem:[#allocation3] sm:$0x3]
        %v544 = vsub.f32 1.0, %v543
        %v545 = vmul.f32 %v542, %v544
        %v546 = vadd.f32 %v545, %v538
        %vm547 = vcmp.gt.f32.partialorder %v546, 0.5
        %v548 = vsel %vm547, 1, 0
        %v549 = vcvt.s32.f32 %v548
        %550 = vst [vmem:[#allocation2] sm:$0x3] %v546
        %551 = vst [vmem:[#allocation3] sm:$0x3] %v549
        %v552 = vpack.c.bf16 %v549, %v549
        %v553 = vld [vmem:[%s3] sm:$0xf]
        %v554 = vld [vmem:[%s3 + $0x4] sm:$0xf]
        %v555 = vld [vmem:[%s3 + $0x8] sm:$0xf]
        %v556 = vld [vmem:[%s3 + $0xc] sm:$0xf]
        %v557 = vld [vmem:[%s3 + $0x10] sm:$0xf]
        %v558 = vld [vmem:[%s3 + $0x14] sm:$0xf]
        %v559 = vld [vmem:[%s3 + $0x18] sm:$0xf]
        %v560 = vld [vmem:[%s3 + $0x1c] sm:$0xf]
        %v561 = vld [vmem:[%s3 + $0x20] sm:$0xf]
        %v562 = vld [vmem:[%s3 + $0x24] sm:$0xf]
        %v563 = vld [vmem:[%s3 + $0x28] sm:$0xf]
        %v564 = vld [vmem:[%s3 + $0x2c] sm:$0xf]
        %v565 = vld [vmem:[%s3 + $0x30] sm:$0xf]
        %v566 = vld [vmem:[%s3 + $0x34] sm:$0xf]
        %v567 = vld [vmem:[%s3 + $0x38] sm:$0xf]
        %v568 = vld [vmem:[%s3 + $0x3c] sm:$0xf]
        %v569 = vld [vmem:[%s4] sm:$0x1]
        %v571 = vperm.slane %v569, 0
        %v589 = vunpack.c.l.b16 %v553
        %v590 = vunpack.c.l.b16 %v554
        %v591 = vunpack.c.l.b16 %v555
        %v592 = vunpack.c.l.b16 %v556
        %v593 = vunpack.c.l.b16 %v557
        %v594 = vunpack.c.l.b16 %v558
        %v595 = vunpack.c.l.b16 %v559
        %v596 = vunpack.c.l.b16 %v560
        %v597 = vunpack.c.l.b16 %v561
        %v598 = vunpack.c.l.b16 %v562
        %v599 = vunpack.c.l.b16 %v563
        %v600 = vunpack.c.l.b16 %v564
        %v601 = vunpack.c.l.b16 %v565
        %v602 = vunpack.c.l.b16 %v566
        %v603 = vunpack.c.l.b16 %v567
        %v604 = vunpack.c.l.b16 %v568
        %v605 = vpack.c.b16 %v590, %v589
        %v606 = vpack.c.b16 %v592, %v591
        %v607 = vpack.c.b16 %v594, %v593
        %v608 = vpack.c.b16 %v596, %v595
        %v609 = vpack.c.b16 %v598, %v597
        %v610 = vpack.c.b16 %v600, %v599
        %v611 = vpack.c.b16 %v602, %v601
        %v612 = vpack.c.b16 %v604, %v603
        %621 = vmatpush.bf16.msra.mxu0 %v612
        %622 = vmatpush.bf16.msra.mxu0 %v611
        %623 = vmatpush.bf16.msra.mxu0 %v610
        %624 = vmatpush.bf16.msra.mxu0 %v609
        %625 = vmatpush.bf16.msra.mxu0 %v608
        %626 = vmatpush.bf16.msra.mxu0 %v607
        %627 = vmatpush.bf16.msra.mxu0 %v606
        %628 = vmatpush.bf16.msra.mxu0 %v605
        %629 = vmatmul.bf16.gmra.mxu0 %v552
        %v630 = vpop.f32.mrf.mxu0
        %v631 = vadd.f32 %v571, %v630
        %v632 = vpop.f32.mrf.mxu0
        %633 = vdwg.mxu0
        %v634 = vld [vmem:[#allocation4] sm:$0x3]
        %v635 = vmul.f32 %v634, 0.2
        %v636 = vld [vmem:[#allocation5] sm:$0x3]
        %v637 = vsub.f32 1.0, %v636
        %v638 = vmul.f32 %v635, %v637
        %v639 = vadd.f32 %v638, %v631
        %vm640 = vcmp.gt.f32.partialorder %v639, 0.5
        %v641 = vsel %vm640, 1, 0
        %v642 = vcvt.s32.f32 %v641
        %vm643 = vcmask 74752
        %644 = vst.msk [vmem:[#allocation4] sm:$0x3] %vm643, %v639
        %645 = vst.msk [vmem:[#allocation5] sm:$0x3] %vm643, %v642
        %v646 = vld [vmem:[#allocation6] sm:$0x3]
        %v647 = vadd.f32 %v646, %v642
        %648 = vst.msk [vmem:[#allocation6] sm:$0x3] %vm643, %v647
        %p649 = scmp.eq.s32.totalorder %s17, 3
        // Predicated region
        $region45: #{scnn_forward.7} parent=39 // pred_check
          %p650 = pneg %p649
        $region46: #{scnn_forward.7} parent=39 // pred_check_branch
          %652 = sbr.rel (%p650) target = $region48
        $region47: #{scnn_forward.7} parent=39 // pred_region
          %v653 = vld [vmem:[#allocation6] sm:$0x3]
          %v654 = vrcp.pop 4.0
          %v655 = vmul.f32 4.0, %v654
          %v656 = vsub.f32 1.0, %v655
          %v657 = vmul.f32 %v654, %v656
          %v658 = vadd.f32 %v654, %v657
          %vm659 = vweird.f32 %v654
          %v660 = vsel %vm659, %v654, %v658
          %v661 = vmul.f32 %v653, %v660
          %662 = vst.msk [vmem:[#allocation6] sm:$0x3] %vm643, %v661
        $region48: #{scnn_forward.7} parent=39 // pred_fallthru
          _
        // Predicated region
        $region49: #{scnn_forward.7} parent=39 // pred_check
          %p663 = pneg %p140
        $region50: #{scnn_forward.7} parent=39 // pred_check_branch
          %665 = sbr.rel (%p663) target = $region52
        $region51: #{scnn_forward.7} parent=39 // pred_region
          %667 = vsyncadd [#allocation7], 0
          %s669 = sshll.u32 [#allocation6], 4
          %s670 = int_to_ptr.vmem [resolvable:$true] %s669
          %s671 = sshll.u32 %s5, 4
          %s672 = int_to_ptr.hbm [resolvable:$true] %s671
          %674 = dma.vmem_to_hbm [thread:$0]  %s670, 32, %s672, [#allocation7]
        $region52: #{scnn_forward.7} parent=39 // pred_fallthru
          _
        // Predicated region
        $region53: #{scnn_forward.7} parent=39 // pred_check
          %p675 = pneg %p140
        $region54: #{scnn_forward.7} parent=39 // pred_check_branch
          %677 = sbr.rel (%p675) target = $region56
        $region55: #{scnn_forward.7} parent=39 // pred_region
          %679 = dma.done [#allocation7], 32
        $region56: #{scnn_forward.7} parent=39 // pred_fallthru
          _
      $region40: #{scnn_forward.7} parent=5 // pred_fallthru
        _
      %p680 = scmp.le.s32.totalorder 2, %s12
      // Predicated region
      $region57: #{scnn_forward.7} parent=5 // pred_check
        %p681 = pneg %p680
      $region58: #{scnn_forward.7} parent=5 // pred_check_branch
        %683 = sbr.rel (%p681) target = $region60
      $region59: #{scnn_forward.7} parent=5 // pred_region
        %s684 = ssub.s32 %s12, 2
      $region60: #{scnn_forward.7} parent=5 // pred_fallthru
        _
    $region6: #{scnn_forward.7} parent=1 // loop_footer
      %s16 = sadd.s32 1, %s12
    $region7: #{scnn_forward.7} parent=1 // loop_footer_branch
      %11 = sbr.rel target = $region3
    $region8: #{scnn_forward.7} parent=1 // loop_exit
      _
    %685 = vsyncpa [#allocation7], 1
    %s686 = scalar_lea.sflag [#allocation7], 1
    %687 = vsyncpa %s686, 1

</llo_original>
